<compile_context>
chip_gen: v6e
topology: v6e:2x2x1
jax: 0.10.0
libtpu: 0.0.40
codegen_flags: <defaults>
</compile_context>

<pallas_src>
import jax
import jax.numpy as jnp
from jax import lax
from jax.experimental import pallas as pl
from jax.experimental.pallas import tpu as pltpu


def _bmap(g):          # batch-blocked (time-major) operands
    return (0, g, 0)


def _wmap(g):          # weights: resident, constant block
    return (0, 0)


def make_encoder_kernel(num_layers, T, BB, H, O):
    three_h = 3 * H
    n_w = 10 * num_layers + 4

    def gru_cell(gi, gh, h):
        # PyTorch GRU cell, gate order [r, z, n]; gi = W_ih x + b_ih,
        # gh = W_hh h + b_hh.  All gate math in f32 (v5e: no bf16 VPU/EUP).
        r = jax.nn.sigmoid(gi[:, 0:H] + gh[:, 0:H])
        z = jax.nn.sigmoid(gi[:, H:2 * H] + gh[:, H:2 * H])
        n = jnp.tanh(gi[:, 2 * H:three_h] + r * gh[:, 2 * H:three_h])
        return (1.0 - z) * n + z * h

    def kernel(x_ref, eps_ref, keep_ref, *rest):
        w_refs = rest[:n_w]
        z_ref = rest[n_w]
        gi_f_sc, gi_r_sc, fwd_sc, bwd_sc = rest[n_w + 1:]

        din = x_ref.shape[2]
        # Time-major activations: row index = t*BB + b  (free reshape: BB=8
        # matches the sublane tile, so (T,BB,·) <-> (T*BB,·) is layout-preserving).
        h_cur = x_ref[...].reshape(T * BB, din).astype(jnp.float32)

        for l in range(num_layers):
            (wih_f_ref, wih_r_ref, bih_f_ref, bih_r_ref,
             whh_f_ref, whh_r_ref, bhh_f_ref, bhh_r_ref,
             gamma_ref, beta_ref) = w_refs[10 * l:10 * (l + 1)]

            # Per-direction input projections (bf16 MXU operands, f32 acc),
            # stored straight into their own scratches: no lane-misaligned
            # 6H slice, no live (T*BB,6H) intermediate.
            hb = h_cur.astype(jnp.bfloat16)
            gi_f_sc[...] = (jnp.dot(hb, wih_f_ref[...],
                                    preferred_element_type=jnp.float32)
                            + bih_f_ref[...])
            gi_r_sc[...] = (jnp.dot(hb, wih_r_ref[...],
                                    preferred_element_type=jnp.float32)
                            + bih_r_ref[...])

            whh_f = whh_f_ref[...]          # bf16, hoisted out of the loop
            whh_r = whh_r_ref[...]
            bhh_f = bhh_f_ref[...]          # f32
            bhh_r = bhh_r_ref[...]

            def step(t, carry):
                hf, hr = carry              # (BB, H) f32 each
                # Two independent (BB,H)@(H,3H) bf16 MXU pushes per step.
                gh_f = jnp.dot(hf.astype(jnp.bfloat16), whh_f,
                               preferred_element_type=jnp.float32) + bhh_f
                gh_r = jnp.dot(hr.astype(jnp.bfloat16), whh_r,
                               preferred_element_type=jnp.float32) + bhh_r
                tf = pl.multiple_of(t * BB, BB)
                tr = pl.multiple_of((T - 1 - t) * BB, BB)
                hf = gru_cell(gi_f_sc[pl.ds(tf, BB), :], gh_f, hf)
                hr = gru_cell(gi_r_sc[pl.ds(tr, BB), :], gh_r, hr)
                fwd_sc[pl.ds(tf, BB), :] = hf     # full (8,H) sublane store
                bwd_sc[pl.ds(tr, BB), :] = hr
                return hf, hr

            h0 = jnp.zeros((BB, H), jnp.float32)
            lax.fori_loop(0, T, step, (h0, h0), unroll=min(8, T))

            # Direction sum + LayerNorm, vectorized over all T*BB rows.
            s = fwd_sc[...] + bwd_sc[...]                 # (T*BB, H) f32
            mu = jnp.mean(s, axis=-1, keepdims=True)
            var = jnp.mean((s - mu) ** 2, axis=-1, keepdims=True)
            h_cur = ((s - mu) * lax.rsqrt(var + 1e-5)
                     * gamma_ref[...] + beta_ref[...])    # (T*BB, H)

        # mean_ / var_ heads: separate (H,O) matmuls (no misaligned 2O slice).
        w_mean_ref, b_mean_ref, w_var_ref, b_var_ref = w_refs[10 * num_layers:]
        hb = h_cur.astype(jnp.bfloat16)
        mean_ = jnp.dot(hb, w_mean_ref[...],
                        preferred_element_type=jnp.float32) + b_mean_ref[...]
        logv = jnp.dot(hb, w_var_ref[...],
                       preferred_element_type=jnp.float32) + b_var_ref[...]

        eps = eps_ref[...].reshape(T * BB, O)
        z = mean_ + jnp.exp(logv * 0.5) * eps             # reparametrize

        # mask_(): keep rows listed in mask_nonzero, zero everything else.
        keep = keep_ref[...].reshape(T * BB, 1)
        z_ref[...] = (z * keep).reshape(T, BB, O).astype(z_ref.dtype)

    return kernel


def _vmem_limit_bytes(T, BB, din, H, O, weight_args):
    f32 = 4
    scratch = (2 * T * BB * 3 * H + 2 * T * BB * H) * f32
    io = 2 * T * BB * (din + O + 1 + O) * f32          # double-buffered x/eps/mask/z
    w = 2 * sum(int(a.size) * a.dtype.itemsize for a in weight_args)  # default 2-deep
    need = scratch + io + w + (4 << 20)                # margin for compiler temps
    # Clamp to v7x's 64 MiB/TC physical ceiling; harmless slack on v5e/v6e.
    return int(min(max(need, 32 << 20), 64 << 20))


def encoder_forward(x, eps, params, mask_batch, mask_row, *, block_b=8):
    B, T, din = x.shape
    H = params["gru"][0]["whh_f"].shape[0]
    O = params["w_mean"].shape[1]
    num_layers = len(params["gru"])

    BB = block_b                              # >= 8 => full sublane recurrence
    B_pad = ((B + BB - 1) // BB) * BB
    pad = B_pad - B

    # Wrapper-side layout plumbing: time-major + batch padding.
    def to_time_major(a):
        a = jnp.transpose(a, (1, 0, 2))
        if pad:
            a = jnp.pad(a, ((0, 0), (0, pad), (0, 0)))
        return a

    x_t = to_time_major(x.astype(jnp.float32))                       # (T,B_pad,Din)
    eps_t = to_time_major(eps.astype(jnp.float32))                   # (T,B_pad,O)
    keep = jnp.zeros((B, T), jnp.float32).at[
        mask_batch.astype(jnp.int32), mask_row.astype(jnp.int32)].set(1.0)
    keep_t = to_time_major(keep[:, :, None])                         # (T,B_pad,1)

    # Weights: MXU operands in bf16 (f32 accumulate in-kernel); biases /
    # LayerNorm params stay f32 (gate math is f32).
    weight_args = []
    for p in params["gru"]:
        weight_args += [
            p["wih_f"].astype(jnp.bfloat16), p["wih_r"].astype(jnp.bfloat16),
            p["bih_f"], p["bih_r"],
            p["whh_f"].astype(jnp.bfloat16), p["whh_r"].astype(jnp.bfloat16),
            p["bhh_f"], p["bhh_r"],
            p["gamma"], p["beta"],
        ]
    weight_args += [params["w_mean"].astype(jnp.bfloat16), params["b_mean"],
                    params["w_var"].astype(jnp.bfloat16), params["b_var"]]

    kernel = make_encoder_kernel(num_layers, T, BB, H, O)

    in_specs = ([pl.BlockSpec((T, BB, din), _bmap),        # x   (time-major block)
                 pl.BlockSpec((T, BB, O), _bmap),          # eps
                 pl.BlockSpec((T, BB, 1), _bmap)]          # keep-mask
                # TODO(synk): v7x — pipeline_mode=pl.Buffered(1) on these
                # constant-index weight specs to halve resident-weight VMEM.
                + [pl.BlockSpec(w.shape, _wmap) for w in weight_args])

    grid_spec = pltpu.PrefetchScalarGridSpec(
        num_scalar_prefetch=0,
        grid=(B_pad // BB,),                  # batch-blocked grid (parallel axis)
        in_specs=in_specs,
        out_specs=pl.BlockSpec((T, BB, O), _bmap),
        scratch_shapes=[pltpu.VMEM((T * BB, 3 * H), jnp.float32),   # gi forward
                        pltpu.VMEM((T * BB, 3 * H), jnp.float32),   # gi reverse
                        pltpu.VMEM((T * BB, H), jnp.float32),       # fwd states
                        pltpu.VMEM((T * BB, H), jnp.float32)],      # bwd states
    )

    z_t = pl.pallas_call(
        kernel,
        grid_spec=grid_spec,
        out_shape=jax.ShapeDtypeStruct((T, B_pad, O), jnp.float32),
        compiler_params=pltpu.CompilerParams(
            dimension_semantics=("parallel",),   # batch blocks across 2 TCs on v7x
            vmem_limit_bytes=_vmem_limit_bytes(T, BB, din, H, O, weight_args)),
    )(x_t, eps_t, keep_t, *weight_args)

    # Back to (B, T, O), dropping batch padding.
    return jnp.transpose(z_t, (1, 0, 2))[:B]


# ----------------------------------------------------------------------------
# Deterministic parameter init (shapes as in Encoder.__init__)
# ----------------------------------------------------------------------------
def init_params(key, input_dim, latent_dim, output_dim, num_layers):
    H = latent_dim
    keys = iter(jax.random.split(key, 8 * num_layers + 4))

    def u(shape, scale):
        return jax.random.uniform(next(keys), shape, jnp.float32, -scale, scale)

    k = 1.0 / float(H) ** 0.5
    gru = []
    for layer in range(num_layers):
        din = input_dim if layer == 0 else latent_dim
        gru.append({
            "wih_f": u((din, 3 * H), k),   # pre-transposed weight_ih (fwd dir)
            "wih_r": u((din, 3 * H), k),   # pre-transposed weight_ih (bwd dir)
            "bih_f": u((1, 3 * H), k),
            "bih_r": u((1, 3 * H), k),
            "whh_f": u((H, 3 * H), k),     # pre-transposed weight_hh (fwd)
            "whh_r": u((H, 3 * H), k),     # pre-transposed weight_hh (bwd)
            "bhh_f": u((1, 3 * H), k),
            "bhh_r": u((1, 3 * H), k),
            "gamma": jnp.ones((1, H), jnp.float32),   # LayerNorm weight
            "beta": jnp.zeros((1, H), jnp.float32),   # LayerNorm bias
        })

    xav = (6.0 / (H + output_dim)) ** 0.5             # xavier_uniform_ bound
    kb = 1.0 / float(H) ** 0.5
    return {
        "gru": gru,
        "w_mean": u((H, output_dim), xav), "b_mean": u((1, output_dim), kb),
        "w_var": u((H, output_dim), xav),  "b_var": u((1, output_dim), kb),
    }


if __name__ == "__main__":
    B, T = 2, 8
    input_dim, latent_dim, output_dim = 16, 32, 16
    num_layers = 2

    root = jax.random.PRNGKey(0)
    k_par, k_x, k_eps = jax.random.split(root, 3)

    params = init_params(k_par, input_dim, latent_dim, output_dim, num_layers)
    x = jax.random.normal(k_x, (B, T, input_dim), jnp.float32)

    # mask_nonzero = (batch_idx, row_idx): rows of z to KEEP (rest zeroed)
    mask_batch = jnp.array([0, 0, 1, 1], dtype=jnp.int32)
    mask_row = jnp.array([1, 3, 0, 5], dtype=jnp.int32)

    # eps for reparametrize (std.data.new(...).normal_() -> standard normal)
    eps = jax.random.normal(k_eps, (B, T, output_dim), jnp.float32)

    z = encoder_forward(x, eps, params, mask_batch, mask_row)
    z = jax.block_until_ready(z)
    assert z.shape == (B, T, output_dim)
    print("KERNEL_OK")
</pallas_src>

<mosaic_0001>
module attributes {stable_mosaic.version = 11 : i64} {
  func.func @kernel(%arg0: i32, %arg1: memref<8x8x16xf32, #tpu.memory_space<vmem>>, %arg2: memref<8x8x16xf32, #tpu.memory_space<vmem>>, %arg3: memref<8x8x1xf32, #tpu.memory_space<vmem>>, %arg4: memref<16x96xbf16, #tpu.memory_space<vmem>>, %arg5: memref<16x96xbf16, #tpu.memory_space<vmem>>, %arg6: memref<1x96xf32, #tpu.memory_space<vmem>>, %arg7: memref<1x96xf32, #tpu.memory_space<vmem>>, %arg8: memref<32x96xbf16, #tpu.memory_space<vmem>>, %arg9: memref<32x96xbf16, #tpu.memory_space<vmem>>, %arg10: memref<1x96xf32, #tpu.memory_space<vmem>>, %arg11: memref<1x96xf32, #tpu.memory_space<vmem>>, %arg12: memref<1x32xf32, #tpu.memory_space<vmem>>, %arg13: memref<1x32xf32, #tpu.memory_space<vmem>>, %arg14: memref<32x96xbf16, #tpu.memory_space<vmem>>, %arg15: memref<32x96xbf16, #tpu.memory_space<vmem>>, %arg16: memref<1x96xf32, #tpu.memory_space<vmem>>, %arg17: memref<1x96xf32, #tpu.memory_space<vmem>>, %arg18: memref<32x96xbf16, #tpu.memory_space<vmem>>, %arg19: memref<32x96xbf16, #tpu.memory_space<vmem>>, %arg20: memref<1x96xf32, #tpu.memory_space<vmem>>, %arg21: memref<1x96xf32, #tpu.memory_space<vmem>>, %arg22: memref<1x32xf32, #tpu.memory_space<vmem>>, %arg23: memref<1x32xf32, #tpu.memory_space<vmem>>, %arg24: memref<32x16xbf16, #tpu.memory_space<vmem>>, %arg25: memref<1x16xf32, #tpu.memory_space<vmem>>, %arg26: memref<32x16xbf16, #tpu.memory_space<vmem>>, %arg27: memref<1x16xf32, #tpu.memory_space<vmem>>, %arg28: memref<8x8x16xf32, #tpu.memory_space<vmem>>, %arg29: memref<64x96xf32, #tpu.memory_space<vmem>>, %arg30: memref<64x96xf32, #tpu.memory_space<vmem>>, %arg31: memref<64x32xf32, #tpu.memory_space<vmem>>, %arg32: memref<64x32xf32, #tpu.memory_space<vmem>>) attributes {dimension_semantics = [#tpu.dimension_semantics<parallel>], iteration_bounds = array<i64: 1>, scalar_prefetch = 0 : i64, scratch_operands = 4 : i64, tpu.core_type = #tpu.core_type<tc>, window_params = [{transform_indices = @transform_0, window_bounds = array<i64: 8, 8, 16>}, {transform_indices = @transform_1, window_bounds = array<i64: 8, 8, 16>}, {transform_indices = @transform_2, window_bounds = array<i64: 8, 8, 1>}, {pipeline_mode = #tpu.pipeline_mode<synchronous>, transform_indices = @transform_3, window_bounds = array<i64: 16, 96>}, {pipeline_mode = #tpu.pipeline_mode<synchronous>, transform_indices = @transform_4, window_bounds = array<i64: 16, 96>}, {pipeline_mode = #tpu.pipeline_mode<synchronous>, transform_indices = @transform_5, window_bounds = array<i64: 1, 96>}, {pipeline_mode = #tpu.pipeline_mode<synchronous>, transform_indices = @transform_6, window_bounds = array<i64: 1, 96>}, {pipeline_mode = #tpu.pipeline_mode<synchronous>, transform_indices = @transform_7, window_bounds = array<i64: 32, 96>}, {pipeline_mode = #tpu.pipeline_mode<synchronous>, transform_indices = @transform_8, window_bounds = array<i64: 32, 96>}, {pipeline_mode = #tpu.pipeline_mode<synchronous>, transform_indices = @transform_9, window_bounds = array<i64: 1, 96>}, {pipeline_mode = #tpu.pipeline_mode<synchronous>, transform_indices = @transform_10, window_bounds = array<i64: 1, 96>}, {pipeline_mode = #tpu.pipeline_mode<synchronous>, transform_indices = @transform_11, window_bounds = array<i64: 1, 32>}, {pipeline_mode = #tpu.pipeline_mode<synchronous>, transform_indices = @transform_12, window_bounds = array<i64: 1, 32>}, {pipeline_mode = #tpu.pipeline_mode<synchronous>, transform_indices = @transform_13, window_bounds = array<i64: 32, 96>}, {pipeline_mode = #tpu.pipeline_mode<synchronous>, transform_indices = @transform_14, window_bounds = array<i64: 32, 96>}, {pipeline_mode = #tpu.pipeline_mode<synchronous>, transform_indices = @transform_15, window_bounds = array<i64: 1, 96>}, {pipeline_mode = #tpu.pipeline_mode<synchronous>, transform_indices = @transform_16, window_bounds = array<i64: 1, 96>}, {pipeline_mode = #tpu.pipeline_mode<synchronous>, transform_indices = @transform_17, window_bounds = array<i64: 32, 96>}, {pipeline_mode = #tpu.pipeline_mode<synchronous>, transform_indices = @transform_18, window_bounds = array<i64: 32, 96>}, {pipeline_mode = #tpu.pipeline_mode<synchronous>, transform_indices = @transform_19, window_bounds = array<i64: 1, 96>}, {pipeline_mode = #tpu.pipeline_mode<synchronous>, transform_indices = @transform_20, window_bounds = array<i64: 1, 96>}, {pipeline_mode = #tpu.pipeline_mode<synchronous>, transform_indices = @transform_21, window_bounds = array<i64: 1, 32>}, {pipeline_mode = #tpu.pipeline_mode<synchronous>, transform_indices = @transform_22, window_bounds = array<i64: 1, 32>}, {pipeline_mode = #tpu.pipeline_mode<synchronous>, transform_indices = @transform_23, window_bounds = array<i64: 32, 16>}, {pipeline_mode = #tpu.pipeline_mode<synchronous>, transform_indices = @transform_24, window_bounds = array<i64: 1, 16>}, {pipeline_mode = #tpu.pipeline_mode<synchronous>, transform_indices = @transform_25, window_bounds = array<i64: 32, 16>}, {pipeline_mode = #tpu.pipeline_mode<synchronous>, transform_indices = @transform_26, window_bounds = array<i64: 1, 16>}, {transform_indices = @transform_27, window_bounds = array<i64: 8, 8, 16>}]} {
    %c0 = arith.constant 0 : index
    %c0_0 = arith.constant 0 : index
    %c0_1 = arith.constant 0 : index
    %0 = vector.load %arg1[%c0, %c0_0, %c0_1] : memref<8x8x16xf32, #tpu.memory_space<vmem>>, vector<8x8x16xf32>
    %1 = vector.shape_cast %0 : vector<8x8x16xf32> to vector<64x16xf32>
    %2 = arith.truncf %1 : vector<64x16xf32> to vector<64x16xbf16>
    %c0_2 = arith.constant 0 : index
    %c0_3 = arith.constant 0 : index
    %3 = vector.load %arg4[%c0_2, %c0_3] : memref<16x96xbf16, #tpu.memory_space<vmem>>, vector<16x96xbf16>
    %cst = arith.constant dense<0.000000e+00> : vector<64x96xf32>
    %4 = tpu.matmul %2, %3, %cst {dimension_numbers = #tpu.dot_dimension_numbers<[1], [0], [0], [1], [0, 0, 1, 1], [], []>} : vector<64x16xbf16>, vector<16x96xbf16>, vector<64x96xf32> -> vector<64x96xf32>
    %c0_4 = arith.constant 0 : index
    %c0_5 = arith.constant 0 : index
    %5 = vector.load %arg6[%c0_4, %c0_5] : memref<1x96xf32, #tpu.memory_space<vmem>>, vector<1x96xf32>
    %6 = vector.broadcast %5 : vector<1x96xf32> to vector<64x96xf32>
    %7 = arith.addf %4, %6 : vector<64x96xf32>
    %c0_6 = arith.constant 0 : index
    %c0_7 = arith.constant 0 : index
    %8 = vector.load %arg29[%c0_6, %c0_7] : memref<64x96xf32, #tpu.memory_space<vmem>>, vector<64x96xf32>
    tpu.vector_store %arg29[%c0_6, %c0_7], %7 {strides = array<i32>} : memref<64x96xf32, #tpu.memory_space<vmem>>, vector<64x96xf32>,
    %c0_8 = arith.constant 0 : index
    %c0_9 = arith.constant 0 : index
    %9 = vector.load %arg5[%c0_8, %c0_9] : memref<16x96xbf16, #tpu.memory_space<vmem>>, vector<16x96xbf16>
    %cst_10 = arith.constant dense<0.000000e+00> : vector<64x96xf32>
    %10 = tpu.matmul %2, %9, %cst_10 {dimension_numbers = #tpu.dot_dimension_numbers<[1], [0], [0], [1], [0, 0, 1, 1], [], []>} : vector<64x16xbf16>, vector<16x96xbf16>, vector<64x96xf32> -> vector<64x96xf32>
    %c0_11 = arith.constant 0 : index
    %c0_12 = arith.constant 0 : index
    %11 = vector.load %arg7[%c0_11, %c0_12] : memref<1x96xf32, #tpu.memory_space<vmem>>, vector<1x96xf32>
    %12 = vector.broadcast %11 : vector<1x96xf32> to vector<64x96xf32>
    %13 = arith.addf %10, %12 : vector<64x96xf32>
    %c0_13 = arith.constant 0 : index
    %c0_14 = arith.constant 0 : index
    %14 = vector.load %arg30[%c0_13, %c0_14] : memref<64x96xf32, #tpu.memory_space<vmem>>, vector<64x96xf32>
    tpu.vector_store %arg30[%c0_13, %c0_14], %13 {strides = array<i32>} : memref<64x96xf32, #tpu.memory_space<vmem>>, vector<64x96xf32>,
    %c0_15 = arith.constant 0 : index
    %c0_16 = arith.constant 0 : index
    %15 = vector.load %arg8[%c0_15, %c0_16] : memref<32x96xbf16, #tpu.memory_space<vmem>>, vector<32x96xbf16>
    %c0_17 = arith.constant 0 : index
    %c0_18 = arith.constant 0 : index
    %16 = vector.load %arg9[%c0_17, %c0_18] : memref<32x96xbf16, #tpu.memory_space<vmem>>, vector<32x96xbf16>
    %c0_19 = arith.constant 0 : index
    %c0_20 = arith.constant 0 : index
    %17 = vector.load %arg10[%c0_19, %c0_20] : memref<1x96xf32, #tpu.memory_space<vmem>>, vector<1x96xf32>
    %c0_21 = arith.constant 0 : index
    %c0_22 = arith.constant 0 : index
    %18 = vector.load %arg11[%c0_21, %c0_22] : memref<1x96xf32, #tpu.memory_space<vmem>>, vector<1x96xf32>
    %cst_23 = arith.constant 0.000000e+00 : f32
    %19 = vector.broadcast %cst_23 : f32 to vector<8x32xf32>
    %c0_i32 = arith.constant 0 : i32
    %20 = arith.truncf %19 : vector<8x32xf32> to vector<8x32xbf16>
    %cst_24 = arith.constant dense<0.000000e+00> : vector<8x96xf32>
    %21 = tpu.matmul %20, %15, %cst_24 {dimension_numbers = #tpu.dot_dimension_numbers<[1], [0], [0], [1], [0, 0, 1, 1], [], []>} : vector<8x32xbf16>, vector<32x96xbf16>, vector<8x96xf32> -> vector<8x96xf32>
    %22 = vector.broadcast %17 : vector<1x96xf32> to vector<8x96xf32>
    %23 = arith.addf %21, %22 : vector<8x96xf32>
    %24 = arith.truncf %19 : vector<8x32xf32> to vector<8x32xbf16>
    %cst_25 = arith.constant dense<0.000000e+00> : vector<8x96xf32>
    %25 = tpu.matmul %24, %16, %cst_25 {dimension_numbers = #tpu.dot_dimension_numbers<[1], [0], [0], [1], [0, 0, 1, 1], [], []>} : vector<8x32xbf16>, vector<32x96xbf16>, vector<8x96xf32> -> vector<8x96xf32>
    %26 = vector.broadcast %18 : vector<1x96xf32> to vector<8x96xf32>
    %27 = arith.addf %25, %26 : vector<8x96xf32>
    %c8_i32 = arith.constant 8 : i32
    %28 = arith.muli %c0_i32, %c8_i32 : i32
    %29 = tpu.assume_multiple %28, 8 : i32
    %c7_i32 = arith.constant 7 : i32
    %30 = arith.subi %c7_i32, %c0_i32 : i32
    %c8_i32_26 = arith.constant 8 : i32
    %31 = arith.muli %30, %c8_i32_26 : i32
    %32 = tpu.assume_multiple %31, 8 : i32
    %33 = arith.index_cast %29 : i32 to index
    %c0_27 = arith.constant 0 : index
    %34 = vector.load %arg29[%33, %c0_27] : memref<64x96xf32, #tpu.memory_space<vmem>>, vector<8x96xf32>
    %35 = vector.extract_strided_slice %34 {offsets = [0, 0], sizes = [8, 32], strides = [1, 1]} : vector<8x96xf32> to vector<8x32xf32>
    %36 = vector.extract_strided_slice %23 {offsets = [0, 0], sizes = [8, 32], strides = [1, 1]} : vector<8x96xf32> to vector<8x32xf32>
    %37 = arith.addf %35, %36 : vector<8x32xf32>
    %38 = arith.negf %37 : vector<8x32xf32>
    %39 = math.exp %38 : vector<8x32xf32>
    %cst_28 = arith.constant 1.000000e+00 : f32
    %40 = vector.broadcast %cst_28 : f32 to vector<8x32xf32>
    %41 = arith.addf %40, %39 : vector<8x32xf32>
    %42 = arith.divf %40, %41 : vector<8x32xf32>
    %43 = vector.extract_strided_slice %34 {offsets = [0, 32], sizes = [8, 32], strides = [1, 1]} : vector<8x96xf32> to vector<8x32xf32>
    %44 = vector.extract_strided_slice %23 {offsets = [0, 32], sizes = [8, 32], strides = [1, 1]} : vector<8x96xf32> to vector<8x32xf32>
    %45 = arith.addf %43, %44 : vector<8x32xf32>
    %46 = arith.negf %45 : vector<8x32xf32>
    %47 = math.exp %46 : vector<8x32xf32>
    %cst_29 = arith.constant 1.000000e+00 : f32
    %48 = vector.broadcast %cst_29 : f32 to vector<8x32xf32>
    %49 = arith.addf %48, %47 : vector<8x32xf32>
    %50 = arith.divf %48, %49 : vector<8x32xf32>
    %51 = vector.extract_strided_slice %34 {offsets = [0, 64], sizes = [8, 32], strides = [1, 1]} : vector<8x96xf32> to vector<8x32xf32>
    %52 = vector.extract_strided_slice %23 {offsets = [0, 64], sizes = [8, 32], strides = [1, 1]} : vector<8x96xf32> to vector<8x32xf32>
    %53 = arith.mulf %42, %52 : vector<8x32xf32>
    %54 = arith.addf %51, %53 : vector<8x32xf32>
    %55 = math.tanh %54 : vector<8x32xf32>
    %cst_30 = arith.constant 1.000000e+00 : f32
    %56 = vector.broadcast %cst_30 : f32 to vector<8x32xf32>
    %57 = arith.subf %56, %50 : vector<8x32xf32>
    %58 = arith.mulf %57, %55 : vector<8x32xf32>
    %59 = arith.mulf %50, %19 : vector<8x32xf32>
    %60 = arith.addf %58, %59 : vector<8x32xf32>
    %61 = arith.index_cast %32 : i32 to index
    %c0_31 = arith.constant 0 : index
    %62 = vector.load %arg30[%61, %c0_31] : memref<64x96xf32, #tpu.memory_space<vmem>>, vector<8x96xf32>
    %63 = vector.extract_strided_slice %62 {offsets = [0, 0], sizes = [8, 32], strides = [1, 1]} : vector<8x96xf32> to vector<8x32xf32>
    %64 = vector.extract_strided_slice %27 {offsets = [0, 0], sizes = [8, 32], strides = [1, 1]} : vector<8x96xf32> to vector<8x32xf32>
    %65 = arith.addf %63, %64 : vector<8x32xf32>
    %66 = arith.negf %65 : vector<8x32xf32>
    %67 = math.exp %66 : vector<8x32xf32>
    %cst_32 = arith.constant 1.000000e+00 : f32
    %68 = vector.broadcast %cst_32 : f32 to vector<8x32xf32>
    %69 = arith.addf %68, %67 : vector<8x32xf32>
    %70 = arith.divf %68, %69 : vector<8x32xf32>
    %71 = vector.extract_strided_slice %62 {offsets = [0, 32], sizes = [8, 32], strides = [1, 1]} : vector<8x96xf32> to vector<8x32xf32>
    %72 = vector.extract_strided_slice %27 {offsets = [0, 32], sizes = [8, 32], strides = [1, 1]} : vector<8x96xf32> to vector<8x32xf32>
    %73 = arith.addf %71, %72 : vector<8x32xf32>
    %74 = arith.negf %73 : vector<8x32xf32>
    %75 = math.exp %74 : vector<8x32xf32>
    %cst_33 = arith.constant 1.000000e+00 : f32
    %76 = vector.broadcast %cst_33 : f32 to vector<8x32xf32>
    %77 = arith.addf %76, %75 : vector<8x32xf32>
    %78 = arith.divf %76, %77 : vector<8x32xf32>
    %79 = vector.extract_strided_slice %62 {offsets = [0, 64], sizes = [8, 32], strides = [1, 1]} : vector<8x96xf32> to vector<8x32xf32>
    %80 = vector.extract_strided_slice %27 {offsets = [0, 64], sizes = [8, 32], strides = [1, 1]} : vector<8x96xf32> to vector<8x32xf32>
    %81 = arith.mulf %70, %80 : vector<8x32xf32>
    %82 = arith.addf %79, %81 : vector<8x32xf32>
    %83 = math.tanh %82 : vector<8x32xf32>
    %cst_34 = arith.constant 1.000000e+00 : f32
    %84 = vector.broadcast %cst_34 : f32 to vector<8x32xf32>
    %85 = arith.subf %84, %78 : vector<8x32xf32>
    %86 = arith.mulf %85, %83 : vector<8x32xf32>
    %87 = arith.mulf %78, %19 : vector<8x32xf32>
    %88 = arith.addf %86, %87 : vector<8x32xf32>
    %89 = arith.index_cast %29 : i32 to index
    %c0_35 = arith.constant 0 : index
    %90 = vector.load %arg31[%89, %c0_35] : memref<64x32xf32, #tpu.memory_space<vmem>>, vector<8x32xf32>
    tpu.vector_store %arg31[%89, %c0_35], %60 {strides = array<i32>} : memref<64x32xf32, #tpu.memory_space<vmem>>, vector<8x32xf32>,
    %91 = arith.index_cast %32 : i32 to index
    %c0_36 = arith.constant 0 : index
    %92 = vector.load %arg32[%91, %c0_36] : memref<64x32xf32, #tpu.memory_space<vmem>>, vector<8x32xf32>
    tpu.vector_store %arg32[%91, %c0_36], %88 {strides = array<i32>} : memref<64x32xf32, #tpu.memory_space<vmem>>, vector<8x32xf32>,
    %c1_i32 = arith.constant 1 : i32
    %93 = arith.truncf %60 : vector<8x32xf32> to vector<8x32xbf16>
    %cst_37 = arith.constant dense<0.000000e+00> : vector<8x96xf32>
    %94 = tpu.matmul %93, %15, %cst_37 {dimension_numbers = #tpu.dot_dimension_numbers<[1], [0], [0], [1], [0, 0, 1, 1], [], []>} : vector<8x32xbf16>, vector<32x96xbf16>, vector<8x96xf32> -> vector<8x96xf32>
    %95 = vector.broadcast %17 : vector<1x96xf32> to vector<8x96xf32>
    %96 = arith.addf %94, %95 : vector<8x96xf32>
    %97 = arith.truncf %88 : vector<8x32xf32> to vector<8x32xbf16>
    %cst_38 = arith.constant dense<0.000000e+00> : vector<8x96xf32>
    %98 = tpu.matmul %97, %16, %cst_38 {dimension_numbers = #tpu.dot_dimension_numbers<[1], [0], [0], [1], [0, 0, 1, 1], [], []>} : vector<8x32xbf16>, vector<32x96xbf16>, vector<8x96xf32> -> vector<8x96xf32>
    %99 = vector.broadcast %18 : vector<1x96xf32> to vector<8x96xf32>
    %100 = arith.addf %98, %99 : vector<8x96xf32>
    %c8_i32_39 = arith.constant 8 : i32
    %101 = arith.muli %c1_i32, %c8_i32_39 : i32
    %102 = tpu.assume_multiple %101, 8 : i32
    %c7_i32_40 = arith.constant 7 : i32
    %103 = arith.subi %c7_i32_40, %c1_i32 : i32
    %c8_i32_41 = arith.constant 8 : i32
    %104 = arith.muli %103, %c8_i32_41 : i32
    %105 = tpu.assume_multiple %104, 8 : i32
    %106 = arith.index_cast %102 : i32 to index
    %c0_42 = arith.constant 0 : index
    %107 = vector.load %arg29[%106, %c0_42] : memref<64x96xf32, #tpu.memory_space<vmem>>, vector<8x96xf32>
    %108 = vector.extract_strided_slice %107 {offsets = [0, 0], sizes = [8, 32], strides = [1, 1]} : vector<8x96xf32> to vector<8x32xf32>
    %109 = vector.extract_strided_slice %96 {offsets = [0, 0], sizes = [8, 32], strides = [1, 1]} : vector<8x96xf32> to vector<8x32xf32>
    %110 = arith.addf %108, %109 : vector<8x32xf32>
    %111 = arith.negf %110 : vector<8x32xf32>
    %112 = math.exp %111 : vector<8x32xf32>
    %cst_43 = arith.constant 1.000000e+00 : f32
    %113 = vector.broadcast %cst_43 : f32 to vector<8x32xf32>
    %114 = arith.addf %113, %112 : vector<8x32xf32>
    %115 = arith.divf %113, %114 : vector<8x32xf32>
    %116 = vector.extract_strided_slice %107 {offsets = [0, 32], sizes = [8, 32], strides = [1, 1]} : vector<8x96xf32> to vector<8x32xf32>
    %117 = vector.extract_strided_slice %96 {offsets = [0, 32], sizes = [8, 32], strides = [1, 1]} : vector<8x96xf32> to vector<8x32xf32>
    %118 = arith.addf %116, %117 : vector<8x32xf32>
    %119 = arith.negf %118 : vector<8x32xf32>
    %120 = math.exp %119 : vector<8x32xf32>
    %cst_44 = arith.constant 1.000000e+00 : f32
    %121 = vector.broadcast %cst_44 : f32 to vector<8x32xf32>
    %122 = arith.addf %121, %120 : vector<8x32xf32>
    %123 = arith.divf %121, %122 : vector<8x32xf32>
    %124 = vector.extract_strided_slice %107 {offsets = [0, 64], sizes = [8, 32], strides = [1, 1]} : vector<8x96xf32> to vector<8x32xf32>
    %125 = vector.extract_strided_slice %96 {offsets = [0, 64], sizes = [8, 32], strides = [1, 1]} : vector<8x96xf32> to vector<8x32xf32>
    %126 = arith.mulf %115, %125 : vector<8x32xf32>
    %127 = arith.addf %124, %126 : vector<8x32xf32>
    %128 = math.tanh %127 : vector<8x32xf32>
    %cst_45 = arith.constant 1.000000e+00 : f32
    %129 = vector.broadcast %cst_45 : f32 to vector<8x32xf32>
    %130 = arith.subf %129, %123 : vector<8x32xf32>
    %131 = arith.mulf %130, %128 : vector<8x32xf32>
    %132 = arith.mulf %123, %60 : vector<8x32xf32>
    %133 = arith.addf %131, %132 : vector<8x32xf32>
    %134 = arith.index_cast %105 : i32 to index
    %c0_46 = arith.constant 0 : index
    %135 = vector.load %arg30[%134, %c0_46] : memref<64x96xf32, #tpu.memory_space<vmem>>, vector<8x96xf32>
    %136 = vector.extract_strided_slice %135 {offsets = [0, 0], sizes = [8, 32], strides = [1, 1]} : vector<8x96xf32> to vector<8x32xf32>
    %137 = vector.extract_strided_slice %100 {offsets = [0, 0], sizes = [8, 32], strides = [1, 1]} : vector<8x96xf32> to vector<8x32xf32>
    %138 = arith.addf %136, %137 : vector<8x32xf32>
    %139 = arith.negf %138 : vector<8x32xf32>
    %140 = math.exp %139 : vector<8x32xf32>
    %cst_47 = arith.constant 1.000000e+00 : f32
    %141 = vector.broadcast %cst_47 : f32 to vector<8x32xf32>
    %142 = arith.addf %141, %140 : vector<8x32xf32>
    %143 = arith.divf %141, %142 : vector<8x32xf32>
    %144 = vector.extract_strided_slice %135 {offsets = [0, 32], sizes = [8, 32], strides = [1, 1]} : vector<8x96xf32> to vector<8x32xf32>
    %145 = vector.extract_strided_slice %100 {offsets = [0, 32], sizes = [8, 32], strides = [1, 1]} : vector<8x96xf32> to vector<8x32xf32>
    %146 = arith.addf %144, %145 : vector<8x32xf32>
    %147 = arith.negf %146 : vector<8x32xf32>
    %148 = math.exp %147 : vector<8x32xf32>
    %cst_48 = arith.constant 1.000000e+00 : f32
    %149 = vector.broadcast %cst_48 : f32 to vector<8x32xf32>
    %150 = arith.addf %149, %148 : vector<8x32xf32>
    %151 = arith.divf %149, %150 : vector<8x32xf32>
    %152 = vector.extract_strided_slice %135 {offsets = [0, 64], sizes = [8, 32], strides = [1, 1]} : vector<8x96xf32> to vector<8x32xf32>
    %153 = vector.extract_strided_slice %100 {offsets = [0, 64], sizes = [8, 32], strides = [1, 1]} : vector<8x96xf32> to vector<8x32xf32>
    %154 = arith.mulf %143, %153 : vector<8x32xf32>
    %155 = arith.addf %152, %154 : vector<8x32xf32>
    %156 = math.tanh %155 : vector<8x32xf32>
    %cst_49 = arith.constant 1.000000e+00 : f32
    %157 = vector.broadcast %cst_49 : f32 to vector<8x32xf32>
    %158 = arith.subf %157, %151 : vector<8x32xf32>
    %159 = arith.mulf %158, %156 : vector<8x32xf32>
    %160 = arith.mulf %151, %88 : vector<8x32xf32>
    %161 = arith.addf %159, %160 : vector<8x32xf32>
    %162 = arith.index_cast %102 : i32 to index
    %c0_50 = arith.constant 0 : index
    %163 = vector.load %arg31[%162, %c0_50] : memref<64x32xf32, #tpu.memory_space<vmem>>, vector<8x32xf32>
    tpu.vector_store %arg31[%162, %c0_50], %133 {strides = array<i32>} : memref<64x32xf32, #tpu.memory_space<vmem>>, vector<8x32xf32>,
    %164 = arith.index_cast %105 : i32 to index
    %c0_51 = arith.constant 0 : index
    %165 = vector.load %arg32[%164, %c0_51] : memref<64x32xf32, #tpu.memory_space<vmem>>, vector<8x32xf32>
    tpu.vector_store %arg32[%164, %c0_51], %161 {strides = array<i32>} : memref<64x32xf32, #tpu.memory_space<vmem>>, vector<8x32xf32>,
    %c2_i32 = arith.constant 2 : i32
    %166 = arith.truncf %133 : vector<8x32xf32> to vector<8x32xbf16>
    %cst_52 = arith.constant dense<0.000000e+00> : vector<8x96xf32>
    %167 = tpu.matmul %166, %15, %cst_52 {dimension_numbers = #tpu.dot_dimension_numbers<[1], [0], [0], [1], [0, 0, 1, 1], [], []>} : vector<8x32xbf16>, vector<32x96xbf16>, vector<8x96xf32> -> vector<8x96xf32>
    %168 = vector.broadcast %17 : vector<1x96xf32> to vector<8x96xf32>
    %169 = arith.addf %167, %168 : vector<8x96xf32>
    %170 = arith.truncf %161 : vector<8x32xf32> to vector<8x32xbf16>
    %cst_53 = arith.constant dense<0.000000e+00> : vector<8x96xf32>
    %171 = tpu.matmul %170, %16, %cst_53 {dimension_numbers = #tpu.dot_dimension_numbers<[1], [0], [0], [1], [0, 0, 1, 1], [], []>} : vector<8x32xbf16>, vector<32x96xbf16>, vector<8x96xf32> -> vector<8x96xf32>
    %172 = vector.broadcast %18 : vector<1x96xf32> to vector<8x96xf32>
    %173 = arith.addf %171, %172 : vector<8x96xf32>
    %c8_i32_54 = arith.constant 8 : i32
    %174 = arith.muli %c2_i32, %c8_i32_54 : i32
    %175 = tpu.assume_multiple %174, 8 : i32
    %c7_i32_55 = arith.constant 7 : i32
    %176 = arith.subi %c7_i32_55, %c2_i32 : i32
    %c8_i32_56 = arith.constant 8 : i32
    %177 = arith.muli %176, %c8_i32_56 : i32
    %178 = tpu.assume_multiple %177, 8 : i32
    %179 = arith.index_cast %175 : i32 to index
    %c0_57 = arith.constant 0 : index
    %180 = vector.load %arg29[%179, %c0_57] : memref<64x96xf32, #tpu.memory_space<vmem>>, vector<8x96xf32>
    %181 = vector.extract_strided_slice %180 {offsets = [0, 0], sizes = [8, 32], strides = [1, 1]} : vector<8x96xf32> to vector<8x32xf32>
    %182 = vector.extract_strided_slice %169 {offsets = [0, 0], sizes = [8, 32], strides = [1, 1]} : vector<8x96xf32> to vector<8x32xf32>
    %183 = arith.addf %181, %182 : vector<8x32xf32>
    %184 = arith.negf %183 : vector<8x32xf32>
    %185 = math.exp %184 : vector<8x32xf32>
    %cst_58 = arith.constant 1.000000e+00 : f32
    %186 = vector.broadcast %cst_58 : f32 to vector<8x32xf32>
    %187 = arith.addf %186, %185 : vector<8x32xf32>
    %188 = arith.divf %186, %187 : vector<8x32xf32>
    %189 = vector.extract_strided_slice %180 {offsets = [0, 32], sizes = [8, 32], strides = [1, 1]} : vector<8x96xf32> to vector<8x32xf32>
    %190 = vector.extract_strided_slice %169 {offsets = [0, 32], sizes = [8, 32], strides = [1, 1]} : vector<8x96xf32> to vector<8x32xf32>
    %191 = arith.addf %189, %190 : vector<8x32xf32>
    %192 = arith.negf %191 : vector<8x32xf32>
    %193 = math.exp %192 : vector<8x32xf32>
    %cst_59 = arith.constant 1.000000e+00 : f32
    %194 = vector.broadcast %cst_59 : f32 to vector<8x32xf32>
    %195 = arith.addf %194, %193 : vector<8x32xf32>
    %196 = arith.divf %194, %195 : vector<8x32xf32>
    %197 = vector.extract_strided_slice %180 {offsets = [0, 64], sizes = [8, 32], strides = [1, 1]} : vector<8x96xf32> to vector<8x32xf32>
    %198 = vector.extract_strided_slice %169 {offsets = [0, 64], sizes = [8, 32], strides = [1, 1]} : vector<8x96xf32> to vector<8x32xf32>
    %199 = arith.mulf %188, %198 : vector<8x32xf32>
    %200 = arith.addf %197, %199 : vector<8x32xf32>
    %201 = math.tanh %200 : vector<8x32xf32>
    %cst_60 = arith.constant 1.000000e+00 : f32
    %202 = vector.broadcast %cst_60 : f32 to vector<8x32xf32>
    %203 = arith.subf %202, %196 : vector<8x32xf32>
    %204 = arith.mulf %203, %201 : vector<8x32xf32>
    %205 = arith.mulf %196, %133 : vector<8x32xf32>
    %206 = arith.addf %204, %205 : vector<8x32xf32>
    %207 = arith.index_cast %178 : i32 to index
    %c0_61 = arith.constant 0 : index
    %208 = vector.load %arg30[%207, %c0_61] : memref<64x96xf32, #tpu.memory_space<vmem>>, vector<8x96xf32>
    %209 = vector.extract_strided_slice %208 {offsets = [0, 0], sizes = [8, 32], strides = [1, 1]} : vector<8x96xf32> to vector<8x32xf32>
    %210 = vector.extract_strided_slice %173 {offsets = [0, 0], sizes = [8, 32], strides = [1, 1]} : vector<8x96xf32> to vector<8x32xf32>
    %211 = arith.addf %209, %210 : vector<8x32xf32>
    %212 = arith.negf %211 : vector<8x32xf32>
    %213 = math.exp %212 : vector<8x32xf32>
    %cst_62 = arith.constant 1.000000e+00 : f32
    %214 = vector.broadcast %cst_62 : f32 to vector<8x32xf32>
    %215 = arith.addf %214, %213 : vector<8x32xf32>
    %216 = arith.divf %214, %215 : vector<8x32xf32>
    %217 = vector.extract_strided_slice %208 {offsets = [0, 32], sizes = [8, 32], strides = [1, 1]} : vector<8x96xf32> to vector<8x32xf32>
    %218 = vector.extract_strided_slice %173 {offsets = [0, 32], sizes = [8, 32], strides = [1, 1]} : vector<8x96xf32> to vector<8x32xf32>
    %219 = arith.addf %217, %218 : vector<8x32xf32>
    %220 = arith.negf %219 : vector<8x32xf32>
    %221 = math.exp %220 : vector<8x32xf32>
    %cst_63 = arith.constant 1.000000e+00 : f32
    %222 = vector.broadcast %cst_63 : f32 to vector<8x32xf32>
    %223 = arith.addf %222, %221 : vector<8x32xf32>
    %224 = arith.divf %222, %223 : vector<8x32xf32>
    %225 = vector.extract_strided_slice %208 {offsets = [0, 64], sizes = [8, 32], strides = [1, 1]} : vector<8x96xf32> to vector<8x32xf32>
    %226 = vector.extract_strided_slice %173 {offsets = [0, 64], sizes = [8, 32], strides = [1, 1]} : vector<8x96xf32> to vector<8x32xf32>
    %227 = arith.mulf %216, %226 : vector<8x32xf32>
    %228 = arith.addf %225, %227 : vector<8x32xf32>
    %229 = math.tanh %228 : vector<8x32xf32>
    %cst_64 = arith.constant 1.000000e+00 : f32
    %230 = vector.broadcast %cst_64 : f32 to vector<8x32xf32>
    %231 = arith.subf %230, %224 : vector<8x32xf32>
    %232 = arith.mulf %231, %229 : vector<8x32xf32>
    %233 = arith.mulf %224, %161 : vector<8x32xf32>
    %234 = arith.addf %232, %233 : vector<8x32xf32>
    %235 = arith.index_cast %175 : i32 to index
    %c0_65 = arith.constant 0 : index
    %236 = vector.load %arg31[%235, %c0_65] : memref<64x32xf32, #tpu.memory_space<vmem>>, vector<8x32xf32>
    tpu.vector_store %arg31[%235, %c0_65], %206 {strides = array<i32>} : memref<64x32xf32, #tpu.memory_space<vmem>>, vector<8x32xf32>,
    %237 = arith.index_cast %178 : i32 to index
    %c0_66 = arith.constant 0 : index
    %238 = vector.load %arg32[%237, %c0_66] : memref<64x32xf32, #tpu.memory_space<vmem>>, vector<8x32xf32>
    tpu.vector_store %arg32[%237, %c0_66], %234 {strides = array<i32>} : memref<64x32xf32, #tpu.memory_space<vmem>>, vector<8x32xf32>,
    %c3_i32 = arith.constant 3 : i32
    %239 = arith.truncf %206 : vector<8x32xf32> to vector<8x32xbf16>
    %cst_67 = arith.constant dense<0.000000e+00> : vector<8x96xf32>
    %240 = tpu.matmul %239, %15, %cst_67 {dimension_numbers = #tpu.dot_dimension_numbers<[1], [0], [0], [1], [0, 0, 1, 1], [], []>} : vector<8x32xbf16>, vector<32x96xbf16>, vector<8x96xf32> -> vector<8x96xf32>
    %241 = vector.broadcast %17 : vector<1x96xf32> to vector<8x96xf32>
    %242 = arith.addf %240, %241 : vector<8x96xf32>
    %243 = arith.truncf %234 : vector<8x32xf32> to vector<8x32xbf16>
    %cst_68 = arith.constant dense<0.000000e+00> : vector<8x96xf32>
    %244 = tpu.matmul %243, %16, %cst_68 {dimension_numbers = #tpu.dot_dimension_numbers<[1], [0], [0], [1], [0, 0, 1, 1], [], []>} : vector<8x32xbf16>, vector<32x96xbf16>, vector<8x96xf32> -> vector<8x96xf32>
    %245 = vector.broadcast %18 : vector<1x96xf32> to vector<8x96xf32>
    %246 = arith.addf %244, %245 : vector<8x96xf32>
    %c8_i32_69 = arith.constant 8 : i32
    %247 = arith.muli %c3_i32, %c8_i32_69 : i32
    %248 = tpu.assume_multiple %247, 8 : i32
    %c7_i32_70 = arith.constant 7 : i32
    %249 = arith.subi %c7_i32_70, %c3_i32 : i32
    %c8_i32_71 = arith.constant 8 : i32
    %250 = arith.muli %249, %c8_i32_71 : i32
    %251 = tpu.assume_multiple %250, 8 : i32
    %252 = arith.index_cast %248 : i32 to index
    %c0_72 = arith.constant 0 : index
    %253 = vector.load %arg29[%252, %c0_72] : memref<64x96xf32, #tpu.memory_space<vmem>>, vector<8x96xf32>
    %254 = vector.extract_strided_slice %253 {offsets = [0, 0], sizes = [8, 32], strides = [1, 1]} : vector<8x96xf32> to vector<8x32xf32>
    %255 = vector.extract_strided_slice %242 {offsets = [0, 0], sizes = [8, 32], strides = [1, 1]} : vector<8x96xf32> to vector<8x32xf32>
    %256 = arith.addf %254, %255 : vector<8x32xf32>
    %257 = arith.negf %256 : vector<8x32xf32>
    %258 = math.exp %257 : vector<8x32xf32>
    %cst_73 = arith.constant 1.000000e+00 : f32
    %259 = vector.broadcast %cst_73 : f32 to vector<8x32xf32>
    %260 = arith.addf %259, %258 : vector<8x32xf32>
    %261 = arith.divf %259, %260 : vector<8x32xf32>
    %262 = vector.extract_strided_slice %253 {offsets = [0, 32], sizes = [8, 32], strides = [1, 1]} : vector<8x96xf32> to vector<8x32xf32>
    %263 = vector.extract_strided_slice %242 {offsets = [0, 32], sizes = [8, 32], strides = [1, 1]} : vector<8x96xf32> to vector<8x32xf32>
    %264 = arith.addf %262, %263 : vector<8x32xf32>
    %265 = arith.negf %264 : vector<8x32xf32>
    %266 = math.exp %265 : vector<8x32xf32>
    %cst_74 = arith.constant 1.000000e+00 : f32
    %267 = vector.broadcast %cst_74 : f32 to vector<8x32xf32>
    %268 = arith.addf %267, %266 : vector<8x32xf32>
    %269 = arith.divf %267, %268 : vector<8x32xf32>
    %270 = vector.extract_strided_slice %253 {offsets = [0, 64], sizes = [8, 32], strides = [1, 1]} : vector<8x96xf32> to vector<8x32xf32>
    %271 = vector.extract_strided_slice %242 {offsets = [0, 64], sizes = [8, 32], strides = [1, 1]} : vector<8x96xf32> to vector<8x32xf32>
    %272 = arith.mulf %261, %271 : vector<8x32xf32>
    %273 = arith.addf %270, %272 : vector<8x32xf32>
    %274 = math.tanh %273 : vector<8x32xf32>
    %cst_75 = arith.constant 1.000000e+00 : f32
    %275 = vector.broadcast %cst_75 : f32 to vector<8x32xf32>
    %276 = arith.subf %275, %269 : vector<8x32xf32>
    %277 = arith.mulf %276, %274 : vector<8x32xf32>
    %278 = arith.mulf %269, %206 : vector<8x32xf32>
    %279 = arith.addf %277, %278 : vector<8x32xf32>
    %280 = arith.index_cast %251 : i32 to index
    %c0_76 = arith.constant 0 : index
    %281 = vector.load %arg30[%280, %c0_76] : memref<64x96xf32, #tpu.memory_space<vmem>>, vector<8x96xf32>
    %282 = vector.extract_strided_slice %281 {offsets = [0, 0], sizes = [8, 32], strides = [1, 1]} : vector<8x96xf32> to vector<8x32xf32>
    %283 = vector.extract_strided_slice %246 {offsets = [0, 0], sizes = [8, 32], strides = [1, 1]} : vector<8x96xf32> to vector<8x32xf32>
    %284 = arith.addf %282, %283 : vector<8x32xf32>
    %285 = arith.negf %284 : vector<8x32xf32>
    %286 = math.exp %285 : vector<8x32xf32>
    %cst_77 = arith.constant 1.000000e+00 : f32
    %287 = vector.broadcast %cst_77 : f32 to vector<8x32xf32>
    %288 = arith.addf %287, %286 : vector<8x32xf32>
    %289 = arith.divf %287, %288 : vector<8x32xf32>
    %290 = vector.extract_strided_slice %281 {offsets = [0, 32], sizes = [8, 32], strides = [1, 1]} : vector<8x96xf32> to vector<8x32xf32>
    %291 = vector.extract_strided_slice %246 {offsets = [0, 32], sizes = [8, 32], strides = [1, 1]} : vector<8x96xf32> to vector<8x32xf32>
    %292 = arith.addf %290, %291 : vector<8x32xf32>
    %293 = arith.negf %292 : vector<8x32xf32>
    %294 = math.exp %293 : vector<8x32xf32>
    %cst_78 = arith.constant 1.000000e+00 : f32
    %295 = vector.broadcast %cst_78 : f32 to vector<8x32xf32>
    %296 = arith.addf %295, %294 : vector<8x32xf32>
    %297 = arith.divf %295, %296 : vector<8x32xf32>
    %298 = vector.extract_strided_slice %281 {offsets = [0, 64], sizes = [8, 32], strides = [1, 1]} : vector<8x96xf32> to vector<8x32xf32>
    %299 = vector.extract_strided_slice %246 {offsets = [0, 64], sizes = [8, 32], strides = [1, 1]} : vector<8x96xf32> to vector<8x32xf32>
    %300 = arith.mulf %289, %299 : vector<8x32xf32>
    %301 = arith.addf %298, %300 : vector<8x32xf32>
    %302 = math.tanh %301 : vector<8x32xf32>
    %cst_79 = arith.constant 1.000000e+00 : f32
    %303 = vector.broadcast %cst_79 : f32 to vector<8x32xf32>
    %304 = arith.subf %303, %297 : vector<8x32xf32>
    %305 = arith.mulf %304, %302 : vector<8x32xf32>
    %306 = arith.mulf %297, %234 : vector<8x32xf32>
    %307 = arith.addf %305, %306 : vector<8x32xf32>
    %308 = arith.index_cast %248 : i32 to index
    %c0_80 = arith.constant 0 : index
    %309 = vector.load %arg31[%308, %c0_80] : memref<64x32xf32, #tpu.memory_space<vmem>>, vector<8x32xf32>
    tpu.vector_store %arg31[%308, %c0_80], %279 {strides = array<i32>} : memref<64x32xf32, #tpu.memory_space<vmem>>, vector<8x32xf32>,
    %310 = arith.index_cast %251 : i32 to index
    %c0_81 = arith.constant 0 : index
    %311 = vector.load %arg32[%310, %c0_81] : memref<64x32xf32, #tpu.memory_space<vmem>>, vector<8x32xf32>
    tpu.vector_store %arg32[%310, %c0_81], %307 {strides = array<i32>} : memref<64x32xf32, #tpu.memory_space<vmem>>, vector<8x32xf32>,
    %c4_i32 = arith.constant 4 : i32
    %312 = arith.truncf %279 : vector<8x32xf32> to vector<8x32xbf16>
    %cst_82 = arith.constant dense<0.000000e+00> : vector<8x96xf32>
    %313 = tpu.matmul %312, %15, %cst_82 {dimension_numbers = #tpu.dot_dimension_numbers<[1], [0], [0], [1], [0, 0, 1, 1], [], []>} : vector<8x32xbf16>, vector<32x96xbf16>, vector<8x96xf32> -> vector<8x96xf32>
    %314 = vector.broadcast %17 : vector<1x96xf32> to vector<8x96xf32>
    %315 = arith.addf %313, %314 : vector<8x96xf32>
    %316 = arith.truncf %307 : vector<8x32xf32> to vector<8x32xbf16>
    %cst_83 = arith.constant dense<0.000000e+00> : vector<8x96xf32>
    %317 = tpu.matmul %316, %16, %cst_83 {dimension_numbers = #tpu.dot_dimension_numbers<[1], [0], [0], [1], [0, 0, 1, 1], [], []>} : vector<8x32xbf16>, vector<32x96xbf16>, vector<8x96xf32> -> vector<8x96xf32>
    %318 = vector.broadcast %18 : vector<1x96xf32> to vector<8x96xf32>
    %319 = arith.addf %317, %318 : vector<8x96xf32>
    %c8_i32_84 = arith.constant 8 : i32
    %320 = arith.muli %c4_i32, %c8_i32_84 : i32
    %321 = tpu.assume_multiple %320, 8 : i32
    %c7_i32_85 = arith.constant 7 : i32
    %322 = arith.subi %c7_i32_85, %c4_i32 : i32
    %c8_i32_86 = arith.constant 8 : i32
    %323 = arith.muli %322, %c8_i32_86 : i32
    %324 = tpu.assume_multiple %323, 8 : i32
    %325 = arith.index_cast %321 : i32 to index
    %c0_87 = arith.constant 0 : index
    %326 = vector.load %arg29[%325, %c0_87] : memref<64x96xf32, #tpu.memory_space<vmem>>, vector<8x96xf32>
    %327 = vector.extract_strided_slice %326 {offsets = [0, 0], sizes = [8, 32], strides = [1, 1]} : vector<8x96xf32> to vector<8x32xf32>
    %328 = vector.extract_strided_slice %315 {offsets = [0, 0], sizes = [8, 32], strides = [1, 1]} : vector<8x96xf32> to vector<8x32xf32>
    %329 = arith.addf %327, %328 : vector<8x32xf32>
    %330 = arith.negf %329 : vector<8x32xf32>
    %331 = math.exp %330 : vector<8x32xf32>
    %cst_88 = arith.constant 1.000000e+00 : f32
    %332 = vector.broadcast %cst_88 : f32 to vector<8x32xf32>
    %333 = arith.addf %332, %331 : vector<8x32xf32>
    %334 = arith.divf %332, %333 : vector<8x32xf32>
    %335 = vector.extract_strided_slice %326 {offsets = [0, 32], sizes = [8, 32], strides = [1, 1]} : vector<8x96xf32> to vector<8x32xf32>
    %336 = vector.extract_strided_slice %315 {offsets = [0, 32], sizes = [8, 32], strides = [1, 1]} : vector<8x96xf32> to vector<8x32xf32>
    %337 = arith.addf %335, %336 : vector<8x32xf32>
    %338 = arith.negf %337 : vector<8x32xf32>
    %339 = math.exp %338 : vector<8x32xf32>
    %cst_89 = arith.constant 1.000000e+00 : f32
    %340 = vector.broadcast %cst_89 : f32 to vector<8x32xf32>
    %341 = arith.addf %340, %339 : vector<8x32xf32>
    %342 = arith.divf %340, %341 : vector<8x32xf32>
    %343 = vector.extract_strided_slice %326 {offsets = [0, 64], sizes = [8, 32], strides = [1, 1]} : vector<8x96xf32> to vector<8x32xf32>
    %344 = vector.extract_strided_slice %315 {offsets = [0, 64], sizes = [8, 32], strides = [1, 1]} : vector<8x96xf32> to vector<8x32xf32>
    %345 = arith.mulf %334, %344 : vector<8x32xf32>
    %346 = arith.addf %343, %345 : vector<8x32xf32>
    %347 = math.tanh %346 : vector<8x32xf32>
    %cst_90 = arith.constant 1.000000e+00 : f32
    %348 = vector.broadcast %cst_90 : f32 to vector<8x32xf32>
    %349 = arith.subf %348, %342 : vector<8x32xf32>
    %350 = arith.mulf %349, %347 : vector<8x32xf32>
    %351 = arith.mulf %342, %279 : vector<8x32xf32>
    %352 = arith.addf %350, %351 : vector<8x32xf32>
    %353 = arith.index_cast %324 : i32 to index
    %c0_91 = arith.constant 0 : index
    %354 = vector.load %arg30[%353, %c0_91] : memref<64x96xf32, #tpu.memory_space<vmem>>, vector<8x96xf32>
    %355 = vector.extract_strided_slice %354 {offsets = [0, 0], sizes = [8, 32], strides = [1, 1]} : vector<8x96xf32> to vector<8x32xf32>
    %356 = vector.extract_strided_slice %319 {offsets = [0, 0], sizes = [8, 32], strides = [1, 1]} : vector<8x96xf32> to vector<8x32xf32>
    %357 = arith.addf %355, %356 : vector<8x32xf32>
    %358 = arith.negf %357 : vector<8x32xf32>
    %359 = math.exp %358 : vector<8x32xf32>
    %cst_92 = arith.constant 1.000000e+00 : f32
    %360 = vector.broadcast %cst_92 : f32 to vector<8x32xf32>
    %361 = arith.addf %360, %359 : vector<8x32xf32>
    %362 = arith.divf %360, %361 : vector<8x32xf32>
    %363 = vector.extract_strided_slice %354 {offsets = [0, 32], sizes = [8, 32], strides = [1, 1]} : vector<8x96xf32> to vector<8x32xf32>
    %364 = vector.extract_strided_slice %319 {offsets = [0, 32], sizes = [8, 32], strides = [1, 1]} : vector<8x96xf32> to vector<8x32xf32>
    %365 = arith.addf %363, %364 : vector<8x32xf32>
    %366 = arith.negf %365 : vector<8x32xf32>
    %367 = math.exp %366 : vector<8x32xf32>
    %cst_93 = arith.constant 1.000000e+00 : f32
    %368 = vector.broadcast %cst_93 : f32 to vector<8x32xf32>
    %369 = arith.addf %368, %367 : vector<8x32xf32>
    %370 = arith.divf %368, %369 : vector<8x32xf32>
    %371 = vector.extract_strided_slice %354 {offsets = [0, 64], sizes = [8, 32], strides = [1, 1]} : vector<8x96xf32> to vector<8x32xf32>
    %372 = vector.extract_strided_slice %319 {offsets = [0, 64], sizes = [8, 32], strides = [1, 1]} : vector<8x96xf32> to vector<8x32xf32>
    %373 = arith.mulf %362, %372 : vector<8x32xf32>
    %374 = arith.addf %371, %373 : vector<8x32xf32>
    %375 = math.tanh %374 : vector<8x32xf32>
    %cst_94 = arith.constant 1.000000e+00 : f32
    %376 = vector.broadcast %cst_94 : f32 to vector<8x32xf32>
    %377 = arith.subf %376, %370 : vector<8x32xf32>
    %378 = arith.mulf %377, %375 : vector<8x32xf32>
    %379 = arith.mulf %370, %307 : vector<8x32xf32>
    %380 = arith.addf %378, %379 : vector<8x32xf32>
    %381 = arith.index_cast %321 : i32 to index
    %c0_95 = arith.constant 0 : index
    %382 = vector.load %arg31[%381, %c0_95] : memref<64x32xf32, #tpu.memory_space<vmem>>, vector<8x32xf32>
    tpu.vector_store %arg31[%381, %c0_95], %352 {strides = array<i32>} : memref<64x32xf32, #tpu.memory_space<vmem>>, vector<8x32xf32>,
    %383 = arith.index_cast %324 : i32 to index
    %c0_96 = arith.constant 0 : index
    %384 = vector.load %arg32[%383, %c0_96] : memref<64x32xf32, #tpu.memory_space<vmem>>, vector<8x32xf32>
    tpu.vector_store %arg32[%383, %c0_96], %380 {strides = array<i32>} : memref<64x32xf32, #tpu.memory_space<vmem>>, vector<8x32xf32>,
    %c5_i32 = arith.constant 5 : i32
    %385 = arith.truncf %352 : vector<8x32xf32> to vector<8x32xbf16>
    %cst_97 = arith.constant dense<0.000000e+00> : vector<8x96xf32>
    %386 = tpu.matmul %385, %15, %cst_97 {dimension_numbers = #tpu.dot_dimension_numbers<[1], [0], [0], [1], [0, 0, 1, 1], [], []>} : vector<8x32xbf16>, vector<32x96xbf16>, vector<8x96xf32> -> vector<8x96xf32>
    %387 = vector.broadcast %17 : vector<1x96xf32> to vector<8x96xf32>
    %388 = arith.addf %386, %387 : vector<8x96xf32>
    %389 = arith.truncf %380 : vector<8x32xf32> to vector<8x32xbf16>
    %cst_98 = arith.constant dense<0.000000e+00> : vector<8x96xf32>
    %390 = tpu.matmul %389, %16, %cst_98 {dimension_numbers = #tpu.dot_dimension_numbers<[1], [0], [0], [1], [0, 0, 1, 1], [], []>} : vector<8x32xbf16>, vector<32x96xbf16>, vector<8x96xf32> -> vector<8x96xf32>
    %391 = vector.broadcast %18 : vector<1x96xf32> to vector<8x96xf32>
    %392 = arith.addf %390, %391 : vector<8x96xf32>
    %c8_i32_99 = arith.constant 8 : i32
    %393 = arith.muli %c5_i32, %c8_i32_99 : i32
    %394 = tpu.assume_multiple %393, 8 : i32
    %c7_i32_100 = arith.constant 7 : i32
    %395 = arith.subi %c7_i32_100, %c5_i32 : i32
    %c8_i32_101 = arith.constant 8 : i32
    %396 = arith.muli %395, %c8_i32_101 : i32
    %397 = tpu.assume_multiple %396, 8 : i32
    %398 = arith.index_cast %394 : i32 to index
    %c0_102 = arith.constant 0 : index
    %399 = vector.load %arg29[%398, %c0_102] : memref<64x96xf32, #tpu.memory_space<vmem>>, vector<8x96xf32>
    %400 = vector.extract_strided_slice %399 {offsets = [0, 0], sizes = [8, 32], strides = [1, 1]} : vector<8x96xf32> to vector<8x32xf32>
    %401 = vector.extract_strided_slice %388 {offsets = [0, 0], sizes = [8, 32], strides = [1, 1]} : vector<8x96xf32> to vector<8x32xf32>
    %402 = arith.addf %400, %401 : vector<8x32xf32>
    %403 = arith.negf %402 : vector<8x32xf32>
    %404 = math.exp %403 : vector<8x32xf32>
    %cst_103 = arith.constant 1.000000e+00 : f32
    %405 = vector.broadcast %cst_103 : f32 to vector<8x32xf32>
    %406 = arith.addf %405, %404 : vector<8x32xf32>
    %407 = arith.divf %405, %406 : vector<8x32xf32>
    %408 = vector.extract_strided_slice %399 {offsets = [0, 32], sizes = [8, 32], strides = [1, 1]} : vector<8x96xf32> to vector<8x32xf32>
    %409 = vector.extract_strided_slice %388 {offsets = [0, 32], sizes = [8, 32], strides = [1, 1]} : vector<8x96xf32> to vector<8x32xf32>
    %410 = arith.addf %408, %409 : vector<8x32xf32>
    %411 = arith.negf %410 : vector<8x32xf32>
    %412 = math.exp %411 : vector<8x32xf32>
    %cst_104 = arith.constant 1.000000e+00 : f32
    %413 = vector.broadcast %cst_104 : f32 to vector<8x32xf32>
    %414 = arith.addf %413, %412 : vector<8x32xf32>
    %415 = arith.divf %413, %414 : vector<8x32xf32>
    %416 = vector.extract_strided_slice %399 {offsets = [0, 64], sizes = [8, 32], strides = [1, 1]} : vector<8x96xf32> to vector<8x32xf32>
    %417 = vector.extract_strided_slice %388 {offsets = [0, 64], sizes = [8, 32], strides = [1, 1]} : vector<8x96xf32> to vector<8x32xf32>
    %418 = arith.mulf %407, %417 : vector<8x32xf32>
    %419 = arith.addf %416, %418 : vector<8x32xf32>
    %420 = math.tanh %419 : vector<8x32xf32>
    %cst_105 = arith.constant 1.000000e+00 : f32
    %421 = vector.broadcast %cst_105 : f32 to vector<8x32xf32>
    %422 = arith.subf %421, %415 : vector<8x32xf32>
    %423 = arith.mulf %422, %420 : vector<8x32xf32>
    %424 = arith.mulf %415, %352 : vector<8x32xf32>
    %425 = arith.addf %423, %424 : vector<8x32xf32>
    %426 = arith.index_cast %397 : i32 to index
    %c0_106 = arith.constant 0 : index
    %427 = vector.load %arg30[%426, %c0_106] : memref<64x96xf32, #tpu.memory_space<vmem>>, vector<8x96xf32>
    %428 = vector.extract_strided_slice %427 {offsets = [0, 0], sizes = [8, 32], strides = [1, 1]} : vector<8x96xf32> to vector<8x32xf32>
    %429 = vector.extract_strided_slice %392 {offsets = [0, 0], sizes = [8, 32], strides = [1, 1]} : vector<8x96xf32> to vector<8x32xf32>
    %430 = arith.addf %428, %429 : vector<8x32xf32>
    %431 = arith.negf %430 : vector<8x32xf32>
    %432 = math.exp %431 : vector<8x32xf32>
    %cst_107 = arith.constant 1.000000e+00 : f32
    %433 = vector.broadcast %cst_107 : f32 to vector<8x32xf32>
    %434 = arith.addf %433, %432 : vector<8x32xf32>
    %435 = arith.divf %433, %434 : vector<8x32xf32>
    %436 = vector.extract_strided_slice %427 {offsets = [0, 32], sizes = [8, 32], strides = [1, 1]} : vector<8x96xf32> to vector<8x32xf32>
    %437 = vector.extract_strided_slice %392 {offsets = [0, 32], sizes = [8, 32], strides = [1, 1]} : vector<8x96xf32> to vector<8x32xf32>
    %438 = arith.addf %436, %437 : vector<8x32xf32>
    %439 = arith.negf %438 : vector<8x32xf32>
    %440 = math.exp %439 : vector<8x32xf32>
    %cst_108 = arith.constant 1.000000e+00 : f32
    %441 = vector.broadcast %cst_108 : f32 to vector<8x32xf32>
    %442 = arith.addf %441, %440 : vector<8x32xf32>
    %443 = arith.divf %441, %442 : vector<8x32xf32>
    %444 = vector.extract_strided_slice %427 {offsets = [0, 64], sizes = [8, 32], strides = [1, 1]} : vector<8x96xf32> to vector<8x32xf32>
    %445 = vector.extract_strided_slice %392 {offsets = [0, 64], sizes = [8, 32], strides = [1, 1]} : vector<8x96xf32> to vector<8x32xf32>
    %446 = arith.mulf %435, %445 : vector<8x32xf32>
    %447 = arith.addf %444, %446 : vector<8x32xf32>
    %448 = math.tanh %447 : vector<8x32xf32>
    %cst_109 = arith.constant 1.000000e+00 : f32
    %449 = vector.broadcast %cst_109 : f32 to vector<8x32xf32>
    %450 = arith.subf %449, %443 : vector<8x32xf32>
    %451 = arith.mulf %450, %448 : vector<8x32xf32>
    %452 = arith.mulf %443, %380 : vector<8x32xf32>
    %453 = arith.addf %451, %452 : vector<8x32xf32>
    %454 = arith.index_cast %394 : i32 to index
    %c0_110 = arith.constant 0 : index
    %455 = vector.load %arg31[%454, %c0_110] : memref<64x32xf32, #tpu.memory_space<vmem>>, vector<8x32xf32>
    tpu.vector_store %arg31[%454, %c0_110], %425 {strides = array<i32>} : memref<64x32xf32, #tpu.memory_space<vmem>>, vector<8x32xf32>,
    %456 = arith.index_cast %397 : i32 to index
    %c0_111 = arith.constant 0 : index
    %457 = vector.load %arg32[%456, %c0_111] : memref<64x32xf32, #tpu.memory_space<vmem>>, vector<8x32xf32>
    tpu.vector_store %arg32[%456, %c0_111], %453 {strides = array<i32>} : memref<64x32xf32, #tpu.memory_space<vmem>>, vector<8x32xf32>,
    %c6_i32 = arith.constant 6 : i32
    %458 = arith.truncf %425 : vector<8x32xf32> to vector<8x32xbf16>
    %cst_112 = arith.constant dense<0.000000e+00> : vector<8x96xf32>
    %459 = tpu.matmul %458, %15, %cst_112 {dimension_numbers = #tpu.dot_dimension_numbers<[1], [0], [0], [1], [0, 0, 1, 1], [], []>} : vector<8x32xbf16>, vector<32x96xbf16>, vector<8x96xf32> -> vector<8x96xf32>
    %460 = vector.broadcast %17 : vector<1x96xf32> to vector<8x96xf32>
    %461 = arith.addf %459, %460 : vector<8x96xf32>
    %462 = arith.truncf %453 : vector<8x32xf32> to vector<8x32xbf16>
    %cst_113 = arith.constant dense<0.000000e+00> : vector<8x96xf32>
    %463 = tpu.matmul %462, %16, %cst_113 {dimension_numbers = #tpu.dot_dimension_numbers<[1], [0], [0], [1], [0, 0, 1, 1], [], []>} : vector<8x32xbf16>, vector<32x96xbf16>, vector<8x96xf32> -> vector<8x96xf32>
    %464 = vector.broadcast %18 : vector<1x96xf32> to vector<8x96xf32>
    %465 = arith.addf %463, %464 : vector<8x96xf32>
    %c8_i32_114 = arith.constant 8 : i32
    %466 = arith.muli %c6_i32, %c8_i32_114 : i32
    %467 = tpu.assume_multiple %466, 8 : i32
    %c7_i32_115 = arith.constant 7 : i32
    %468 = arith.subi %c7_i32_115, %c6_i32 : i32
    %c8_i32_116 = arith.constant 8 : i32
    %469 = arith.muli %468, %c8_i32_116 : i32
    %470 = tpu.assume_multiple %469, 8 : i32
    %471 = arith.index_cast %467 : i32 to index
    %c0_117 = arith.constant 0 : index
    %472 = vector.load %arg29[%471, %c0_117] : memref<64x96xf32, #tpu.memory_space<vmem>>, vector<8x96xf32>
    %473 = vector.extract_strided_slice %472 {offsets = [0, 0], sizes = [8, 32], strides = [1, 1]} : vector<8x96xf32> to vector<8x32xf32>
    %474 = vector.extract_strided_slice %461 {offsets = [0, 0], sizes = [8, 32], strides = [1, 1]} : vector<8x96xf32> to vector<8x32xf32>
    %475 = arith.addf %473, %474 : vector<8x32xf32>
    %476 = arith.negf %475 : vector<8x32xf32>
    %477 = math.exp %476 : vector<8x32xf32>
    %cst_118 = arith.constant 1.000000e+00 : f32
    %478 = vector.broadcast %cst_118 : f32 to vector<8x32xf32>
    %479 = arith.addf %478, %477 : vector<8x32xf32>
    %480 = arith.divf %478, %479 : vector<8x32xf32>
    %481 = vector.extract_strided_slice %472 {offsets = [0, 32], sizes = [8, 32], strides = [1, 1]} : vector<8x96xf32> to vector<8x32xf32>
    %482 = vector.extract_strided_slice %461 {offsets = [0, 32], sizes = [8, 32], strides = [1, 1]} : vector<8x96xf32> to vector<8x32xf32>
    %483 = arith.addf %481, %482 : vector<8x32xf32>
    %484 = arith.negf %483 : vector<8x32xf32>
    %485 = math.exp %484 : vector<8x32xf32>
    %cst_119 = arith.constant 1.000000e+00 : f32
    %486 = vector.broadcast %cst_119 : f32 to vector<8x32xf32>
    %487 = arith.addf %486, %485 : vector<8x32xf32>
    %488 = arith.divf %486, %487 : vector<8x32xf32>
    %489 = vector.extract_strided_slice %472 {offsets = [0, 64], sizes = [8, 32], strides = [1, 1]} : vector<8x96xf32> to vector<8x32xf32>
    %490 = vector.extract_strided_slice %461 {offsets = [0, 64], sizes = [8, 32], strides = [1, 1]} : vector<8x96xf32> to vector<8x32xf32>
    %491 = arith.mulf %480, %490 : vector<8x32xf32>
    %492 = arith.addf %489, %491 : vector<8x32xf32>
    %493 = math.tanh %492 : vector<8x32xf32>
    %cst_120 = arith.constant 1.000000e+00 : f32
    %494 = vector.broadcast %cst_120 : f32 to vector<8x32xf32>
    %495 = arith.subf %494, %488 : vector<8x32xf32>
    %496 = arith.mulf %495, %493 : vector<8x32xf32>
    %497 = arith.mulf %488, %425 : vector<8x32xf32>
    %498 = arith.addf %496, %497 : vector<8x32xf32>
    %499 = arith.index_cast %470 : i32 to index
    %c0_121 = arith.constant 0 : index
    %500 = vector.load %arg30[%499, %c0_121] : memref<64x96xf32, #tpu.memory_space<vmem>>, vector<8x96xf32>
    %501 = vector.extract_strided_slice %500 {offsets = [0, 0], sizes = [8, 32], strides = [1, 1]} : vector<8x96xf32> to vector<8x32xf32>
    %502 = vector.extract_strided_slice %465 {offsets = [0, 0], sizes = [8, 32], strides = [1, 1]} : vector<8x96xf32> to vector<8x32xf32>
    %503 = arith.addf %501, %502 : vector<8x32xf32>
    %504 = arith.negf %503 : vector<8x32xf32>
    %505 = math.exp %504 : vector<8x32xf32>
    %cst_122 = arith.constant 1.000000e+00 : f32
    %506 = vector.broadcast %cst_122 : f32 to vector<8x32xf32>
    %507 = arith.addf %506, %505 : vector<8x32xf32>
    %508 = arith.divf %506, %507 : vector<8x32xf32>
    %509 = vector.extract_strided_slice %500 {offsets = [0, 32], sizes = [8, 32], strides = [1, 1]} : vector<8x96xf32> to vector<8x32xf32>
    %510 = vector.extract_strided_slice %465 {offsets = [0, 32], sizes = [8, 32], strides = [1, 1]} : vector<8x96xf32> to vector<8x32xf32>
    %511 = arith.addf %509, %510 : vector<8x32xf32>
    %512 = arith.negf %511 : vector<8x32xf32>
    %513 = math.exp %512 : vector<8x32xf32>
    %cst_123 = arith.constant 1.000000e+00 : f32
    %514 = vector.broadcast %cst_123 : f32 to vector<8x32xf32>
    %515 = arith.addf %514, %513 : vector<8x32xf32>
    %516 = arith.divf %514, %515 : vector<8x32xf32>
    %517 = vector.extract_strided_slice %500 {offsets = [0, 64], sizes = [8, 32], strides = [1, 1]} : vector<8x96xf32> to vector<8x32xf32>
    %518 = vector.extract_strided_slice %465 {offsets = [0, 64], sizes = [8, 32], strides = [1, 1]} : vector<8x96xf32> to vector<8x32xf32>
    %519 = arith.mulf %508, %518 : vector<8x32xf32>
    %520 = arith.addf %517, %519 : vector<8x32xf32>
    %521 = math.tanh %520 : vector<8x32xf32>
    %cst_124 = arith.constant 1.000000e+00 : f32
    %522 = vector.broadcast %cst_124 : f32 to vector<8x32xf32>
    %523 = arith.subf %522, %516 : vector<8x32xf32>
    %524 = arith.mulf %523, %521 : vector<8x32xf32>
    %525 = arith.mulf %516, %453 : vector<8x32xf32>
    %526 = arith.addf %524, %525 : vector<8x32xf32>
    %527 = arith.index_cast %467 : i32 to index
    %c0_125 = arith.constant 0 : index
    %528 = vector.load %arg31[%527, %c0_125] : memref<64x32xf32, #tpu.memory_space<vmem>>, vector<8x32xf32>
    tpu.vector_store %arg31[%527, %c0_125], %498 {strides = array<i32>} : memref<64x32xf32, #tpu.memory_space<vmem>>, vector<8x32xf32>,
    %529 = arith.index_cast %470 : i32 to index
    %c0_126 = arith.constant 0 : index
    %530 = vector.load %arg32[%529, %c0_126] : memref<64x32xf32, #tpu.memory_space<vmem>>, vector<8x32xf32>
    tpu.vector_store %arg32[%529, %c0_126], %526 {strides = array<i32>} : memref<64x32xf32, #tpu.memory_space<vmem>>, vector<8x32xf32>,
    %c7_i32_127 = arith.constant 7 : i32
    %531 = arith.truncf %498 : vector<8x32xf32> to vector<8x32xbf16>
    %cst_128 = arith.constant dense<0.000000e+00> : vector<8x96xf32>
    %532 = tpu.matmul %531, %15, %cst_128 {dimension_numbers = #tpu.dot_dimension_numbers<[1], [0], [0], [1], [0, 0, 1, 1], [], []>} : vector<8x32xbf16>, vector<32x96xbf16>, vector<8x96xf32> -> vector<8x96xf32>
    %533 = vector.broadcast %17 : vector<1x96xf32> to vector<8x96xf32>
    %534 = arith.addf %532, %533 : vector<8x96xf32>
    %535 = arith.truncf %526 : vector<8x32xf32> to vector<8x32xbf16>
    %cst_129 = arith.constant dense<0.000000e+00> : vector<8x96xf32>
    %536 = tpu.matmul %535, %16, %cst_129 {dimension_numbers = #tpu.dot_dimension_numbers<[1], [0], [0], [1], [0, 0, 1, 1], [], []>} : vector<8x32xbf16>, vector<32x96xbf16>, vector<8x96xf32> -> vector<8x96xf32>
    %537 = vector.broadcast %18 : vector<1x96xf32> to vector<8x96xf32>
    %538 = arith.addf %536, %537 : vector<8x96xf32>
    %c8_i32_130 = arith.constant 8 : i32
    %539 = arith.muli %c7_i32_127, %c8_i32_130 : i32
    %540 = tpu.assume_multiple %539, 8 : i32
    %c7_i32_131 = arith.constant 7 : i32
    %541 = arith.subi %c7_i32_131, %c7_i32_127 : i32
    %c8_i32_132 = arith.constant 8 : i32
    %542 = arith.muli %541, %c8_i32_132 : i32
    %543 = tpu.assume_multiple %542, 8 : i32
    %544 = arith.index_cast %540 : i32 to index
    %c0_133 = arith.constant 0 : index
    %545 = vector.load %arg29[%544, %c0_133] : memref<64x96xf32, #tpu.memory_space<vmem>>, vector<8x96xf32>
    %546 = vector.extract_strided_slice %545 {offsets = [0, 0], sizes = [8, 32], strides = [1, 1]} : vector<8x96xf32> to vector<8x32xf32>
    %547 = vector.extract_strided_slice %534 {offsets = [0, 0], sizes = [8, 32], strides = [1, 1]} : vector<8x96xf32> to vector<8x32xf32>
    %548 = arith.addf %546, %547 : vector<8x32xf32>
    %549 = arith.negf %548 : vector<8x32xf32>
    %550 = math.exp %549 : vector<8x32xf32>
    %cst_134 = arith.constant 1.000000e+00 : f32
    %551 = vector.broadcast %cst_134 : f32 to vector<8x32xf32>
    %552 = arith.addf %551, %550 : vector<8x32xf32>
    %553 = arith.divf %551, %552 : vector<8x32xf32>
    %554 = vector.extract_strided_slice %545 {offsets = [0, 32], sizes = [8, 32], strides = [1, 1]} : vector<8x96xf32> to vector<8x32xf32>
    %555 = vector.extract_strided_slice %534 {offsets = [0, 32], sizes = [8, 32], strides = [1, 1]} : vector<8x96xf32> to vector<8x32xf32>
    %556 = arith.addf %554, %555 : vector<8x32xf32>
    %557 = arith.negf %556 : vector<8x32xf32>
    %558 = math.exp %557 : vector<8x32xf32>
    %cst_135 = arith.constant 1.000000e+00 : f32
    %559 = vector.broadcast %cst_135 : f32 to vector<8x32xf32>
    %560 = arith.addf %559, %558 : vector<8x32xf32>
    %561 = arith.divf %559, %560 : vector<8x32xf32>
    %562 = vector.extract_strided_slice %545 {offsets = [0, 64], sizes = [8, 32], strides = [1, 1]} : vector<8x96xf32> to vector<8x32xf32>
    %563 = vector.extract_strided_slice %534 {offsets = [0, 64], sizes = [8, 32], strides = [1, 1]} : vector<8x96xf32> to vector<8x32xf32>
    %564 = arith.mulf %553, %563 : vector<8x32xf32>
    %565 = arith.addf %562, %564 : vector<8x32xf32>
    %566 = math.tanh %565 : vector<8x32xf32>
    %cst_136 = arith.constant 1.000000e+00 : f32
    %567 = vector.broadcast %cst_136 : f32 to vector<8x32xf32>
    %568 = arith.subf %567, %561 : vector<8x32xf32>
    %569 = arith.mulf %568, %566 : vector<8x32xf32>
    %570 = arith.mulf %561, %498 : vector<8x32xf32>
    %571 = arith.addf %569, %570 : vector<8x32xf32>
    %572 = arith.index_cast %543 : i32 to index
    %c0_137 = arith.constant 0 : index
    %573 = vector.load %arg30[%572, %c0_137] : memref<64x96xf32, #tpu.memory_space<vmem>>, vector<8x96xf32>
    %574 = vector.extract_strided_slice %573 {offsets = [0, 0], sizes = [8, 32], strides = [1, 1]} : vector<8x96xf32> to vector<8x32xf32>
    %575 = vector.extract_strided_slice %538 {offsets = [0, 0], sizes = [8, 32], strides = [1, 1]} : vector<8x96xf32> to vector<8x32xf32>
    %576 = arith.addf %574, %575 : vector<8x32xf32>
    %577 = arith.negf %576 : vector<8x32xf32>
    %578 = math.exp %577 : vector<8x32xf32>
    %cst_138 = arith.constant 1.000000e+00 : f32
    %579 = vector.broadcast %cst_138 : f32 to vector<8x32xf32>
    %580 = arith.addf %579, %578 : vector<8x32xf32>
    %581 = arith.divf %579, %580 : vector<8x32xf32>
    %582 = vector.extract_strided_slice %573 {offsets = [0, 32], sizes = [8, 32], strides = [1, 1]} : vector<8x96xf32> to vector<8x32xf32>
    %583 = vector.extract_strided_slice %538 {offsets = [0, 32], sizes = [8, 32], strides = [1, 1]} : vector<8x96xf32> to vector<8x32xf32>
    %584 = arith.addf %582, %583 : vector<8x32xf32>
    %585 = arith.negf %584 : vector<8x32xf32>
    %586 = math.exp %585 : vector<8x32xf32>
    %cst_139 = arith.constant 1.000000e+00 : f32
    %587 = vector.broadcast %cst_139 : f32 to vector<8x32xf32>
    %588 = arith.addf %587, %586 : vector<8x32xf32>
    %589 = arith.divf %587, %588 : vector<8x32xf32>
    %590 = vector.extract_strided_slice %573 {offsets = [0, 64], sizes = [8, 32], strides = [1, 1]} : vector<8x96xf32> to vector<8x32xf32>
    %591 = vector.extract_strided_slice %538 {offsets = [0, 64], sizes = [8, 32], strides = [1, 1]} : vector<8x96xf32> to vector<8x32xf32>
    %592 = arith.mulf %581, %591 : vector<8x32xf32>
    %593 = arith.addf %590, %592 : vector<8x32xf32>
    %594 = math.tanh %593 : vector<8x32xf32>
    %cst_140 = arith.constant 1.000000e+00 : f32
    %595 = vector.broadcast %cst_140 : f32 to vector<8x32xf32>
    %596 = arith.subf %595, %589 : vector<8x32xf32>
    %597 = arith.mulf %596, %594 : vector<8x32xf32>
    %598 = arith.mulf %589, %526 : vector<8x32xf32>
    %599 = arith.addf %597, %598 : vector<8x32xf32>
    %600 = arith.index_cast %540 : i32 to index
    %c0_141 = arith.constant 0 : index
    %601 = vector.load %arg31[%600, %c0_141] : memref<64x32xf32, #tpu.memory_space<vmem>>, vector<8x32xf32>
    tpu.vector_store %arg31[%600, %c0_141], %571 {strides = array<i32>} : memref<64x32xf32, #tpu.memory_space<vmem>>, vector<8x32xf32>,
    %602 = arith.index_cast %543 : i32 to index
    %c0_142 = arith.constant 0 : index
    %603 = vector.load %arg32[%602, %c0_142] : memref<64x32xf32, #tpu.memory_space<vmem>>, vector<8x32xf32>
    tpu.vector_store %arg32[%602, %c0_142], %599 {strides = array<i32>} : memref<64x32xf32, #tpu.memory_space<vmem>>, vector<8x32xf32>,
    %c8_i32_143 = arith.constant 8 : i32
    %c0_144 = arith.constant 0 : index
    %c0_145 = arith.constant 0 : index
    %604 = vector.load %arg31[%c0_144, %c0_145] : memref<64x32xf32, #tpu.memory_space<vmem>>, vector<64x32xf32>
    %c0_146 = arith.constant 0 : index
    %c0_147 = arith.constant 0 : index
    %605 = vector.load %arg32[%c0_146, %c0_147] : memref<64x32xf32, #tpu.memory_space<vmem>>, vector<64x32xf32>
    %606 = arith.addf %604, %605 : vector<64x32xf32>
    %cst_148 = arith.constant dense<0.000000e+00> : vector<64xf32>
    %607 = vector.multi_reduction <add>, %606, %cst_148 [1] : vector<64x32xf32> to vector<64xf32>
    %608 = vector.shape_cast %607 : vector<64xf32> to vector<64x1xf32>
    %cst_149 = arith.constant 3.200000e+01 : f32
    %609 = vector.broadcast %cst_149 : f32 to vector<64x1xf32>
    %610 = arith.divf %608, %609 : vector<64x1xf32>
    %611 = vector.broadcast %610 : vector<64x1xf32> to vector<64x32xf32>
    %612 = arith.subf %606, %611 : vector<64x32xf32>
    %613 = arith.mulf %612, %612 : vector<64x32xf32>
    %cst_150 = arith.constant dense<0.000000e+00> : vector<64xf32>
    %614 = vector.multi_reduction <add>, %613, %cst_150 [1] : vector<64x32xf32> to vector<64xf32>
    %615 = vector.shape_cast %614 : vector<64xf32> to vector<64x1xf32>
    %cst_151 = arith.constant 3.200000e+01 : f32
    %616 = vector.broadcast %cst_151 : f32 to vector<64x1xf32>
    %617 = arith.divf %615, %616 : vector<64x1xf32>
    %618 = vector.broadcast %610 : vector<64x1xf32> to vector<64x32xf32>
    %619 = arith.subf %606, %618 : vector<64x32xf32>
    %cst_152 = arith.constant 9.99999974E-6 : f32
    %620 = vector.broadcast %cst_152 : f32 to vector<64x1xf32>
    %621 = arith.addf %617, %620 : vector<64x1xf32>
    %622 = math.rsqrt %621 : vector<64x1xf32>
    %623 = vector.broadcast %622 : vector<64x1xf32> to vector<64x32xf32>
    %624 = arith.mulf %619, %623 : vector<64x32xf32>
    %c0_153 = arith.constant 0 : index
    %c0_154 = arith.constant 0 : index
    %625 = vector.load %arg12[%c0_153, %c0_154] : memref<1x32xf32, #tpu.memory_space<vmem>>, vector<1x32xf32>
    %626 = vector.broadcast %625 : vector<1x32xf32> to vector<64x32xf32>
    %627 = arith.mulf %624, %626 : vector<64x32xf32>
    %c0_155 = arith.constant 0 : index
    %c0_156 = arith.constant 0 : index
    %628 = vector.load %arg13[%c0_155, %c0_156] : memref<1x32xf32, #tpu.memory_space<vmem>>, vector<1x32xf32>
    %629 = vector.broadcast %628 : vector<1x32xf32> to vector<64x32xf32>
    %630 = arith.addf %627, %629 : vector<64x32xf32>
    %631 = arith.truncf %630 : vector<64x32xf32> to vector<64x32xbf16>
    %c0_157 = arith.constant 0 : index
    %c0_158 = arith.constant 0 : index
    %632 = vector.load %arg14[%c0_157, %c0_158] : memref<32x96xbf16, #tpu.memory_space<vmem>>, vector<32x96xbf16>
    %cst_159 = arith.constant dense<0.000000e+00> : vector<64x96xf32>
    %633 = tpu.matmul %631, %632, %cst_159 {dimension_numbers = #tpu.dot_dimension_numbers<[1], [0], [0], [1], [0, 0, 1, 1], [], []>} : vector<64x32xbf16>, vector<32x96xbf16>, vector<64x96xf32> -> vector<64x96xf32>
    %c0_160 = arith.constant 0 : index
    %c0_161 = arith.constant 0 : index
    %634 = vector.load %arg16[%c0_160, %c0_161] : memref<1x96xf32, #tpu.memory_space<vmem>>, vector<1x96xf32>
    %635 = vector.broadcast %634 : vector<1x96xf32> to vector<64x96xf32>
    %636 = arith.addf %633, %635 : vector<64x96xf32>
    %c0_162 = arith.constant 0 : index
    %c0_163 = arith.constant 0 : index
    %637 = vector.load %arg29[%c0_162, %c0_163] : memref<64x96xf32, #tpu.memory_space<vmem>>, vector<64x96xf32>
    tpu.vector_store %arg29[%c0_162, %c0_163], %636 {strides = array<i32>} : memref<64x96xf32, #tpu.memory_space<vmem>>, vector<64x96xf32>,
    %c0_164 = arith.constant 0 : index
    %c0_165 = arith.constant 0 : index
    %638 = vector.load %arg15[%c0_164, %c0_165] : memref<32x96xbf16, #tpu.memory_space<vmem>>, vector<32x96xbf16>
    %cst_166 = arith.constant dense<0.000000e+00> : vector<64x96xf32>
    %639 = tpu.matmul %631, %638, %cst_166 {dimension_numbers = #tpu.dot_dimension_numbers<[1], [0], [0], [1], [0, 0, 1, 1], [], []>} : vector<64x32xbf16>, vector<32x96xbf16>, vector<64x96xf32> -> vector<64x96xf32>
    %c0_167 = arith.constant 0 : index
    %c0_168 = arith.constant 0 : index
    %640 = vector.load %arg17[%c0_167, %c0_168] : memref<1x96xf32, #tpu.memory_space<vmem>>, vector<1x96xf32>
    %641 = vector.broadcast %640 : vector<1x96xf32> to vector<64x96xf32>
    %642 = arith.addf %639, %641 : vector<64x96xf32>
    %c0_169 = arith.constant 0 : index
    %c0_170 = arith.constant 0 : index
    %643 = vector.load %arg30[%c0_169, %c0_170] : memref<64x96xf32, #tpu.memory_space<vmem>>, vector<64x96xf32>
    tpu.vector_store %arg30[%c0_169, %c0_170], %642 {strides = array<i32>} : memref<64x96xf32, #tpu.memory_space<vmem>>, vector<64x96xf32>,
    %c0_171 = arith.constant 0 : index
    %c0_172 = arith.constant 0 : index
    %644 = vector.load %arg18[%c0_171, %c0_172] : memref<32x96xbf16, #tpu.memory_space<vmem>>, vector<32x96xbf16>
    %c0_173 = arith.constant 0 : index
    %c0_174 = arith.constant 0 : index
    %645 = vector.load %arg19[%c0_173, %c0_174] : memref<32x96xbf16, #tpu.memory_space<vmem>>, vector<32x96xbf16>
    %c0_175 = arith.constant 0 : index
    %c0_176 = arith.constant 0 : index
    %646 = vector.load %arg20[%c0_175, %c0_176] : memref<1x96xf32, #tpu.memory_space<vmem>>, vector<1x96xf32>
    %c0_177 = arith.constant 0 : index
    %c0_178 = arith.constant 0 : index
    %647 = vector.load %arg21[%c0_177, %c0_178] : memref<1x96xf32, #tpu.memory_space<vmem>>, vector<1x96xf32>
    %cst_179 = arith.constant 0.000000e+00 : f32
    %648 = vector.broadcast %cst_179 : f32 to vector<8x32xf32>
    %c0_i32_180 = arith.constant 0 : i32
    %649 = arith.truncf %648 : vector<8x32xf32> to vector<8x32xbf16>
    %cst_181 = arith.constant dense<0.000000e+00> : vector<8x96xf32>
    %650 = tpu.matmul %649, %644, %cst_181 {dimension_numbers = #tpu.dot_dimension_numbers<[1], [0], [0], [1], [0, 0, 1, 1], [], []>} : vector<8x32xbf16>, vector<32x96xbf16>, vector<8x96xf32> -> vector<8x96xf32>
    %651 = vector.broadcast %646 : vector<1x96xf32> to vector<8x96xf32>
    %652 = arith.addf %650, %651 : vector<8x96xf32>
    %653 = arith.truncf %648 : vector<8x32xf32> to vector<8x32xbf16>
    %cst_182 = arith.constant dense<0.000000e+00> : vector<8x96xf32>
    %654 = tpu.matmul %653, %645, %cst_182 {dimension_numbers = #tpu.dot_dimension_numbers<[1], [0], [0], [1], [0, 0, 1, 1], [], []>} : vector<8x32xbf16>, vector<32x96xbf16>, vector<8x96xf32> -> vector<8x96xf32>
    %655 = vector.broadcast %647 : vector<1x96xf32> to vector<8x96xf32>
    %656 = arith.addf %654, %655 : vector<8x96xf32>
    %c8_i32_183 = arith.constant 8 : i32
    %657 = arith.muli %c0_i32_180, %c8_i32_183 : i32
    %658 = tpu.assume_multiple %657, 8 : i32
    %c7_i32_184 = arith.constant 7 : i32
    %659 = arith.subi %c7_i32_184, %c0_i32_180 : i32
    %c8_i32_185 = arith.constant 8 : i32
    %660 = arith.muli %659, %c8_i32_185 : i32
    %661 = tpu.assume_multiple %660, 8 : i32
    %662 = arith.index_cast %658 : i32 to index
    %c0_186 = arith.constant 0 : index
    %663 = vector.load %arg29[%662, %c0_186] : memref<64x96xf32, #tpu.memory_space<vmem>>, vector<8x96xf32>
    %664 = vector.extract_strided_slice %663 {offsets = [0, 0], sizes = [8, 32], strides = [1, 1]} : vector<8x96xf32> to vector<8x32xf32>
    %665 = vector.extract_strided_slice %652 {offsets = [0, 0], sizes = [8, 32], strides = [1, 1]} : vector<8x96xf32> to vector<8x32xf32>
    %666 = arith.addf %664, %665 : vector<8x32xf32>
    %667 = arith.negf %666 : vector<8x32xf32>
    %668 = math.exp %667 : vector<8x32xf32>
    %cst_187 = arith.constant 1.000000e+00 : f32
    %669 = vector.broadcast %cst_187 : f32 to vector<8x32xf32>
    %670 = arith.addf %669, %668 : vector<8x32xf32>
    %671 = arith.divf %669, %670 : vector<8x32xf32>
    %672 = vector.extract_strided_slice %663 {offsets = [0, 32], sizes = [8, 32], strides = [1, 1]} : vector<8x96xf32> to vector<8x32xf32>
    %673 = vector.extract_strided_slice %652 {offsets = [0, 32], sizes = [8, 32], strides = [1, 1]} : vector<8x96xf32> to vector<8x32xf32>
    %674 = arith.addf %672, %673 : vector<8x32xf32>
    %675 = arith.negf %674 : vector<8x32xf32>
    %676 = math.exp %675 : vector<8x32xf32>
    %cst_188 = arith.constant 1.000000e+00 : f32
    %677 = vector.broadcast %cst_188 : f32 to vector<8x32xf32>
    %678 = arith.addf %677, %676 : vector<8x32xf32>
    %679 = arith.divf %677, %678 : vector<8x32xf32>
    %680 = vector.extract_strided_slice %663 {offsets = [0, 64], sizes = [8, 32], strides = [1, 1]} : vector<8x96xf32> to vector<8x32xf32>
    %681 = vector.extract_strided_slice %652 {offsets = [0, 64], sizes = [8, 32], strides = [1, 1]} : vector<8x96xf32> to vector<8x32xf32>
    %682 = arith.mulf %671, %681 : vector<8x32xf32>
    %683 = arith.addf %680, %682 : vector<8x32xf32>
    %684 = math.tanh %683 : vector<8x32xf32>
    %cst_189 = arith.constant 1.000000e+00 : f32
    %685 = vector.broadcast %cst_189 : f32 to vector<8x32xf32>
    %686 = arith.subf %685, %679 : vector<8x32xf32>
    %687 = arith.mulf %686, %684 : vector<8x32xf32>
    %688 = arith.mulf %679, %648 : vector<8x32xf32>
    %689 = arith.addf %687, %688 : vector<8x32xf32>
    %690 = arith.index_cast %661 : i32 to index
    %c0_190 = arith.constant 0 : index
    %691 = vector.load %arg30[%690, %c0_190] : memref<64x96xf32, #tpu.memory_space<vmem>>, vector<8x96xf32>
    %692 = vector.extract_strided_slice %691 {offsets = [0, 0], sizes = [8, 32], strides = [1, 1]} : vector<8x96xf32> to vector<8x32xf32>
    %693 = vector.extract_strided_slice %656 {offsets = [0, 0], sizes = [8, 32], strides = [1, 1]} : vector<8x96xf32> to vector<8x32xf32>
    %694 = arith.addf %692, %693 : vector<8x32xf32>
    %695 = arith.negf %694 : vector<8x32xf32>
    %696 = math.exp %695 : vector<8x32xf32>
    %cst_191 = arith.constant 1.000000e+00 : f32
    %697 = vector.broadcast %cst_191 : f32 to vector<8x32xf32>
    %698 = arith.addf %697, %696 : vector<8x32xf32>
    %699 = arith.divf %697, %698 : vector<8x32xf32>
    %700 = vector.extract_strided_slice %691 {offsets = [0, 32], sizes = [8, 32], strides = [1, 1]} : vector<8x96xf32> to vector<8x32xf32>
    %701 = vector.extract_strided_slice %656 {offsets = [0, 32], sizes = [8, 32], strides = [1, 1]} : vector<8x96xf32> to vector<8x32xf32>
    %702 = arith.addf %700, %701 : vector<8x32xf32>
    %703 = arith.negf %702 : vector<8x32xf32>
    %704 = math.exp %703 : vector<8x32xf32>
    %cst_192 = arith.constant 1.000000e+00 : f32
    %705 = vector.broadcast %cst_192 : f32 to vector<8x32xf32>
    %706 = arith.addf %705, %704 : vector<8x32xf32>
    %707 = arith.divf %705, %706 : vector<8x32xf32>
    %708 = vector.extract_strided_slice %691 {offsets = [0, 64], sizes = [8, 32], strides = [1, 1]} : vector<8x96xf32> to vector<8x32xf32>
    %709 = vector.extract_strided_slice %656 {offsets = [0, 64], sizes = [8, 32], strides = [1, 1]} : vector<8x96xf32> to vector<8x32xf32>
    %710 = arith.mulf %699, %709 : vector<8x32xf32>
    %711 = arith.addf %708, %710 : vector<8x32xf32>
    %712 = math.tanh %711 : vector<8x32xf32>
    %cst_193 = arith.constant 1.000000e+00 : f32
    %713 = vector.broadcast %cst_193 : f32 to vector<8x32xf32>
    %714 = arith.subf %713, %707 : vector<8x32xf32>
    %715 = arith.mulf %714, %712 : vector<8x32xf32>
    %716 = arith.mulf %707, %648 : vector<8x32xf32>
    %717 = arith.addf %715, %716 : vector<8x32xf32>
    %718 = arith.index_cast %658 : i32 to index
    %c0_194 = arith.constant 0 : index
    %719 = vector.load %arg31[%718, %c0_194] : memref<64x32xf32, #tpu.memory_space<vmem>>, vector<8x32xf32>
    tpu.vector_store %arg31[%718, %c0_194], %689 {strides = array<i32>} : memref<64x32xf32, #tpu.memory_space<vmem>>, vector<8x32xf32>,
    %720 = arith.index_cast %661 : i32 to index
    %c0_195 = arith.constant 0 : index
    %721 = vector.load %arg32[%720, %c0_195] : memref<64x32xf32, #tpu.memory_space<vmem>>, vector<8x32xf32>
    tpu.vector_store %arg32[%720, %c0_195], %717 {strides = array<i32>} : memref<64x32xf32, #tpu.memory_space<vmem>>, vector<8x32xf32>,
    %c1_i32_196 = arith.constant 1 : i32
    %722 = arith.truncf %689 : vector<8x32xf32> to vector<8x32xbf16>
    %cst_197 = arith.constant dense<0.000000e+00> : vector<8x96xf32>
    %723 = tpu.matmul %722, %644, %cst_197 {dimension_numbers = #tpu.dot_dimension_numbers<[1], [0], [0], [1], [0, 0, 1, 1], [], []>} : vector<8x32xbf16>, vector<32x96xbf16>, vector<8x96xf32> -> vector<8x96xf32>
    %724 = vector.broadcast %646 : vector<1x96xf32> to vector<8x96xf32>
    %725 = arith.addf %723, %724 : vector<8x96xf32>
    %726 = arith.truncf %717 : vector<8x32xf32> to vector<8x32xbf16>
    %cst_198 = arith.constant dense<0.000000e+00> : vector<8x96xf32>
    %727 = tpu.matmul %726, %645, %cst_198 {dimension_numbers = #tpu.dot_dimension_numbers<[1], [0], [0], [1], [0, 0, 1, 1], [], []>} : vector<8x32xbf16>, vector<32x96xbf16>, vector<8x96xf32> -> vector<8x96xf32>
    %728 = vector.broadcast %647 : vector<1x96xf32> to vector<8x96xf32>
    %729 = arith.addf %727, %728 : vector<8x96xf32>
    %c8_i32_199 = arith.constant 8 : i32
    %730 = arith.muli %c1_i32_196, %c8_i32_199 : i32
    %731 = tpu.assume_multiple %730, 8 : i32
    %c7_i32_200 = arith.constant 7 : i32
    %732 = arith.subi %c7_i32_200, %c1_i32_196 : i32
    %c8_i32_201 = arith.constant 8 : i32
    %733 = arith.muli %732, %c8_i32_201 : i32
    %734 = tpu.assume_multiple %733, 8 : i32
    %735 = arith.index_cast %731 : i32 to index
    %c0_202 = arith.constant 0 : index
    %736 = vector.load %arg29[%735, %c0_202] : memref<64x96xf32, #tpu.memory_space<vmem>>, vector<8x96xf32>
    %737 = vector.extract_strided_slice %736 {offsets = [0, 0], sizes = [8, 32], strides = [1, 1]} : vector<8x96xf32> to vector<8x32xf32>
    %738 = vector.extract_strided_slice %725 {offsets = [0, 0], sizes = [8, 32], strides = [1, 1]} : vector<8x96xf32> to vector<8x32xf32>
    %739 = arith.addf %737, %738 : vector<8x32xf32>
    %740 = arith.negf %739 : vector<8x32xf32>
    %741 = math.exp %740 : vector<8x32xf32>
    %cst_203 = arith.constant 1.000000e+00 : f32
    %742 = vector.broadcast %cst_203 : f32 to vector<8x32xf32>
    %743 = arith.addf %742, %741 : vector<8x32xf32>
    %744 = arith.divf %742, %743 : vector<8x32xf32>
    %745 = vector.extract_strided_slice %736 {offsets = [0, 32], sizes = [8, 32], strides = [1, 1]} : vector<8x96xf32> to vector<8x32xf32>
    %746 = vector.extract_strided_slice %725 {offsets = [0, 32], sizes = [8, 32], strides = [1, 1]} : vector<8x96xf32> to vector<8x32xf32>
    %747 = arith.addf %745, %746 : vector<8x32xf32>
    %748 = arith.negf %747 : vector<8x32xf32>
    %749 = math.exp %748 : vector<8x32xf32>
    %cst_204 = arith.constant 1.000000e+00 : f32
    %750 = vector.broadcast %cst_204 : f32 to vector<8x32xf32>
    %751 = arith.addf %750, %749 : vector<8x32xf32>
    %752 = arith.divf %750, %751 : vector<8x32xf32>
    %753 = vector.extract_strided_slice %736 {offsets = [0, 64], sizes = [8, 32], strides = [1, 1]} : vector<8x96xf32> to vector<8x32xf32>
    %754 = vector.extract_strided_slice %725 {offsets = [0, 64], sizes = [8, 32], strides = [1, 1]} : vector<8x96xf32> to vector<8x32xf32>
    %755 = arith.mulf %744, %754 : vector<8x32xf32>
    %756 = arith.addf %753, %755 : vector<8x32xf32>
    %757 = math.tanh %756 : vector<8x32xf32>
    %cst_205 = arith.constant 1.000000e+00 : f32
    %758 = vector.broadcast %cst_205 : f32 to vector<8x32xf32>
    %759 = arith.subf %758, %752 : vector<8x32xf32>
    %760 = arith.mulf %759, %757 : vector<8x32xf32>
    %761 = arith.mulf %752, %689 : vector<8x32xf32>
    %762 = arith.addf %760, %761 : vector<8x32xf32>
    %763 = arith.index_cast %734 : i32 to index
    %c0_206 = arith.constant 0 : index
    %764 = vector.load %arg30[%763, %c0_206] : memref<64x96xf32, #tpu.memory_space<vmem>>, vector<8x96xf32>
    %765 = vector.extract_strided_slice %764 {offsets = [0, 0], sizes = [8, 32], strides = [1, 1]} : vector<8x96xf32> to vector<8x32xf32>
    %766 = vector.extract_strided_slice %729 {offsets = [0, 0], sizes = [8, 32], strides = [1, 1]} : vector<8x96xf32> to vector<8x32xf32>
    %767 = arith.addf %765, %766 : vector<8x32xf32>
    %768 = arith.negf %767 : vector<8x32xf32>
    %769 = math.exp %768 : vector<8x32xf32>
    %cst_207 = arith.constant 1.000000e+00 : f32
    %770 = vector.broadcast %cst_207 : f32 to vector<8x32xf32>
    %771 = arith.addf %770, %769 : vector<8x32xf32>
    %772 = arith.divf %770, %771 : vector<8x32xf32>
    %773 = vector.extract_strided_slice %764 {offsets = [0, 32], sizes = [8, 32], strides = [1, 1]} : vector<8x96xf32> to vector<8x32xf32>
    %774 = vector.extract_strided_slice %729 {offsets = [0, 32], sizes = [8, 32], strides = [1, 1]} : vector<8x96xf32> to vector<8x32xf32>
    %775 = arith.addf %773, %774 : vector<8x32xf32>
    %776 = arith.negf %775 : vector<8x32xf32>
    %777 = math.exp %776 : vector<8x32xf32>
    %cst_208 = arith.constant 1.000000e+00 : f32
    %778 = vector.broadcast %cst_208 : f32 to vector<8x32xf32>
    %779 = arith.addf %778, %777 : vector<8x32xf32>
    %780 = arith.divf %778, %779 : vector<8x32xf32>
    %781 = vector.extract_strided_slice %764 {offsets = [0, 64], sizes = [8, 32], strides = [1, 1]} : vector<8x96xf32> to vector<8x32xf32>
    %782 = vector.extract_strided_slice %729 {offsets = [0, 64], sizes = [8, 32], strides = [1, 1]} : vector<8x96xf32> to vector<8x32xf32>
    %783 = arith.mulf %772, %782 : vector<8x32xf32>
    %784 = arith.addf %781, %783 : vector<8x32xf32>
    %785 = math.tanh %784 : vector<8x32xf32>
    %cst_209 = arith.constant 1.000000e+00 : f32
    %786 = vector.broadcast %cst_209 : f32 to vector<8x32xf32>
    %787 = arith.subf %786, %780 : vector<8x32xf32>
    %788 = arith.mulf %787, %785 : vector<8x32xf32>
    %789 = arith.mulf %780, %717 : vector<8x32xf32>
    %790 = arith.addf %788, %789 : vector<8x32xf32>
    %791 = arith.index_cast %731 : i32 to index
    %c0_210 = arith.constant 0 : index
    %792 = vector.load %arg31[%791, %c0_210] : memref<64x32xf32, #tpu.memory_space<vmem>>, vector<8x32xf32>
    tpu.vector_store %arg31[%791, %c0_210], %762 {strides = array<i32>} : memref<64x32xf32, #tpu.memory_space<vmem>>, vector<8x32xf32>,
    %793 = arith.index_cast %734 : i32 to index
    %c0_211 = arith.constant 0 : index
    %794 = vector.load %arg32[%793, %c0_211] : memref<64x32xf32, #tpu.memory_space<vmem>>, vector<8x32xf32>
    tpu.vector_store %arg32[%793, %c0_211], %790 {strides = array<i32>} : memref<64x32xf32, #tpu.memory_space<vmem>>, vector<8x32xf32>,
    %c2_i32_212 = arith.constant 2 : i32
    %795 = arith.truncf %762 : vector<8x32xf32> to vector<8x32xbf16>
    %cst_213 = arith.constant dense<0.000000e+00> : vector<8x96xf32>
    %796 = tpu.matmul %795, %644, %cst_213 {dimension_numbers = #tpu.dot_dimension_numbers<[1], [0], [0], [1], [0, 0, 1, 1], [], []>} : vector<8x32xbf16>, vector<32x96xbf16>, vector<8x96xf32> -> vector<8x96xf32>
    %797 = vector.broadcast %646 : vector<1x96xf32> to vector<8x96xf32>
    %798 = arith.addf %796, %797 : vector<8x96xf32>
    %799 = arith.truncf %790 : vector<8x32xf32> to vector<8x32xbf16>
    %cst_214 = arith.constant dense<0.000000e+00> : vector<8x96xf32>
    %800 = tpu.matmul %799, %645, %cst_214 {dimension_numbers = #tpu.dot_dimension_numbers<[1], [0], [0], [1], [0, 0, 1, 1], [], []>} : vector<8x32xbf16>, vector<32x96xbf16>, vector<8x96xf32> -> vector<8x96xf32>
    %801 = vector.broadcast %647 : vector<1x96xf32> to vector<8x96xf32>
    %802 = arith.addf %800, %801 : vector<8x96xf32>
    %c8_i32_215 = arith.constant 8 : i32
    %803 = arith.muli %c2_i32_212, %c8_i32_215 : i32
    %804 = tpu.assume_multiple %803, 8 : i32
    %c7_i32_216 = arith.constant 7 : i32
    %805 = arith.subi %c7_i32_216, %c2_i32_212 : i32
    %c8_i32_217 = arith.constant 8 : i32
    %806 = arith.muli %805, %c8_i32_217 : i32
    %807 = tpu.assume_multiple %806, 8 : i32
    %808 = arith.index_cast %804 : i32 to index
    %c0_218 = arith.constant 0 : index
    %809 = vector.load %arg29[%808, %c0_218] : memref<64x96xf32, #tpu.memory_space<vmem>>, vector<8x96xf32>
    %810 = vector.extract_strided_slice %809 {offsets = [0, 0], sizes = [8, 32], strides = [1, 1]} : vector<8x96xf32> to vector<8x32xf32>
    %811 = vector.extract_strided_slice %798 {offsets = [0, 0], sizes = [8, 32], strides = [1, 1]} : vector<8x96xf32> to vector<8x32xf32>
    %812 = arith.addf %810, %811 : vector<8x32xf32>
    %813 = arith.negf %812 : vector<8x32xf32>
    %814 = math.exp %813 : vector<8x32xf32>
    %cst_219 = arith.constant 1.000000e+00 : f32
    %815 = vector.broadcast %cst_219 : f32 to vector<8x32xf32>
    %816 = arith.addf %815, %814 : vector<8x32xf32>
    %817 = arith.divf %815, %816 : vector<8x32xf32>
    %818 = vector.extract_strided_slice %809 {offsets = [0, 32], sizes = [8, 32], strides = [1, 1]} : vector<8x96xf32> to vector<8x32xf32>
    %819 = vector.extract_strided_slice %798 {offsets = [0, 32], sizes = [8, 32], strides = [1, 1]} : vector<8x96xf32> to vector<8x32xf32>
    %820 = arith.addf %818, %819 : vector<8x32xf32>
    %821 = arith.negf %820 : vector<8x32xf32>
    %822 = math.exp %821 : vector<8x32xf32>
    %cst_220 = arith.constant 1.000000e+00 : f32
    %823 = vector.broadcast %cst_220 : f32 to vector<8x32xf32>
    %824 = arith.addf %823, %822 : vector<8x32xf32>
    %825 = arith.divf %823, %824 : vector<8x32xf32>
    %826 = vector.extract_strided_slice %809 {offsets = [0, 64], sizes = [8, 32], strides = [1, 1]} : vector<8x96xf32> to vector<8x32xf32>
    %827 = vector.extract_strided_slice %798 {offsets = [0, 64], sizes = [8, 32], strides = [1, 1]} : vector<8x96xf32> to vector<8x32xf32>
    %828 = arith.mulf %817, %827 : vector<8x32xf32>
    %829 = arith.addf %826, %828 : vector<8x32xf32>
    %830 = math.tanh %829 : vector<8x32xf32>
    %cst_221 = arith.constant 1.000000e+00 : f32
    %831 = vector.broadcast %cst_221 : f32 to vector<8x32xf32>
    %832 = arith.subf %831, %825 : vector<8x32xf32>
    %833 = arith.mulf %832, %830 : vector<8x32xf32>
    %834 = arith.mulf %825, %762 : vector<8x32xf32>
    %835 = arith.addf %833, %834 : vector<8x32xf32>
    %836 = arith.index_cast %807 : i32 to index
    %c0_222 = arith.constant 0 : index
    %837 = vector.load %arg30[%836, %c0_222] : memref<64x96xf32, #tpu.memory_space<vmem>>, vector<8x96xf32>
    %838 = vector.extract_strided_slice %837 {offsets = [0, 0], sizes = [8, 32], strides = [1, 1]} : vector<8x96xf32> to vector<8x32xf32>
    %839 = vector.extract_strided_slice %802 {offsets = [0, 0], sizes = [8, 32], strides = [1, 1]} : vector<8x96xf32> to vector<8x32xf32>
    %840 = arith.addf %838, %839 : vector<8x32xf32>
    %841 = arith.negf %840 : vector<8x32xf32>
    %842 = math.exp %841 : vector<8x32xf32>
    %cst_223 = arith.constant 1.000000e+00 : f32
    %843 = vector.broadcast %cst_223 : f32 to vector<8x32xf32>
    %844 = arith.addf %843, %842 : vector<8x32xf32>
    %845 = arith.divf %843, %844 : vector<8x32xf32>
    %846 = vector.extract_strided_slice %837 {offsets = [0, 32], sizes = [8, 32], strides = [1, 1]} : vector<8x96xf32> to vector<8x32xf32>
    %847 = vector.extract_strided_slice %802 {offsets = [0, 32], sizes = [8, 32], strides = [1, 1]} : vector<8x96xf32> to vector<8x32xf32>
    %848 = arith.addf %846, %847 : vector<8x32xf32>
    %849 = arith.negf %848 : vector<8x32xf32>
    %850 = math.exp %849 : vector<8x32xf32>
    %cst_224 = arith.constant 1.000000e+00 : f32
    %851 = vector.broadcast %cst_224 : f32 to vector<8x32xf32>
    %852 = arith.addf %851, %850 : vector<8x32xf32>
    %853 = arith.divf %851, %852 : vector<8x32xf32>
    %854 = vector.extract_strided_slice %837 {offsets = [0, 64], sizes = [8, 32], strides = [1, 1]} : vector<8x96xf32> to vector<8x32xf32>
    %855 = vector.extract_strided_slice %802 {offsets = [0, 64], sizes = [8, 32], strides = [1, 1]} : vector<8x96xf32> to vector<8x32xf32>
    %856 = arith.mulf %845, %855 : vector<8x32xf32>
    %857 = arith.addf %854, %856 : vector<8x32xf32>
    %858 = math.tanh %857 : vector<8x32xf32>
    %cst_225 = arith.constant 1.000000e+00 : f32
    %859 = vector.broadcast %cst_225 : f32 to vector<8x32xf32>
    %860 = arith.subf %859, %853 : vector<8x32xf32>
    %861 = arith.mulf %860, %858 : vector<8x32xf32>
    %862 = arith.mulf %853, %790 : vector<8x32xf32>
    %863 = arith.addf %861, %862 : vector<8x32xf32>
    %864 = arith.index_cast %804 : i32 to index
    %c0_226 = arith.constant 0 : index
    %865 = vector.load %arg31[%864, %c0_226] : memref<64x32xf32, #tpu.memory_space<vmem>>, vector<8x32xf32>
    tpu.vector_store %arg31[%864, %c0_226], %835 {strides = array<i32>} : memref<64x32xf32, #tpu.memory_space<vmem>>, vector<8x32xf32>,
    %866 = arith.index_cast %807 : i32 to index
    %c0_227 = arith.constant 0 : index
    %867 = vector.load %arg32[%866, %c0_227] : memref<64x32xf32, #tpu.memory_space<vmem>>, vector<8x32xf32>
    tpu.vector_store %arg32[%866, %c0_227], %863 {strides = array<i32>} : memref<64x32xf32, #tpu.memory_space<vmem>>, vector<8x32xf32>,
    %c3_i32_228 = arith.constant 3 : i32
    %868 = arith.truncf %835 : vector<8x32xf32> to vector<8x32xbf16>
    %cst_229 = arith.constant dense<0.000000e+00> : vector<8x96xf32>
    %869 = tpu.matmul %868, %644, %cst_229 {dimension_numbers = #tpu.dot_dimension_numbers<[1], [0], [0], [1], [0, 0, 1, 1], [], []>} : vector<8x32xbf16>, vector<32x96xbf16>, vector<8x96xf32> -> vector<8x96xf32>
    %870 = vector.broadcast %646 : vector<1x96xf32> to vector<8x96xf32>
    %871 = arith.addf %869, %870 : vector<8x96xf32>
    %872 = arith.truncf %863 : vector<8x32xf32> to vector<8x32xbf16>
    %cst_230 = arith.constant dense<0.000000e+00> : vector<8x96xf32>
    %873 = tpu.matmul %872, %645, %cst_230 {dimension_numbers = #tpu.dot_dimension_numbers<[1], [0], [0], [1], [0, 0, 1, 1], [], []>} : vector<8x32xbf16>, vector<32x96xbf16>, vector<8x96xf32> -> vector<8x96xf32>
    %874 = vector.broadcast %647 : vector<1x96xf32> to vector<8x96xf32>
    %875 = arith.addf %873, %874 : vector<8x96xf32>
    %c8_i32_231 = arith.constant 8 : i32
    %876 = arith.muli %c3_i32_228, %c8_i32_231 : i32
    %877 = tpu.assume_multiple %876, 8 : i32
    %c7_i32_232 = arith.constant 7 : i32
    %878 = arith.subi %c7_i32_232, %c3_i32_228 : i32
    %c8_i32_233 = arith.constant 8 : i32
    %879 = arith.muli %878, %c8_i32_233 : i32
    %880 = tpu.assume_multiple %879, 8 : i32
    %881 = arith.index_cast %877 : i32 to index
    %c0_234 = arith.constant 0 : index
    %882 = vector.load %arg29[%881, %c0_234] : memref<64x96xf32, #tpu.memory_space<vmem>>, vector<8x96xf32>
    %883 = vector.extract_strided_slice %882 {offsets = [0, 0], sizes = [8, 32], strides = [1, 1]} : vector<8x96xf32> to vector<8x32xf32>
    %884 = vector.extract_strided_slice %871 {offsets = [0, 0], sizes = [8, 32], strides = [1, 1]} : vector<8x96xf32> to vector<8x32xf32>
    %885 = arith.addf %883, %884 : vector<8x32xf32>
    %886 = arith.negf %885 : vector<8x32xf32>
    %887 = math.exp %886 : vector<8x32xf32>
    %cst_235 = arith.constant 1.000000e+00 : f32
    %888 = vector.broadcast %cst_235 : f32 to vector<8x32xf32>
    %889 = arith.addf %888, %887 : vector<8x32xf32>
    %890 = arith.divf %888, %889 : vector<8x32xf32>
    %891 = vector.extract_strided_slice %882 {offsets = [0, 32], sizes = [8, 32], strides = [1, 1]} : vector<8x96xf32> to vector<8x32xf32>
    %892 = vector.extract_strided_slice %871 {offsets = [0, 32], sizes = [8, 32], strides = [1, 1]} : vector<8x96xf32> to vector<8x32xf32>
    %893 = arith.addf %891, %892 : vector<8x32xf32>
    %894 = arith.negf %893 : vector<8x32xf32>
    %895 = math.exp %894 : vector<8x32xf32>
    %cst_236 = arith.constant 1.000000e+00 : f32
    %896 = vector.broadcast %cst_236 : f32 to vector<8x32xf32>
    %897 = arith.addf %896, %895 : vector<8x32xf32>
    %898 = arith.divf %896, %897 : vector<8x32xf32>
    %899 = vector.extract_strided_slice %882 {offsets = [0, 64], sizes = [8, 32], strides = [1, 1]} : vector<8x96xf32> to vector<8x32xf32>
    %900 = vector.extract_strided_slice %871 {offsets = [0, 64], sizes = [8, 32], strides = [1, 1]} : vector<8x96xf32> to vector<8x32xf32>
    %901 = arith.mulf %890, %900 : vector<8x32xf32>
    %902 = arith.addf %899, %901 : vector<8x32xf32>
    %903 = math.tanh %902 : vector<8x32xf32>
    %cst_237 = arith.constant 1.000000e+00 : f32
    %904 = vector.broadcast %cst_237 : f32 to vector<8x32xf32>
    %905 = arith.subf %904, %898 : vector<8x32xf32>
    %906 = arith.mulf %905, %903 : vector<8x32xf32>
    %907 = arith.mulf %898, %835 : vector<8x32xf32>
    %908 = arith.addf %906, %907 : vector<8x32xf32>
    %909 = arith.index_cast %880 : i32 to index
    %c0_238 = arith.constant 0 : index
    %910 = vector.load %arg30[%909, %c0_238] : memref<64x96xf32, #tpu.memory_space<vmem>>, vector<8x96xf32>
    %911 = vector.extract_strided_slice %910 {offsets = [0, 0], sizes = [8, 32], strides = [1, 1]} : vector<8x96xf32> to vector<8x32xf32>
    %912 = vector.extract_strided_slice %875 {offsets = [0, 0], sizes = [8, 32], strides = [1, 1]} : vector<8x96xf32> to vector<8x32xf32>
    %913 = arith.addf %911, %912 : vector<8x32xf32>
    %914 = arith.negf %913 : vector<8x32xf32>
    %915 = math.exp %914 : vector<8x32xf32>
    %cst_239 = arith.constant 1.000000e+00 : f32
    %916 = vector.broadcast %cst_239 : f32 to vector<8x32xf32>
    %917 = arith.addf %916, %915 : vector<8x32xf32>
    %918 = arith.divf %916, %917 : vector<8x32xf32>
    %919 = vector.extract_strided_slice %910 {offsets = [0, 32], sizes = [8, 32], strides = [1, 1]} : vector<8x96xf32> to vector<8x32xf32>
    %920 = vector.extract_strided_slice %875 {offsets = [0, 32], sizes = [8, 32], strides = [1, 1]} : vector<8x96xf32> to vector<8x32xf32>
    %921 = arith.addf %919, %920 : vector<8x32xf32>
    %922 = arith.negf %921 : vector<8x32xf32>
    %923 = math.exp %922 : vector<8x32xf32>
    %cst_240 = arith.constant 1.000000e+00 : f32
    %924 = vector.broadcast %cst_240 : f32 to vector<8x32xf32>
    %925 = arith.addf %924, %923 : vector<8x32xf32>
    %926 = arith.divf %924, %925 : vector<8x32xf32>
    %927 = vector.extract_strided_slice %910 {offsets = [0, 64], sizes = [8, 32], strides = [1, 1]} : vector<8x96xf32> to vector<8x32xf32>
    %928 = vector.extract_strided_slice %875 {offsets = [0, 64], sizes = [8, 32], strides = [1, 1]} : vector<8x96xf32> to vector<8x32xf32>
    %929 = arith.mulf %918, %928 : vector<8x32xf32>
    %930 = arith.addf %927, %929 : vector<8x32xf32>
    %931 = math.tanh %930 : vector<8x32xf32>
    %cst_241 = arith.constant 1.000000e+00 : f32
    %932 = vector.broadcast %cst_241 : f32 to vector<8x32xf32>
    %933 = arith.subf %932, %926 : vector<8x32xf32>
    %934 = arith.mulf %933, %931 : vector<8x32xf32>
    %935 = arith.mulf %926, %863 : vector<8x32xf32>
    %936 = arith.addf %934, %935 : vector<8x32xf32>
    %937 = arith.index_cast %877 : i32 to index
    %c0_242 = arith.constant 0 : index
    %938 = vector.load %arg31[%937, %c0_242] : memref<64x32xf32, #tpu.memory_space<vmem>>, vector<8x32xf32>
    tpu.vector_store %arg31[%937, %c0_242], %908 {strides = array<i32>} : memref<64x32xf32, #tpu.memory_space<vmem>>, vector<8x32xf32>,
    %939 = arith.index_cast %880 : i32 to index
    %c0_243 = arith.constant 0 : index
    %940 = vector.load %arg32[%939, %c0_243] : memref<64x32xf32, #tpu.memory_space<vmem>>, vector<8x32xf32>
    tpu.vector_store %arg32[%939, %c0_243], %936 {strides = array<i32>} : memref<64x32xf32, #tpu.memory_space<vmem>>, vector<8x32xf32>,
    %c4_i32_244 = arith.constant 4 : i32
    %941 = arith.truncf %908 : vector<8x32xf32> to vector<8x32xbf16>
    %cst_245 = arith.constant dense<0.000000e+00> : vector<8x96xf32>
    %942 = tpu.matmul %941, %644, %cst_245 {dimension_numbers = #tpu.dot_dimension_numbers<[1], [0], [0], [1], [0, 0, 1, 1], [], []>} : vector<8x32xbf16>, vector<32x96xbf16>, vector<8x96xf32> -> vector<8x96xf32>
    %943 = vector.broadcast %646 : vector<1x96xf32> to vector<8x96xf32>
    %944 = arith.addf %942, %943 : vector<8x96xf32>
    %945 = arith.truncf %936 : vector<8x32xf32> to vector<8x32xbf16>
    %cst_246 = arith.constant dense<0.000000e+00> : vector<8x96xf32>
    %946 = tpu.matmul %945, %645, %cst_246 {dimension_numbers = #tpu.dot_dimension_numbers<[1], [0], [0], [1], [0, 0, 1, 1], [], []>} : vector<8x32xbf16>, vector<32x96xbf16>, vector<8x96xf32> -> vector<8x96xf32>
    %947 = vector.broadcast %647 : vector<1x96xf32> to vector<8x96xf32>
    %948 = arith.addf %946, %947 : vector<8x96xf32>
    %c8_i32_247 = arith.constant 8 : i32
    %949 = arith.muli %c4_i32_244, %c8_i32_247 : i32
    %950 = tpu.assume_multiple %949, 8 : i32
    %c7_i32_248 = arith.constant 7 : i32
    %951 = arith.subi %c7_i32_248, %c4_i32_244 : i32
    %c8_i32_249 = arith.constant 8 : i32
    %952 = arith.muli %951, %c8_i32_249 : i32
    %953 = tpu.assume_multiple %952, 8 : i32
    %954 = arith.index_cast %950 : i32 to index
    %c0_250 = arith.constant 0 : index
    %955 = vector.load %arg29[%954, %c0_250] : memref<64x96xf32, #tpu.memory_space<vmem>>, vector<8x96xf32>
    %956 = vector.extract_strided_slice %955 {offsets = [0, 0], sizes = [8, 32], strides = [1, 1]} : vector<8x96xf32> to vector<8x32xf32>
    %957 = vector.extract_strided_slice %944 {offsets = [0, 0], sizes = [8, 32], strides = [1, 1]} : vector<8x96xf32> to vector<8x32xf32>
    %958 = arith.addf %956, %957 : vector<8x32xf32>
    %959 = arith.negf %958 : vector<8x32xf32>
    %960 = math.exp %959 : vector<8x32xf32>
    %cst_251 = arith.constant 1.000000e+00 : f32
    %961 = vector.broadcast %cst_251 : f32 to vector<8x32xf32>
    %962 = arith.addf %961, %960 : vector<8x32xf32>
    %963 = arith.divf %961, %962 : vector<8x32xf32>
    %964 = vector.extract_strided_slice %955 {offsets = [0, 32], sizes = [8, 32], strides = [1, 1]} : vector<8x96xf32> to vector<8x32xf32>
    %965 = vector.extract_strided_slice %944 {offsets = [0, 32], sizes = [8, 32], strides = [1, 1]} : vector<8x96xf32> to vector<8x32xf32>
    %966 = arith.addf %964, %965 : vector<8x32xf32>
    %967 = arith.negf %966 : vector<8x32xf32>
    %968 = math.exp %967 : vector<8x32xf32>
    %cst_252 = arith.constant 1.000000e+00 : f32
    %969 = vector.broadcast %cst_252 : f32 to vector<8x32xf32>
    %970 = arith.addf %969, %968 : vector<8x32xf32>
    %971 = arith.divf %969, %970 : vector<8x32xf32>
    %972 = vector.extract_strided_slice %955 {offsets = [0, 64], sizes = [8, 32], strides = [1, 1]} : vector<8x96xf32> to vector<8x32xf32>
    %973 = vector.extract_strided_slice %944 {offsets = [0, 64], sizes = [8, 32], strides = [1, 1]} : vector<8x96xf32> to vector<8x32xf32>
    %974 = arith.mulf %963, %973 : vector<8x32xf32>
    %975 = arith.addf %972, %974 : vector<8x32xf32>
    %976 = math.tanh %975 : vector<8x32xf32>
    %cst_253 = arith.constant 1.000000e+00 : f32
    %977 = vector.broadcast %cst_253 : f32 to vector<8x32xf32>
    %978 = arith.subf %977, %971 : vector<8x32xf32>
    %979 = arith.mulf %978, %976 : vector<8x32xf32>
    %980 = arith.mulf %971, %908 : vector<8x32xf32>
    %981 = arith.addf %979, %980 : vector<8x32xf32>
    %982 = arith.index_cast %953 : i32 to index
    %c0_254 = arith.constant 0 : index
    %983 = vector.load %arg30[%982, %c0_254] : memref<64x96xf32, #tpu.memory_space<vmem>>, vector<8x96xf32>
    %984 = vector.extract_strided_slice %983 {offsets = [0, 0], sizes = [8, 32], strides = [1, 1]} : vector<8x96xf32> to vector<8x32xf32>
    %985 = vector.extract_strided_slice %948 {offsets = [0, 0], sizes = [8, 32], strides = [1, 1]} : vector<8x96xf32> to vector<8x32xf32>
    %986 = arith.addf %984, %985 : vector<8x32xf32>
    %987 = arith.negf %986 : vector<8x32xf32>
    %988 = math.exp %987 : vector<8x32xf32>
    %cst_255 = arith.constant 1.000000e+00 : f32
    %989 = vector.broadcast %cst_255 : f32 to vector<8x32xf32>
    %990 = arith.addf %989, %988 : vector<8x32xf32>
    %991 = arith.divf %989, %990 : vector<8x32xf32>
    %992 = vector.extract_strided_slice %983 {offsets = [0, 32], sizes = [8, 32], strides = [1, 1]} : vector<8x96xf32> to vector<8x32xf32>
    %993 = vector.extract_strided_slice %948 {offsets = [0, 32], sizes = [8, 32], strides = [1, 1]} : vector<8x96xf32> to vector<8x32xf32>
    %994 = arith.addf %992, %993 : vector<8x32xf32>
    %995 = arith.negf %994 : vector<8x32xf32>
    %996 = math.exp %995 : vector<8x32xf32>
    %cst_256 = arith.constant 1.000000e+00 : f32
    %997 = vector.broadcast %cst_256 : f32 to vector<8x32xf32>
    %998 = arith.addf %997, %996 : vector<8x32xf32>
    %999 = arith.divf %997, %998 : vector<8x32xf32>
    %1000 = vector.extract_strided_slice %983 {offsets = [0, 64], sizes = [8, 32], strides = [1, 1]} : vector<8x96xf32> to vector<8x32xf32>
    %1001 = vector.extract_strided_slice %948 {offsets = [0, 64], sizes = [8, 32], strides = [1, 1]} : vector<8x96xf32> to vector<8x32xf32>
    %1002 = arith.mulf %991, %1001 : vector<8x32xf32>
    %1003 = arith.addf %1000, %1002 : vector<8x32xf32>
    %1004 = math.tanh %1003 : vector<8x32xf32>
    %cst_257 = arith.constant 1.000000e+00 : f32
    %1005 = vector.broadcast %cst_257 : f32 to vector<8x32xf32>
    %1006 = arith.subf %1005, %999 : vector<8x32xf32>
    %1007 = arith.mulf %1006, %1004 : vector<8x32xf32>
    %1008 = arith.mulf %999, %936 : vector<8x32xf32>
    %1009 = arith.addf %1007, %1008 : vector<8x32xf32>
    %1010 = arith.index_cast %950 : i32 to index
    %c0_258 = arith.constant 0 : index
    %1011 = vector.load %arg31[%1010, %c0_258] : memref<64x32xf32, #tpu.memory_space<vmem>>, vector<8x32xf32>
    tpu.vector_store %arg31[%1010, %c0_258], %981 {strides = array<i32>} : memref<64x32xf32, #tpu.memory_space<vmem>>, vector<8x32xf32>,
    %1012 = arith.index_cast %953 : i32 to index
    %c0_259 = arith.constant 0 : index
    %1013 = vector.load %arg32[%1012, %c0_259] : memref<64x32xf32, #tpu.memory_space<vmem>>, vector<8x32xf32>
    tpu.vector_store %arg32[%1012, %c0_259], %1009 {strides = array<i32>} : memref<64x32xf32, #tpu.memory_space<vmem>>, vector<8x32xf32>,
    %c5_i32_260 = arith.constant 5 : i32
    %1014 = arith.truncf %981 : vector<8x32xf32> to vector<8x32xbf16>
    %cst_261 = arith.constant dense<0.000000e+00> : vector<8x96xf32>
    %1015 = tpu.matmul %1014, %644, %cst_261 {dimension_numbers = #tpu.dot_dimension_numbers<[1], [0], [0], [1], [0, 0, 1, 1], [], []>} : vector<8x32xbf16>, vector<32x96xbf16>, vector<8x96xf32> -> vector<8x96xf32>
    %1016 = vector.broadcast %646 : vector<1x96xf32> to vector<8x96xf32>
    %1017 = arith.addf %1015, %1016 : vector<8x96xf32>
    %1018 = arith.truncf %1009 : vector<8x32xf32> to vector<8x32xbf16>
    %cst_262 = arith.constant dense<0.000000e+00> : vector<8x96xf32>
    %1019 = tpu.matmul %1018, %645, %cst_262 {dimension_numbers = #tpu.dot_dimension_numbers<[1], [0], [0], [1], [0, 0, 1, 1], [], []>} : vector<8x32xbf16>, vector<32x96xbf16>, vector<8x96xf32> -> vector<8x96xf32>
    %1020 = vector.broadcast %647 : vector<1x96xf32> to vector<8x96xf32>
    %1021 = arith.addf %1019, %1020 : vector<8x96xf32>
    %c8_i32_263 = arith.constant 8 : i32
    %1022 = arith.muli %c5_i32_260, %c8_i32_263 : i32
    %1023 = tpu.assume_multiple %1022, 8 : i32
    %c7_i32_264 = arith.constant 7 : i32
    %1024 = arith.subi %c7_i32_264, %c5_i32_260 : i32
    %c8_i32_265 = arith.constant 8 : i32
    %1025 = arith.muli %1024, %c8_i32_265 : i32
    %1026 = tpu.assume_multiple %1025, 8 : i32
    %1027 = arith.index_cast %1023 : i32 to index
    %c0_266 = arith.constant 0 : index
    %1028 = vector.load %arg29[%1027, %c0_266] : memref<64x96xf32, #tpu.memory_space<vmem>>, vector<8x96xf32>
    %1029 = vector.extract_strided_slice %1028 {offsets = [0, 0], sizes = [8, 32], strides = [1, 1]} : vector<8x96xf32> to vector<8x32xf32>
    %1030 = vector.extract_strided_slice %1017 {offsets = [0, 0], sizes = [8, 32], strides = [1, 1]} : vector<8x96xf32> to vector<8x32xf32>
    %1031 = arith.addf %1029, %1030 : vector<8x32xf32>
    %1032 = arith.negf %1031 : vector<8x32xf32>
    %1033 = math.exp %1032 : vector<8x32xf32>
    %cst_267 = arith.constant 1.000000e+00 : f32
    %1034 = vector.broadcast %cst_267 : f32 to vector<8x32xf32>
    %1035 = arith.addf %1034, %1033 : vector<8x32xf32>
    %1036 = arith.divf %1034, %1035 : vector<8x32xf32>
    %1037 = vector.extract_strided_slice %1028 {offsets = [0, 32], sizes = [8, 32], strides = [1, 1]} : vector<8x96xf32> to vector<8x32xf32>
    %1038 = vector.extract_strided_slice %1017 {offsets = [0, 32], sizes = [8, 32], strides = [1, 1]} : vector<8x96xf32> to vector<8x32xf32>
    %1039 = arith.addf %1037, %1038 : vector<8x32xf32>
    %1040 = arith.negf %1039 : vector<8x32xf32>
    %1041 = math.exp %1040 : vector<8x32xf32>
    %cst_268 = arith.constant 1.000000e+00 : f32
    %1042 = vector.broadcast %cst_268 : f32 to vector<8x32xf32>
    %1043 = arith.addf %1042, %1041 : vector<8x32xf32>
    %1044 = arith.divf %1042, %1043 : vector<8x32xf32>
    %1045 = vector.extract_strided_slice %1028 {offsets = [0, 64], sizes = [8, 32], strides = [1, 1]} : vector<8x96xf32> to vector<8x32xf32>
    %1046 = vector.extract_strided_slice %1017 {offsets = [0, 64], sizes = [8, 32], strides = [1, 1]} : vector<8x96xf32> to vector<8x32xf32>
    %1047 = arith.mulf %1036, %1046 : vector<8x32xf32>
    %1048 = arith.addf %1045, %1047 : vector<8x32xf32>
    %1049 = math.tanh %1048 : vector<8x32xf32>
    %cst_269 = arith.constant 1.000000e+00 : f32
    %1050 = vector.broadcast %cst_269 : f32 to vector<8x32xf32>
    %1051 = arith.subf %1050, %1044 : vector<8x32xf32>
    %1052 = arith.mulf %1051, %1049 : vector<8x32xf32>
    %1053 = arith.mulf %1044, %981 : vector<8x32xf32>
    %1054 = arith.addf %1052, %1053 : vector<8x32xf32>
    %1055 = arith.index_cast %1026 : i32 to index
    %c0_270 = arith.constant 0 : index
    %1056 = vector.load %arg30[%1055, %c0_270] : memref<64x96xf32, #tpu.memory_space<vmem>>, vector<8x96xf32>
    %1057 = vector.extract_strided_slice %1056 {offsets = [0, 0], sizes = [8, 32], strides = [1, 1]} : vector<8x96xf32> to vector<8x32xf32>
    %1058 = vector.extract_strided_slice %1021 {offsets = [0, 0], sizes = [8, 32], strides = [1, 1]} : vector<8x96xf32> to vector<8x32xf32>
    %1059 = arith.addf %1057, %1058 : vector<8x32xf32>
    %1060 = arith.negf %1059 : vector<8x32xf32>
    %1061 = math.exp %1060 : vector<8x32xf32>
    %cst_271 = arith.constant 1.000000e+00 : f32
    %1062 = vector.broadcast %cst_271 : f32 to vector<8x32xf32>
    %1063 = arith.addf %1062, %1061 : vector<8x32xf32>
    %1064 = arith.divf %1062, %1063 : vector<8x32xf32>
    %1065 = vector.extract_strided_slice %1056 {offsets = [0, 32], sizes = [8, 32], strides = [1, 1]} : vector<8x96xf32> to vector<8x32xf32>
    %1066 = vector.extract_strided_slice %1021 {offsets = [0, 32], sizes = [8, 32], strides = [1, 1]} : vector<8x96xf32> to vector<8x32xf32>
    %1067 = arith.addf %1065, %1066 : vector<8x32xf32>
    %1068 = arith.negf %1067 : vector<8x32xf32>
    %1069 = math.exp %1068 : vector<8x32xf32>
    %cst_272 = arith.constant 1.000000e+00 : f32
    %1070 = vector.broadcast %cst_272 : f32 to vector<8x32xf32>
    %1071 = arith.addf %1070, %1069 : vector<8x32xf32>
    %1072 = arith.divf %1070, %1071 : vector<8x32xf32>
    %1073 = vector.extract_strided_slice %1056 {offsets = [0, 64], sizes = [8, 32], strides = [1, 1]} : vector<8x96xf32> to vector<8x32xf32>
    %1074 = vector.extract_strided_slice %1021 {offsets = [0, 64], sizes = [8, 32], strides = [1, 1]} : vector<8x96xf32> to vector<8x32xf32>
    %1075 = arith.mulf %1064, %1074 : vector<8x32xf32>
    %1076 = arith.addf %1073, %1075 : vector<8x32xf32>
    %1077 = math.tanh %1076 : vector<8x32xf32>
    %cst_273 = arith.constant 1.000000e+00 : f32
    %1078 = vector.broadcast %cst_273 : f32 to vector<8x32xf32>
    %1079 = arith.subf %1078, %1072 : vector<8x32xf32>
    %1080 = arith.mulf %1079, %1077 : vector<8x32xf32>
    %1081 = arith.mulf %1072, %1009 : vector<8x32xf32>
    %1082 = arith.addf %1080, %1081 : vector<8x32xf32>
    %1083 = arith.index_cast %1023 : i32 to index
    %c0_274 = arith.constant 0 : index
    %1084 = vector.load %arg31[%1083, %c0_274] : memref<64x32xf32, #tpu.memory_space<vmem>>, vector<8x32xf32>
    tpu.vector_store %arg31[%1083, %c0_274], %1054 {strides = array<i32>} : memref<64x32xf32, #tpu.memory_space<vmem>>, vector<8x32xf32>,
    %1085 = arith.index_cast %1026 : i32 to index
    %c0_275 = arith.constant 0 : index
    %1086 = vector.load %arg32[%1085, %c0_275] : memref<64x32xf32, #tpu.memory_space<vmem>>, vector<8x32xf32>
    tpu.vector_store %arg32[%1085, %c0_275], %1082 {strides = array<i32>} : memref<64x32xf32, #tpu.memory_space<vmem>>, vector<8x32xf32>,
    %c6_i32_276 = arith.constant 6 : i32
    %1087 = arith.truncf %1054 : vector<8x32xf32> to vector<8x32xbf16>
    %cst_277 = arith.constant dense<0.000000e+00> : vector<8x96xf32>
    %1088 = tpu.matmul %1087, %644, %cst_277 {dimension_numbers = #tpu.dot_dimension_numbers<[1], [0], [0], [1], [0, 0, 1, 1], [], []>} : vector<8x32xbf16>, vector<32x96xbf16>, vector<8x96xf32> -> vector<8x96xf32>
    %1089 = vector.broadcast %646 : vector<1x96xf32> to vector<8x96xf32>
    %1090 = arith.addf %1088, %1089 : vector<8x96xf32>
    %1091 = arith.truncf %1082 : vector<8x32xf32> to vector<8x32xbf16>
    %cst_278 = arith.constant dense<0.000000e+00> : vector<8x96xf32>
    %1092 = tpu.matmul %1091, %645, %cst_278 {dimension_numbers = #tpu.dot_dimension_numbers<[1], [0], [0], [1], [0, 0, 1, 1], [], []>} : vector<8x32xbf16>, vector<32x96xbf16>, vector<8x96xf32> -> vector<8x96xf32>
    %1093 = vector.broadcast %647 : vector<1x96xf32> to vector<8x96xf32>
    %1094 = arith.addf %1092, %1093 : vector<8x96xf32>
    %c8_i32_279 = arith.constant 8 : i32
    %1095 = arith.muli %c6_i32_276, %c8_i32_279 : i32
    %1096 = tpu.assume_multiple %1095, 8 : i32
    %c7_i32_280 = arith.constant 7 : i32
    %1097 = arith.subi %c7_i32_280, %c6_i32_276 : i32
    %c8_i32_281 = arith.constant 8 : i32
    %1098 = arith.muli %1097, %c8_i32_281 : i32
    %1099 = tpu.assume_multiple %1098, 8 : i32
    %1100 = arith.index_cast %1096 : i32 to index
    %c0_282 = arith.constant 0 : index
    %1101 = vector.load %arg29[%1100, %c0_282] : memref<64x96xf32, #tpu.memory_space<vmem>>, vector<8x96xf32>
    %1102 = vector.extract_strided_slice %1101 {offsets = [0, 0], sizes = [8, 32], strides = [1, 1]} : vector<8x96xf32> to vector<8x32xf32>
    %1103 = vector.extract_strided_slice %1090 {offsets = [0, 0], sizes = [8, 32], strides = [1, 1]} : vector<8x96xf32> to vector<8x32xf32>
    %1104 = arith.addf %1102, %1103 : vector<8x32xf32>
    %1105 = arith.negf %1104 : vector<8x32xf32>
    %1106 = math.exp %1105 : vector<8x32xf32>
    %cst_283 = arith.constant 1.000000e+00 : f32
    %1107 = vector.broadcast %cst_283 : f32 to vector<8x32xf32>
    %1108 = arith.addf %1107, %1106 : vector<8x32xf32>
    %1109 = arith.divf %1107, %1108 : vector<8x32xf32>
    %1110 = vector.extract_strided_slice %1101 {offsets = [0, 32], sizes = [8, 32], strides = [1, 1]} : vector<8x96xf32> to vector<8x32xf32>
    %1111 = vector.extract_strided_slice %1090 {offsets = [0, 32], sizes = [8, 32], strides = [1, 1]} : vector<8x96xf32> to vector<8x32xf32>
    %1112 = arith.addf %1110, %1111 : vector<8x32xf32>
    %1113 = arith.negf %1112 : vector<8x32xf32>
    %1114 = math.exp %1113 : vector<8x32xf32>
    %cst_284 = arith.constant 1.000000e+00 : f32
    %1115 = vector.broadcast %cst_284 : f32 to vector<8x32xf32>
    %1116 = arith.addf %1115, %1114 : vector<8x32xf32>
    %1117 = arith.divf %1115, %1116 : vector<8x32xf32>
    %1118 = vector.extract_strided_slice %1101 {offsets = [0, 64], sizes = [8, 32], strides = [1, 1]} : vector<8x96xf32> to vector<8x32xf32>
    %1119 = vector.extract_strided_slice %1090 {offsets = [0, 64], sizes = [8, 32], strides = [1, 1]} : vector<8x96xf32> to vector<8x32xf32>
    %1120 = arith.mulf %1109, %1119 : vector<8x32xf32>
    %1121 = arith.addf %1118, %1120 : vector<8x32xf32>
    %1122 = math.tanh %1121 : vector<8x32xf32>
    %cst_285 = arith.constant 1.000000e+00 : f32
    %1123 = vector.broadcast %cst_285 : f32 to vector<8x32xf32>
    %1124 = arith.subf %1123, %1117 : vector<8x32xf32>
    %1125 = arith.mulf %1124, %1122 : vector<8x32xf32>
    %1126 = arith.mulf %1117, %1054 : vector<8x32xf32>
    %1127 = arith.addf %1125, %1126 : vector<8x32xf32>
    %1128 = arith.index_cast %1099 : i32 to index
    %c0_286 = arith.constant 0 : index
    %1129 = vector.load %arg30[%1128, %c0_286] : memref<64x96xf32, #tpu.memory_space<vmem>>, vector<8x96xf32>
    %1130 = vector.extract_strided_slice %1129 {offsets = [0, 0], sizes = [8, 32], strides = [1, 1]} : vector<8x96xf32> to vector<8x32xf32>
    %1131 = vector.extract_strided_slice %1094 {offsets = [0, 0], sizes = [8, 32], strides = [1, 1]} : vector<8x96xf32> to vector<8x32xf32>
    %1132 = arith.addf %1130, %1131 : vector<8x32xf32>
    %1133 = arith.negf %1132 : vector<8x32xf32>
    %1134 = math.exp %1133 : vector<8x32xf32>
    %cst_287 = arith.constant 1.000000e+00 : f32
    %1135 = vector.broadcast %cst_287 : f32 to vector<8x32xf32>
    %1136 = arith.addf %1135, %1134 : vector<8x32xf32>
    %1137 = arith.divf %1135, %1136 : vector<8x32xf32>
    %1138 = vector.extract_strided_slice %1129 {offsets = [0, 32], sizes = [8, 32], strides = [1, 1]} : vector<8x96xf32> to vector<8x32xf32>
    %1139 = vector.extract_strided_slice %1094 {offsets = [0, 32], sizes = [8, 32], strides = [1, 1]} : vector<8x96xf32> to vector<8x32xf32>
    %1140 = arith.addf %1138, %1139 : vector<8x32xf32>
    %1141 = arith.negf %1140 : vector<8x32xf32>
    %1142 = math.exp %1141 : vector<8x32xf32>
    %cst_288 = arith.constant 1.000000e+00 : f32
    %1143 = vector.broadcast %cst_288 : f32 to vector<8x32xf32>
    %1144 = arith.addf %1143, %1142 : vector<8x32xf32>
    %1145 = arith.divf %1143, %1144 : vector<8x32xf32>
    %1146 = vector.extract_strided_slice %1129 {offsets = [0, 64], sizes = [8, 32], strides = [1, 1]} : vector<8x96xf32> to vector<8x32xf32>
    %1147 = vector.extract_strided_slice %1094 {offsets = [0, 64], sizes = [8, 32], strides = [1, 1]} : vector<8x96xf32> to vector<8x32xf32>
    %1148 = arith.mulf %1137, %1147 : vector<8x32xf32>
    %1149 = arith.addf %1146, %1148 : vector<8x32xf32>
    %1150 = math.tanh %1149 : vector<8x32xf32>
    %cst_289 = arith.constant 1.000000e+00 : f32
    %1151 = vector.broadcast %cst_289 : f32 to vector<8x32xf32>
    %1152 = arith.subf %1151, %1145 : vector<8x32xf32>
    %1153 = arith.mulf %1152, %1150 : vector<8x32xf32>
    %1154 = arith.mulf %1145, %1082 : vector<8x32xf32>
    %1155 = arith.addf %1153, %1154 : vector<8x32xf32>
    %1156 = arith.index_cast %1096 : i32 to index
    %c0_290 = arith.constant 0 : index
    %1157 = vector.load %arg31[%1156, %c0_290] : memref<64x32xf32, #tpu.memory_space<vmem>>, vector<8x32xf32>
    tpu.vector_store %arg31[%1156, %c0_290], %1127 {strides = array<i32>} : memref<64x32xf32, #tpu.memory_space<vmem>>, vector<8x32xf32>,
    %1158 = arith.index_cast %1099 : i32 to index
    %c0_291 = arith.constant 0 : index
    %1159 = vector.load %arg32[%1158, %c0_291] : memref<64x32xf32, #tpu.memory_space<vmem>>, vector<8x32xf32>
    tpu.vector_store %arg32[%1158, %c0_291], %1155 {strides = array<i32>} : memref<64x32xf32, #tpu.memory_space<vmem>>, vector<8x32xf32>,
    %c7_i32_292 = arith.constant 7 : i32
    %1160 = arith.truncf %1127 : vector<8x32xf32> to vector<8x32xbf16>
    %cst_293 = arith.constant dense<0.000000e+00> : vector<8x96xf32>
    %1161 = tpu.matmul %1160, %644, %cst_293 {dimension_numbers = #tpu.dot_dimension_numbers<[1], [0], [0], [1], [0, 0, 1, 1], [], []>} : vector<8x32xbf16>, vector<32x96xbf16>, vector<8x96xf32> -> vector<8x96xf32>
    %1162 = vector.broadcast %646 : vector<1x96xf32> to vector<8x96xf32>
    %1163 = arith.addf %1161, %1162 : vector<8x96xf32>
    %1164 = arith.truncf %1155 : vector<8x32xf32> to vector<8x32xbf16>
    %cst_294 = arith.constant dense<0.000000e+00> : vector<8x96xf32>
    %1165 = tpu.matmul %1164, %645, %cst_294 {dimension_numbers = #tpu.dot_dimension_numbers<[1], [0], [0], [1], [0, 0, 1, 1], [], []>} : vector<8x32xbf16>, vector<32x96xbf16>, vector<8x96xf32> -> vector<8x96xf32>
    %1166 = vector.broadcast %647 : vector<1x96xf32> to vector<8x96xf32>
    %1167 = arith.addf %1165, %1166 : vector<8x96xf32>
    %c8_i32_295 = arith.constant 8 : i32
    %1168 = arith.muli %c7_i32_292, %c8_i32_295 : i32
    %1169 = tpu.assume_multiple %1168, 8 : i32
    %c7_i32_296 = arith.constant 7 : i32
    %1170 = arith.subi %c7_i32_296, %c7_i32_292 : i32
    %c8_i32_297 = arith.constant 8 : i32
    %1171 = arith.muli %1170, %c8_i32_297 : i32
    %1172 = tpu.assume_multiple %1171, 8 : i32
    %1173 = arith.index_cast %1169 : i32 to index
    %c0_298 = arith.constant 0 : index
    %1174 = vector.load %arg29[%1173, %c0_298] : memref<64x96xf32, #tpu.memory_space<vmem>>, vector<8x96xf32>
    %1175 = vector.extract_strided_slice %1174 {offsets = [0, 0], sizes = [8, 32], strides = [1, 1]} : vector<8x96xf32> to vector<8x32xf32>
    %1176 = vector.extract_strided_slice %1163 {offsets = [0, 0], sizes = [8, 32], strides = [1, 1]} : vector<8x96xf32> to vector<8x32xf32>
    %1177 = arith.addf %1175, %1176 : vector<8x32xf32>
    %1178 = arith.negf %1177 : vector<8x32xf32>
    %1179 = math.exp %1178 : vector<8x32xf32>
    %cst_299 = arith.constant 1.000000e+00 : f32
    %1180 = vector.broadcast %cst_299 : f32 to vector<8x32xf32>
    %1181 = arith.addf %1180, %1179 : vector<8x32xf32>
    %1182 = arith.divf %1180, %1181 : vector<8x32xf32>
    %1183 = vector.extract_strided_slice %1174 {offsets = [0, 32], sizes = [8, 32], strides = [1, 1]} : vector<8x96xf32> to vector<8x32xf32>
    %1184 = vector.extract_strided_slice %1163 {offsets = [0, 32], sizes = [8, 32], strides = [1, 1]} : vector<8x96xf32> to vector<8x32xf32>
    %1185 = arith.addf %1183, %1184 : vector<8x32xf32>
    %1186 = arith.negf %1185 : vector<8x32xf32>
    %1187 = math.exp %1186 : vector<8x32xf32>
    %cst_300 = arith.constant 1.000000e+00 : f32
    %1188 = vector.broadcast %cst_300 : f32 to vector<8x32xf32>
    %1189 = arith.addf %1188, %1187 : vector<8x32xf32>
    %1190 = arith.divf %1188, %1189 : vector<8x32xf32>
    %1191 = vector.extract_strided_slice %1174 {offsets = [0, 64], sizes = [8, 32], strides = [1, 1]} : vector<8x96xf32> to vector<8x32xf32>
    %1192 = vector.extract_strided_slice %1163 {offsets = [0, 64], sizes = [8, 32], strides = [1, 1]} : vector<8x96xf32> to vector<8x32xf32>
    %1193 = arith.mulf %1182, %1192 : vector<8x32xf32>
    %1194 = arith.addf %1191, %1193 : vector<8x32xf32>
    %1195 = math.tanh %1194 : vector<8x32xf32>
    %cst_301 = arith.constant 1.000000e+00 : f32
    %1196 = vector.broadcast %cst_301 : f32 to vector<8x32xf32>
    %1197 = arith.subf %1196, %1190 : vector<8x32xf32>
    %1198 = arith.mulf %1197, %1195 : vector<8x32xf32>
    %1199 = arith.mulf %1190, %1127 : vector<8x32xf32>
    %1200 = arith.addf %1198, %1199 : vector<8x32xf32>
    %1201 = arith.index_cast %1172 : i32 to index
    %c0_302 = arith.constant 0 : index
    %1202 = vector.load %arg30[%1201, %c0_302] : memref<64x96xf32, #tpu.memory_space<vmem>>, vector<8x96xf32>
    %1203 = vector.extract_strided_slice %1202 {offsets = [0, 0], sizes = [8, 32], strides = [1, 1]} : vector<8x96xf32> to vector<8x32xf32>
    %1204 = vector.extract_strided_slice %1167 {offsets = [0, 0], sizes = [8, 32], strides = [1, 1]} : vector<8x96xf32> to vector<8x32xf32>
    %1205 = arith.addf %1203, %1204 : vector<8x32xf32>
    %1206 = arith.negf %1205 : vector<8x32xf32>
    %1207 = math.exp %1206 : vector<8x32xf32>
    %cst_303 = arith.constant 1.000000e+00 : f32
    %1208 = vector.broadcast %cst_303 : f32 to vector<8x32xf32>
    %1209 = arith.addf %1208, %1207 : vector<8x32xf32>
    %1210 = arith.divf %1208, %1209 : vector<8x32xf32>
    %1211 = vector.extract_strided_slice %1202 {offsets = [0, 32], sizes = [8, 32], strides = [1, 1]} : vector<8x96xf32> to vector<8x32xf32>
    %1212 = vector.extract_strided_slice %1167 {offsets = [0, 32], sizes = [8, 32], strides = [1, 1]} : vector<8x96xf32> to vector<8x32xf32>
    %1213 = arith.addf %1211, %1212 : vector<8x32xf32>
    %1214 = arith.negf %1213 : vector<8x32xf32>
    %1215 = math.exp %1214 : vector<8x32xf32>
    %cst_304 = arith.constant 1.000000e+00 : f32
    %1216 = vector.broadcast %cst_304 : f32 to vector<8x32xf32>
    %1217 = arith.addf %1216, %1215 : vector<8x32xf32>
    %1218 = arith.divf %1216, %1217 : vector<8x32xf32>
    %1219 = vector.extract_strided_slice %1202 {offsets = [0, 64], sizes = [8, 32], strides = [1, 1]} : vector<8x96xf32> to vector<8x32xf32>
    %1220 = vector.extract_strided_slice %1167 {offsets = [0, 64], sizes = [8, 32], strides = [1, 1]} : vector<8x96xf32> to vector<8x32xf32>
    %1221 = arith.mulf %1210, %1220 : vector<8x32xf32>
    %1222 = arith.addf %1219, %1221 : vector<8x32xf32>
    %1223 = math.tanh %1222 : vector<8x32xf32>
    %cst_305 = arith.constant 1.000000e+00 : f32
    %1224 = vector.broadcast %cst_305 : f32 to vector<8x32xf32>
    %1225 = arith.subf %1224, %1218 : vector<8x32xf32>
    %1226 = arith.mulf %1225, %1223 : vector<8x32xf32>
    %1227 = arith.mulf %1218, %1155 : vector<8x32xf32>
    %1228 = arith.addf %1226, %1227 : vector<8x32xf32>
    %1229 = arith.index_cast %1169 : i32 to index
    %c0_306 = arith.constant 0 : index
    %1230 = vector.load %arg31[%1229, %c0_306] : memref<64x32xf32, #tpu.memory_space<vmem>>, vector<8x32xf32>
    tpu.vector_store %arg31[%1229, %c0_306], %1200 {strides = array<i32>} : memref<64x32xf32, #tpu.memory_space<vmem>>, vector<8x32xf32>,
    %1231 = arith.index_cast %1172 : i32 to index
    %c0_307 = arith.constant 0 : index
    %1232 = vector.load %arg32[%1231, %c0_307] : memref<64x32xf32, #tpu.memory_space<vmem>>, vector<8x32xf32>
    tpu.vector_store %arg32[%1231, %c0_307], %1228 {strides = array<i32>} : memref<64x32xf32, #tpu.memory_space<vmem>>, vector<8x32xf32>,
    %c8_i32_308 = arith.constant 8 : i32
    %c0_309 = arith.constant 0 : index
    %c0_310 = arith.constant 0 : index
    %1233 = vector.load %arg31[%c0_309, %c0_310] : memref<64x32xf32, #tpu.memory_space<vmem>>, vector<64x32xf32>
    %c0_311 = arith.constant 0 : index
    %c0_312 = arith.constant 0 : index
    %1234 = vector.load %arg32[%c0_311, %c0_312] : memref<64x32xf32, #tpu.memory_space<vmem>>, vector<64x32xf32>
    %1235 = arith.addf %1233, %1234 : vector<64x32xf32>
    %cst_313 = arith.constant dense<0.000000e+00> : vector<64xf32>
    %1236 = vector.multi_reduction <add>, %1235, %cst_313 [1] : vector<64x32xf32> to vector<64xf32>
    %1237 = vector.shape_cast %1236 : vector<64xf32> to vector<64x1xf32>
    %cst_314 = arith.constant 3.200000e+01 : f32
    %1238 = vector.broadcast %cst_314 : f32 to vector<64x1xf32>
    %1239 = arith.divf %1237, %1238 : vector<64x1xf32>
    %1240 = vector.broadcast %1239 : vector<64x1xf32> to vector<64x32xf32>
    %1241 = arith.subf %1235, %1240 : vector<64x32xf32>
    %1242 = arith.mulf %1241, %1241 : vector<64x32xf32>
    %cst_315 = arith.constant dense<0.000000e+00> : vector<64xf32>
    %1243 = vector.multi_reduction <add>, %1242, %cst_315 [1] : vector<64x32xf32> to vector<64xf32>
    %1244 = vector.shape_cast %1243 : vector<64xf32> to vector<64x1xf32>
    %cst_316 = arith.constant 3.200000e+01 : f32
    %1245 = vector.broadcast %cst_316 : f32 to vector<64x1xf32>
    %1246 = arith.divf %1244, %1245 : vector<64x1xf32>
    %1247 = vector.broadcast %1239 : vector<64x1xf32> to vector<64x32xf32>
    %1248 = arith.subf %1235, %1247 : vector<64x32xf32>
    %cst_317 = arith.constant 9.99999974E-6 : f32
    %1249 = vector.broadcast %cst_317 : f32 to vector<64x1xf32>
    %1250 = arith.addf %1246, %1249 : vector<64x1xf32>
    %1251 = math.rsqrt %1250 : vector<64x1xf32>
    %1252 = vector.broadcast %1251 : vector<64x1xf32> to vector<64x32xf32>
    %1253 = arith.mulf %1248, %1252 : vector<64x32xf32>
    %c0_318 = arith.constant 0 : index
    %c0_319 = arith.constant 0 : index
    %1254 = vector.load %arg22[%c0_318, %c0_319] : memref<1x32xf32, #tpu.memory_space<vmem>>, vector<1x32xf32>
    %1255 = vector.broadcast %1254 : vector<1x32xf32> to vector<64x32xf32>
    %1256 = arith.mulf %1253, %1255 : vector<64x32xf32>
    %c0_320 = arith.constant 0 : index
    %c0_321 = arith.constant 0 : index
    %1257 = vector.load %arg23[%c0_320, %c0_321] : memref<1x32xf32, #tpu.memory_space<vmem>>, vector<1x32xf32>
    %1258 = vector.broadcast %1257 : vector<1x32xf32> to vector<64x32xf32>
    %1259 = arith.addf %1256, %1258 : vector<64x32xf32>
    %1260 = arith.truncf %1259 : vector<64x32xf32> to vector<64x32xbf16>
    %c0_322 = arith.constant 0 : index
    %c0_323 = arith.constant 0 : index
    %1261 = vector.load %arg24[%c0_322, %c0_323] : memref<32x16xbf16, #tpu.memory_space<vmem>>, vector<32x16xbf16>
    %cst_324 = arith.constant dense<0.000000e+00> : vector<64x16xf32>
    %1262 = tpu.matmul %1260, %1261, %cst_324 {dimension_numbers = #tpu.dot_dimension_numbers<[1], [0], [0], [1], [0, 0, 1, 1], [], []>} : vector<64x32xbf16>, vector<32x16xbf16>, vector<64x16xf32> -> vector<64x16xf32>
    %c0_325 = arith.constant 0 : index
    %c0_326 = arith.constant 0 : index
    %1263 = vector.load %arg25[%c0_325, %c0_326] : memref<1x16xf32, #tpu.memory_space<vmem>>, vector<1x16xf32>
    %1264 = vector.broadcast %1263 : vector<1x16xf32> to vector<64x16xf32>
    %1265 = arith.addf %1262, %1264 : vector<64x16xf32>
    %c0_327 = arith.constant 0 : index
    %c0_328 = arith.constant 0 : index
    %1266 = vector.load %arg26[%c0_327, %c0_328] : memref<32x16xbf16, #tpu.memory_space<vmem>>, vector<32x16xbf16>
    %cst_329 = arith.constant dense<0.000000e+00> : vector<64x16xf32>
    %1267 = tpu.matmul %1260, %1266, %cst_329 {dimension_numbers = #tpu.dot_dimension_numbers<[1], [0], [0], [1], [0, 0, 1, 1], [], []>} : vector<64x32xbf16>, vector<32x16xbf16>, vector<64x16xf32> -> vector<64x16xf32>
    %c0_330 = arith.constant 0 : index
    %c0_331 = arith.constant 0 : index
    %1268 = vector.load %arg27[%c0_330, %c0_331] : memref<1x16xf32, #tpu.memory_space<vmem>>, vector<1x16xf32>
    %1269 = vector.broadcast %1268 : vector<1x16xf32> to vector<64x16xf32>
    %1270 = arith.addf %1267, %1269 : vector<64x16xf32>
    %c0_332 = arith.constant 0 : index
    %c0_333 = arith.constant 0 : index
    %c0_334 = arith.constant 0 : index
    %1271 = vector.load %arg2[%c0_332, %c0_333, %c0_334] : memref<8x8x16xf32, #tpu.memory_space<vmem>>, vector<8x8x16xf32>
    %1272 = vector.shape_cast %1271 : vector<8x8x16xf32> to vector<64x16xf32>
    %cst_335 = arith.constant 5.000000e-01 : f32
    %1273 = vector.broadcast %cst_335 : f32 to vector<64x16xf32>
    %1274 = arith.mulf %1270, %1273 : vector<64x16xf32>
    %1275 = math.exp %1274 : vector<64x16xf32>
    %1276 = arith.mulf %1275, %1272 : vector<64x16xf32>
    %1277 = arith.addf %1265, %1276 : vector<64x16xf32>
    %c0_336 = arith.constant 0 : index
    %c0_337 = arith.constant 0 : index
    %c0_338 = arith.constant 0 : index
    %1278 = vector.load %arg3[%c0_336, %c0_337, %c0_338] : memref<8x8x1xf32, #tpu.memory_space<vmem>>, vector<8x8x1xf32>
    %1279 = vector.shape_cast %1278 : vector<8x8x1xf32> to vector<64x1xf32>
    %1280 = vector.broadcast %1279 : vector<64x1xf32> to vector<64x16xf32>
    %1281 = arith.mulf %1277, %1280 : vector<64x16xf32>
    %1282 = vector.shape_cast %1281 : vector<64x16xf32> to vector<8x8x16xf32>
    %c0_339 = arith.constant 0 : index
    %c0_340 = arith.constant 0 : index
    %c0_341 = arith.constant 0 : index
    %1283 = vector.load %arg28[%c0_339, %c0_340, %c0_341] : memref<8x8x16xf32, #tpu.memory_space<vmem>>, vector<8x8x16xf32>
    tpu.vector_store %arg28[%c0_339, %c0_340, %c0_341], %1282 {strides = array<i32>} : memref<8x8x16xf32, #tpu.memory_space<vmem>>, vector<8x8x16xf32>,
    return
  }
  func.func @transform_0(%arg0: i32) -> (i32, i32, i32) {
    %c0_i32 = arith.constant 0 : i32
    %c0_i32_0 = arith.constant 0 : i32
    %c0_i32_1 = arith.constant 0 : i32
    return %c0_i32, %arg0, %c0_i32_0 : i32, i32, i32
  }
  func.func @transform_1(%arg0: i32) -> (i32, i32, i32) {
    %c0_i32 = arith.constant 0 : i32
    %c0_i32_0 = arith.constant 0 : i32
    %c0_i32_1 = arith.constant 0 : i32
    return %c0_i32, %arg0, %c0_i32_0 : i32, i32, i32
  }
  func.func @transform_2(%arg0: i32) -> (i32, i32, i32) {
    %c0_i32 = arith.constant 0 : i32
    %c0_i32_0 = arith.constant 0 : i32
    %c0_i32_1 = arith.constant 0 : i32
    return %c0_i32, %arg0, %c0_i32_0 : i32, i32, i32
  }
  func.func @transform_3(%arg0: i32) -> (i32, i32) {
    %c0_i32 = arith.constant 0 : i32
    %c0_i32_0 = arith.constant 0 : i32
    %c0_i32_1 = arith.constant 0 : i32
    return %c0_i32, %c0_i32_0 : i32, i32
  }
  func.func @transform_4(%arg0: i32) -> (i32, i32) {
    %c0_i32 = arith.constant 0 : i32
    %c0_i32_0 = arith.constant 0 : i32
    %c0_i32_1 = arith.constant 0 : i32
    return %c0_i32, %c0_i32_0 : i32, i32
  }
  func.func @transform_5(%arg0: i32) -> (i32, i32) {
    %c0_i32 = arith.constant 0 : i32
    %c0_i32_0 = arith.constant 0 : i32
    %c0_i32_1 = arith.constant 0 : i32
    return %c0_i32, %c0_i32_0 : i32, i32
  }
  func.func @transform_6(%arg0: i32) -> (i32, i32) {
    %c0_i32 = arith.constant 0 : i32
    %c0_i32_0 = arith.constant 0 : i32
    %c0_i32_1 = arith.constant 0 : i32
    return %c0_i32, %c0_i32_0 : i32, i32
  }
  func.func @transform_7(%arg0: i32) -> (i32, i32) {
    %c0_i32 = arith.constant 0 : i32
    %c0_i32_0 = arith.constant 0 : i32
    %c0_i32_1 = arith.constant 0 : i32
    return %c0_i32, %c0_i32_0 : i32, i32
  }
  func.func @transform_8(%arg0: i32) -> (i32, i32) {
    %c0_i32 = arith.constant 0 : i32
    %c0_i32_0 = arith.constant 0 : i32
    %c0_i32_1 = arith.constant 0 : i32
    return %c0_i32, %c0_i32_0 : i32, i32
  }
  func.func @transform_9(%arg0: i32) -> (i32, i32) {
    %c0_i32 = arith.constant 0 : i32
    %c0_i32_0 = arith.constant 0 : i32
    %c0_i32_1 = arith.constant 0 : i32
    return %c0_i32, %c0_i32_0 : i32, i32
  }
  func.func @transform_10(%arg0: i32) -> (i32, i32) {
    %c0_i32 = arith.constant 0 : i32
    %c0_i32_0 = arith.constant 0 : i32
    %c0_i32_1 = arith.constant 0 : i32
    return %c0_i32, %c0_i32_0 : i32, i32
  }
  func.func @transform_11(%arg0: i32) -> (i32, i32) {
    %c0_i32 = arith.constant 0 : i32
    %c0_i32_0 = arith.constant 0 : i32
    %c0_i32_1 = arith.constant 0 : i32
    return %c0_i32, %c0_i32_0 : i32, i32
  }
  func.func @transform_12(%arg0: i32) -> (i32, i32) {
    %c0_i32 = arith.constant 0 : i32
    %c0_i32_0 = arith.constant 0 : i32
    %c0_i32_1 = arith.constant 0 : i32
    return %c0_i32, %c0_i32_0 : i32, i32
  }
  func.func @transform_13(%arg0: i32) -> (i32, i32) {
    %c0_i32 = arith.constant 0 : i32
    %c0_i32_0 = arith.constant 0 : i32
    %c0_i32_1 = arith.constant 0 : i32
    return %c0_i32, %c0_i32_0 : i32, i32
  }
  func.func @transform_14(%arg0: i32) -> (i32, i32) {
    %c0_i32 = arith.constant 0 : i32
    %c0_i32_0 = arith.constant 0 : i32
    %c0_i32_1 = arith.constant 0 : i32
    return %c0_i32, %c0_i32_0 : i32, i32
  }
  func.func @transform_15(%arg0: i32) -> (i32, i32) {
    %c0_i32 = arith.constant 0 : i32
    %c0_i32_0 = arith.constant 0 : i32
    %c0_i32_1 = arith.constant 0 : i32
    return %c0_i32, %c0_i32_0 : i32, i32
  }
  func.func @transform_16(%arg0: i32) -> (i32, i32) {
    %c0_i32 = arith.constant 0 : i32
    %c0_i32_0 = arith.constant 0 : i32
    %c0_i32_1 = arith.constant 0 : i32
    return %c0_i32, %c0_i32_0 : i32, i32
  }
  func.func @transform_17(%arg0: i32) -> (i32, i32) {
    %c0_i32 = arith.constant 0 : i32
    %c0_i32_0 = arith.constant 0 : i32
    %c0_i32_1 = arith.constant 0 : i32
    return %c0_i32, %c0_i32_0 : i32, i32
  }
  func.func @transform_18(%arg0: i32) -> (i32, i32) {
    %c0_i32 = arith.constant 0 : i32
    %c0_i32_0 = arith.constant 0 : i32
    %c0_i32_1 = arith.constant 0 : i32
    return %c0_i32, %c0_i32_0 : i32, i32
  }
  func.func @transform_19(%arg0: i32) -> (i32, i32) {
    %c0_i32 = arith.constant 0 : i32
    %c0_i32_0 = arith.constant 0 : i32
    %c0_i32_1 = arith.constant 0 : i32
    return %c0_i32, %c0_i32_0 : i32, i32
  }
  func.func @transform_20(%arg0: i32) -> (i32, i32) {
    %c0_i32 = arith.constant 0 : i32
    %c0_i32_0 = arith.constant 0 : i32
    %c0_i32_1 = arith.constant 0 : i32
    return %c0_i32, %c0_i32_0 : i32, i32
  }
  func.func @transform_21(%arg0: i32) -> (i32, i32) {
    %c0_i32 = arith.constant 0 : i32
    %c0_i32_0 = arith.constant 0 : i32
    %c0_i32_1 = arith.constant 0 : i32
    return %c0_i32, %c0_i32_0 : i32, i32
  }
  func.func @transform_22(%arg0: i32) -> (i32, i32) {
    %c0_i32 = arith.constant 0 : i32
    %c0_i32_0 = arith.constant 0 : i32
    %c0_i32_1 = arith.constant 0 : i32
    return %c0_i32, %c0_i32_0 : i32, i32
  }
  func.func @transform_23(%arg0: i32) -> (i32, i32) {
    %c0_i32 = arith.constant 0 : i32
    %c0_i32_0 = arith.constant 0 : i32
    %c0_i32_1 = arith.constant 0 : i32
    return %c0_i32, %c0_i32_0 : i32, i32
  }
  func.func @transform_24(%arg0: i32) -> (i32, i32) {
    %c0_i32 = arith.constant 0 : i32
    %c0_i32_0 = arith.constant 0 : i32
    %c0_i32_1 = arith.constant 0 : i32
    return %c0_i32, %c0_i32_0 : i32, i32
  }
  func.func @transform_25(%arg0: i32) -> (i32, i32) {
    %c0_i32 = arith.constant 0 : i32
    %c0_i32_0 = arith.constant 0 : i32
    %c0_i32_1 = arith.constant 0 : i32
    return %c0_i32, %c0_i32_0 : i32, i32
  }
  func.func @transform_26(%arg0: i32) -> (i32, i32) {
    %c0_i32 = arith.constant 0 : i32
    %c0_i32_0 = arith.constant 0 : i32
    %c0_i32_1 = arith.constant 0 : i32
    return %c0_i32, %c0_i32_0 : i32, i32
  }
  func.func @transform_27(%arg0: i32) -> (i32, i32, i32) {
    %c0_i32 = arith.constant 0 : i32
    %c0_i32_0 = arith.constant 0 : i32
    %c0_i32_1 = arith.constant 0 : i32
    return %c0_i32, %arg0, %c0_i32_0 : i32, i32, i32
  }
}

</mosaic_0001>

<llo_original>
// kernel: tpu_custom_call.1
$region0: #{tpu_custom_call.1}
  #allocation0 [shape = 'u32[]', space=smem, size = 0x4, offset = 0x4, fixed_abs, tag = 'smem constant byte address 0x4 - core index']
  #allocation1 [shape = 'u32[144,128]{1,0:T(1,128)}', space=vmem, size = 0x12000, scoped, tag = 'internal scratch']
  #allocation2 [shape = 'f32[64,96]{1,0:T(8,128)}', space=vmem, size = 0x8000, scoped, tag = 'scratch operand']
  #allocation3 [shape = 'f32[64,96]{1,0:T(8,128)}', space=vmem, size = 0x8000, scoped, tag = 'scratch operand']
  #allocation4 [shape = 'f32[64,32]{1,0:T(8,128)}', space=vmem, size = 0x8000, scoped, tag = 'scratch operand']
  #allocation5 [shape = 'f32[64,32]{1,0:T(8,128)}', space=vmem, size = 0x8000, scoped, tag = 'scratch operand']
  %s0 = inlined_call_operand.vmem [shape: f32[8,8,16], index: 0, kind: input, shape index: {}]
  %s1 = inlined_call_operand.hbm [shape: f32[8,8,16], index: 1, kind: input, shape index: {}]
  %s2 = inlined_call_operand.vmem [shape: f32[8,8,1], index: 2, kind: input, shape index: {}]
  %s3 = inlined_call_operand.hbm [shape: bf16[16,96], index: 3, kind: input, shape index: {}]
  %s4 = inlined_call_operand.hbm [shape: bf16[16,96], index: 4, kind: input, shape index: {}]
  %s5 = inlined_call_operand.hbm [shape: f32[1,96], index: 5, kind: input, shape index: {}]
  %s6 = inlined_call_operand.hbm [shape: f32[1,96], index: 6, kind: input, shape index: {}]
  %s7 = inlined_call_operand.vmem [shape: bf16[32,96], index: 7, kind: input, shape index: {}]
  %s8 = inlined_call_operand.vmem [shape: bf16[32,96], index: 8, kind: input, shape index: {}]
  %s9 = inlined_call_operand.hbm [shape: f32[1,96], index: 9, kind: input, shape index: {}]
  %s10 = inlined_call_operand.hbm [shape: f32[1,96], index: 10, kind: input, shape index: {}]
  %s11 = inlined_call_operand.hbm [shape: f32[1,32], index: 11, kind: input, shape index: {}]
  %s12 = inlined_call_operand.hbm [shape: f32[1,32], index: 12, kind: input, shape index: {}]
  %s13 = inlined_call_operand.vmem [shape: bf16[32,96], index: 13, kind: input, shape index: {}]
  %s14 = inlined_call_operand.vmem [shape: bf16[32,96], index: 14, kind: input, shape index: {}]
  %s15 = inlined_call_operand.hbm [shape: f32[1,96], index: 15, kind: input, shape index: {}]
  %s16 = inlined_call_operand.hbm [shape: f32[1,96], index: 16, kind: input, shape index: {}]
  %s17 = inlined_call_operand.vmem [shape: bf16[32,96], index: 17, kind: input, shape index: {}]
  %s18 = inlined_call_operand.hbm [shape: bf16[32,96], index: 18, kind: input, shape index: {}]
  %s19 = inlined_call_operand.hbm [shape: f32[1,96], index: 19, kind: input, shape index: {}]
  %s20 = inlined_call_operand.hbm [shape: f32[1,96], index: 20, kind: input, shape index: {}]
  %s21 = inlined_call_operand.hbm [shape: f32[1,32], index: 21, kind: input, shape index: {}]
  %s22 = inlined_call_operand.hbm [shape: f32[1,32], index: 22, kind: input, shape index: {}]
  %s23 = inlined_call_operand.vmem [shape: bf16[32,16], index: 23, kind: input, shape index: {}]
  %s24 = inlined_call_operand.vmem [shape: f32[1,16], index: 24, kind: input, shape index: {}]
  %s25 = inlined_call_operand.vmem [shape: bf16[32,16], index: 25, kind: input, shape index: {}]
  %s26 = inlined_call_operand.vmem [shape: f32[1,16], index: 26, kind: input, shape index: {}]
  %s27 = inlined_call_operand.hbm [shape: f32[8,8,16], index: 27, kind: output, shape index: {}]
  %s28 = sld [smem:[#allocation0]]
  $region182: #{tpu_custom_call.1} parent=0
    _
  %s30 = ssub.s32 1, %s28
  %s31 = scalar_select 0, %s30, %s28
  $region1: #{tpu_custom_call.1} parent=0
    #allocation6 [shape = 'u8[32768]{0}', space=vmem, size = 0x8000, scoped, tag = 'input window, operand 1, single buffered']
    #allocation7 [shape = 's32[1]{0}', space=sflag, size = 0x4, scoped, tag = 'scoped memory for tpu_custom_call.1']
    #allocation8 [shape = 's32[1]{0}', space=sflag, size = 0x4, scoped, tag = 'scoped memory for tpu_custom_call.1']
    #allocation9 [shape = 'u8[4096]{0}', space=vmem, size = 0x1000, scoped, tag = 'input window, operand 3, single buffered']
    #allocation10 [shape = 's32[1]{0}', space=sflag, size = 0x4, scoped, tag = 'scoped memory for tpu_custom_call.1']
    #allocation11 [shape = 'u8[4096]{0}', space=vmem, size = 0x1000, scoped, tag = 'input window, operand 4, single buffered']
    #allocation12 [shape = 'u8[512]{0}', space=vmem, size = 0x400, scoped, tag = 'input window, operand 5, single buffered']
    #allocation13 [shape = 's32[1]{0}', space=sflag, size = 0x4, scoped, tag = 'scoped memory for tpu_custom_call.1']
    #allocation14 [shape = 'u8[512]{0}', space=vmem, size = 0x400, scoped, tag = 'input window, operand 6, single buffered']
    #allocation15 [shape = 'u8[512]{0}', space=vmem, size = 0x400, scoped, tag = 'input window, operand 9, single buffered']
    #allocation16 [shape = 's32[1]{0}', space=sflag, size = 0x4, scoped, tag = 'scoped memory for tpu_custom_call.1']
    #allocation17 [shape = 'u8[512]{0}', space=vmem, size = 0x400, scoped, tag = 'input window, operand 10, single buffered']
    #allocation18 [shape = 'u8[512]{0}', space=vmem, size = 0x400, scoped, tag = 'input window, operand 11, single buffered']
    #allocation19 [shape = 's32[1]{0}', space=sflag, size = 0x4, scoped, tag = 'scoped memory for tpu_custom_call.1']
    #allocation20 [shape = 'u8[512]{0}', space=vmem, size = 0x400, scoped, tag = 'input window, operand 12, single buffered']
    #allocation21 [shape = 'u8[512]{0}', space=vmem, size = 0x400, scoped, tag = 'input window, operand 15, single buffered']
    #allocation22 [shape = 's32[1]{0}', space=sflag, size = 0x4, scoped, tag = 'scoped memory for tpu_custom_call.1']
    #allocation23 [shape = 'u8[512]{0}', space=vmem, size = 0x400, scoped, tag = 'input window, operand 16, single buffered']
    #allocation24 [shape = 'u8[8192]{0}', space=vmem, size = 0x2000, scoped, tag = 'input window, operand 18, single buffered']
    #allocation25 [shape = 's32[1]{0}', space=sflag, size = 0x4, scoped, tag = 'scoped memory for tpu_custom_call.1']
    #allocation26 [shape = 'u8[512]{0}', space=vmem, size = 0x400, scoped, tag = 'input window, operand 19, single buffered']
    #allocation27 [shape = 'u8[512]{0}', space=vmem, size = 0x400, scoped, tag = 'input window, operand 20, single buffered']
    #allocation28 [shape = 's32[1]{0}', space=sflag, size = 0x4, scoped, tag = 'scoped memory for tpu_custom_call.1']
    #allocation29 [shape = 'u8[512]{0}', space=vmem, size = 0x400, scoped, tag = 'input window, operand 21, single buffered']
    #allocation30 [shape = 'u8[512]{0}', space=vmem, size = 0x400, scoped, tag = 'input window, operand 22, single buffered']
    #allocation31 [shape = 's32[1]{0}', space=sflag, size = 0x4, scoped, tag = 'scoped memory for tpu_custom_call.1']
    #allocation32 [shape = 'u8[32768]{0}', space=vmem, size = 0x8000, scoped, tag = 'output window, operand 0, single buffered']
    %32 = vsyncpa [#allocation7], 0
    %33 = vsyncpa [#allocation10], 0
    %34 = vsyncpa [#allocation13], 0
    %35 = vsyncpa [#allocation16], 0
    %36 = vsyncpa [#allocation19], 0
    %37 = vsyncpa [#allocation22], 0
    %38 = vsyncpa [#allocation25], 0
    %39 = vsyncpa [#allocation28], 0
    %40 = vsyncpa [#allocation31], 0
    %41 = vsyncpa [#allocation8], 0
    // Predicated region
    $region2: #{tpu_custom_call.1} parent=1 // pred_check
      _
    $region3: #{tpu_custom_call.1} parent=1 // pred_check_branch
      %43 = sbr.rel (0) target = $region5
    $region4: #{tpu_custom_call.1} parent=1 // pred_region
      _
    $region5: #{tpu_custom_call.1} parent=1 // pred_fallthru
      _
    // Predicated region
    $region6: #{tpu_custom_call.1} parent=1 // pred_check
      _
    $region7: #{tpu_custom_call.1} parent=1 // pred_check_branch
      %45 = sbr.rel (0) target = $region9
    $region8: #{tpu_custom_call.1} parent=1 // pred_region
      %s47 = ssub.s32 1024, 1024
      %48 = vsyncadd [#allocation7], %s47
      %s49 = sshll.u32 [#allocation6], 4
      %s50 = int_to_ptr.vmem [resolvable:$true] %s49
      %55 = dma.hbm_to_vmem [thread:$0]  %s1, 1024, %s50, [#allocation7], 128, 128, 8
    $region9: #{tpu_custom_call.1} parent=1 // pred_fallthru
      _
    // Predicated region
    $region10: #{tpu_custom_call.1} parent=1 // pred_check
      _
    $region11: #{tpu_custom_call.1} parent=1 // pred_check_branch
      %57 = sbr.rel (0) target = $region13
    $region12: #{tpu_custom_call.1} parent=1 // pred_region
      _
    $region13: #{tpu_custom_call.1} parent=1 // pred_fallthru
      _
    // Predicated region
    $region14: #{tpu_custom_call.1} parent=1 // pred_check
      _
    $region15: #{tpu_custom_call.1} parent=1 // pred_check_branch
      %59 = sbr.rel (0) target = $region17
    $region16: #{tpu_custom_call.1} parent=1 // pred_region
      %s61 = ssub.s32 128, 128
      %62 = vsyncadd [#allocation10], %s61
      %s63 = sshll.u32 [#allocation9], 4
      %s64 = int_to_ptr.vmem [resolvable:$true] %s63
      %69 = dma.hbm_to_vmem [thread:$0]  %s3, 128, %s64, [#allocation10], 64, 64, 4
    $region17: #{tpu_custom_call.1} parent=1 // pred_fallthru
      _
    // Predicated region
    $region18: #{tpu_custom_call.1} parent=1 // pred_check
      _
    $region19: #{tpu_custom_call.1} parent=1 // pred_check_branch
      %71 = sbr.rel (0) target = $region21
    $region20: #{tpu_custom_call.1} parent=1 // pred_region
      %s73 = ssub.s32 128, 128
      %74 = vsyncadd [#allocation10], %s73
      %s75 = sshll.u32 [#allocation11], 4
      %s76 = int_to_ptr.vmem [resolvable:$true] %s75
      %81 = dma.hbm_to_vmem [thread:$0]  %s4, 128, %s76, [#allocation10], 64, 64, 4
    $region21: #{tpu_custom_call.1} parent=1 // pred_fallthru
      _
    // Predicated region
    $region22: #{tpu_custom_call.1} parent=1 // pred_check
      _
    $region23: #{tpu_custom_call.1} parent=1 // pred_check_branch
      %83 = sbr.rel (0) target = $region25
    $region24: #{tpu_custom_call.1} parent=1 // pred_region
      %s85 = ssub.s32 16, 16
      %86 = vsyncadd [#allocation13], %s85
      %s88 = sshll.u32 [#allocation12], 4
      %s89 = int_to_ptr.vmem [resolvable:$true] %s88
      %91 = dma.hbm_to_vmem [thread:$0]  %s5, 16, %s89, [#allocation13]
    $region25: #{tpu_custom_call.1} parent=1 // pred_fallthru
      _
    // Predicated region
    $region26: #{tpu_custom_call.1} parent=1 // pred_check
      _
    $region27: #{tpu_custom_call.1} parent=1 // pred_check_branch
      %93 = sbr.rel (0) target = $region29
    $region28: #{tpu_custom_call.1} parent=1 // pred_region
      %s95 = ssub.s32 16, 16
      %96 = vsyncadd [#allocation13], %s95
      %s98 = sshll.u32 [#allocation14], 4
      %s99 = int_to_ptr.vmem [resolvable:$true] %s98
      %101 = dma.hbm_to_vmem [thread:$0]  %s6, 16, %s99, [#allocation13]
    $region29: #{tpu_custom_call.1} parent=1 // pred_fallthru
      _
    // Predicated region
    $region30: #{tpu_custom_call.1} parent=1 // pred_check
      _
    $region31: #{tpu_custom_call.1} parent=1 // pred_check_branch
      %103 = sbr.rel (0) target = $region33
    $region32: #{tpu_custom_call.1} parent=1 // pred_region
      _
    $region33: #{tpu_custom_call.1} parent=1 // pred_fallthru
      _
    // Predicated region
    $region34: #{tpu_custom_call.1} parent=1 // pred_check
      _
    $region35: #{tpu_custom_call.1} parent=1 // pred_check_branch
      %105 = sbr.rel (0) target = $region37
    $region36: #{tpu_custom_call.1} parent=1 // pred_region
      _
    $region37: #{tpu_custom_call.1} parent=1 // pred_fallthru
      _
    // Predicated region
    $region38: #{tpu_custom_call.1} parent=1 // pred_check
      _
    $region39: #{tpu_custom_call.1} parent=1 // pred_check_branch
      %107 = sbr.rel (0) target = $region41
    $region40: #{tpu_custom_call.1} parent=1 // pred_region
      %s109 = ssub.s32 16, 16
      %110 = vsyncadd [#allocation16], %s109
      %s112 = sshll.u32 [#allocation15], 4
      %s113 = int_to_ptr.vmem [resolvable:$true] %s112
      %115 = dma.hbm_to_vmem [thread:$0]  %s9, 16, %s113, [#allocation16]
    $region41: #{tpu_custom_call.1} parent=1 // pred_fallthru
      _
    // Predicated region
    $region42: #{tpu_custom_call.1} parent=1 // pred_check
      _
    $region43: #{tpu_custom_call.1} parent=1 // pred_check_branch
      %117 = sbr.rel (0) target = $region45
    $region44: #{tpu_custom_call.1} parent=1 // pred_region
      %s119 = ssub.s32 16, 16
      %120 = vsyncadd [#allocation16], %s119
      %s122 = sshll.u32 [#allocation17], 4
      %s123 = int_to_ptr.vmem [resolvable:$true] %s122
      %125 = dma.hbm_to_vmem [thread:$0]  %s10, 16, %s123, [#allocation16]
    $region45: #{tpu_custom_call.1} parent=1 // pred_fallthru
      _
    // Predicated region
    $region46: #{tpu_custom_call.1} parent=1 // pred_check
      _
    $region47: #{tpu_custom_call.1} parent=1 // pred_check_branch
      %127 = sbr.rel (0) target = $region49
    $region48: #{tpu_custom_call.1} parent=1 // pred_region
      %s129 = ssub.s32 16, 16
      %130 = vsyncadd [#allocation19], %s129
      %s132 = sshll.u32 [#allocation18], 4
      %s133 = int_to_ptr.vmem [resolvable:$true] %s132
      %135 = dma.hbm_to_vmem [thread:$0]  %s11, 16, %s133, [#allocation19]
    $region49: #{tpu_custom_call.1} parent=1 // pred_fallthru
      _
    // Predicated region
    $region50: #{tpu_custom_call.1} parent=1 // pred_check
      _
    $region51: #{tpu_custom_call.1} parent=1 // pred_check_branch
      %137 = sbr.rel (0) target = $region53
    $region52: #{tpu_custom_call.1} parent=1 // pred_region
      %s139 = ssub.s32 16, 16
      %140 = vsyncadd [#allocation19], %s139
      %s142 = sshll.u32 [#allocation20], 4
      %s143 = int_to_ptr.vmem [resolvable:$true] %s142
      %145 = dma.hbm_to_vmem [thread:$0]  %s12, 16, %s143, [#allocation19]
    $region53: #{tpu_custom_call.1} parent=1 // pred_fallthru
      _
    // Predicated region
    $region54: #{tpu_custom_call.1} parent=1 // pred_check
      _
    $region55: #{tpu_custom_call.1} parent=1 // pred_check_branch
      %147 = sbr.rel (0) target = $region57
    $region56: #{tpu_custom_call.1} parent=1 // pred_region
      _
    $region57: #{tpu_custom_call.1} parent=1 // pred_fallthru
      _
    // Predicated region
    $region58: #{tpu_custom_call.1} parent=1 // pred_check
      _
    $region59: #{tpu_custom_call.1} parent=1 // pred_check_branch
      %149 = sbr.rel (0) target = $region61
    $region60: #{tpu_custom_call.1} parent=1 // pred_region
      _
    $region61: #{tpu_custom_call.1} parent=1 // pred_fallthru
      _
    // Predicated region
    $region62: #{tpu_custom_call.1} parent=1 // pred_check
      _
    $region63: #{tpu_custom_call.1} parent=1 // pred_check_branch
      %151 = sbr.rel (0) target = $region65
    $region64: #{tpu_custom_call.1} parent=1 // pred_region
      %s153 = ssub.s32 16, 16
      %154 = vsyncadd [#allocation22], %s153
      %s156 = sshll.u32 [#allocation21], 4
      %s157 = int_to_ptr.vmem [resolvable:$true] %s156
      %159 = dma.hbm_to_vmem [thread:$0]  %s15, 16, %s157, [#allocation22]
    $region65: #{tpu_custom_call.1} parent=1 // pred_fallthru
      _
    // Predicated region
    $region66: #{tpu_custom_call.1} parent=1 // pred_check
      _
    $region67: #{tpu_custom_call.1} parent=1 // pred_check_branch
      %161 = sbr.rel (0) target = $region69
    $region68: #{tpu_custom_call.1} parent=1 // pred_region
      %s163 = ssub.s32 16, 16
      %164 = vsyncadd [#allocation22], %s163
      %s166 = sshll.u32 [#allocation23], 4
      %s167 = int_to_ptr.vmem [resolvable:$true] %s166
      %169 = dma.hbm_to_vmem [thread:$0]  %s16, 16, %s167, [#allocation22]
    $region69: #{tpu_custom_call.1} parent=1 // pred_fallthru
      _
    // Predicated region
    $region70: #{tpu_custom_call.1} parent=1 // pred_check
      _
    $region71: #{tpu_custom_call.1} parent=1 // pred_check_branch
      %171 = sbr.rel (0) target = $region73
    $region72: #{tpu_custom_call.1} parent=1 // pred_region
      _
    $region73: #{tpu_custom_call.1} parent=1 // pred_fallthru
      _
    // Predicated region
    $region74: #{tpu_custom_call.1} parent=1 // pred_check
      _
    $region75: #{tpu_custom_call.1} parent=1 // pred_check_branch
      %173 = sbr.rel (0) target = $region77
    $region76: #{tpu_custom_call.1} parent=1 // pred_region
      %s175 = ssub.s32 256, 256
      %176 = vsyncadd [#allocation25], %s175
      %s177 = sshll.u32 [#allocation24], 4
      %s178 = int_to_ptr.vmem [resolvable:$true] %s177
      %183 = dma.hbm_to_vmem [thread:$0]  %s18, 256, %s178, [#allocation25], 64, 64, 4
    $region77: #{tpu_custom_call.1} parent=1 // pred_fallthru
      _
    // Predicated region
    $region78: #{tpu_custom_call.1} parent=1 // pred_check
      _
    $region79: #{tpu_custom_call.1} parent=1 // pred_check_branch
      %185 = sbr.rel (0) target = $region81
    $region80: #{tpu_custom_call.1} parent=1 // pred_region
      %s187 = ssub.s32 16, 16
      %188 = vsyncadd [#allocation25], %s187
      %s190 = sshll.u32 [#allocation26], 4
      %s191 = int_to_ptr.vmem [resolvable:$true] %s190
      %193 = dma.hbm_to_vmem [thread:$0]  %s19, 16, %s191, [#allocation25]
    $region81: #{tpu_custom_call.1} parent=1 // pred_fallthru
      _
    // Predicated region
    $region82: #{tpu_custom_call.1} parent=1 // pred_check
      _
    $region83: #{tpu_custom_call.1} parent=1 // pred_check_branch
      %195 = sbr.rel (0) target = $region85
    $region84: #{tpu_custom_call.1} parent=1 // pred_region
      %s197 = ssub.s32 16, 16
      %198 = vsyncadd [#allocation28], %s197
      %s200 = sshll.u32 [#allocation27], 4
      %s201 = int_to_ptr.vmem [resolvable:$true] %s200
      %203 = dma.hbm_to_vmem [thread:$0]  %s20, 16, %s201, [#allocation28]
    $region85: #{tpu_custom_call.1} parent=1 // pred_fallthru
      _
    // Predicated region
    $region86: #{tpu_custom_call.1} parent=1 // pred_check
      _
    $region87: #{tpu_custom_call.1} parent=1 // pred_check_branch
      %205 = sbr.rel (0) target = $region89
    $region88: #{tpu_custom_call.1} parent=1 // pred_region
      %s207 = ssub.s32 16, 16
      %208 = vsyncadd [#allocation28], %s207
      %s210 = sshll.u32 [#allocation29], 4
      %s211 = int_to_ptr.vmem [resolvable:$true] %s210
      %213 = dma.hbm_to_vmem [thread:$0]  %s21, 16, %s211, [#allocation28]
    $region89: #{tpu_custom_call.1} parent=1 // pred_fallthru
      _
    // Predicated region
    $region90: #{tpu_custom_call.1} parent=1 // pred_check
      _
    $region91: #{tpu_custom_call.1} parent=1 // pred_check_branch
      %215 = sbr.rel (0) target = $region93
    $region92: #{tpu_custom_call.1} parent=1 // pred_region
      %s217 = ssub.s32 16, 16
      %218 = vsyncadd [#allocation31], %s217
      %s220 = sshll.u32 [#allocation30], 4
      %s221 = int_to_ptr.vmem [resolvable:$true] %s220
      %223 = dma.hbm_to_vmem [thread:$0]  %s22, 16, %s221, [#allocation31]
    $region93: #{tpu_custom_call.1} parent=1 // pred_fallthru
      _
    // Predicated region
    $region94: #{tpu_custom_call.1} parent=1 // pred_check
      _
    $region95: #{tpu_custom_call.1} parent=1 // pred_check_branch
      %225 = sbr.rel (0) target = $region97
    $region96: #{tpu_custom_call.1} parent=1 // pred_region
      _
    $region97: #{tpu_custom_call.1} parent=1 // pred_fallthru
      _
    // Predicated region
    $region98: #{tpu_custom_call.1} parent=1 // pred_check
      _
    $region99: #{tpu_custom_call.1} parent=1 // pred_check_branch
      %227 = sbr.rel (0) target = $region101
    $region100: #{tpu_custom_call.1} parent=1 // pred_region
      _
    $region101: #{tpu_custom_call.1} parent=1 // pred_fallthru
      _
    // Predicated region
    $region102: #{tpu_custom_call.1} parent=1 // pred_check
      _
    $region103: #{tpu_custom_call.1} parent=1 // pred_check_branch
      %229 = sbr.rel (0) target = $region105
    $region104: #{tpu_custom_call.1} parent=1 // pred_region
      _
    $region105: #{tpu_custom_call.1} parent=1 // pred_fallthru
      _
    // Predicated region
    $region106: #{tpu_custom_call.1} parent=1 // pred_check
      _
    $region107: #{tpu_custom_call.1} parent=1 // pred_check_branch
      %231 = sbr.rel (0) target = $region109
    $region108: #{tpu_custom_call.1} parent=1 // pred_region
      _
    $region109: #{tpu_custom_call.1} parent=1 // pred_fallthru
      _
    // Predicated region
    $region110: #{tpu_custom_call.1} parent=1 // pred_check
      _
    $region111: #{tpu_custom_call.1} parent=1 // pred_check_branch
      %233 = sbr.rel (0) target = $region113
    $region112: #{tpu_custom_call.1} parent=1 // pred_region
      %234 = dma.done [#allocation7], 1024
    $region113: #{tpu_custom_call.1} parent=1 // pred_fallthru
      _
    // Predicated region
    $region114: #{tpu_custom_call.1} parent=1 // pred_check
      _
    $region115: #{tpu_custom_call.1} parent=1 // pred_check_branch
      %236 = sbr.rel (0) target = $region117
    $region116: #{tpu_custom_call.1} parent=1 // pred_region
      %237 = dma.done [#allocation10], 128
    $region117: #{tpu_custom_call.1} parent=1 // pred_fallthru
      _
    // Predicated region
    $region118: #{tpu_custom_call.1} parent=1 // pred_check
      _
    $region119: #{tpu_custom_call.1} parent=1 // pred_check_branch
      %239 = sbr.rel (0) target = $region121
    $region120: #{tpu_custom_call.1} parent=1 // pred_region
      %240 = dma.done [#allocation10], 128
    $region121: #{tpu_custom_call.1} parent=1 // pred_fallthru
      _
    // Predicated region
    $region122: #{tpu_custom_call.1} parent=1 // pred_check
      _
    $region123: #{tpu_custom_call.1} parent=1 // pred_check_branch
      %242 = sbr.rel (0) target = $region125
    $region124: #{tpu_custom_call.1} parent=1 // pred_region
      %243 = dma.done [#allocation13], 16
    $region125: #{tpu_custom_call.1} parent=1 // pred_fallthru
      _
    // Predicated region
    $region126: #{tpu_custom_call.1} parent=1 // pred_check
      _
    $region127: #{tpu_custom_call.1} parent=1 // pred_check_branch
      %245 = sbr.rel (0) target = $region129
    $region128: #{tpu_custom_call.1} parent=1 // pred_region
      %246 = dma.done [#allocation13], 16
    $region129: #{tpu_custom_call.1} parent=1 // pred_fallthru
      _
    // Predicated region
    $region130: #{tpu_custom_call.1} parent=1 // pred_check
      _
    $region131: #{tpu_custom_call.1} parent=1 // pred_check_branch
      %248 = sbr.rel (0) target = $region133
    $region132: #{tpu_custom_call.1} parent=1 // pred_region
      %249 = dma.done [#allocation16], 16
    $region133: #{tpu_custom_call.1} parent=1 // pred_fallthru
      _
    // Predicated region
    $region134: #{tpu_custom_call.1} parent=1 // pred_check
      _
    $region135: #{tpu_custom_call.1} parent=1 // pred_check_branch
      %251 = sbr.rel (0) target = $region137
    $region136: #{tpu_custom_call.1} parent=1 // pred_region
      %252 = dma.done [#allocation16], 16
    $region137: #{tpu_custom_call.1} parent=1 // pred_fallthru
      _
    // Predicated region
    $region138: #{tpu_custom_call.1} parent=1 // pred_check
      _
    $region139: #{tpu_custom_call.1} parent=1 // pred_check_branch
      %254 = sbr.rel (0) target = $region141
    $region140: #{tpu_custom_call.1} parent=1 // pred_region
      %255 = dma.done [#allocation19], 16
    $region141: #{tpu_custom_call.1} parent=1 // pred_fallthru
      _
    // Predicated region
    $region142: #{tpu_custom_call.1} parent=1 // pred_check
      _
    $region143: #{tpu_custom_call.1} parent=1 // pred_check_branch
      %257 = sbr.rel (0) target = $region145
    $region144: #{tpu_custom_call.1} parent=1 // pred_region
      %258 = dma.done [#allocation19], 16
    $region145: #{tpu_custom_call.1} parent=1 // pred_fallthru
      _
    // Predicated region
    $region146: #{tpu_custom_call.1} parent=1 // pred_check
      _
    $region147: #{tpu_custom_call.1} parent=1 // pred_check_branch
      %260 = sbr.rel (0) target = $region149
    $region148: #{tpu_custom_call.1} parent=1 // pred_region
      %261 = dma.done [#allocation22], 16
    $region149: #{tpu_custom_call.1} parent=1 // pred_fallthru
      _
    // Predicated region
    $region150: #{tpu_custom_call.1} parent=1 // pred_check
      _
    $region151: #{tpu_custom_call.1} parent=1 // pred_check_branch
      %263 = sbr.rel (0) target = $region153
    $region152: #{tpu_custom_call.1} parent=1 // pred_region
      %264 = dma.done [#allocation22], 16
    $region153: #{tpu_custom_call.1} parent=1 // pred_fallthru
      _
    // Predicated region
    $region154: #{tpu_custom_call.1} parent=1 // pred_check
      _
    $region155: #{tpu_custom_call.1} parent=1 // pred_check_branch
      %266 = sbr.rel (0) target = $region157
    $region156: #{tpu_custom_call.1} parent=1 // pred_region
      %267 = dma.done [#allocation25], 256
    $region157: #{tpu_custom_call.1} parent=1 // pred_fallthru
      _
    // Predicated region
    $region158: #{tpu_custom_call.1} parent=1 // pred_check
      _
    $region159: #{tpu_custom_call.1} parent=1 // pred_check_branch
      %269 = sbr.rel (0) target = $region161
    $region160: #{tpu_custom_call.1} parent=1 // pred_region
      %270 = dma.done [#allocation25], 16
    $region161: #{tpu_custom_call.1} parent=1 // pred_fallthru
      _
    // Predicated region
    $region162: #{tpu_custom_call.1} parent=1 // pred_check
      _
    $region163: #{tpu_custom_call.1} parent=1 // pred_check_branch
      %272 = sbr.rel (0) target = $region165
    $region164: #{tpu_custom_call.1} parent=1 // pred_region
      %273 = dma.done [#allocation28], 16
    $region165: #{tpu_custom_call.1} parent=1 // pred_fallthru
      _
    // Predicated region
    $region166: #{tpu_custom_call.1} parent=1 // pred_check
      _
    $region167: #{tpu_custom_call.1} parent=1 // pred_check_branch
      %275 = sbr.rel (0) target = $region169
    $region168: #{tpu_custom_call.1} parent=1 // pred_region
      %276 = dma.done [#allocation28], 16
    $region169: #{tpu_custom_call.1} parent=1 // pred_fallthru
      _
    // Predicated region
    $region170: #{tpu_custom_call.1} parent=1 // pred_check
      _
    $region171: #{tpu_custom_call.1} parent=1 // pred_check_branch
      %278 = sbr.rel (0) target = $region173
    $region172: #{tpu_custom_call.1} parent=1 // pred_region
      %279 = dma.done [#allocation31], 16
    $region173: #{tpu_custom_call.1} parent=1 // pred_fallthru
      _
    %v281 = vld [vmem:[%s0] sm:$0xff]
    %v282 = vld [vmem:[%s0 + $0x8] sm:$0xff]
    %v283 = vld [vmem:[%s0 + $0x10] sm:$0xff]
    %v284 = vld [vmem:[%s0 + $0x18] sm:$0xff]
    %v285 = vld [vmem:[%s0 + $0x20] sm:$0xff]
    %v286 = vld [vmem:[%s0 + $0x28] sm:$0xff]
    %v287 = vld [vmem:[%s0 + $0x30] sm:$0xff]
    %v288 = vld [vmem:[%s0 + $0x38] sm:$0xff]
    %v289 = vpack.c.bf16 %v282, %v281
    %v290 = vpack.c.bf16 %v284, %v283
    %v291 = vpack.c.bf16 %v286, %v285
    %v292 = vpack.c.bf16 %v288, %v287
    %v293 = vld [vmem:[#allocation9] sm:$0xf]
    %v294 = vld [vmem:[#allocation9 + $0x4] sm:$0xf]
    %v295 = vld [vmem:[#allocation12] sm:$0x1]
    %v297 = vlaneseq
    %v298 = vshrl.u32 %v297, 7
    %v299 = vsub.s32 0, %v298
    %v300 = vrot.slane %v295, %v299
    %v304 = vunpack.c.l.b16 %v293
    %v305 = vunpack.c.l.b16 %v294
    %v306 = vpack.c.b16 %v305, %v304
    %vm308 = vcmask 130048
    %v310 = vsel %vm308, %v289, 0
    %v313 = vsel %vm308, %v290, 0
    %v316 = vsel %vm308, %v291, 0
    %v319 = vsel %vm308, %v292, 0
    %321 = vmatprep.subr.bf16.mxu0 0
    %322 = vmatpush1.bf16.msra.mxu0 0
    %323 = vmatprep.subr.bf16.mxu0 0
    %324 = vmatpush1.bf16.msra.mxu0 0
    %325 = vmatprep.subr.bf16.mxu0 0
    %326 = vmatpush1.bf16.msra.mxu0 0
    %327 = vmatprep.subr.bf16.mxu0 0
    %328 = vmatpush1.bf16.msra.mxu0 0
    %329 = vmatprep.subr.bf16.mxu0 0
    %330 = vmatpush1.bf16.msra.mxu0 0
    %331 = vmatprep.subr.bf16.mxu0 0
    %332 = vmatpush1.bf16.msra.mxu0 0
    %333 = vmatprep.subr.bf16.mxu0 0
    %334 = vmatpush1.bf16.msra.mxu0 0
    %335 = vmatprep.subr.bf16.mxu0 0
    %336 = vmatpush1.bf16.msra.mxu0 %v306
    %337 = vmatprep.subr.bf16.mxu0 0
    %338 = vmatpush2.bf16.msra.mxu0 0
    %339 = vmatprep.subr.bf16.mxu0 0
    %340 = vmatpush2.bf16.msra.mxu0 0
    %341 = vmatprep.subr.bf16.mxu0 0
    %342 = vmatpush2.bf16.msra.mxu0 0
    %343 = vmatprep.subr.bf16.mxu0 0
    %344 = vmatpush2.bf16.msra.mxu0 0
    %345 = vmatprep.subr.bf16.mxu0 0
    %346 = vmatpush2.bf16.msra.mxu0 0
    %347 = vmatprep.subr.bf16.mxu0 0
    %348 = vmatpush2.bf16.msra.mxu0 0
    %349 = vmatprep.subr.bf16.mxu0 0
    %350 = vmatpush2.bf16.msra.mxu0 0
    %351 = vmatprep.subr.bf16.mxu0 0
    %352 = vmatpush2.bf16.msra.mxu0 0
    %353 = vmatprep.mubr.bf16.mxu0 0
    %354 = vmatmul.mubr.bf16.gmra.mxu0 %v310
    %v355 = vpop.f32.mrf.mxu0
    %v356 = vadd.f32 %v300, %v355
    %v357 = vpop.f32.mrf.mxu0
    %v358 = vpop.f32.mrf.mxu0
    %v359 = vadd.f32 %v300, %v358
    %v360 = vpop.f32.mrf.mxu0
    %361 = vmatprep.mubr.bf16.mxu0 0
    %362 = vmatmul.mubr.bf16.gmra.mxu0 %v313
    %v363 = vpop.f32.mrf.mxu0
    %v364 = vadd.f32 %v300, %v363
    %v365 = vpop.f32.mrf.mxu0
    %v366 = vpop.f32.mrf.mxu0
    %v367 = vadd.f32 %v300, %v366
    %v368 = vpop.f32.mrf.mxu0
    %369 = vmatprep.mubr.bf16.mxu0 0
    %370 = vmatmul.mubr.bf16.gmra.mxu0 %v316
    %v371 = vpop.f32.mrf.mxu0
    %v372 = vadd.f32 %v300, %v371
    %v373 = vpop.f32.mrf.mxu0
    %v374 = vpop.f32.mrf.mxu0
    %v375 = vadd.f32 %v300, %v374
    %v376 = vpop.f32.mrf.mxu0
    %377 = vmatprep.mubr.bf16.mxu0 0
    %378 = vmatmul.mubr.bf16.gmra.mxu0 %v319
    %v379 = vpop.f32.mrf.mxu0
    %v380 = vadd.f32 %v300, %v379
    %v381 = vpop.f32.mrf.mxu0
    %v382 = vpop.f32.mrf.mxu0
    %v383 = vadd.f32 %v300, %v382
    %v384 = vpop.f32.mrf.mxu0
    %385 = vdwg.mxu0
    %vm386 = vcmask 785408
    %387 = vst.msk [vmem:[#allocation2] sm:$0xff] %vm386, %v356
    %388 = vst.msk [vmem:[#allocation2 + $0x8] sm:$0xff] %vm386, %v359
    %389 = vst.msk [vmem:[#allocation2 + $0x10] sm:$0xff] %vm386, %v364
    %390 = vst.msk [vmem:[#allocation2 + $0x18] sm:$0xff] %vm386, %v367
    %391 = vst.msk [vmem:[#allocation2 + $0x20] sm:$0xff] %vm386, %v372
    %392 = vst.msk [vmem:[#allocation2 + $0x28] sm:$0xff] %vm386, %v375
    %393 = vst.msk [vmem:[#allocation2 + $0x30] sm:$0xff] %vm386, %v380
    %394 = vst.msk [vmem:[#allocation2 + $0x38] sm:$0xff] %vm386, %v383
    %v395 = vld [vmem:[#allocation11] sm:$0xf]
    %v396 = vld [vmem:[#allocation11 + $0x4] sm:$0xf]
    %v397 = vld [vmem:[#allocation14] sm:$0x1]
    %v399 = vlaneseq
    %v400 = vshrl.u32 %v399, 7
    %v401 = vsub.s32 0, %v400
    %v402 = vrot.slane %v397, %v401
    %v406 = vunpack.c.l.b16 %v395
    %v407 = vunpack.c.l.b16 %v396
    %v408 = vpack.c.b16 %v407, %v406
    %410 = vmatprep.subr.bf16.mxu0 0
    %411 = vmatpush1.bf16.msra.mxu0 0
    %412 = vmatprep.subr.bf16.mxu0 0
    %413 = vmatpush1.bf16.msra.mxu0 0
    %414 = vmatprep.subr.bf16.mxu0 0
    %415 = vmatpush1.bf16.msra.mxu0 0
    %416 = vmatprep.subr.bf16.mxu0 0
    %417 = vmatpush1.bf16.msra.mxu0 0
    %418 = vmatprep.subr.bf16.mxu0 0
    %419 = vmatpush1.bf16.msra.mxu0 0
    %420 = vmatprep.subr.bf16.mxu0 0
    %421 = vmatpush1.bf16.msra.mxu0 0
    %422 = vmatprep.subr.bf16.mxu0 0
    %423 = vmatpush1.bf16.msra.mxu0 0
    %424 = vmatprep.subr.bf16.mxu0 0
    %425 = vmatpush1.bf16.msra.mxu0 %v408
    %426 = vmatprep.subr.bf16.mxu0 0
    %427 = vmatpush2.bf16.msra.mxu0 0
    %428 = vmatprep.subr.bf16.mxu0 0
    %429 = vmatpush2.bf16.msra.mxu0 0
    %430 = vmatprep.subr.bf16.mxu0 0
    %431 = vmatpush2.bf16.msra.mxu0 0
    %432 = vmatprep.subr.bf16.mxu0 0
    %433 = vmatpush2.bf16.msra.mxu0 0
    %434 = vmatprep.subr.bf16.mxu0 0
    %435 = vmatpush2.bf16.msra.mxu0 0
    %436 = vmatprep.subr.bf16.mxu0 0
    %437 = vmatpush2.bf16.msra.mxu0 0
    %438 = vmatprep.subr.bf16.mxu0 0
    %439 = vmatpush2.bf16.msra.mxu0 0
    %440 = vmatprep.subr.bf16.mxu0 0
    %441 = vmatpush2.bf16.msra.mxu0 0
    %442 = vmatprep.mubr.bf16.mxu0 0
    %443 = vmatmul.mubr.bf16.gmra.mxu0 %v310
    %v444 = vpop.f32.mrf.mxu0
    %v445 = vadd.f32 %v402, %v444
    %v446 = vpop.f32.mrf.mxu0
    %v447 = vpop.f32.mrf.mxu0
    %v448 = vadd.f32 %v402, %v447
    %v449 = vpop.f32.mrf.mxu0
    %450 = vmatprep.mubr.bf16.mxu0 0
    %451 = vmatmul.mubr.bf16.gmra.mxu0 %v313
    %v452 = vpop.f32.mrf.mxu0
    %v453 = vadd.f32 %v402, %v452
    %v454 = vpop.f32.mrf.mxu0
    %v455 = vpop.f32.mrf.mxu0
    %v456 = vadd.f32 %v402, %v455
    %v457 = vpop.f32.mrf.mxu0
    %458 = vmatprep.mubr.bf16.mxu0 0
    %459 = vmatmul.mubr.bf16.gmra.mxu0 %v316
    %v460 = vpop.f32.mrf.mxu0
    %v461 = vadd.f32 %v402, %v460
    %v462 = vpop.f32.mrf.mxu0
    %v463 = vpop.f32.mrf.mxu0
    %v464 = vadd.f32 %v402, %v463
    %v465 = vpop.f32.mrf.mxu0
    %466 = vmatprep.mubr.bf16.mxu0 0
    %467 = vmatmul.mubr.bf16.gmra.mxu0 %v319
    %v468 = vpop.f32.mrf.mxu0
    %v469 = vadd.f32 %v402, %v468
    %v470 = vpop.f32.mrf.mxu0
    %v471 = vpop.f32.mrf.mxu0
    %v472 = vadd.f32 %v402, %v471
    %v473 = vpop.f32.mrf.mxu0
    %474 = vdwg.mxu0
    %475 = vst.msk [vmem:[#allocation3] sm:$0xff] %vm386, %v445
    %476 = vst.msk [vmem:[#allocation3 + $0x8] sm:$0xff] %vm386, %v448
    %477 = vst.msk [vmem:[#allocation3 + $0x10] sm:$0xff] %vm386, %v453
    %478 = vst.msk [vmem:[#allocation3 + $0x18] sm:$0xff] %vm386, %v456
    %479 = vst.msk [vmem:[#allocation3 + $0x20] sm:$0xff] %vm386, %v461
    %480 = vst.msk [vmem:[#allocation3 + $0x28] sm:$0xff] %vm386, %v464
    %481 = vst.msk [vmem:[#allocation3 + $0x30] sm:$0xff] %vm386, %v469
    %482 = vst.msk [vmem:[#allocation3 + $0x38] sm:$0xff] %vm386, %v472
    %v483 = vld [vmem:[%s7] sm:$0xf]
    %v484 = vld [vmem:[%s7 + $0x4] sm:$0xf]
    %v485 = vld [vmem:[%s7 + $0x8] sm:$0xf]
    %v486 = vld [vmem:[%s7 + $0xc] sm:$0xf]
    %v487 = vld [vmem:[%s8] sm:$0xf]
    %v488 = vld [vmem:[%s8 + $0x4] sm:$0xf]
    %v489 = vld [vmem:[%s8 + $0x8] sm:$0xf]
    %v490 = vld [vmem:[%s8 + $0xc] sm:$0xf]
    %v491 = vld [vmem:[#allocation15] sm:$0x1]
    %v492 = vld [vmem:[#allocation17] sm:$0x1]
    %v494 = vlaneseq
    %v495 = vshrl.u32 %v494, 7
    %v496 = vsub.s32 0, %v495
    %v497 = vrot.slane %v491, %v496
    %v503 = vunpack.c.l.b16 %v483
    %v504 = vunpack.c.l.b16 %v484
    %v505 = vunpack.c.l.b16 %v485
    %v506 = vunpack.c.l.b16 %v486
    %v507 = vpack.c.b16 %v504, %v503
    %v508 = vpack.c.b16 %v506, %v505
    %vm511 = vcmask 261120
    %v513 = vsel %vm511, 0, 0
    %515 = vmatprep.subr.bf16.mxu0 0
    %516 = vmatpush1.bf16.msra.mxu0 0
    %517 = vmatprep.subr.bf16.mxu0 0
    %518 = vmatpush1.bf16.msra.mxu0 0
    %519 = vmatprep.subr.bf16.mxu0 0
    %520 = vmatpush1.bf16.msra.mxu0 0
    %521 = vmatprep.subr.bf16.mxu0 0
    %522 = vmatpush1.bf16.msra.mxu0 0
    %523 = vmatprep.subr.bf16.mxu0 0
    %524 = vmatpush1.bf16.msra.mxu0 0
    %525 = vmatprep.subr.bf16.mxu0 0
    %526 = vmatpush1.bf16.msra.mxu0 0
    %527 = vmatprep.subr.bf16.mxu0 0
    %528 = vmatpush1.bf16.msra.mxu0 %v508
    %529 = vmatprep.subr.bf16.mxu0 0
    %530 = vmatpush1.bf16.msra.mxu0 %v507
    %531 = vmatprep.subr.bf16.mxu0 0
    %532 = vmatpush2.bf16.msra.mxu0 0
    %533 = vmatprep.subr.bf16.mxu0 0
    %534 = vmatpush2.bf16.msra.mxu0 0
    %535 = vmatprep.subr.bf16.mxu0 0
    %536 = vmatpush2.bf16.msra.mxu0 0
    %537 = vmatprep.subr.bf16.mxu0 0
    %538 = vmatpush2.bf16.msra.mxu0 0
    %539 = vmatprep.subr.bf16.mxu0 0
    %540 = vmatpush2.bf16.msra.mxu0 0
    %541 = vmatprep.subr.bf16.mxu0 0
    %542 = vmatpush2.bf16.msra.mxu0 0
    %543 = vmatprep.subr.bf16.mxu0 0
    %544 = vmatpush2.bf16.msra.mxu0 0
    %545 = vmatprep.subr.bf16.mxu0 0
    %546 = vmatpush2.bf16.msra.mxu0 0
    %547 = vmatprep.mubr.bf16.mxu0 0
    %548 = vmatmul.mubr.bf16.gmra.mxu0 %v513
    %v549 = vpop.f32.mrf.mxu0
    %v550 = vadd.f32 %v497, %v549
    %v551 = vpop.f32.mrf.mxu0
    %v552 = vpop.f32.mrf.mxu0
    %v553 = vpop.f32.mrf.mxu0
    %554 = vdwg.mxu0
    %v556 = vlaneseq
    %v557 = vshrl.u32 %v556, 7
    %v558 = vsub.s32 0, %v557
    %v559 = vrot.slane %v492, %v558
    %v565 = vunpack.c.l.b16 %v487
    %v566 = vunpack.c.l.b16 %v488
    %v567 = vunpack.c.l.b16 %v489
    %v568 = vunpack.c.l.b16 %v490
    %v569 = vpack.c.b16 %v566, %v565
    %v570 = vpack.c.b16 %v568, %v567
    %573 = vmatprep.subr.bf16.mxu0 0
    %574 = vmatpush1.bf16.msra.mxu0 0
    %575 = vmatprep.subr.bf16.mxu0 0
    %576 = vmatpush1.bf16.msra.mxu0 0
    %577 = vmatprep.subr.bf16.mxu0 0
    %578 = vmatpush1.bf16.msra.mxu0 0
    %579 = vmatprep.subr.bf16.mxu0 0
    %580 = vmatpush1.bf16.msra.mxu0 0
    %581 = vmatprep.subr.bf16.mxu0 0
    %582 = vmatpush1.bf16.msra.mxu0 0
    %583 = vmatprep.subr.bf16.mxu0 0
    %584 = vmatpush1.bf16.msra.mxu0 0
    %585 = vmatprep.subr.bf16.mxu0 0
    %586 = vmatpush1.bf16.msra.mxu0 %v570
    %587 = vmatprep.subr.bf16.mxu0 0
    %588 = vmatpush1.bf16.msra.mxu0 %v569
    %589 = vmatprep.subr.bf16.mxu0 0
    %590 = vmatpush2.bf16.msra.mxu0 0
    %591 = vmatprep.subr.bf16.mxu0 0
    %592 = vmatpush2.bf16.msra.mxu0 0
    %593 = vmatprep.subr.bf16.mxu0 0
    %594 = vmatpush2.bf16.msra.mxu0 0
    %595 = vmatprep.subr.bf16.mxu0 0
    %596 = vmatpush2.bf16.msra.mxu0 0
    %597 = vmatprep.subr.bf16.mxu0 0
    %598 = vmatpush2.bf16.msra.mxu0 0
    %599 = vmatprep.subr.bf16.mxu0 0
    %600 = vmatpush2.bf16.msra.mxu0 0
    %601 = vmatprep.subr.bf16.mxu0 0
    %602 = vmatpush2.bf16.msra.mxu0 0
    %603 = vmatprep.subr.bf16.mxu0 0
    %604 = vmatpush2.bf16.msra.mxu0 0
    %605 = vmatprep.mubr.bf16.mxu0 0
    %606 = vmatmul.mubr.bf16.gmra.mxu0 %v513
    %v607 = vpop.f32.mrf.mxu0
    %v608 = vadd.f32 %v559, %v607
    %v609 = vpop.f32.mrf.mxu0
    %v610 = vpop.f32.mrf.mxu0
    %v611 = vpop.f32.mrf.mxu0
    %612 = vdwg.mxu0
    %v613 = vld [vmem:[#allocation2] sm:$0xff]
    %v614 = vadd.f32 %v613, %v550
    %v615 = vxor.u32 %v614, 2147483648
    %v616 = vmul.f32 %v615, 1.442695
    %v617 = vpow.pop %v616
    %v618 = vadd.f32 %v617, 1.0
    %v619 = vrcp.pop %v618
    %v620 = vmul.f32 1.0, %v619
    %622 = vrot.lane.b32.xlu0 %v550, 64
    %v623 = vpop.permute.xlu0 %622
    %v625 = vmul.f32 %v620, %v623
    %627 = vrot.lane.b32.xlu0 %v625, 64
    %v628 = vpop.permute.xlu0 %627
    %v630 = vadd.f32 %v613, %v628
    %v631 = vtanh.pop %v630
    %v632 = vsub.f32 1.0, %v620
    %634 = vrot.lane.b32.xlu0 %v631, 96
    %v635 = vpop.permute.xlu0 %634
    %v637 = vmul.f32 %v632, %v635
    %v638 = vmul.f32 %v620, 0.0
    %v639 = vadd.f32 %v637, %v638
    %s640 = scalar_lea.vmem [#allocation3], 56
    %v641 = vld [vmem:[%s640] sm:$0xff]
    %v642 = vadd.f32 %v641, %v608
    %v643 = vxor.u32 %v642, 2147483648
    %v644 = vmul.f32 %v643, 1.442695
    %v645 = vpow.pop %v644
    %v646 = vadd.f32 %v645, 1.0
    %v647 = vrcp.pop %v646
    %v648 = vmul.f32 1.0, %v647
    %650 = vrot.lane.b32.xlu0 %v608, 64
    %v651 = vpop.permute.xlu0 %650
    %v653 = vmul.f32 %v648, %v651
    %655 = vrot.lane.b32.xlu0 %v653, 64
    %v656 = vpop.permute.xlu0 %655
    %v658 = vadd.f32 %v641, %v656
    %v659 = vtanh.pop %v658
    %v660 = vsub.f32 1.0, %v648
    %662 = vrot.lane.b32.xlu0 %v659, 96
    %v663 = vpop.permute.xlu0 %662
    %v665 = vmul.f32 %v660, %v663
    %v666 = vmul.f32 %v648, 0.0
    %v667 = vadd.f32 %v665, %v666
    %669 = vrot.lane.b32.xlu0 %v639, 96
    %v670 = vpop.permute.xlu0 %669
    %672 = vst.msk [vmem:[#allocation4] sm:$0xff] %vm511, %v670
    %674 = vrot.lane.b32.xlu0 %v667, 96
    %v675 = vpop.permute.xlu0 %674
    %s677 = scalar_lea.vmem [#allocation5], 56
    %678 = vst.msk [vmem:[%s677] sm:$0xff] %vm511, %v675
    %v679 = vpack.c.bf16 %v639, %v639
    %681 = vrot.lane.b32.xlu0 %v679, 96
    %v682 = vpop.permute.xlu0 %681
    %v684 = vsel %vm511, %v682, 0
    %686 = vmatprep.subr.bf16.mxu0 0
    %687 = vmatpush1.bf16.msra.mxu0 0
    %688 = vmatprep.subr.bf16.mxu0 0
    %689 = vmatpush1.bf16.msra.mxu0 0
    %690 = vmatprep.subr.bf16.mxu0 0
    %691 = vmatpush1.bf16.msra.mxu0 0
    %692 = vmatprep.subr.bf16.mxu0 0
    %693 = vmatpush1.bf16.msra.mxu0 0
    %694 = vmatprep.subr.bf16.mxu0 0
    %695 = vmatpush1.bf16.msra.mxu0 0
    %696 = vmatprep.subr.bf16.mxu0 0
    %697 = vmatpush1.bf16.msra.mxu0 0
    %698 = vmatprep.subr.bf16.mxu0 0
    %699 = vmatpush1.bf16.msra.mxu0 %v508
    %700 = vmatprep.subr.bf16.mxu0 0
    %701 = vmatpush1.bf16.msra.mxu0 %v507
    %702 = vmatprep.subr.bf16.mxu0 0
    %703 = vmatpush2.bf16.msra.mxu0 0
    %704 = vmatprep.subr.bf16.mxu0 0
    %705 = vmatpush2.bf16.msra.mxu0 0
    %706 = vmatprep.subr.bf16.mxu0 0
    %707 = vmatpush2.bf16.msra.mxu0 0
    %708 = vmatprep.subr.bf16.mxu0 0
    %709 = vmatpush2.bf16.msra.mxu0 0
    %710 = vmatprep.subr.bf16.mxu0 0
    %711 = vmatpush2.bf16.msra.mxu0 0
    %712 = vmatprep.subr.bf16.mxu0 0
    %713 = vmatpush2.bf16.msra.mxu0 0
    %714 = vmatprep.subr.bf16.mxu0 0
    %715 = vmatpush2.bf16.msra.mxu0 0
    %716 = vmatprep.subr.bf16.mxu0 0
    %717 = vmatpush2.bf16.msra.mxu0 0
    %718 = vmatprep.mubr.bf16.mxu0 0
    %719 = vmatmul.mubr.bf16.gmra.mxu0 %v684
    %v720 = vpop.f32.mrf.mxu0
    %v721 = vadd.f32 %v497, %v720
    %v722 = vpop.f32.mrf.mxu0
    %v723 = vpop.f32.mrf.mxu0
    %v724 = vpop.f32.mrf.mxu0
    %725 = vdwg.mxu0
    %v726 = vpack.c.bf16 %v667, %v667
    %728 = vrot.lane.b32.xlu0 %v726, 96
    %v729 = vpop.permute.xlu0 %728
    %v731 = vsel %vm511, %v729, 0
    %733 = vmatprep.subr.bf16.mxu0 0
    %734 = vmatpush1.bf16.msra.mxu0 0
    %735 = vmatprep.subr.bf16.mxu0 0
    %736 = vmatpush1.bf16.msra.mxu0 0
    %737 = vmatprep.subr.bf16.mxu0 0
    %738 = vmatpush1.bf16.msra.mxu0 0
    %739 = vmatprep.subr.bf16.mxu0 0
    %740 = vmatpush1.bf16.msra.mxu0 0
    %741 = vmatprep.subr.bf16.mxu0 0
    %742 = vmatpush1.bf16.msra.mxu0 0
    %743 = vmatprep.subr.bf16.mxu0 0
    %744 = vmatpush1.bf16.msra.mxu0 0
    %745 = vmatprep.subr.bf16.mxu0 0
    %746 = vmatpush1.bf16.msra.mxu0 %v570
    %747 = vmatprep.subr.bf16.mxu0 0
    %748 = vmatpush1.bf16.msra.mxu0 %v569
    %749 = vmatprep.subr.bf16.mxu0 0
    %750 = vmatpush2.bf16.msra.mxu0 0
    %751 = vmatprep.subr.bf16.mxu0 0
    %752 = vmatpush2.bf16.msra.mxu0 0
    %753 = vmatprep.subr.bf16.mxu0 0
    %754 = vmatpush2.bf16.msra.mxu0 0
    %755 = vmatprep.subr.bf16.mxu0 0
    %756 = vmatpush2.bf16.msra.mxu0 0
    %757 = vmatprep.subr.bf16.mxu0 0
    %758 = vmatpush2.bf16.msra.mxu0 0
    %759 = vmatprep.subr.bf16.mxu0 0
    %760 = vmatpush2.bf16.msra.mxu0 0
    %761 = vmatprep.subr.bf16.mxu0 0
    %762 = vmatpush2.bf16.msra.mxu0 0
    %763 = vmatprep.subr.bf16.mxu0 0
    %764 = vmatpush2.bf16.msra.mxu0 0
    %765 = vmatprep.mubr.bf16.mxu0 0
    %766 = vmatmul.mubr.bf16.gmra.mxu0 %v731
    %v767 = vpop.f32.mrf.mxu0
    %v768 = vadd.f32 %v559, %v767
    %v769 = vpop.f32.mrf.mxu0
    %v770 = vpop.f32.mrf.mxu0
    %v771 = vpop.f32.mrf.mxu0
    %772 = vdwg.mxu0
    %s773 = scalar_lea.vmem [#allocation2], 8
    %v774 = vld [vmem:[%s773] sm:$0xff]
    %v775 = vadd.f32 %v774, %v721
    %v776 = vxor.u32 %v775, 2147483648
    %v777 = vmul.f32 %v776, 1.442695
    %v778 = vpow.pop %v777
    %v779 = vadd.f32 %v778, 1.0
    %v780 = vrcp.pop %v779
    %v781 = vmul.f32 1.0, %v780
    %783 = vrot.lane.b32.xlu0 %v721, 64
    %v784 = vpop.permute.xlu0 %783
    %v786 = vmul.f32 %v781, %v784
    %788 = vrot.lane.b32.xlu0 %v786, 64
    %v789 = vpop.permute.xlu0 %788
    %v791 = vadd.f32 %v774, %v789
    %v792 = vtanh.pop %v791
    %v793 = vsub.f32 1.0, %v781
    %795 = vrot.lane.b32.xlu0 %v792, 96
    %v796 = vpop.permute.xlu0 %795
    %v798 = vmul.f32 %v793, %v796
    %v799 = vmul.f32 %v781, %v639
    %v800 = vadd.f32 %v798, %v799
    %s801 = scalar_lea.vmem [#allocation3], 48
    %v802 = vld [vmem:[%s801] sm:$0xff]
    %v803 = vadd.f32 %v802, %v768
    %v804 = vxor.u32 %v803, 2147483648
    %v805 = vmul.f32 %v804, 1.442695
    %v806 = vpow.pop %v805
    %v807 = vadd.f32 %v806, 1.0
    %v808 = vrcp.pop %v807
    %v809 = vmul.f32 1.0, %v808
    %811 = vrot.lane.b32.xlu0 %v768, 64
    %v812 = vpop.permute.xlu0 %811
    %v814 = vmul.f32 %v809, %v812
    %816 = vrot.lane.b32.xlu0 %v814, 64
    %v817 = vpop.permute.xlu0 %816
    %v819 = vadd.f32 %v802, %v817
    %v820 = vtanh.pop %v819
    %v821 = vsub.f32 1.0, %v809
    %823 = vrot.lane.b32.xlu0 %v820, 96
    %v824 = vpop.permute.xlu0 %823
    %v826 = vmul.f32 %v821, %v824
    %v827 = vmul.f32 %v809, %v667
    %v828 = vadd.f32 %v826, %v827
    %830 = vrot.lane.b32.xlu0 %v800, 96
    %v831 = vpop.permute.xlu0 %830
    %s833 = scalar_lea.vmem [#allocation4], 8
    %834 = vst.msk [vmem:[%s833] sm:$0xff] %vm511, %v831
    %836 = vrot.lane.b32.xlu0 %v828, 96
    %v837 = vpop.permute.xlu0 %836
    %s839 = scalar_lea.vmem [#allocation5], 48
    %840 = vst.msk [vmem:[%s839] sm:$0xff] %vm511, %v837
    %v841 = vpack.c.bf16 %v800, %v800
    %843 = vrot.lane.b32.xlu0 %v841, 96
    %v844 = vpop.permute.xlu0 %843
    %v846 = vsel %vm511, %v844, 0
    %848 = vmatprep.subr.bf16.mxu0 0
    %849 = vmatpush1.bf16.msra.mxu0 0
    %850 = vmatprep.subr.bf16.mxu0 0
    %851 = vmatpush1.bf16.msra.mxu0 0
    %852 = vmatprep.subr.bf16.mxu0 0
    %853 = vmatpush1.bf16.msra.mxu0 0
    %854 = vmatprep.subr.bf16.mxu0 0
    %855 = vmatpush1.bf16.msra.mxu0 0
    %856 = vmatprep.subr.bf16.mxu0 0
    %857 = vmatpush1.bf16.msra.mxu0 0
    %858 = vmatprep.subr.bf16.mxu0 0
    %859 = vmatpush1.bf16.msra.mxu0 0
    %860 = vmatprep.subr.bf16.mxu0 0
    %861 = vmatpush1.bf16.msra.mxu0 %v508
    %862 = vmatprep.subr.bf16.mxu0 0
    %863 = vmatpush1.bf16.msra.mxu0 %v507
    %864 = vmatprep.subr.bf16.mxu0 0
    %865 = vmatpush2.bf16.msra.mxu0 0
    %866 = vmatprep.subr.bf16.mxu0 0
    %867 = vmatpush2.bf16.msra.mxu0 0
    %868 = vmatprep.subr.bf16.mxu0 0
    %869 = vmatpush2.bf16.msra.mxu0 0
    %870 = vmatprep.subr.bf16.mxu0 0
    %871 = vmatpush2.bf16.msra.mxu0 0
    %872 = vmatprep.subr.bf16.mxu0 0
    %873 = vmatpush2.bf16.msra.mxu0 0
    %874 = vmatprep.subr.bf16.mxu0 0
    %875 = vmatpush2.bf16.msra.mxu0 0
    %876 = vmatprep.subr.bf16.mxu0 0
    %877 = vmatpush2.bf16.msra.mxu0 0
    %878 = vmatprep.subr.bf16.mxu0 0
    %879 = vmatpush2.bf16.msra.mxu0 0
    %880 = vmatprep.mubr.bf16.mxu0 0
    %881 = vmatmul.mubr.bf16.gmra.mxu0 %v846
    %v882 = vpop.f32.mrf.mxu0
    %v883 = vadd.f32 %v497, %v882
    %v884 = vpop.f32.mrf.mxu0
    %v885 = vpop.f32.mrf.mxu0
    %v886 = vpop.f32.mrf.mxu0
    %887 = vdwg.mxu0
    %v888 = vpack.c.bf16 %v828, %v828
    %890 = vrot.lane.b32.xlu0 %v888, 96
    %v891 = vpop.permute.xlu0 %890
    %v893 = vsel %vm511, %v891, 0
    %895 = vmatprep.subr.bf16.mxu0 0
    %896 = vmatpush1.bf16.msra.mxu0 0
    %897 = vmatprep.subr.bf16.mxu0 0
    %898 = vmatpush1.bf16.msra.mxu0 0
    %899 = vmatprep.subr.bf16.mxu0 0
    %900 = vmatpush1.bf16.msra.mxu0 0
    %901 = vmatprep.subr.bf16.mxu0 0
    %902 = vmatpush1.bf16.msra.mxu0 0
    %903 = vmatprep.subr.bf16.mxu0 0
    %904 = vmatpush1.bf16.msra.mxu0 0
    %905 = vmatprep.subr.bf16.mxu0 0
    %906 = vmatpush1.bf16.msra.mxu0 0
    %907 = vmatprep.subr.bf16.mxu0 0
    %908 = vmatpush1.bf16.msra.mxu0 %v570
    %909 = vmatprep.subr.bf16.mxu0 0
    %910 = vmatpush1.bf16.msra.mxu0 %v569
    %911 = vmatprep.subr.bf16.mxu0 0
    %912 = vmatpush2.bf16.msra.mxu0 0
    %913 = vmatprep.subr.bf16.mxu0 0
    %914 = vmatpush2.bf16.msra.mxu0 0
    %915 = vmatprep.subr.bf16.mxu0 0
    %916 = vmatpush2.bf16.msra.mxu0 0
    %917 = vmatprep.subr.bf16.mxu0 0
    %918 = vmatpush2.bf16.msra.mxu0 0
    %919 = vmatprep.subr.bf16.mxu0 0
    %920 = vmatpush2.bf16.msra.mxu0 0
    %921 = vmatprep.subr.bf16.mxu0 0
    %922 = vmatpush2.bf16.msra.mxu0 0
    %923 = vmatprep.subr.bf16.mxu0 0
    %924 = vmatpush2.bf16.msra.mxu0 0
    %925 = vmatprep.subr.bf16.mxu0 0
    %926 = vmatpush2.bf16.msra.mxu0 0
    %927 = vmatprep.mubr.bf16.mxu0 0
    %928 = vmatmul.mubr.bf16.gmra.mxu0 %v893
    %v929 = vpop.f32.mrf.mxu0
    %v930 = vadd.f32 %v559, %v929
    %v931 = vpop.f32.mrf.mxu0
    %v932 = vpop.f32.mrf.mxu0
    %v933 = vpop.f32.mrf.mxu0
    %934 = vdwg.mxu0
    %s935 = scalar_lea.vmem [#allocation2], 16
    %v936 = vld [vmem:[%s935] sm:$0xff]
    %v937 = vadd.f32 %v936, %v883
    %v938 = vxor.u32 %v937, 2147483648
    %v939 = vmul.f32 %v938, 1.442695
    %v940 = vpow.pop %v939
    %v941 = vadd.f32 %v940, 1.0
    %v942 = vrcp.pop %v941
    %v943 = vmul.f32 1.0, %v942
    %945 = vrot.lane.b32.xlu0 %v883, 64
    %v946 = vpop.permute.xlu0 %945
    %v948 = vmul.f32 %v943, %v946
    %950 = vrot.lane.b32.xlu0 %v948, 64
    %v951 = vpop.permute.xlu0 %950
    %v953 = vadd.f32 %v936, %v951
    %v954 = vtanh.pop %v953
    %v955 = vsub.f32 1.0, %v943
    %957 = vrot.lane.b32.xlu0 %v954, 96
    %v958 = vpop.permute.xlu0 %957
    %v960 = vmul.f32 %v955, %v958
    %v961 = vmul.f32 %v943, %v800
    %v962 = vadd.f32 %v960, %v961
    %s963 = scalar_lea.vmem [#allocation3], 40
    %v964 = vld [vmem:[%s963] sm:$0xff]
    %v965 = vadd.f32 %v964, %v930
    %v966 = vxor.u32 %v965, 2147483648
    %v967 = vmul.f32 %v966, 1.442695
    %v968 = vpow.pop %v967
    %v969 = vadd.f32 %v968, 1.0
    %v970 = vrcp.pop %v969
    %v971 = vmul.f32 1.0, %v970
    %973 = vrot.lane.b32.xlu0 %v930, 64
    %v974 = vpop.permute.xlu0 %973
    %v976 = vmul.f32 %v971, %v974
    %978 = vrot.lane.b32.xlu0 %v976, 64
    %v979 = vpop.permute.xlu0 %978
    %v981 = vadd.f32 %v964, %v979
    %v982 = vtanh.pop %v981
    %v983 = vsub.f32 1.0, %v971
    %985 = vrot.lane.b32.xlu0 %v982, 96
    %v986 = vpop.permute.xlu0 %985
    %v988 = vmul.f32 %v983, %v986
    %v989 = vmul.f32 %v971, %v828
    %v990 = vadd.f32 %v988, %v989
    %992 = vrot.lane.b32.xlu0 %v962, 96
    %v993 = vpop.permute.xlu0 %992
    %s995 = scalar_lea.vmem [#allocation4], 16
    %996 = vst.msk [vmem:[%s995] sm:$0xff] %vm511, %v993
    %998 = vrot.lane.b32.xlu0 %v990, 96
    %v999 = vpop.permute.xlu0 %998
    %s1001 = scalar_lea.vmem [#allocation5], 40
    %1002 = vst.msk [vmem:[%s1001] sm:$0xff] %vm511, %v999
    %v1003 = vpack.c.bf16 %v962, %v962
    %1005 = vrot.lane.b32.xlu0 %v1003, 96
    %v1006 = vpop.permute.xlu0 %1005
    %v1008 = vsel %vm511, %v1006, 0
    %1010 = vmatprep.subr.bf16.mxu0 0
    %1011 = vmatpush1.bf16.msra.mxu0 0
    %1012 = vmatprep.subr.bf16.mxu0 0
    %1013 = vmatpush1.bf16.msra.mxu0 0
    %1014 = vmatprep.subr.bf16.mxu0 0
    %1015 = vmatpush1.bf16.msra.mxu0 0
    %1016 = vmatprep.subr.bf16.mxu0 0
    %1017 = vmatpush1.bf16.msra.mxu0 0
    %1018 = vmatprep.subr.bf16.mxu0 0
    %1019 = vmatpush1.bf16.msra.mxu0 0
    %1020 = vmatprep.subr.bf16.mxu0 0
    %1021 = vmatpush1.bf16.msra.mxu0 0
    %1022 = vmatprep.subr.bf16.mxu0 0
    %1023 = vmatpush1.bf16.msra.mxu0 %v508
    %1024 = vmatprep.subr.bf16.mxu0 0
    %1025 = vmatpush1.bf16.msra.mxu0 %v507
    %1026 = vmatprep.subr.bf16.mxu0 0
    %1027 = vmatpush2.bf16.msra.mxu0 0
    %1028 = vmatprep.subr.bf16.mxu0 0
    %1029 = vmatpush2.bf16.msra.mxu0 0
    %1030 = vmatprep.subr.bf16.mxu0 0
    %1031 = vmatpush2.bf16.msra.mxu0 0
    %1032 = vmatprep.subr.bf16.mxu0 0
    %1033 = vmatpush2.bf16.msra.mxu0 0
    %1034 = vmatprep.subr.bf16.mxu0 0
    %1035 = vmatpush2.bf16.msra.mxu0 0
    %1036 = vmatprep.subr.bf16.mxu0 0
    %1037 = vmatpush2.bf16.msra.mxu0 0
    %1038 = vmatprep.subr.bf16.mxu0 0
    %1039 = vmatpush2.bf16.msra.mxu0 0
    %1040 = vmatprep.subr.bf16.mxu0 0
    %1041 = vmatpush2.bf16.msra.mxu0 0
    %1042 = vmatprep.mubr.bf16.mxu0 0
    %1043 = vmatmul.mubr.bf16.gmra.mxu0 %v1008
    %v1044 = vpop.f32.mrf.mxu0
    %v1045 = vadd.f32 %v497, %v1044
    %v1046 = vpop.f32.mrf.mxu0
    %v1047 = vpop.f32.mrf.mxu0
    %v1048 = vpop.f32.mrf.mxu0
    %1049 = vdwg.mxu0
    %v1050 = vpack.c.bf16 %v990, %v990
    %1052 = vrot.lane.b32.xlu0 %v1050, 96
    %v1053 = vpop.permute.xlu0 %1052
    %v1055 = vsel %vm511, %v1053, 0
    %1057 = vmatprep.subr.bf16.mxu0 0
    %1058 = vmatpush1.bf16.msra.mxu0 0
    %1059 = vmatprep.subr.bf16.mxu0 0
    %1060 = vmatpush1.bf16.msra.mxu0 0
    %1061 = vmatprep.subr.bf16.mxu0 0
    %1062 = vmatpush1.bf16.msra.mxu0 0
    %1063 = vmatprep.subr.bf16.mxu0 0
    %1064 = vmatpush1.bf16.msra.mxu0 0
    %1065 = vmatprep.subr.bf16.mxu0 0
    %1066 = vmatpush1.bf16.msra.mxu0 0
    %1067 = vmatprep.subr.bf16.mxu0 0
    %1068 = vmatpush1.bf16.msra.mxu0 0
    %1069 = vmatprep.subr.bf16.mxu0 0
    %1070 = vmatpush1.bf16.msra.mxu0 %v570
    %1071 = vmatprep.subr.bf16.mxu0 0
    %1072 = vmatpush1.bf16.msra.mxu0 %v569
    %1073 = vmatprep.subr.bf16.mxu0 0
    %1074 = vmatpush2.bf16.msra.mxu0 0
    %1075 = vmatprep.subr.bf16.mxu0 0
    %1076 = vmatpush2.bf16.msra.mxu0 0
    %1077 = vmatprep.subr.bf16.mxu0 0
    %1078 = vmatpush2.bf16.msra.mxu0 0
    %1079 = vmatprep.subr.bf16.mxu0 0
    %1080 = vmatpush2.bf16.msra.mxu0 0
    %1081 = vmatprep.subr.bf16.mxu0 0
    %1082 = vmatpush2.bf16.msra.mxu0 0
    %1083 = vmatprep.subr.bf16.mxu0 0
    %1084 = vmatpush2.bf16.msra.mxu0 0
    %1085 = vmatprep.subr.bf16.mxu0 0
    %1086 = vmatpush2.bf16.msra.mxu0 0
    %1087 = vmatprep.subr.bf16.mxu0 0
    %1088 = vmatpush2.bf16.msra.mxu0 0
    %1089 = vmatprep.mubr.bf16.mxu0 0
    %1090 = vmatmul.mubr.bf16.gmra.mxu0 %v1055
    %v1091 = vpop.f32.mrf.mxu0
    %v1092 = vadd.f32 %v559, %v1091
    %v1093 = vpop.f32.mrf.mxu0
    %v1094 = vpop.f32.mrf.mxu0
    %v1095 = vpop.f32.mrf.mxu0
    %1096 = vdwg.mxu0
    %s1097 = scalar_lea.vmem [#allocation2], 24
    %v1098 = vld [vmem:[%s1097] sm:$0xff]
    %v1099 = vadd.f32 %v1098, %v1045
    %v1100 = vxor.u32 %v1099, 2147483648
    %v1101 = vmul.f32 %v1100, 1.442695
    %v1102 = vpow.pop %v1101
    %v1103 = vadd.f32 %v1102, 1.0
    %v1104 = vrcp.pop %v1103
    %v1105 = vmul.f32 1.0, %v1104
    %1107 = vrot.lane.b32.xlu0 %v1045, 64
    %v1108 = vpop.permute.xlu0 %1107
    %v1110 = vmul.f32 %v1105, %v1108
    %1112 = vrot.lane.b32.xlu0 %v1110, 64
    %v1113 = vpop.permute.xlu0 %1112
    %v1115 = vadd.f32 %v1098, %v1113
    %v1116 = vtanh.pop %v1115
    %v1117 = vsub.f32 1.0, %v1105
    %1119 = vrot.lane.b32.xlu0 %v1116, 96
    %v1120 = vpop.permute.xlu0 %1119
    %v1122 = vmul.f32 %v1117, %v1120
    %v1123 = vmul.f32 %v1105, %v962
    %v1124 = vadd.f32 %v1122, %v1123
    %s1125 = scalar_lea.vmem [#allocation3], 32
    %v1126 = vld [vmem:[%s1125] sm:$0xff]
    %v1127 = vadd.f32 %v1126, %v1092
    %v1128 = vxor.u32 %v1127, 2147483648
    %v1129 = vmul.f32 %v1128, 1.442695
    %v1130 = vpow.pop %v1129
    %v1131 = vadd.f32 %v1130, 1.0
    %v1132 = vrcp.pop %v1131
    %v1133 = vmul.f32 1.0, %v1132
    %1135 = vrot.lane.b32.xlu0 %v1092, 64
    %v1136 = vpop.permute.xlu0 %1135
    %v1138 = vmul.f32 %v1133, %v1136
    %1140 = vrot.lane.b32.xlu0 %v1138, 64
    %v1141 = vpop.permute.xlu0 %1140
    %v1143 = vadd.f32 %v1126, %v1141
    %v1144 = vtanh.pop %v1143
    %v1145 = vsub.f32 1.0, %v1133
    %1147 = vrot.lane.b32.xlu0 %v1144, 96
    %v1148 = vpop.permute.xlu0 %1147
    %v1150 = vmul.f32 %v1145, %v1148
    %v1151 = vmul.f32 %v1133, %v990
    %v1152 = vadd.f32 %v1150, %v1151
    %1154 = vrot.lane.b32.xlu0 %v1124, 96
    %v1155 = vpop.permute.xlu0 %1154
    %s1157 = scalar_lea.vmem [#allocation4], 24
    %1158 = vst.msk [vmem:[%s1157] sm:$0xff] %vm511, %v1155
    %1160 = vrot.lane.b32.xlu0 %v1152, 96
    %v1161 = vpop.permute.xlu0 %1160
    %s1163 = scalar_lea.vmem [#allocation5], 32
    %1164 = vst.msk [vmem:[%s1163] sm:$0xff] %vm511, %v1161
    %v1165 = vpack.c.bf16 %v1124, %v1124
    %1167 = vrot.lane.b32.xlu0 %v1165, 96
    %v1168 = vpop.permute.xlu0 %1167
    %v1170 = vsel %vm511, %v1168, 0
    %1172 = vmatprep.subr.bf16.mxu0 0
    %1173 = vmatpush1.bf16.msra.mxu0 0
    %1174 = vmatprep.subr.bf16.mxu0 0
    %1175 = vmatpush1.bf16.msra.mxu0 0
    %1176 = vmatprep.subr.bf16.mxu0 0
    %1177 = vmatpush1.bf16.msra.mxu0 0
    %1178 = vmatprep.subr.bf16.mxu0 0
    %1179 = vmatpush1.bf16.msra.mxu0 0
    %1180 = vmatprep.subr.bf16.mxu0 0
    %1181 = vmatpush1.bf16.msra.mxu0 0
    %1182 = vmatprep.subr.bf16.mxu0 0
    %1183 = vmatpush1.bf16.msra.mxu0 0
    %1184 = vmatprep.subr.bf16.mxu0 0
    %1185 = vmatpush1.bf16.msra.mxu0 %v508
    %1186 = vmatprep.subr.bf16.mxu0 0
    %1187 = vmatpush1.bf16.msra.mxu0 %v507
    %1188 = vmatprep.subr.bf16.mxu0 0
    %1189 = vmatpush2.bf16.msra.mxu0 0
    %1190 = vmatprep.subr.bf16.mxu0 0
    %1191 = vmatpush2.bf16.msra.mxu0 0
    %1192 = vmatprep.subr.bf16.mxu0 0
    %1193 = vmatpush2.bf16.msra.mxu0 0
    %1194 = vmatprep.subr.bf16.mxu0 0
    %1195 = vmatpush2.bf16.msra.mxu0 0
    %1196 = vmatprep.subr.bf16.mxu0 0
    %1197 = vmatpush2.bf16.msra.mxu0 0
    %1198 = vmatprep.subr.bf16.mxu0 0
    %1199 = vmatpush2.bf16.msra.mxu0 0
    %1200 = vmatprep.subr.bf16.mxu0 0
    %1201 = vmatpush2.bf16.msra.mxu0 0
    %1202 = vmatprep.subr.bf16.mxu0 0
    %1203 = vmatpush2.bf16.msra.mxu0 0
    %1204 = vmatprep.mubr.bf16.mxu0 0
    %1205 = vmatmul.mubr.bf16.gmra.mxu0 %v1170
    %v1206 = vpop.f32.mrf.mxu0
    %v1207 = vadd.f32 %v497, %v1206
    %v1208 = vpop.f32.mrf.mxu0
    %v1209 = vpop.f32.mrf.mxu0
    %v1210 = vpop.f32.mrf.mxu0
    %1211 = vdwg.mxu0
    %v1212 = vpack.c.bf16 %v1152, %v1152
    %1214 = vrot.lane.b32.xlu0 %v1212, 96
    %v1215 = vpop.permute.xlu0 %1214
    %v1217 = vsel %vm511, %v1215, 0
    %1219 = vmatprep.subr.bf16.mxu0 0
    %1220 = vmatpush1.bf16.msra.mxu0 0
    %1221 = vmatprep.subr.bf16.mxu0 0
    %1222 = vmatpush1.bf16.msra.mxu0 0
    %1223 = vmatprep.subr.bf16.mxu0 0
    %1224 = vmatpush1.bf16.msra.mxu0 0
    %1225 = vmatprep.subr.bf16.mxu0 0
    %1226 = vmatpush1.bf16.msra.mxu0 0
    %1227 = vmatprep.subr.bf16.mxu0 0
    %1228 = vmatpush1.bf16.msra.mxu0 0
    %1229 = vmatprep.subr.bf16.mxu0 0
    %1230 = vmatpush1.bf16.msra.mxu0 0
    %1231 = vmatprep.subr.bf16.mxu0 0
    %1232 = vmatpush1.bf16.msra.mxu0 %v570
    %1233 = vmatprep.subr.bf16.mxu0 0
    %1234 = vmatpush1.bf16.msra.mxu0 %v569
    %1235 = vmatprep.subr.bf16.mxu0 0
    %1236 = vmatpush2.bf16.msra.mxu0 0
    %1237 = vmatprep.subr.bf16.mxu0 0
    %1238 = vmatpush2.bf16.msra.mxu0 0
    %1239 = vmatprep.subr.bf16.mxu0 0
    %1240 = vmatpush2.bf16.msra.mxu0 0
    %1241 = vmatprep.subr.bf16.mxu0 0
    %1242 = vmatpush2.bf16.msra.mxu0 0
    %1243 = vmatprep.subr.bf16.mxu0 0
    %1244 = vmatpush2.bf16.msra.mxu0 0
    %1245 = vmatprep.subr.bf16.mxu0 0
    %1246 = vmatpush2.bf16.msra.mxu0 0
    %1247 = vmatprep.subr.bf16.mxu0 0
    %1248 = vmatpush2.bf16.msra.mxu0 0
    %1249 = vmatprep.subr.bf16.mxu0 0
    %1250 = vmatpush2.bf16.msra.mxu0 0
    %1251 = vmatprep.mubr.bf16.mxu0 0
    %1252 = vmatmul.mubr.bf16.gmra.mxu0 %v1217
    %v1253 = vpop.f32.mrf.mxu0
    %v1254 = vadd.f32 %v559, %v1253
    %v1255 = vpop.f32.mrf.mxu0
    %v1256 = vpop.f32.mrf.mxu0
    %v1257 = vpop.f32.mrf.mxu0
    %1258 = vdwg.mxu0
    %s1259 = scalar_lea.vmem [#allocation2], 32
    %v1260 = vld [vmem:[%s1259] sm:$0xff]
    %v1261 = vadd.f32 %v1260, %v1207
    %v1262 = vxor.u32 %v1261, 2147483648
    %v1263 = vmul.f32 %v1262, 1.442695
    %v1264 = vpow.pop %v1263
    %v1265 = vadd.f32 %v1264, 1.0
    %v1266 = vrcp.pop %v1265
    %v1267 = vmul.f32 1.0, %v1266
    %1269 = vrot.lane.b32.xlu0 %v1207, 64
    %v1270 = vpop.permute.xlu0 %1269
    %v1272 = vmul.f32 %v1267, %v1270
    %1274 = vrot.lane.b32.xlu0 %v1272, 64
    %v1275 = vpop.permute.xlu0 %1274
    %v1277 = vadd.f32 %v1260, %v1275
    %v1278 = vtanh.pop %v1277
    %v1279 = vsub.f32 1.0, %v1267
    %1281 = vrot.lane.b32.xlu0 %v1278, 96
    %v1282 = vpop.permute.xlu0 %1281
    %v1284 = vmul.f32 %v1279, %v1282
    %v1285 = vmul.f32 %v1267, %v1124
    %v1286 = vadd.f32 %v1284, %v1285
    %s1287 = scalar_lea.vmem [#allocation3], 24
    %v1288 = vld [vmem:[%s1287] sm:$0xff]
    %v1289 = vadd.f32 %v1288, %v1254
    %v1290 = vxor.u32 %v1289, 2147483648
    %v1291 = vmul.f32 %v1290, 1.442695
    %v1292 = vpow.pop %v1291
    %v1293 = vadd.f32 %v1292, 1.0
    %v1294 = vrcp.pop %v1293
    %v1295 = vmul.f32 1.0, %v1294
    %1297 = vrot.lane.b32.xlu0 %v1254, 64
    %v1298 = vpop.permute.xlu0 %1297
    %v1300 = vmul.f32 %v1295, %v1298
    %1302 = vrot.lane.b32.xlu0 %v1300, 64
    %v1303 = vpop.permute.xlu0 %1302
    %v1305 = vadd.f32 %v1288, %v1303
    %v1306 = vtanh.pop %v1305
    %v1307 = vsub.f32 1.0, %v1295
    %1309 = vrot.lane.b32.xlu0 %v1306, 96
    %v1310 = vpop.permute.xlu0 %1309
    %v1312 = vmul.f32 %v1307, %v1310
    %v1313 = vmul.f32 %v1295, %v1152
    %v1314 = vadd.f32 %v1312, %v1313
    %1316 = vrot.lane.b32.xlu0 %v1286, 96
    %v1317 = vpop.permute.xlu0 %1316
    %s1319 = scalar_lea.vmem [#allocation4], 32
    %1320 = vst.msk [vmem:[%s1319] sm:$0xff] %vm511, %v1317
    %1322 = vrot.lane.b32.xlu0 %v1314, 96
    %v1323 = vpop.permute.xlu0 %1322
    %s1325 = scalar_lea.vmem [#allocation5], 24
    %1326 = vst.msk [vmem:[%s1325] sm:$0xff] %vm511, %v1323
    %v1327 = vpack.c.bf16 %v1286, %v1286
    %1329 = vrot.lane.b32.xlu0 %v1327, 96
    %v1330 = vpop.permute.xlu0 %1329
    %v1332 = vsel %vm511, %v1330, 0
    %1334 = vmatprep.subr.bf16.mxu0 0
    %1335 = vmatpush1.bf16.msra.mxu0 0
    %1336 = vmatprep.subr.bf16.mxu0 0
    %1337 = vmatpush1.bf16.msra.mxu0 0
    %1338 = vmatprep.subr.bf16.mxu0 0
    %1339 = vmatpush1.bf16.msra.mxu0 0
    %1340 = vmatprep.subr.bf16.mxu0 0
    %1341 = vmatpush1.bf16.msra.mxu0 0
    %1342 = vmatprep.subr.bf16.mxu0 0
    %1343 = vmatpush1.bf16.msra.mxu0 0
    %1344 = vmatprep.subr.bf16.mxu0 0
    %1345 = vmatpush1.bf16.msra.mxu0 0
    %1346 = vmatprep.subr.bf16.mxu0 0
    %1347 = vmatpush1.bf16.msra.mxu0 %v508
    %1348 = vmatprep.subr.bf16.mxu0 0
    %1349 = vmatpush1.bf16.msra.mxu0 %v507
    %1350 = vmatprep.subr.bf16.mxu0 0
    %1351 = vmatpush2.bf16.msra.mxu0 0
    %1352 = vmatprep.subr.bf16.mxu0 0
    %1353 = vmatpush2.bf16.msra.mxu0 0
    %1354 = vmatprep.subr.bf16.mxu0 0
    %1355 = vmatpush2.bf16.msra.mxu0 0
    %1356 = vmatprep.subr.bf16.mxu0 0
    %1357 = vmatpush2.bf16.msra.mxu0 0
    %1358 = vmatprep.subr.bf16.mxu0 0
    %1359 = vmatpush2.bf16.msra.mxu0 0
    %1360 = vmatprep.subr.bf16.mxu0 0
    %1361 = vmatpush2.bf16.msra.mxu0 0
    %1362 = vmatprep.subr.bf16.mxu0 0
    %1363 = vmatpush2.bf16.msra.mxu0 0
    %1364 = vmatprep.subr.bf16.mxu0 0
    %1365 = vmatpush2.bf16.msra.mxu0 0
    %1366 = vmatprep.mubr.bf16.mxu0 0
    %1367 = vmatmul.mubr.bf16.gmra.mxu0 %v1332
    %v1368 = vpop.f32.mrf.mxu0
    %v1369 = vadd.f32 %v497, %v1368
    %v1370 = vpop.f32.mrf.mxu0
    %v1371 = vpop.f32.mrf.mxu0
    %v1372 = vpop.f32.mrf.mxu0
    %1373 = vdwg.mxu0
    %v1374 = vpack.c.bf16 %v1314, %v1314
    %1376 = vrot.lane.b32.xlu0 %v1374, 96
    %v1377 = vpop.permute.xlu0 %1376
    %v1379 = vsel %vm511, %v1377, 0
    %1381 = vmatprep.subr.bf16.mxu0 0
    %1382 = vmatpush1.bf16.msra.mxu0 0
    %1383 = vmatprep.subr.bf16.mxu0 0
    %1384 = vmatpush1.bf16.msra.mxu0 0
    %1385 = vmatprep.subr.bf16.mxu0 0
    %1386 = vmatpush1.bf16.msra.mxu0 0
    %1387 = vmatprep.subr.bf16.mxu0 0
    %1388 = vmatpush1.bf16.msra.mxu0 0
    %1389 = vmatprep.subr.bf16.mxu0 0
    %1390 = vmatpush1.bf16.msra.mxu0 0
    %1391 = vmatprep.subr.bf16.mxu0 0
    %1392 = vmatpush1.bf16.msra.mxu0 0
    %1393 = vmatprep.subr.bf16.mxu0 0
    %1394 = vmatpush1.bf16.msra.mxu0 %v570
    %1395 = vmatprep.subr.bf16.mxu0 0
    %1396 = vmatpush1.bf16.msra.mxu0 %v569
    %1397 = vmatprep.subr.bf16.mxu0 0
    %1398 = vmatpush2.bf16.msra.mxu0 0
    %1399 = vmatprep.subr.bf16.mxu0 0
    %1400 = vmatpush2.bf16.msra.mxu0 0
    %1401 = vmatprep.subr.bf16.mxu0 0
    %1402 = vmatpush2.bf16.msra.mxu0 0
    %1403 = vmatprep.subr.bf16.mxu0 0
    %1404 = vmatpush2.bf16.msra.mxu0 0
    %1405 = vmatprep.subr.bf16.mxu0 0
    %1406 = vmatpush2.bf16.msra.mxu0 0
    %1407 = vmatprep.subr.bf16.mxu0 0
    %1408 = vmatpush2.bf16.msra.mxu0 0
    %1409 = vmatprep.subr.bf16.mxu0 0
    %1410 = vmatpush2.bf16.msra.mxu0 0
    %1411 = vmatprep.subr.bf16.mxu0 0
    %1412 = vmatpush2.bf16.msra.mxu0 0
    %1413 = vmatprep.mubr.bf16.mxu0 0
    %1414 = vmatmul.mubr.bf16.gmra.mxu0 %v1379
    %v1415 = vpop.f32.mrf.mxu0
    %v1416 = vadd.f32 %v559, %v1415
    %v1417 = vpop.f32.mrf.mxu0
    %v1418 = vpop.f32.mrf.mxu0
    %v1419 = vpop.f32.mrf.mxu0
    %1420 = vdwg.mxu0
    %s1421 = scalar_lea.vmem [#allocation2], 40
    %v1422 = vld [vmem:[%s1421] sm:$0xff]
    %v1423 = vadd.f32 %v1422, %v1369
    %v1424 = vxor.u32 %v1423, 2147483648
    %v1425 = vmul.f32 %v1424, 1.442695
    %v1426 = vpow.pop %v1425
    %v1427 = vadd.f32 %v1426, 1.0
    %v1428 = vrcp.pop %v1427
    %v1429 = vmul.f32 1.0, %v1428
    %1431 = vrot.lane.b32.xlu0 %v1369, 64
    %v1432 = vpop.permute.xlu0 %1431
    %v1434 = vmul.f32 %v1429, %v1432
    %1436 = vrot.lane.b32.xlu0 %v1434, 64
    %v1437 = vpop.permute.xlu0 %1436
    %v1439 = vadd.f32 %v1422, %v1437
    %v1440 = vtanh.pop %v1439
    %v1441 = vsub.f32 1.0, %v1429
    %1443 = vrot.lane.b32.xlu0 %v1440, 96
    %v1444 = vpop.permute.xlu0 %1443
    %v1446 = vmul.f32 %v1441, %v1444
    %v1447 = vmul.f32 %v1429, %v1286
    %v1448 = vadd.f32 %v1446, %v1447
    %s1449 = scalar_lea.vmem [#allocation3], 16
    %v1450 = vld [vmem:[%s1449] sm:$0xff]
    %v1451 = vadd.f32 %v1450, %v1416
    %v1452 = vxor.u32 %v1451, 2147483648
    %v1453 = vmul.f32 %v1452, 1.442695
    %v1454 = vpow.pop %v1453
    %v1455 = vadd.f32 %v1454, 1.0
    %v1456 = vrcp.pop %v1455
    %v1457 = vmul.f32 1.0, %v1456
    %1459 = vrot.lane.b32.xlu0 %v1416, 64
    %v1460 = vpop.permute.xlu0 %1459
    %v1462 = vmul.f32 %v1457, %v1460
    %1464 = vrot.lane.b32.xlu0 %v1462, 64
    %v1465 = vpop.permute.xlu0 %1464
    %v1467 = vadd.f32 %v1450, %v1465
    %v1468 = vtanh.pop %v1467
    %v1469 = vsub.f32 1.0, %v1457
    %1471 = vrot.lane.b32.xlu0 %v1468, 96
    %v1472 = vpop.permute.xlu0 %1471
    %v1474 = vmul.f32 %v1469, %v1472
    %v1475 = vmul.f32 %v1457, %v1314
    %v1476 = vadd.f32 %v1474, %v1475
    %1478 = vrot.lane.b32.xlu0 %v1448, 96
    %v1479 = vpop.permute.xlu0 %1478
    %s1481 = scalar_lea.vmem [#allocation4], 40
    %1482 = vst.msk [vmem:[%s1481] sm:$0xff] %vm511, %v1479
    %1484 = vrot.lane.b32.xlu0 %v1476, 96
    %v1485 = vpop.permute.xlu0 %1484
    %s1487 = scalar_lea.vmem [#allocation5], 16
    %1488 = vst.msk [vmem:[%s1487] sm:$0xff] %vm511, %v1485
    %v1489 = vpack.c.bf16 %v1448, %v1448
    %1491 = vrot.lane.b32.xlu0 %v1489, 96
    %v1492 = vpop.permute.xlu0 %1491
    %v1494 = vsel %vm511, %v1492, 0
    %1496 = vmatprep.subr.bf16.mxu0 0
    %1497 = vmatpush1.bf16.msra.mxu0 0
    %1498 = vmatprep.subr.bf16.mxu0 0
    %1499 = vmatpush1.bf16.msra.mxu0 0
    %1500 = vmatprep.subr.bf16.mxu0 0
    %1501 = vmatpush1.bf16.msra.mxu0 0
    %1502 = vmatprep.subr.bf16.mxu0 0
    %1503 = vmatpush1.bf16.msra.mxu0 0
    %1504 = vmatprep.subr.bf16.mxu0 0
    %1505 = vmatpush1.bf16.msra.mxu0 0
    %1506 = vmatprep.subr.bf16.mxu0 0
    %1507 = vmatpush1.bf16.msra.mxu0 0
    %1508 = vmatprep.subr.bf16.mxu0 0
    %1509 = vmatpush1.bf16.msra.mxu0 %v508
    %1510 = vmatprep.subr.bf16.mxu0 0
    %1511 = vmatpush1.bf16.msra.mxu0 %v507
    %1512 = vmatprep.subr.bf16.mxu0 0
    %1513 = vmatpush2.bf16.msra.mxu0 0
    %1514 = vmatprep.subr.bf16.mxu0 0
    %1515 = vmatpush2.bf16.msra.mxu0 0
    %1516 = vmatprep.subr.bf16.mxu0 0
    %1517 = vmatpush2.bf16.msra.mxu0 0
    %1518 = vmatprep.subr.bf16.mxu0 0
    %1519 = vmatpush2.bf16.msra.mxu0 0
    %1520 = vmatprep.subr.bf16.mxu0 0
    %1521 = vmatpush2.bf16.msra.mxu0 0
    %1522 = vmatprep.subr.bf16.mxu0 0
    %1523 = vmatpush2.bf16.msra.mxu0 0
    %1524 = vmatprep.subr.bf16.mxu0 0
    %1525 = vmatpush2.bf16.msra.mxu0 0
    %1526 = vmatprep.subr.bf16.mxu0 0
    %1527 = vmatpush2.bf16.msra.mxu0 0
    %1528 = vmatprep.mubr.bf16.mxu0 0
    %1529 = vmatmul.mubr.bf16.gmra.mxu0 %v1494
    %v1530 = vpop.f32.mrf.mxu0
    %v1531 = vadd.f32 %v497, %v1530
    %v1532 = vpop.f32.mrf.mxu0
    %v1533 = vpop.f32.mrf.mxu0
    %v1534 = vpop.f32.mrf.mxu0
    %1535 = vdwg.mxu0
    %v1536 = vpack.c.bf16 %v1476, %v1476
    %1538 = vrot.lane.b32.xlu0 %v1536, 96
    %v1539 = vpop.permute.xlu0 %1538
    %v1541 = vsel %vm511, %v1539, 0
    %1543 = vmatprep.subr.bf16.mxu0 0
    %1544 = vmatpush1.bf16.msra.mxu0 0
    %1545 = vmatprep.subr.bf16.mxu0 0
    %1546 = vmatpush1.bf16.msra.mxu0 0
    %1547 = vmatprep.subr.bf16.mxu0 0
    %1548 = vmatpush1.bf16.msra.mxu0 0
    %1549 = vmatprep.subr.bf16.mxu0 0
    %1550 = vmatpush1.bf16.msra.mxu0 0
    %1551 = vmatprep.subr.bf16.mxu0 0
    %1552 = vmatpush1.bf16.msra.mxu0 0
    %1553 = vmatprep.subr.bf16.mxu0 0
    %1554 = vmatpush1.bf16.msra.mxu0 0
    %1555 = vmatprep.subr.bf16.mxu0 0
    %1556 = vmatpush1.bf16.msra.mxu0 %v570
    %1557 = vmatprep.subr.bf16.mxu0 0
    %1558 = vmatpush1.bf16.msra.mxu0 %v569
    %1559 = vmatprep.subr.bf16.mxu0 0
    %1560 = vmatpush2.bf16.msra.mxu0 0
    %1561 = vmatprep.subr.bf16.mxu0 0
    %1562 = vmatpush2.bf16.msra.mxu0 0
    %1563 = vmatprep.subr.bf16.mxu0 0
    %1564 = vmatpush2.bf16.msra.mxu0 0
    %1565 = vmatprep.subr.bf16.mxu0 0
    %1566 = vmatpush2.bf16.msra.mxu0 0
    %1567 = vmatprep.subr.bf16.mxu0 0
    %1568 = vmatpush2.bf16.msra.mxu0 0
    %1569 = vmatprep.subr.bf16.mxu0 0
    %1570 = vmatpush2.bf16.msra.mxu0 0
    %1571 = vmatprep.subr.bf16.mxu0 0
    %1572 = vmatpush2.bf16.msra.mxu0 0
    %1573 = vmatprep.subr.bf16.mxu0 0
    %1574 = vmatpush2.bf16.msra.mxu0 0
    %1575 = vmatprep.mubr.bf16.mxu0 0
    %1576 = vmatmul.mubr.bf16.gmra.mxu0 %v1541
    %v1577 = vpop.f32.mrf.mxu0
    %v1578 = vadd.f32 %v559, %v1577
    %v1579 = vpop.f32.mrf.mxu0
    %v1580 = vpop.f32.mrf.mxu0
    %v1581 = vpop.f32.mrf.mxu0
    %1582 = vdwg.mxu0
    %s1583 = scalar_lea.vmem [#allocation2], 48
    %v1584 = vld [vmem:[%s1583] sm:$0xff]
    %v1585 = vadd.f32 %v1584, %v1531
    %v1586 = vxor.u32 %v1585, 2147483648
    %v1587 = vmul.f32 %v1586, 1.442695
    %v1588 = vpow.pop %v1587
    %v1589 = vadd.f32 %v1588, 1.0
    %v1590 = vrcp.pop %v1589
    %v1591 = vmul.f32 1.0, %v1590
    %1593 = vrot.lane.b32.xlu0 %v1531, 64
    %v1594 = vpop.permute.xlu0 %1593
    %v1596 = vmul.f32 %v1591, %v1594
    %1598 = vrot.lane.b32.xlu0 %v1596, 64
    %v1599 = vpop.permute.xlu0 %1598
    %v1601 = vadd.f32 %v1584, %v1599
    %v1602 = vtanh.pop %v1601
    %v1603 = vsub.f32 1.0, %v1591
    %1605 = vrot.lane.b32.xlu0 %v1602, 96
    %v1606 = vpop.permute.xlu0 %1605
    %v1608 = vmul.f32 %v1603, %v1606
    %v1609 = vmul.f32 %v1591, %v1448
    %v1610 = vadd.f32 %v1608, %v1609
    %s1611 = scalar_lea.vmem [#allocation3], 8
    %v1612 = vld [vmem:[%s1611] sm:$0xff]
    %v1613 = vadd.f32 %v1612, %v1578
    %v1614 = vxor.u32 %v1613, 2147483648
    %v1615 = vmul.f32 %v1614, 1.442695
    %v1616 = vpow.pop %v1615
    %v1617 = vadd.f32 %v1616, 1.0
    %v1618 = vrcp.pop %v1617
    %v1619 = vmul.f32 1.0, %v1618
    %1621 = vrot.lane.b32.xlu0 %v1578, 64
    %v1622 = vpop.permute.xlu0 %1621
    %v1624 = vmul.f32 %v1619, %v1622
    %1626 = vrot.lane.b32.xlu0 %v1624, 64
    %v1627 = vpop.permute.xlu0 %1626
    %v1629 = vadd.f32 %v1612, %v1627
    %v1630 = vtanh.pop %v1629
    %v1631 = vsub.f32 1.0, %v1619
    %1633 = vrot.lane.b32.xlu0 %v1630, 96
    %v1634 = vpop.permute.xlu0 %1633
    %v1636 = vmul.f32 %v1631, %v1634
    %v1637 = vmul.f32 %v1619, %v1476
    %v1638 = vadd.f32 %v1636, %v1637
    %1640 = vrot.lane.b32.xlu0 %v1610, 96
    %v1641 = vpop.permute.xlu0 %1640
    %s1643 = scalar_lea.vmem [#allocation4], 48
    %1644 = vst.msk [vmem:[%s1643] sm:$0xff] %vm511, %v1641
    %1646 = vrot.lane.b32.xlu0 %v1638, 96
    %v1647 = vpop.permute.xlu0 %1646
    %s1649 = scalar_lea.vmem [#allocation5], 8
    %1650 = vst.msk [vmem:[%s1649] sm:$0xff] %vm511, %v1647
    %v1651 = vpack.c.bf16 %v1610, %v1610
    %1653 = vrot.lane.b32.xlu0 %v1651, 96
    %v1654 = vpop.permute.xlu0 %1653
    %v1656 = vsel %vm511, %v1654, 0
    %1658 = vmatprep.subr.bf16.mxu0 0
    %1659 = vmatpush1.bf16.msra.mxu0 0
    %1660 = vmatprep.subr.bf16.mxu0 0
    %1661 = vmatpush1.bf16.msra.mxu0 0
    %1662 = vmatprep.subr.bf16.mxu0 0
    %1663 = vmatpush1.bf16.msra.mxu0 0
    %1664 = vmatprep.subr.bf16.mxu0 0
    %1665 = vmatpush1.bf16.msra.mxu0 0
    %1666 = vmatprep.subr.bf16.mxu0 0
    %1667 = vmatpush1.bf16.msra.mxu0 0
    %1668 = vmatprep.subr.bf16.mxu0 0
    %1669 = vmatpush1.bf16.msra.mxu0 0
    %1670 = vmatprep.subr.bf16.mxu0 0
    %1671 = vmatpush1.bf16.msra.mxu0 %v508
    %1672 = vmatprep.subr.bf16.mxu0 0
    %1673 = vmatpush1.bf16.msra.mxu0 %v507
    %1674 = vmatprep.subr.bf16.mxu0 0
    %1675 = vmatpush2.bf16.msra.mxu0 0
    %1676 = vmatprep.subr.bf16.mxu0 0
    %1677 = vmatpush2.bf16.msra.mxu0 0
    %1678 = vmatprep.subr.bf16.mxu0 0
    %1679 = vmatpush2.bf16.msra.mxu0 0
    %1680 = vmatprep.subr.bf16.mxu0 0
    %1681 = vmatpush2.bf16.msra.mxu0 0
    %1682 = vmatprep.subr.bf16.mxu0 0
    %1683 = vmatpush2.bf16.msra.mxu0 0
    %1684 = vmatprep.subr.bf16.mxu0 0
    %1685 = vmatpush2.bf16.msra.mxu0 0
    %1686 = vmatprep.subr.bf16.mxu0 0
    %1687 = vmatpush2.bf16.msra.mxu0 0
    %1688 = vmatprep.subr.bf16.mxu0 0
    %1689 = vmatpush2.bf16.msra.mxu0 0
    %1690 = vmatprep.mubr.bf16.mxu0 0
    %1691 = vmatmul.mubr.bf16.gmra.mxu0 %v1656
    %v1692 = vpop.f32.mrf.mxu0
    %v1693 = vadd.f32 %v497, %v1692
    %v1694 = vpop.f32.mrf.mxu0
    %v1695 = vpop.f32.mrf.mxu0
    %v1696 = vpop.f32.mrf.mxu0
    %1697 = vdwg.mxu0
    %v1698 = vpack.c.bf16 %v1638, %v1638
    %1700 = vrot.lane.b32.xlu0 %v1698, 96
    %v1701 = vpop.permute.xlu0 %1700
    %v1703 = vsel %vm511, %v1701, 0
    %1705 = vmatprep.subr.bf16.mxu0 0
    %1706 = vmatpush1.bf16.msra.mxu0 0
    %1707 = vmatprep.subr.bf16.mxu0 0
    %1708 = vmatpush1.bf16.msra.mxu0 0
    %1709 = vmatprep.subr.bf16.mxu0 0
    %1710 = vmatpush1.bf16.msra.mxu0 0
    %1711 = vmatprep.subr.bf16.mxu0 0
    %1712 = vmatpush1.bf16.msra.mxu0 0
    %1713 = vmatprep.subr.bf16.mxu0 0
    %1714 = vmatpush1.bf16.msra.mxu0 0
    %1715 = vmatprep.subr.bf16.mxu0 0
    %1716 = vmatpush1.bf16.msra.mxu0 0
    %1717 = vmatprep.subr.bf16.mxu0 0
    %1718 = vmatpush1.bf16.msra.mxu0 %v570
    %1719 = vmatprep.subr.bf16.mxu0 0
    %1720 = vmatpush1.bf16.msra.mxu0 %v569
    %1721 = vmatprep.subr.bf16.mxu0 0
    %1722 = vmatpush2.bf16.msra.mxu0 0
    %1723 = vmatprep.subr.bf16.mxu0 0
    %1724 = vmatpush2.bf16.msra.mxu0 0
    %1725 = vmatprep.subr.bf16.mxu0 0
    %1726 = vmatpush2.bf16.msra.mxu0 0
    %1727 = vmatprep.subr.bf16.mxu0 0
    %1728 = vmatpush2.bf16.msra.mxu0 0
    %1729 = vmatprep.subr.bf16.mxu0 0
    %1730 = vmatpush2.bf16.msra.mxu0 0
    %1731 = vmatprep.subr.bf16.mxu0 0
    %1732 = vmatpush2.bf16.msra.mxu0 0
    %1733 = vmatprep.subr.bf16.mxu0 0
    %1734 = vmatpush2.bf16.msra.mxu0 0
    %1735 = vmatprep.subr.bf16.mxu0 0
    %1736 = vmatpush2.bf16.msra.mxu0 0
    %1737 = vmatprep.mubr.bf16.mxu0 0
    %1738 = vmatmul.mubr.bf16.gmra.mxu0 %v1703
    %v1739 = vpop.f32.mrf.mxu0
    %v1740 = vadd.f32 %v559, %v1739
    %v1741 = vpop.f32.mrf.mxu0
    %v1742 = vpop.f32.mrf.mxu0
    %v1743 = vpop.f32.mrf.mxu0
    %1744 = vdwg.mxu0
    %s1745 = scalar_lea.vmem [#allocation2], 56
    %v1746 = vld [vmem:[%s1745] sm:$0xff]
    %v1747 = vadd.f32 %v1746, %v1693
    %v1748 = vxor.u32 %v1747, 2147483648
    %v1749 = vmul.f32 %v1748, 1.442695
    %v1750 = vpow.pop %v1749
    %v1751 = vadd.f32 %v1750, 1.0
    %v1752 = vrcp.pop %v1751
    %v1753 = vmul.f32 1.0, %v1752
    %1755 = vrot.lane.b32.xlu0 %v1693, 64
    %v1756 = vpop.permute.xlu0 %1755
    %v1758 = vmul.f32 %v1753, %v1756
    %1760 = vrot.lane.b32.xlu0 %v1758, 64
    %v1761 = vpop.permute.xlu0 %1760
    %v1763 = vadd.f32 %v1746, %v1761
    %v1764 = vtanh.pop %v1763
    %v1765 = vsub.f32 1.0, %v1753
    %1767 = vrot.lane.b32.xlu0 %v1764, 96
    %v1768 = vpop.permute.xlu0 %1767
    %v1770 = vmul.f32 %v1765, %v1768
    %v1771 = vmul.f32 %v1753, %v1610
    %v1772 = vadd.f32 %v1770, %v1771
    %v1773 = vld [vmem:[#allocation3] sm:$0xff]
    %v1774 = vadd.f32 %v1773, %v1740
    %v1775 = vxor.u32 %v1774, 2147483648
    %v1776 = vmul.f32 %v1775, 1.442695
    %v1777 = vpow.pop %v1776
    %v1778 = vadd.f32 %v1777, 1.0
    %v1779 = vrcp.pop %v1778
    %v1780 = vmul.f32 1.0, %v1779
    %1782 = vrot.lane.b32.xlu0 %v1740, 64
    %v1783 = vpop.permute.xlu0 %1782
    %v1785 = vmul.f32 %v1780, %v1783
    %1787 = vrot.lane.b32.xlu0 %v1785, 64
    %v1788 = vpop.permute.xlu0 %1787
    %v1790 = vadd.f32 %v1773, %v1788
    %v1791 = vtanh.pop %v1790
    %v1792 = vsub.f32 1.0, %v1780
    %1794 = vrot.lane.b32.xlu0 %v1791, 96
    %v1795 = vpop.permute.xlu0 %1794
    %v1797 = vmul.f32 %v1792, %v1795
    %v1798 = vmul.f32 %v1780, %v1638
    %v1799 = vadd.f32 %v1797, %v1798
    %1801 = vrot.lane.b32.xlu0 %v1772, 96
    %v1802 = vpop.permute.xlu0 %1801
    %s1804 = scalar_lea.vmem [#allocation4], 56
    %1805 = vst.msk [vmem:[%s1804] sm:$0xff] %vm511, %v1802
    %1807 = vrot.lane.b32.xlu0 %v1799, 96
    %v1808 = vpop.permute.xlu0 %1807
    %1810 = vst.msk [vmem:[#allocation5] sm:$0xff] %vm511, %v1808
    %v1811 = vld [vmem:[#allocation4] sm:$0xff]
    %v1812 = vld [vmem:[#allocation4 + $0x8] sm:$0xff]
    %v1813 = vld [vmem:[#allocation4 + $0x10] sm:$0xff]
    %v1814 = vld [vmem:[#allocation4 + $0x18] sm:$0xff]
    %v1815 = vld [vmem:[#allocation4 + $0x20] sm:$0xff]
    %v1816 = vld [vmem:[#allocation4 + $0x28] sm:$0xff]
    %v1817 = vld [vmem:[#allocation4 + $0x30] sm:$0xff]
    %v1818 = vld [vmem:[#allocation4 + $0x38] sm:$0xff]
    %v1819 = vld [vmem:[#allocation5] sm:$0xff]
    %v1820 = vld [vmem:[#allocation5 + $0x8] sm:$0xff]
    %v1821 = vld [vmem:[#allocation5 + $0x10] sm:$0xff]
    %v1822 = vld [vmem:[#allocation5 + $0x18] sm:$0xff]
    %v1823 = vld [vmem:[#allocation5 + $0x20] sm:$0xff]
    %v1824 = vld [vmem:[#allocation5 + $0x28] sm:$0xff]
    %v1825 = vld [vmem:[#allocation5 + $0x30] sm:$0xff]
    %v1826 = vld [vmem:[#allocation5 + $0x38] sm:$0xff]
    %v1827 = vadd.f32 %v1811, %v1819
    %v1828 = vadd.f32 %v1812, %v1820
    %v1829 = vadd.f32 %v1813, %v1821
    %v1830 = vadd.f32 %v1814, %v1822
    %v1831 = vadd.f32 %v1815, %v1823
    %v1832 = vadd.f32 %v1816, %v1824
    %v1833 = vadd.f32 %v1817, %v1825
    %v1834 = vadd.f32 %v1818, %v1826
    %v1835 = vsel %vm511, %v1827, 0.0
    %1836 = vadd.xlane.f32.xlu0 %v1835
    %v1837 = vpop.xlane.xlu0 %1836
    %v1838 = vsel %vm511, %v1828, 0.0
    %1839 = vadd.xlane.f32.xlu0 %v1838
    %v1840 = vpop.xlane.xlu0 %1839
    %v1841 = vsel %vm511, %v1829, 0.0
    %1842 = vadd.xlane.f32.xlu0 %v1841
    %v1843 = vpop.xlane.xlu0 %1842
    %v1844 = vsel %vm511, %v1830, 0.0
    %1845 = vadd.xlane.f32.xlu0 %v1844
    %v1846 = vpop.xlane.xlu0 %1845
    %v1847 = vsel %vm511, %v1831, 0.0
    %1848 = vadd.xlane.f32.xlu0 %v1847
    %v1849 = vpop.xlane.xlu0 %1848
    %v1850 = vsel %vm511, %v1832, 0.0
    %1851 = vadd.xlane.f32.xlu0 %v1850
    %v1852 = vpop.xlane.xlu0 %1851
    %v1853 = vsel %vm511, %v1833, 0.0
    %1854 = vadd.xlane.f32.xlu0 %v1853
    %v1855 = vpop.xlane.xlu0 %1854
    %v1856 = vsel %vm511, %v1834, 0.0
    %1857 = vadd.xlane.f32.xlu0 %v1856
    %v1858 = vpop.xlane.xlu0 %1857
    %v1859 = vrcp.pop 32.0
    %v1860 = vmul.f32 %v1837, %v1859
    %v1861 = vmul.f32 %v1840, %v1859
    %v1862 = vmul.f32 %v1843, %v1859
    %v1863 = vmul.f32 %v1846, %v1859
    %v1864 = vmul.f32 %v1849, %v1859
    %v1865 = vmul.f32 %v1852, %v1859
    %v1866 = vmul.f32 %v1855, %v1859
    %v1867 = vmul.f32 %v1858, %v1859
    %v1868 = vsub.f32 %v1827, %v1860
    %v1869 = vsub.f32 %v1828, %v1861
    %v1870 = vsub.f32 %v1829, %v1862
    %v1871 = vsub.f32 %v1830, %v1863
    %v1872 = vsub.f32 %v1831, %v1864
    %v1873 = vsub.f32 %v1832, %v1865
    %v1874 = vsub.f32 %v1833, %v1866
    %v1875 = vsub.f32 %v1834, %v1867
    %v1876 = vmul.f32 %v1868, %v1868
    %v1877 = vmul.f32 %v1869, %v1869
    %v1878 = vmul.f32 %v1870, %v1870
    %v1879 = vmul.f32 %v1871, %v1871
    %v1880 = vmul.f32 %v1872, %v1872
    %v1881 = vmul.f32 %v1873, %v1873
    %v1882 = vmul.f32 %v1874, %v1874
    %v1883 = vmul.f32 %v1875, %v1875
    %v1884 = vsel %vm511, %v1876, 0.0
    %1885 = vadd.xlane.f32.xlu0 %v1884
    %v1886 = vpop.xlane.xlu0 %1885
    %v1887 = vsel %vm511, %v1877, 0.0
    %1888 = vadd.xlane.f32.xlu0 %v1887
    %v1889 = vpop.xlane.xlu0 %1888
    %v1890 = vsel %vm511, %v1878, 0.0
    %1891 = vadd.xlane.f32.xlu0 %v1890
    %v1892 = vpop.xlane.xlu0 %1891
    %v1893 = vsel %vm511, %v1879, 0.0
    %1894 = vadd.xlane.f32.xlu0 %v1893
    %v1895 = vpop.xlane.xlu0 %1894
    %v1896 = vsel %vm511, %v1880, 0.0
    %1897 = vadd.xlane.f32.xlu0 %v1896
    %v1898 = vpop.xlane.xlu0 %1897
    %v1899 = vsel %vm511, %v1881, 0.0
    %1900 = vadd.xlane.f32.xlu0 %v1899
    %v1901 = vpop.xlane.xlu0 %1900
    %v1902 = vsel %vm511, %v1882, 0.0
    %1903 = vadd.xlane.f32.xlu0 %v1902
    %v1904 = vpop.xlane.xlu0 %1903
    %v1905 = vsel %vm511, %v1883, 0.0
    %1906 = vadd.xlane.f32.xlu0 %v1905
    %v1907 = vpop.xlane.xlu0 %1906
    %v1908 = vmul.f32 %v1886, %v1859
    %v1909 = vmul.f32 %v1889, %v1859
    %v1910 = vmul.f32 %v1892, %v1859
    %v1911 = vmul.f32 %v1895, %v1859
    %v1912 = vmul.f32 %v1898, %v1859
    %v1913 = vmul.f32 %v1901, %v1859
    %v1914 = vmul.f32 %v1904, %v1859
    %v1915 = vmul.f32 %v1907, %v1859
    %v1916 = vadd.f32 %v1908, 1e-05
    %v1917 = vadd.f32 %v1909, 1e-05
    %v1918 = vadd.f32 %v1910, 1e-05
    %v1919 = vadd.f32 %v1911, 1e-05
    %v1920 = vadd.f32 %v1912, 1e-05
    %v1921 = vadd.f32 %v1913, 1e-05
    %v1922 = vadd.f32 %v1914, 1e-05
    %v1923 = vadd.f32 %v1915, 1e-05
    %v1924 = vrsqrt.pop %v1916
    %v1925 = vrsqrt.pop %v1917
    %v1926 = vrsqrt.pop %v1918
    %v1927 = vrsqrt.pop %v1919
    %v1928 = vrsqrt.pop %v1920
    %v1929 = vrsqrt.pop %v1921
    %v1930 = vrsqrt.pop %v1922
    %v1931 = vrsqrt.pop %v1923
    %v1932 = vmul.f32 %v1868, %v1924
    %v1933 = vmul.f32 %v1869, %v1925
    %v1934 = vmul.f32 %v1870, %v1926
    %v1935 = vmul.f32 %v1871, %v1927
    %v1936 = vmul.f32 %v1872, %v1928
    %v1937 = vmul.f32 %v1873, %v1929
    %v1938 = vmul.f32 %v1874, %v1930
    %v1939 = vmul.f32 %v1875, %v1931
    %v1940 = vld [vmem:[#allocation18] sm:$0x1]
    %v1942 = vlaneseq
    %v1943 = vshrl.u32 %v1942, 7
    %v1944 = vsub.s32 0, %v1943
    %v1945 = vrot.slane %v1940, %v1944
    %v1947 = vmul.f32 %v1932, %v1945
    %v1948 = vmul.f32 %v1933, %v1945
    %v1949 = vmul.f32 %v1934, %v1945
    %v1950 = vmul.f32 %v1935, %v1945
    %v1951 = vmul.f32 %v1936, %v1945
    %v1952 = vmul.f32 %v1937, %v1945
    %v1953 = vmul.f32 %v1938, %v1945
    %v1954 = vmul.f32 %v1939, %v1945
    %v1955 = vld [vmem:[#allocation20] sm:$0x1]
    %v1957 = vlaneseq
    %v1958 = vshrl.u32 %v1957, 7
    %v1959 = vsub.s32 0, %v1958
    %v1960 = vrot.slane %v1955, %v1959
    %v1962 = vadd.f32 %v1947, %v1960
    %v1963 = vadd.f32 %v1948, %v1960
    %v1964 = vadd.f32 %v1949, %v1960
    %v1965 = vadd.f32 %v1950, %v1960
    %v1966 = vadd.f32 %v1951, %v1960
    %v1967 = vadd.f32 %v1952, %v1960
    %v1968 = vadd.f32 %v1953, %v1960
    %v1969 = vadd.f32 %v1954, %v1960
    %v1970 = vpack.c.bf16 %v1963, %v1962
    %v1971 = vpack.c.bf16 %v1965, %v1964
    %v1972 = vpack.c.bf16 %v1967, %v1966
    %v1973 = vpack.c.bf16 %v1969, %v1968
    %v1974 = vld [vmem:[%s13] sm:$0xf]
    %v1975 = vld [vmem:[%s13 + $0x4] sm:$0xf]
    %v1976 = vld [vmem:[%s13 + $0x8] sm:$0xf]
    %v1977 = vld [vmem:[%s13 + $0xc] sm:$0xf]
    %v1978 = vld [vmem:[#allocation21] sm:$0x1]
    %v1980 = vlaneseq
    %v1981 = vshrl.u32 %v1980, 7
    %v1982 = vsub.s32 0, %v1981
    %v1983 = vrot.slane %v1978, %v1982
    %v1989 = vunpack.c.l.b16 %v1974
    %v1990 = vunpack.c.l.b16 %v1975
    %v1991 = vunpack.c.l.b16 %v1976
    %v1992 = vunpack.c.l.b16 %v1977
    %v1993 = vpack.c.b16 %v1990, %v1989
    %v1994 = vpack.c.b16 %v1992, %v1991
    %v1998 = vsel %vm511, %v1970, 0
    %v2001 = vsel %vm511, %v1971, 0
    %v2004 = vsel %vm511, %v1972, 0
    %v2007 = vsel %vm511, %v1973, 0
    %2009 = vmatprep.subr.bf16.mxu0 0
    %2010 = vmatpush1.bf16.msra.mxu0 0
    %2011 = vmatprep.subr.bf16.mxu0 0
    %2012 = vmatpush1.bf16.msra.mxu0 0
    %2013 = vmatprep.subr.bf16.mxu0 0
    %2014 = vmatpush1.bf16.msra.mxu0 0
    %2015 = vmatprep.subr.bf16.mxu0 0
    %2016 = vmatpush1.bf16.msra.mxu0 0
    %2017 = vmatprep.subr.bf16.mxu0 0
    %2018 = vmatpush1.bf16.msra.mxu0 0
    %2019 = vmatprep.subr.bf16.mxu0 0
    %2020 = vmatpush1.bf16.msra.mxu0 0
    %2021 = vmatprep.subr.bf16.mxu0 0
    %2022 = vmatpush1.bf16.msra.mxu0 %v1994
    %2023 = vmatprep.subr.bf16.mxu0 0
    %2024 = vmatpush1.bf16.msra.mxu0 %v1993
    %2025 = vmatprep.subr.bf16.mxu0 0
    %2026 = vmatpush2.bf16.msra.mxu0 0
    %2027 = vmatprep.subr.bf16.mxu0 0
    %2028 = vmatpush2.bf16.msra.mxu0 0
    %2029 = vmatprep.subr.bf16.mxu0 0
    %2030 = vmatpush2.bf16.msra.mxu0 0
    %2031 = vmatprep.subr.bf16.mxu0 0
    %2032 = vmatpush2.bf16.msra.mxu0 0
    %2033 = vmatprep.subr.bf16.mxu0 0
    %2034 = vmatpush2.bf16.msra.mxu0 0
    %2035 = vmatprep.subr.bf16.mxu0 0
    %2036 = vmatpush2.bf16.msra.mxu0 0
    %2037 = vmatprep.subr.bf16.mxu0 0
    %2038 = vmatpush2.bf16.msra.mxu0 0
    %2039 = vmatprep.subr.bf16.mxu0 0
    %2040 = vmatpush2.bf16.msra.mxu0 0
    %2041 = vmatprep.mubr.bf16.mxu0 0
    %2042 = vmatmul.mubr.bf16.gmra.mxu0 %v1998
    %v2043 = vpop.f32.mrf.mxu0
    %v2044 = vadd.f32 %v1983, %v2043
    %v2045 = vpop.f32.mrf.mxu0
    %v2046 = vpop.f32.mrf.mxu0
    %v2047 = vadd.f32 %v1983, %v2046
    %v2048 = vpop.f32.mrf.mxu0
    %2049 = vmatprep.mubr.bf16.mxu0 0
    %2050 = vmatmul.mubr.bf16.gmra.mxu0 %v2001
    %v2051 = vpop.f32.mrf.mxu0
    %v2052 = vadd.f32 %v1983, %v2051
    %v2053 = vpop.f32.mrf.mxu0
    %v2054 = vpop.f32.mrf.mxu0
    %v2055 = vadd.f32 %v1983, %v2054
    %v2056 = vpop.f32.mrf.mxu0
    %2057 = vmatprep.mubr.bf16.mxu0 0
    %2058 = vmatmul.mubr.bf16.gmra.mxu0 %v2004
    %v2059 = vpop.f32.mrf.mxu0
    %v2060 = vadd.f32 %v1983, %v2059
    %v2061 = vpop.f32.mrf.mxu0
    %v2062 = vpop.f32.mrf.mxu0
    %v2063 = vadd.f32 %v1983, %v2062
    %v2064 = vpop.f32.mrf.mxu0
    %2065 = vmatprep.mubr.bf16.mxu0 0
    %2066 = vmatmul.mubr.bf16.gmra.mxu0 %v2007
    %v2067 = vpop.f32.mrf.mxu0
    %v2068 = vadd.f32 %v1983, %v2067
    %v2069 = vpop.f32.mrf.mxu0
    %v2070 = vpop.f32.mrf.mxu0
    %v2071 = vadd.f32 %v1983, %v2070
    %v2072 = vpop.f32.mrf.mxu0
    %2073 = vdwg.mxu0
    %2074 = vst.msk [vmem:[#allocation2] sm:$0xff] %vm386, %v2044
    %2075 = vst.msk [vmem:[#allocation2 + $0x8] sm:$0xff] %vm386, %v2047
    %2076 = vst.msk [vmem:[#allocation2 + $0x10] sm:$0xff] %vm386, %v2052
    %2077 = vst.msk [vmem:[#allocation2 + $0x18] sm:$0xff] %vm386, %v2055
    %2078 = vst.msk [vmem:[#allocation2 + $0x20] sm:$0xff] %vm386, %v2060
    %2079 = vst.msk [vmem:[#allocation2 + $0x28] sm:$0xff] %vm386, %v2063
    %2080 = vst.msk [vmem:[#allocation2 + $0x30] sm:$0xff] %vm386, %v2068
    %2081 = vst.msk [vmem:[#allocation2 + $0x38] sm:$0xff] %vm386, %v2071
    %v2082 = vld [vmem:[%s14] sm:$0xf]
    %v2083 = vld [vmem:[%s14 + $0x4] sm:$0xf]
    %v2084 = vld [vmem:[%s14 + $0x8] sm:$0xf]
    %v2085 = vld [vmem:[%s14 + $0xc] sm:$0xf]
    %v2086 = vld [vmem:[#allocation23] sm:$0x1]
    %v2088 = vlaneseq
    %v2089 = vshrl.u32 %v2088, 7
    %v2090 = vsub.s32 0, %v2089
    %v2091 = vrot.slane %v2086, %v2090
    %v2097 = vunpack.c.l.b16 %v2082
    %v2098 = vunpack.c.l.b16 %v2083
    %v2099 = vunpack.c.l.b16 %v2084
    %v2100 = vunpack.c.l.b16 %v2085
    %v2101 = vpack.c.b16 %v2098, %v2097
    %v2102 = vpack.c.b16 %v2100, %v2099
    %2105 = vmatprep.subr.bf16.mxu0 0
    %2106 = vmatpush1.bf16.msra.mxu0 0
    %2107 = vmatprep.subr.bf16.mxu0 0
    %2108 = vmatpush1.bf16.msra.mxu0 0
    %2109 = vmatprep.subr.bf16.mxu0 0
    %2110 = vmatpush1.bf16.msra.mxu0 0
    %2111 = vmatprep.subr.bf16.mxu0 0
    %2112 = vmatpush1.bf16.msra.mxu0 0
    %2113 = vmatprep.subr.bf16.mxu0 0
    %2114 = vmatpush1.bf16.msra.mxu0 0
    %2115 = vmatprep.subr.bf16.mxu0 0
    %2116 = vmatpush1.bf16.msra.mxu0 0
    %2117 = vmatprep.subr.bf16.mxu0 0
    %2118 = vmatpush1.bf16.msra.mxu0 %v2102
    %2119 = vmatprep.subr.bf16.mxu0 0
    %2120 = vmatpush1.bf16.msra.mxu0 %v2101
    %2121 = vmatprep.subr.bf16.mxu0 0
    %2122 = vmatpush2.bf16.msra.mxu0 0
    %2123 = vmatprep.subr.bf16.mxu0 0
    %2124 = vmatpush2.bf16.msra.mxu0 0
    %2125 = vmatprep.subr.bf16.mxu0 0
    %2126 = vmatpush2.bf16.msra.mxu0 0
    %2127 = vmatprep.subr.bf16.mxu0 0
    %2128 = vmatpush2.bf16.msra.mxu0 0
    %2129 = vmatprep.subr.bf16.mxu0 0
    %2130 = vmatpush2.bf16.msra.mxu0 0
    %2131 = vmatprep.subr.bf16.mxu0 0
    %2132 = vmatpush2.bf16.msra.mxu0 0
    %2133 = vmatprep.subr.bf16.mxu0 0
    %2134 = vmatpush2.bf16.msra.mxu0 0
    %2135 = vmatprep.subr.bf16.mxu0 0
    %2136 = vmatpush2.bf16.msra.mxu0 0
    %2137 = vmatprep.mubr.bf16.mxu0 0
    %2138 = vmatmul.mubr.bf16.gmra.mxu0 %v1998
    %v2139 = vpop.f32.mrf.mxu0
    %v2140 = vadd.f32 %v2091, %v2139
    %v2141 = vpop.f32.mrf.mxu0
    %v2142 = vpop.f32.mrf.mxu0
    %v2143 = vadd.f32 %v2091, %v2142
    %v2144 = vpop.f32.mrf.mxu0
    %2145 = vmatprep.mubr.bf16.mxu0 0
    %2146 = vmatmul.mubr.bf16.gmra.mxu0 %v2001
    %v2147 = vpop.f32.mrf.mxu0
    %v2148 = vadd.f32 %v2091, %v2147
    %v2149 = vpop.f32.mrf.mxu0
    %v2150 = vpop.f32.mrf.mxu0
    %v2151 = vadd.f32 %v2091, %v2150
    %v2152 = vpop.f32.mrf.mxu0
    %2153 = vmatprep.mubr.bf16.mxu0 0
    %2154 = vmatmul.mubr.bf16.gmra.mxu0 %v2004
    %v2155 = vpop.f32.mrf.mxu0
    %v2156 = vadd.f32 %v2091, %v2155
    %v2157 = vpop.f32.mrf.mxu0
    %v2158 = vpop.f32.mrf.mxu0
    %v2159 = vadd.f32 %v2091, %v2158
    %v2160 = vpop.f32.mrf.mxu0
    %2161 = vmatprep.mubr.bf16.mxu0 0
    %2162 = vmatmul.mubr.bf16.gmra.mxu0 %v2007
    %v2163 = vpop.f32.mrf.mxu0
    %v2164 = vadd.f32 %v2091, %v2163
    %v2165 = vpop.f32.mrf.mxu0
    %v2166 = vpop.f32.mrf.mxu0
    %v2167 = vadd.f32 %v2091, %v2166
    %v2168 = vpop.f32.mrf.mxu0
    %2169 = vdwg.mxu0
    %2170 = vst.msk [vmem:[#allocation3] sm:$0xff] %vm386, %v2140
    %2171 = vst.msk [vmem:[#allocation3 + $0x8] sm:$0xff] %vm386, %v2143
    %2172 = vst.msk [vmem:[#allocation3 + $0x10] sm:$0xff] %vm386, %v2148
    %2173 = vst.msk [vmem:[#allocation3 + $0x18] sm:$0xff] %vm386, %v2151
    %2174 = vst.msk [vmem:[#allocation3 + $0x20] sm:$0xff] %vm386, %v2156
    %2175 = vst.msk [vmem:[#allocation3 + $0x28] sm:$0xff] %vm386, %v2159
    %2176 = vst.msk [vmem:[#allocation3 + $0x30] sm:$0xff] %vm386, %v2164
    %2177 = vst.msk [vmem:[#allocation3 + $0x38] sm:$0xff] %vm386, %v2167
    %v2178 = vld [vmem:[%s17] sm:$0xf]
    %v2179 = vld [vmem:[%s17 + $0x4] sm:$0xf]
    %v2180 = vld [vmem:[%s17 + $0x8] sm:$0xf]
    %v2181 = vld [vmem:[%s17 + $0xc] sm:$0xf]
    %v2182 = vld [vmem:[#allocation24] sm:$0xf]
    %v2183 = vld [vmem:[#allocation24 + $0x4] sm:$0xf]
    %v2184 = vld [vmem:[#allocation24 + $0x8] sm:$0xf]
    %v2185 = vld [vmem:[#allocation24 + $0xc] sm:$0xf]
    %v2186 = vld [vmem:[#allocation26] sm:$0x1]
    %v2187 = vld [vmem:[#allocation27] sm:$0x1]
    %v2189 = vlaneseq
    %v2190 = vshrl.u32 %v2189, 7
    %v2191 = vsub.s32 0, %v2190
    %v2192 = vrot.slane %v2186, %v2191
    %v2198 = vunpack.c.l.b16 %v2178
    %v2199 = vunpack.c.l.b16 %v2179
    %v2200 = vunpack.c.l.b16 %v2180
    %v2201 = vunpack.c.l.b16 %v2181
    %v2202 = vpack.c.b16 %v2199, %v2198
    %v2203 = vpack.c.b16 %v2201, %v2200
    %2206 = vmatprep.subr.bf16.mxu0 0
    %2207 = vmatpush1.bf16.msra.mxu0 0
    %2208 = vmatprep.subr.bf16.mxu0 0
    %2209 = vmatpush1.bf16.msra.mxu0 0
    %2210 = vmatprep.subr.bf16.mxu0 0
    %2211 = vmatpush1.bf16.msra.mxu0 0
    %2212 = vmatprep.subr.bf16.mxu0 0
    %2213 = vmatpush1.bf16.msra.mxu0 0
    %2214 = vmatprep.subr.bf16.mxu0 0
    %2215 = vmatpush1.bf16.msra.mxu0 0
    %2216 = vmatprep.subr.bf16.mxu0 0
    %2217 = vmatpush1.bf16.msra.mxu0 0
    %2218 = vmatprep.subr.bf16.mxu0 0
    %2219 = vmatpush1.bf16.msra.mxu0 %v2203
    %2220 = vmatprep.subr.bf16.mxu0 0
    %2221 = vmatpush1.bf16.msra.mxu0 %v2202
    %2222 = vmatprep.subr.bf16.mxu0 0
    %2223 = vmatpush2.bf16.msra.mxu0 0
    %2224 = vmatprep.subr.bf16.mxu0 0
    %2225 = vmatpush2.bf16.msra.mxu0 0
    %2226 = vmatprep.subr.bf16.mxu0 0
    %2227 = vmatpush2.bf16.msra.mxu0 0
    %2228 = vmatprep.subr.bf16.mxu0 0
    %2229 = vmatpush2.bf16.msra.mxu0 0
    %2230 = vmatprep.subr.bf16.mxu0 0
    %2231 = vmatpush2.bf16.msra.mxu0 0
    %2232 = vmatprep.subr.bf16.mxu0 0
    %2233 = vmatpush2.bf16.msra.mxu0 0
    %2234 = vmatprep.subr.bf16.mxu0 0
    %2235 = vmatpush2.bf16.msra.mxu0 0
    %2236 = vmatprep.subr.bf16.mxu0 0
    %2237 = vmatpush2.bf16.msra.mxu0 0
    %2238 = vmatprep.mubr.bf16.mxu0 0
    %2239 = vmatmul.mubr.bf16.gmra.mxu0 %v513
    %v2240 = vpop.f32.mrf.mxu0
    %v2241 = vadd.f32 %v2192, %v2240
    %v2242 = vpop.f32.mrf.mxu0
    %v2243 = vpop.f32.mrf.mxu0
    %v2244 = vpop.f32.mrf.mxu0
    %2245 = vdwg.mxu0
    %v2247 = vlaneseq
    %v2248 = vshrl.u32 %v2247, 7
    %v2249 = vsub.s32 0, %v2248
    %v2250 = vrot.slane %v2187, %v2249
    %v2256 = vunpack.c.l.b16 %v2182
    %v2257 = vunpack.c.l.b16 %v2183
    %v2258 = vunpack.c.l.b16 %v2184
    %v2259 = vunpack.c.l.b16 %v2185
    %v2260 = vpack.c.b16 %v2257, %v2256
    %v2261 = vpack.c.b16 %v2259, %v2258
    %2264 = vmatprep.subr.bf16.mxu0 0
    %2265 = vmatpush1.bf16.msra.mxu0 0
    %2266 = vmatprep.subr.bf16.mxu0 0
    %2267 = vmatpush1.bf16.msra.mxu0 0
    %2268 = vmatprep.subr.bf16.mxu0 0
    %2269 = vmatpush1.bf16.msra.mxu0 0
    %2270 = vmatprep.subr.bf16.mxu0 0
    %2271 = vmatpush1.bf16.msra.mxu0 0
    %2272 = vmatprep.subr.bf16.mxu0 0
    %2273 = vmatpush1.bf16.msra.mxu0 0
    %2274 = vmatprep.subr.bf16.mxu0 0
    %2275 = vmatpush1.bf16.msra.mxu0 0
    %2276 = vmatprep.subr.bf16.mxu0 0
    %2277 = vmatpush1.bf16.msra.mxu0 %v2261
    %2278 = vmatprep.subr.bf16.mxu0 0
    %2279 = vmatpush1.bf16.msra.mxu0 %v2260
    %2280 = vmatprep.subr.bf16.mxu0 0
    %2281 = vmatpush2.bf16.msra.mxu0 0
    %2282 = vmatprep.subr.bf16.mxu0 0
    %2283 = vmatpush2.bf16.msra.mxu0 0
    %2284 = vmatprep.subr.bf16.mxu0 0
    %2285 = vmatpush2.bf16.msra.mxu0 0
    %2286 = vmatprep.subr.bf16.mxu0 0
    %2287 = vmatpush2.bf16.msra.mxu0 0
    %2288 = vmatprep.subr.bf16.mxu0 0
    %2289 = vmatpush2.bf16.msra.mxu0 0
    %2290 = vmatprep.subr.bf16.mxu0 0
    %2291 = vmatpush2.bf16.msra.mxu0 0
    %2292 = vmatprep.subr.bf16.mxu0 0
    %2293 = vmatpush2.bf16.msra.mxu0 0
    %2294 = vmatprep.subr.bf16.mxu0 0
    %2295 = vmatpush2.bf16.msra.mxu0 0
    %2296 = vmatprep.mubr.bf16.mxu0 0
    %2297 = vmatmul.mubr.bf16.gmra.mxu0 %v513
    %v2298 = vpop.f32.mrf.mxu0
    %v2299 = vadd.f32 %v2250, %v2298
    %v2300 = vpop.f32.mrf.mxu0
    %v2301 = vpop.f32.mrf.mxu0
    %v2302 = vpop.f32.mrf.mxu0
    %2303 = vdwg.mxu0
    %v2304 = vld [vmem:[#allocation2] sm:$0xff]
    %v2305 = vadd.f32 %v2304, %v2241
    %v2306 = vxor.u32 %v2305, 2147483648
    %v2307 = vmul.f32 %v2306, 1.442695
    %v2308 = vpow.pop %v2307
    %v2309 = vadd.f32 %v2308, 1.0
    %v2310 = vrcp.pop %v2309
    %v2311 = vmul.f32 1.0, %v2310
    %2313 = vrot.lane.b32.xlu0 %v2241, 64
    %v2314 = vpop.permute.xlu0 %2313
    %v2316 = vmul.f32 %v2311, %v2314
    %2318 = vrot.lane.b32.xlu0 %v2316, 64
    %v2319 = vpop.permute.xlu0 %2318
    %v2321 = vadd.f32 %v2304, %v2319
    %v2322 = vtanh.pop %v2321
    %v2323 = vsub.f32 1.0, %v2311
    %2325 = vrot.lane.b32.xlu0 %v2322, 96
    %v2326 = vpop.permute.xlu0 %2325
    %v2328 = vmul.f32 %v2323, %v2326
    %v2329 = vmul.f32 %v2311, 0.0
    %v2330 = vadd.f32 %v2328, %v2329
    %v2331 = vld [vmem:[%s640] sm:$0xff]
    %v2332 = vadd.f32 %v2331, %v2299
    %v2333 = vxor.u32 %v2332, 2147483648
    %v2334 = vmul.f32 %v2333, 1.442695
    %v2335 = vpow.pop %v2334
    %v2336 = vadd.f32 %v2335, 1.0
    %v2337 = vrcp.pop %v2336
    %v2338 = vmul.f32 1.0, %v2337
    %2340 = vrot.lane.b32.xlu0 %v2299, 64
    %v2341 = vpop.permute.xlu0 %2340
    %v2343 = vmul.f32 %v2338, %v2341
    %2345 = vrot.lane.b32.xlu0 %v2343, 64
    %v2346 = vpop.permute.xlu0 %2345
    %v2348 = vadd.f32 %v2331, %v2346
    %v2349 = vtanh.pop %v2348
    %v2350 = vsub.f32 1.0, %v2338
    %2352 = vrot.lane.b32.xlu0 %v2349, 96
    %v2353 = vpop.permute.xlu0 %2352
    %v2355 = vmul.f32 %v2350, %v2353
    %v2356 = vmul.f32 %v2338, 0.0
    %v2357 = vadd.f32 %v2355, %v2356
    %2359 = vrot.lane.b32.xlu0 %v2330, 96
    %v2360 = vpop.permute.xlu0 %2359
    %2362 = vst.msk [vmem:[#allocation4] sm:$0xff] %vm511, %v2360
    %2364 = vrot.lane.b32.xlu0 %v2357, 96
    %v2365 = vpop.permute.xlu0 %2364
    %2367 = vst.msk [vmem:[%s677] sm:$0xff] %vm511, %v2365
    %v2368 = vpack.c.bf16 %v2330, %v2330
    %2370 = vrot.lane.b32.xlu0 %v2368, 96
    %v2371 = vpop.permute.xlu0 %2370
    %v2373 = vsel %vm511, %v2371, 0
    %2375 = vmatprep.subr.bf16.mxu0 0
    %2376 = vmatpush1.bf16.msra.mxu0 0
    %2377 = vmatprep.subr.bf16.mxu0 0
    %2378 = vmatpush1.bf16.msra.mxu0 0
    %2379 = vmatprep.subr.bf16.mxu0 0
    %2380 = vmatpush1.bf16.msra.mxu0 0
    %2381 = vmatprep.subr.bf16.mxu0 0
    %2382 = vmatpush1.bf16.msra.mxu0 0
    %2383 = vmatprep.subr.bf16.mxu0 0
    %2384 = vmatpush1.bf16.msra.mxu0 0
    %2385 = vmatprep.subr.bf16.mxu0 0
    %2386 = vmatpush1.bf16.msra.mxu0 0
    %2387 = vmatprep.subr.bf16.mxu0 0
    %2388 = vmatpush1.bf16.msra.mxu0 %v2203
    %2389 = vmatprep.subr.bf16.mxu0 0
    %2390 = vmatpush1.bf16.msra.mxu0 %v2202
    %2391 = vmatprep.subr.bf16.mxu0 0
    %2392 = vmatpush2.bf16.msra.mxu0 0
    %2393 = vmatprep.subr.bf16.mxu0 0
    %2394 = vmatpush2.bf16.msra.mxu0 0
    %2395 = vmatprep.subr.bf16.mxu0 0
    %2396 = vmatpush2.bf16.msra.mxu0 0
    %2397 = vmatprep.subr.bf16.mxu0 0
    %2398 = vmatpush2.bf16.msra.mxu0 0
    %2399 = vmatprep.subr.bf16.mxu0 0
    %2400 = vmatpush2.bf16.msra.mxu0 0
    %2401 = vmatprep.subr.bf16.mxu0 0
    %2402 = vmatpush2.bf16.msra.mxu0 0
    %2403 = vmatprep.subr.bf16.mxu0 0
    %2404 = vmatpush2.bf16.msra.mxu0 0
    %2405 = vmatprep.subr.bf16.mxu0 0
    %2406 = vmatpush2.bf16.msra.mxu0 0
    %2407 = vmatprep.mubr.bf16.mxu0 0
    %2408 = vmatmul.mubr.bf16.gmra.mxu0 %v2373
    %v2409 = vpop.f32.mrf.mxu0
    %v2410 = vadd.f32 %v2192, %v2409
    %v2411 = vpop.f32.mrf.mxu0
    %v2412 = vpop.f32.mrf.mxu0
    %v2413 = vpop.f32.mrf.mxu0
    %2414 = vdwg.mxu0
    %v2415 = vpack.c.bf16 %v2357, %v2357
    %2417 = vrot.lane.b32.xlu0 %v2415, 96
    %v2418 = vpop.permute.xlu0 %2417
    %v2420 = vsel %vm511, %v2418, 0
    %2422 = vmatprep.subr.bf16.mxu0 0
    %2423 = vmatpush1.bf16.msra.mxu0 0
    %2424 = vmatprep.subr.bf16.mxu0 0
    %2425 = vmatpush1.bf16.msra.mxu0 0
    %2426 = vmatprep.subr.bf16.mxu0 0
    %2427 = vmatpush1.bf16.msra.mxu0 0
    %2428 = vmatprep.subr.bf16.mxu0 0
    %2429 = vmatpush1.bf16.msra.mxu0 0
    %2430 = vmatprep.subr.bf16.mxu0 0
    %2431 = vmatpush1.bf16.msra.mxu0 0
    %2432 = vmatprep.subr.bf16.mxu0 0
    %2433 = vmatpush1.bf16.msra.mxu0 0
    %2434 = vmatprep.subr.bf16.mxu0 0
    %2435 = vmatpush1.bf16.msra.mxu0 %v2261
    %2436 = vmatprep.subr.bf16.mxu0 0
    %2437 = vmatpush1.bf16.msra.mxu0 %v2260
    %2438 = vmatprep.subr.bf16.mxu0 0
    %2439 = vmatpush2.bf16.msra.mxu0 0
    %2440 = vmatprep.subr.bf16.mxu0 0
    %2441 = vmatpush2.bf16.msra.mxu0 0
    %2442 = vmatprep.subr.bf16.mxu0 0
    %2443 = vmatpush2.bf16.msra.mxu0 0
    %2444 = vmatprep.subr.bf16.mxu0 0
    %2445 = vmatpush2.bf16.msra.mxu0 0
    %2446 = vmatprep.subr.bf16.mxu0 0
    %2447 = vmatpush2.bf16.msra.mxu0 0
    %2448 = vmatprep.subr.bf16.mxu0 0
    %2449 = vmatpush2.bf16.msra.mxu0 0
    %2450 = vmatprep.subr.bf16.mxu0 0
    %2451 = vmatpush2.bf16.msra.mxu0 0
    %2452 = vmatprep.subr.bf16.mxu0 0
    %2453 = vmatpush2.bf16.msra.mxu0 0
    %2454 = vmatprep.mubr.bf16.mxu0 0
    %2455 = vmatmul.mubr.bf16.gmra.mxu0 %v2420
    %v2456 = vpop.f32.mrf.mxu0
    %v2457 = vadd.f32 %v2250, %v2456
    %v2458 = vpop.f32.mrf.mxu0
    %v2459 = vpop.f32.mrf.mxu0
    %v2460 = vpop.f32.mrf.mxu0
    %2461 = vdwg.mxu0
    %v2462 = vld [vmem:[%s773] sm:$0xff]
    %v2463 = vadd.f32 %v2462, %v2410
    %v2464 = vxor.u32 %v2463, 2147483648
    %v2465 = vmul.f32 %v2464, 1.442695
    %v2466 = vpow.pop %v2465
    %v2467 = vadd.f32 %v2466, 1.0
    %v2468 = vrcp.pop %v2467
    %v2469 = vmul.f32 1.0, %v2468
    %2471 = vrot.lane.b32.xlu0 %v2410, 64
    %v2472 = vpop.permute.xlu0 %2471
    %v2474 = vmul.f32 %v2469, %v2472
    %2476 = vrot.lane.b32.xlu0 %v2474, 64
    %v2477 = vpop.permute.xlu0 %2476
    %v2479 = vadd.f32 %v2462, %v2477
    %v2480 = vtanh.pop %v2479
    %v2481 = vsub.f32 1.0, %v2469
    %2483 = vrot.lane.b32.xlu0 %v2480, 96
    %v2484 = vpop.permute.xlu0 %2483
    %v2486 = vmul.f32 %v2481, %v2484
    %v2487 = vmul.f32 %v2469, %v2330
    %v2488 = vadd.f32 %v2486, %v2487
    %v2489 = vld [vmem:[%s801] sm:$0xff]
    %v2490 = vadd.f32 %v2489, %v2457
    %v2491 = vxor.u32 %v2490, 2147483648
    %v2492 = vmul.f32 %v2491, 1.442695
    %v2493 = vpow.pop %v2492
    %v2494 = vadd.f32 %v2493, 1.0
    %v2495 = vrcp.pop %v2494
    %v2496 = vmul.f32 1.0, %v2495
    %2498 = vrot.lane.b32.xlu0 %v2457, 64
    %v2499 = vpop.permute.xlu0 %2498
    %v2501 = vmul.f32 %v2496, %v2499
    %2503 = vrot.lane.b32.xlu0 %v2501, 64
    %v2504 = vpop.permute.xlu0 %2503
    %v2506 = vadd.f32 %v2489, %v2504
    %v2507 = vtanh.pop %v2506
    %v2508 = vsub.f32 1.0, %v2496
    %2510 = vrot.lane.b32.xlu0 %v2507, 96
    %v2511 = vpop.permute.xlu0 %2510
    %v2513 = vmul.f32 %v2508, %v2511
    %v2514 = vmul.f32 %v2496, %v2357
    %v2515 = vadd.f32 %v2513, %v2514
    %2517 = vrot.lane.b32.xlu0 %v2488, 96
    %v2518 = vpop.permute.xlu0 %2517
    %2520 = vst.msk [vmem:[%s833] sm:$0xff] %vm511, %v2518
    %2522 = vrot.lane.b32.xlu0 %v2515, 96
    %v2523 = vpop.permute.xlu0 %2522
    %2525 = vst.msk [vmem:[%s839] sm:$0xff] %vm511, %v2523
    %v2526 = vpack.c.bf16 %v2488, %v2488
    %2528 = vrot.lane.b32.xlu0 %v2526, 96
    %v2529 = vpop.permute.xlu0 %2528
    %v2531 = vsel %vm511, %v2529, 0
    %2533 = vmatprep.subr.bf16.mxu0 0
    %2534 = vmatpush1.bf16.msra.mxu0 0
    %2535 = vmatprep.subr.bf16.mxu0 0
    %2536 = vmatpush1.bf16.msra.mxu0 0
    %2537 = vmatprep.subr.bf16.mxu0 0
    %2538 = vmatpush1.bf16.msra.mxu0 0
    %2539 = vmatprep.subr.bf16.mxu0 0
    %2540 = vmatpush1.bf16.msra.mxu0 0
    %2541 = vmatprep.subr.bf16.mxu0 0
    %2542 = vmatpush1.bf16.msra.mxu0 0
    %2543 = vmatprep.subr.bf16.mxu0 0
    %2544 = vmatpush1.bf16.msra.mxu0 0
    %2545 = vmatprep.subr.bf16.mxu0 0
    %2546 = vmatpush1.bf16.msra.mxu0 %v2203
    %2547 = vmatprep.subr.bf16.mxu0 0
    %2548 = vmatpush1.bf16.msra.mxu0 %v2202
    %2549 = vmatprep.subr.bf16.mxu0 0
    %2550 = vmatpush2.bf16.msra.mxu0 0
    %2551 = vmatprep.subr.bf16.mxu0 0
    %2552 = vmatpush2.bf16.msra.mxu0 0
    %2553 = vmatprep.subr.bf16.mxu0 0
    %2554 = vmatpush2.bf16.msra.mxu0 0
    %2555 = vmatprep.subr.bf16.mxu0 0
    %2556 = vmatpush2.bf16.msra.mxu0 0
    %2557 = vmatprep.subr.bf16.mxu0 0
    %2558 = vmatpush2.bf16.msra.mxu0 0
    %2559 = vmatprep.subr.bf16.mxu0 0
    %2560 = vmatpush2.bf16.msra.mxu0 0
    %2561 = vmatprep.subr.bf16.mxu0 0
    %2562 = vmatpush2.bf16.msra.mxu0 0
    %2563 = vmatprep.subr.bf16.mxu0 0
    %2564 = vmatpush2.bf16.msra.mxu0 0
    %2565 = vmatprep.mubr.bf16.mxu0 0
    %2566 = vmatmul.mubr.bf16.gmra.mxu0 %v2531
    %v2567 = vpop.f32.mrf.mxu0
    %v2568 = vadd.f32 %v2192, %v2567
    %v2569 = vpop.f32.mrf.mxu0
    %v2570 = vpop.f32.mrf.mxu0
    %v2571 = vpop.f32.mrf.mxu0
    %2572 = vdwg.mxu0
    %v2573 = vpack.c.bf16 %v2515, %v2515
    %2575 = vrot.lane.b32.xlu0 %v2573, 96
    %v2576 = vpop.permute.xlu0 %2575
    %v2578 = vsel %vm511, %v2576, 0
    %2580 = vmatprep.subr.bf16.mxu0 0
    %2581 = vmatpush1.bf16.msra.mxu0 0
    %2582 = vmatprep.subr.bf16.mxu0 0
    %2583 = vmatpush1.bf16.msra.mxu0 0
    %2584 = vmatprep.subr.bf16.mxu0 0
    %2585 = vmatpush1.bf16.msra.mxu0 0
    %2586 = vmatprep.subr.bf16.mxu0 0
    %2587 = vmatpush1.bf16.msra.mxu0 0
    %2588 = vmatprep.subr.bf16.mxu0 0
    %2589 = vmatpush1.bf16.msra.mxu0 0
    %2590 = vmatprep.subr.bf16.mxu0 0
    %2591 = vmatpush1.bf16.msra.mxu0 0
    %2592 = vmatprep.subr.bf16.mxu0 0
    %2593 = vmatpush1.bf16.msra.mxu0 %v2261
    %2594 = vmatprep.subr.bf16.mxu0 0
    %2595 = vmatpush1.bf16.msra.mxu0 %v2260
    %2596 = vmatprep.subr.bf16.mxu0 0
    %2597 = vmatpush2.bf16.msra.mxu0 0
    %2598 = vmatprep.subr.bf16.mxu0 0
    %2599 = vmatpush2.bf16.msra.mxu0 0
    %2600 = vmatprep.subr.bf16.mxu0 0
    %2601 = vmatpush2.bf16.msra.mxu0 0
    %2602 = vmatprep.subr.bf16.mxu0 0
    %2603 = vmatpush2.bf16.msra.mxu0 0
    %2604 = vmatprep.subr.bf16.mxu0 0
    %2605 = vmatpush2.bf16.msra.mxu0 0
    %2606 = vmatprep.subr.bf16.mxu0 0
    %2607 = vmatpush2.bf16.msra.mxu0 0
    %2608 = vmatprep.subr.bf16.mxu0 0
    %2609 = vmatpush2.bf16.msra.mxu0 0
    %2610 = vmatprep.subr.bf16.mxu0 0
    %2611 = vmatpush2.bf16.msra.mxu0 0
    %2612 = vmatprep.mubr.bf16.mxu0 0
    %2613 = vmatmul.mubr.bf16.gmra.mxu0 %v2578
    %v2614 = vpop.f32.mrf.mxu0
    %v2615 = vadd.f32 %v2250, %v2614
    %v2616 = vpop.f32.mrf.mxu0
    %v2617 = vpop.f32.mrf.mxu0
    %v2618 = vpop.f32.mrf.mxu0
    %2619 = vdwg.mxu0
    %v2620 = vld [vmem:[%s935] sm:$0xff]
    %v2621 = vadd.f32 %v2620, %v2568
    %v2622 = vxor.u32 %v2621, 2147483648
    %v2623 = vmul.f32 %v2622, 1.442695
    %v2624 = vpow.pop %v2623
    %v2625 = vadd.f32 %v2624, 1.0
    %v2626 = vrcp.pop %v2625
    %v2627 = vmul.f32 1.0, %v2626
    %2629 = vrot.lane.b32.xlu0 %v2568, 64
    %v2630 = vpop.permute.xlu0 %2629
    %v2632 = vmul.f32 %v2627, %v2630
    %2634 = vrot.lane.b32.xlu0 %v2632, 64
    %v2635 = vpop.permute.xlu0 %2634
    %v2637 = vadd.f32 %v2620, %v2635
    %v2638 = vtanh.pop %v2637
    %v2639 = vsub.f32 1.0, %v2627
    %2641 = vrot.lane.b32.xlu0 %v2638, 96
    %v2642 = vpop.permute.xlu0 %2641
    %v2644 = vmul.f32 %v2639, %v2642
    %v2645 = vmul.f32 %v2627, %v2488
    %v2646 = vadd.f32 %v2644, %v2645
    %v2647 = vld [vmem:[%s963] sm:$0xff]
    %v2648 = vadd.f32 %v2647, %v2615
    %v2649 = vxor.u32 %v2648, 2147483648
    %v2650 = vmul.f32 %v2649, 1.442695
    %v2651 = vpow.pop %v2650
    %v2652 = vadd.f32 %v2651, 1.0
    %v2653 = vrcp.pop %v2652
    %v2654 = vmul.f32 1.0, %v2653
    %2656 = vrot.lane.b32.xlu0 %v2615, 64
    %v2657 = vpop.permute.xlu0 %2656
    %v2659 = vmul.f32 %v2654, %v2657
    %2661 = vrot.lane.b32.xlu0 %v2659, 64
    %v2662 = vpop.permute.xlu0 %2661
    %v2664 = vadd.f32 %v2647, %v2662
    %v2665 = vtanh.pop %v2664
    %v2666 = vsub.f32 1.0, %v2654
    %2668 = vrot.lane.b32.xlu0 %v2665, 96
    %v2669 = vpop.permute.xlu0 %2668
    %v2671 = vmul.f32 %v2666, %v2669
    %v2672 = vmul.f32 %v2654, %v2515
    %v2673 = vadd.f32 %v2671, %v2672
    %2675 = vrot.lane.b32.xlu0 %v2646, 96
    %v2676 = vpop.permute.xlu0 %2675
    %2678 = vst.msk [vmem:[%s995] sm:$0xff] %vm511, %v2676
    %2680 = vrot.lane.b32.xlu0 %v2673, 96
    %v2681 = vpop.permute.xlu0 %2680
    %2683 = vst.msk [vmem:[%s1001] sm:$0xff] %vm511, %v2681
    %v2684 = vpack.c.bf16 %v2646, %v2646
    %2686 = vrot.lane.b32.xlu0 %v2684, 96
    %v2687 = vpop.permute.xlu0 %2686
    %v2689 = vsel %vm511, %v2687, 0
    %2691 = vmatprep.subr.bf16.mxu0 0
    %2692 = vmatpush1.bf16.msra.mxu0 0
    %2693 = vmatprep.subr.bf16.mxu0 0
    %2694 = vmatpush1.bf16.msra.mxu0 0
    %2695 = vmatprep.subr.bf16.mxu0 0
    %2696 = vmatpush1.bf16.msra.mxu0 0
    %2697 = vmatprep.subr.bf16.mxu0 0
    %2698 = vmatpush1.bf16.msra.mxu0 0
    %2699 = vmatprep.subr.bf16.mxu0 0
    %2700 = vmatpush1.bf16.msra.mxu0 0
    %2701 = vmatprep.subr.bf16.mxu0 0
    %2702 = vmatpush1.bf16.msra.mxu0 0
    %2703 = vmatprep.subr.bf16.mxu0 0
    %2704 = vmatpush1.bf16.msra.mxu0 %v2203
    %2705 = vmatprep.subr.bf16.mxu0 0
    %2706 = vmatpush1.bf16.msra.mxu0 %v2202
    %2707 = vmatprep.subr.bf16.mxu0 0
    %2708 = vmatpush2.bf16.msra.mxu0 0
    %2709 = vmatprep.subr.bf16.mxu0 0
    %2710 = vmatpush2.bf16.msra.mxu0 0
    %2711 = vmatprep.subr.bf16.mxu0 0
    %2712 = vmatpush2.bf16.msra.mxu0 0
    %2713 = vmatprep.subr.bf16.mxu0 0
    %2714 = vmatpush2.bf16.msra.mxu0 0
    %2715 = vmatprep.subr.bf16.mxu0 0
    %2716 = vmatpush2.bf16.msra.mxu0 0
    %2717 = vmatprep.subr.bf16.mxu0 0
    %2718 = vmatpush2.bf16.msra.mxu0 0
    %2719 = vmatprep.subr.bf16.mxu0 0
    %2720 = vmatpush2.bf16.msra.mxu0 0
    %2721 = vmatprep.subr.bf16.mxu0 0
    %2722 = vmatpush2.bf16.msra.mxu0 0
    %2723 = vmatprep.mubr.bf16.mxu0 0
    %2724 = vmatmul.mubr.bf16.gmra.mxu0 %v2689
    %v2725 = vpop.f32.mrf.mxu0
    %v2726 = vadd.f32 %v2192, %v2725
    %v2727 = vpop.f32.mrf.mxu0
    %v2728 = vpop.f32.mrf.mxu0
    %v2729 = vpop.f32.mrf.mxu0
    %2730 = vdwg.mxu0
    %v2731 = vpack.c.bf16 %v2673, %v2673
    %2733 = vrot.lane.b32.xlu0 %v2731, 96
    %v2734 = vpop.permute.xlu0 %2733
    %v2736 = vsel %vm511, %v2734, 0
    %2738 = vmatprep.subr.bf16.mxu0 0
    %2739 = vmatpush1.bf16.msra.mxu0 0
    %2740 = vmatprep.subr.bf16.mxu0 0
    %2741 = vmatpush1.bf16.msra.mxu0 0
    %2742 = vmatprep.subr.bf16.mxu0 0
    %2743 = vmatpush1.bf16.msra.mxu0 0
    %2744 = vmatprep.subr.bf16.mxu0 0
    %2745 = vmatpush1.bf16.msra.mxu0 0
    %2746 = vmatprep.subr.bf16.mxu0 0
    %2747 = vmatpush1.bf16.msra.mxu0 0
    %2748 = vmatprep.subr.bf16.mxu0 0
    %2749 = vmatpush1.bf16.msra.mxu0 0
    %2750 = vmatprep.subr.bf16.mxu0 0
    %2751 = vmatpush1.bf16.msra.mxu0 %v2261
    %2752 = vmatprep.subr.bf16.mxu0 0
    %2753 = vmatpush1.bf16.msra.mxu0 %v2260
    %2754 = vmatprep.subr.bf16.mxu0 0
    %2755 = vmatpush2.bf16.msra.mxu0 0
    %2756 = vmatprep.subr.bf16.mxu0 0
    %2757 = vmatpush2.bf16.msra.mxu0 0
    %2758 = vmatprep.subr.bf16.mxu0 0
    %2759 = vmatpush2.bf16.msra.mxu0 0
    %2760 = vmatprep.subr.bf16.mxu0 0
    %2761 = vmatpush2.bf16.msra.mxu0 0
    %2762 = vmatprep.subr.bf16.mxu0 0
    %2763 = vmatpush2.bf16.msra.mxu0 0
    %2764 = vmatprep.subr.bf16.mxu0 0
    %2765 = vmatpush2.bf16.msra.mxu0 0
    %2766 = vmatprep.subr.bf16.mxu0 0
    %2767 = vmatpush2.bf16.msra.mxu0 0
    %2768 = vmatprep.subr.bf16.mxu0 0
    %2769 = vmatpush2.bf16.msra.mxu0 0
    %2770 = vmatprep.mubr.bf16.mxu0 0
    %2771 = vmatmul.mubr.bf16.gmra.mxu0 %v2736
    %v2772 = vpop.f32.mrf.mxu0
    %v2773 = vadd.f32 %v2250, %v2772
    %v2774 = vpop.f32.mrf.mxu0
    %v2775 = vpop.f32.mrf.mxu0
    %v2776 = vpop.f32.mrf.mxu0
    %2777 = vdwg.mxu0
    %v2778 = vld [vmem:[%s1097] sm:$0xff]
    %v2779 = vadd.f32 %v2778, %v2726
    %v2780 = vxor.u32 %v2779, 2147483648
    %v2781 = vmul.f32 %v2780, 1.442695
    %v2782 = vpow.pop %v2781
    %v2783 = vadd.f32 %v2782, 1.0
    %v2784 = vrcp.pop %v2783
    %v2785 = vmul.f32 1.0, %v2784
    %2787 = vrot.lane.b32.xlu0 %v2726, 64
    %v2788 = vpop.permute.xlu0 %2787
    %v2790 = vmul.f32 %v2785, %v2788
    %2792 = vrot.lane.b32.xlu0 %v2790, 64
    %v2793 = vpop.permute.xlu0 %2792
    %v2795 = vadd.f32 %v2778, %v2793
    %v2796 = vtanh.pop %v2795
    %v2797 = vsub.f32 1.0, %v2785
    %2799 = vrot.lane.b32.xlu0 %v2796, 96
    %v2800 = vpop.permute.xlu0 %2799
    %v2802 = vmul.f32 %v2797, %v2800
    %v2803 = vmul.f32 %v2785, %v2646
    %v2804 = vadd.f32 %v2802, %v2803
    %v2805 = vld [vmem:[%s1125] sm:$0xff]
    %v2806 = vadd.f32 %v2805, %v2773
    %v2807 = vxor.u32 %v2806, 2147483648
    %v2808 = vmul.f32 %v2807, 1.442695
    %v2809 = vpow.pop %v2808
    %v2810 = vadd.f32 %v2809, 1.0
    %v2811 = vrcp.pop %v2810
    %v2812 = vmul.f32 1.0, %v2811
    %2814 = vrot.lane.b32.xlu0 %v2773, 64
    %v2815 = vpop.permute.xlu0 %2814
    %v2817 = vmul.f32 %v2812, %v2815
    %2819 = vrot.lane.b32.xlu0 %v2817, 64
    %v2820 = vpop.permute.xlu0 %2819
    %v2822 = vadd.f32 %v2805, %v2820
    %v2823 = vtanh.pop %v2822
    %v2824 = vsub.f32 1.0, %v2812
    %2826 = vrot.lane.b32.xlu0 %v2823, 96
    %v2827 = vpop.permute.xlu0 %2826
    %v2829 = vmul.f32 %v2824, %v2827
    %v2830 = vmul.f32 %v2812, %v2673
    %v2831 = vadd.f32 %v2829, %v2830
    %2833 = vrot.lane.b32.xlu0 %v2804, 96
    %v2834 = vpop.permute.xlu0 %2833
    %2836 = vst.msk [vmem:[%s1157] sm:$0xff] %vm511, %v2834
    %2838 = vrot.lane.b32.xlu0 %v2831, 96
    %v2839 = vpop.permute.xlu0 %2838
    %2841 = vst.msk [vmem:[%s1163] sm:$0xff] %vm511, %v2839
    %v2842 = vpack.c.bf16 %v2804, %v2804
    %2844 = vrot.lane.b32.xlu0 %v2842, 96
    %v2845 = vpop.permute.xlu0 %2844
    %v2847 = vsel %vm511, %v2845, 0
    %2849 = vmatprep.subr.bf16.mxu0 0
    %2850 = vmatpush1.bf16.msra.mxu0 0
    %2851 = vmatprep.subr.bf16.mxu0 0
    %2852 = vmatpush1.bf16.msra.mxu0 0
    %2853 = vmatprep.subr.bf16.mxu0 0
    %2854 = vmatpush1.bf16.msra.mxu0 0
    %2855 = vmatprep.subr.bf16.mxu0 0
    %2856 = vmatpush1.bf16.msra.mxu0 0
    %2857 = vmatprep.subr.bf16.mxu0 0
    %2858 = vmatpush1.bf16.msra.mxu0 0
    %2859 = vmatprep.subr.bf16.mxu0 0
    %2860 = vmatpush1.bf16.msra.mxu0 0
    %2861 = vmatprep.subr.bf16.mxu0 0
    %2862 = vmatpush1.bf16.msra.mxu0 %v2203
    %2863 = vmatprep.subr.bf16.mxu0 0
    %2864 = vmatpush1.bf16.msra.mxu0 %v2202
    %2865 = vmatprep.subr.bf16.mxu0 0
    %2866 = vmatpush2.bf16.msra.mxu0 0
    %2867 = vmatprep.subr.bf16.mxu0 0
    %2868 = vmatpush2.bf16.msra.mxu0 0
    %2869 = vmatprep.subr.bf16.mxu0 0
    %2870 = vmatpush2.bf16.msra.mxu0 0
    %2871 = vmatprep.subr.bf16.mxu0 0
    %2872 = vmatpush2.bf16.msra.mxu0 0
    %2873 = vmatprep.subr.bf16.mxu0 0
    %2874 = vmatpush2.bf16.msra.mxu0 0
    %2875 = vmatprep.subr.bf16.mxu0 0
    %2876 = vmatpush2.bf16.msra.mxu0 0
    %2877 = vmatprep.subr.bf16.mxu0 0
    %2878 = vmatpush2.bf16.msra.mxu0 0
    %2879 = vmatprep.subr.bf16.mxu0 0
    %2880 = vmatpush2.bf16.msra.mxu0 0
    %2881 = vmatprep.mubr.bf16.mxu0 0
    %2882 = vmatmul.mubr.bf16.gmra.mxu0 %v2847
    %v2883 = vpop.f32.mrf.mxu0
    %v2884 = vadd.f32 %v2192, %v2883
    %v2885 = vpop.f32.mrf.mxu0
    %v2886 = vpop.f32.mrf.mxu0
    %v2887 = vpop.f32.mrf.mxu0
    %2888 = vdwg.mxu0
    %v2889 = vpack.c.bf16 %v2831, %v2831
    %2891 = vrot.lane.b32.xlu0 %v2889, 96
    %v2892 = vpop.permute.xlu0 %2891
    %v2894 = vsel %vm511, %v2892, 0
    %2896 = vmatprep.subr.bf16.mxu0 0
    %2897 = vmatpush1.bf16.msra.mxu0 0
    %2898 = vmatprep.subr.bf16.mxu0 0
    %2899 = vmatpush1.bf16.msra.mxu0 0
    %2900 = vmatprep.subr.bf16.mxu0 0
    %2901 = vmatpush1.bf16.msra.mxu0 0
    %2902 = vmatprep.subr.bf16.mxu0 0
    %2903 = vmatpush1.bf16.msra.mxu0 0
    %2904 = vmatprep.subr.bf16.mxu0 0
    %2905 = vmatpush1.bf16.msra.mxu0 0
    %2906 = vmatprep.subr.bf16.mxu0 0
    %2907 = vmatpush1.bf16.msra.mxu0 0
    %2908 = vmatprep.subr.bf16.mxu0 0
    %2909 = vmatpush1.bf16.msra.mxu0 %v2261
    %2910 = vmatprep.subr.bf16.mxu0 0
    %2911 = vmatpush1.bf16.msra.mxu0 %v2260
    %2912 = vmatprep.subr.bf16.mxu0 0
    %2913 = vmatpush2.bf16.msra.mxu0 0
    %2914 = vmatprep.subr.bf16.mxu0 0
    %2915 = vmatpush2.bf16.msra.mxu0 0
    %2916 = vmatprep.subr.bf16.mxu0 0
    %2917 = vmatpush2.bf16.msra.mxu0 0
    %2918 = vmatprep.subr.bf16.mxu0 0
    %2919 = vmatpush2.bf16.msra.mxu0 0
    %2920 = vmatprep.subr.bf16.mxu0 0
    %2921 = vmatpush2.bf16.msra.mxu0 0
    %2922 = vmatprep.subr.bf16.mxu0 0
    %2923 = vmatpush2.bf16.msra.mxu0 0
    %2924 = vmatprep.subr.bf16.mxu0 0
    %2925 = vmatpush2.bf16.msra.mxu0 0
    %2926 = vmatprep.subr.bf16.mxu0 0
    %2927 = vmatpush2.bf16.msra.mxu0 0
    %2928 = vmatprep.mubr.bf16.mxu0 0
    %2929 = vmatmul.mubr.bf16.gmra.mxu0 %v2894
    %v2930 = vpop.f32.mrf.mxu0
    %v2931 = vadd.f32 %v2250, %v2930
    %v2932 = vpop.f32.mrf.mxu0
    %v2933 = vpop.f32.mrf.mxu0
    %v2934 = vpop.f32.mrf.mxu0
    %2935 = vdwg.mxu0
    %v2936 = vld [vmem:[%s1259] sm:$0xff]
    %v2937 = vadd.f32 %v2936, %v2884
    %v2938 = vxor.u32 %v2937, 2147483648
    %v2939 = vmul.f32 %v2938, 1.442695
    %v2940 = vpow.pop %v2939
    %v2941 = vadd.f32 %v2940, 1.0
    %v2942 = vrcp.pop %v2941
    %v2943 = vmul.f32 1.0, %v2942
    %2945 = vrot.lane.b32.xlu0 %v2884, 64
    %v2946 = vpop.permute.xlu0 %2945
    %v2948 = vmul.f32 %v2943, %v2946
    %2950 = vrot.lane.b32.xlu0 %v2948, 64
    %v2951 = vpop.permute.xlu0 %2950
    %v2953 = vadd.f32 %v2936, %v2951
    %v2954 = vtanh.pop %v2953
    %v2955 = vsub.f32 1.0, %v2943
    %2957 = vrot.lane.b32.xlu0 %v2954, 96
    %v2958 = vpop.permute.xlu0 %2957
    %v2960 = vmul.f32 %v2955, %v2958
    %v2961 = vmul.f32 %v2943, %v2804
    %v2962 = vadd.f32 %v2960, %v2961
    %v2963 = vld [vmem:[%s1287] sm:$0xff]
    %v2964 = vadd.f32 %v2963, %v2931
    %v2965 = vxor.u32 %v2964, 2147483648
    %v2966 = vmul.f32 %v2965, 1.442695
    %v2967 = vpow.pop %v2966
    %v2968 = vadd.f32 %v2967, 1.0
    %v2969 = vrcp.pop %v2968
    %v2970 = vmul.f32 1.0, %v2969
    %2972 = vrot.lane.b32.xlu0 %v2931, 64
    %v2973 = vpop.permute.xlu0 %2972
    %v2975 = vmul.f32 %v2970, %v2973
    %2977 = vrot.lane.b32.xlu0 %v2975, 64
    %v2978 = vpop.permute.xlu0 %2977
    %v2980 = vadd.f32 %v2963, %v2978
    %v2981 = vtanh.pop %v2980
    %v2982 = vsub.f32 1.0, %v2970
    %2984 = vrot.lane.b32.xlu0 %v2981, 96
    %v2985 = vpop.permute.xlu0 %2984
    %v2987 = vmul.f32 %v2982, %v2985
    %v2988 = vmul.f32 %v2970, %v2831
    %v2989 = vadd.f32 %v2987, %v2988
    %2991 = vrot.lane.b32.xlu0 %v2962, 96
    %v2992 = vpop.permute.xlu0 %2991
    %2994 = vst.msk [vmem:[%s1319] sm:$0xff] %vm511, %v2992
    %2996 = vrot.lane.b32.xlu0 %v2989, 96
    %v2997 = vpop.permute.xlu0 %2996
    %2999 = vst.msk [vmem:[%s1325] sm:$0xff] %vm511, %v2997
    %v3000 = vpack.c.bf16 %v2962, %v2962
    %3002 = vrot.lane.b32.xlu0 %v3000, 96
    %v3003 = vpop.permute.xlu0 %3002
    %v3005 = vsel %vm511, %v3003, 0
    %3007 = vmatprep.subr.bf16.mxu0 0
    %3008 = vmatpush1.bf16.msra.mxu0 0
    %3009 = vmatprep.subr.bf16.mxu0 0
    %3010 = vmatpush1.bf16.msra.mxu0 0
    %3011 = vmatprep.subr.bf16.mxu0 0
    %3012 = vmatpush1.bf16.msra.mxu0 0
    %3013 = vmatprep.subr.bf16.mxu0 0
    %3014 = vmatpush1.bf16.msra.mxu0 0
    %3015 = vmatprep.subr.bf16.mxu0 0
    %3016 = vmatpush1.bf16.msra.mxu0 0
    %3017 = vmatprep.subr.bf16.mxu0 0
    %3018 = vmatpush1.bf16.msra.mxu0 0
    %3019 = vmatprep.subr.bf16.mxu0 0
    %3020 = vmatpush1.bf16.msra.mxu0 %v2203
    %3021 = vmatprep.subr.bf16.mxu0 0
    %3022 = vmatpush1.bf16.msra.mxu0 %v2202
    %3023 = vmatprep.subr.bf16.mxu0 0
    %3024 = vmatpush2.bf16.msra.mxu0 0
    %3025 = vmatprep.subr.bf16.mxu0 0
    %3026 = vmatpush2.bf16.msra.mxu0 0
    %3027 = vmatprep.subr.bf16.mxu0 0
    %3028 = vmatpush2.bf16.msra.mxu0 0
    %3029 = vmatprep.subr.bf16.mxu0 0
    %3030 = vmatpush2.bf16.msra.mxu0 0
    %3031 = vmatprep.subr.bf16.mxu0 0
    %3032 = vmatpush2.bf16.msra.mxu0 0
    %3033 = vmatprep.subr.bf16.mxu0 0
    %3034 = vmatpush2.bf16.msra.mxu0 0
    %3035 = vmatprep.subr.bf16.mxu0 0
    %3036 = vmatpush2.bf16.msra.mxu0 0
    %3037 = vmatprep.subr.bf16.mxu0 0
    %3038 = vmatpush2.bf16.msra.mxu0 0
    %3039 = vmatprep.mubr.bf16.mxu0 0
    %3040 = vmatmul.mubr.bf16.gmra.mxu0 %v3005
    %v3041 = vpop.f32.mrf.mxu0
    %v3042 = vadd.f32 %v2192, %v3041
    %v3043 = vpop.f32.mrf.mxu0
    %v3044 = vpop.f32.mrf.mxu0
    %v3045 = vpop.f32.mrf.mxu0
    %3046 = vdwg.mxu0
    %v3047 = vpack.c.bf16 %v2989, %v2989
    %3049 = vrot.lane.b32.xlu0 %v3047, 96
    %v3050 = vpop.permute.xlu0 %3049
    %v3052 = vsel %vm511, %v3050, 0
    %3054 = vmatprep.subr.bf16.mxu0 0
    %3055 = vmatpush1.bf16.msra.mxu0 0
    %3056 = vmatprep.subr.bf16.mxu0 0
    %3057 = vmatpush1.bf16.msra.mxu0 0
    %3058 = vmatprep.subr.bf16.mxu0 0
    %3059 = vmatpush1.bf16.msra.mxu0 0
    %3060 = vmatprep.subr.bf16.mxu0 0
    %3061 = vmatpush1.bf16.msra.mxu0 0
    %3062 = vmatprep.subr.bf16.mxu0 0
    %3063 = vmatpush1.bf16.msra.mxu0 0
    %3064 = vmatprep.subr.bf16.mxu0 0
    %3065 = vmatpush1.bf16.msra.mxu0 0
    %3066 = vmatprep.subr.bf16.mxu0 0
    %3067 = vmatpush1.bf16.msra.mxu0 %v2261
    %3068 = vmatprep.subr.bf16.mxu0 0
    %3069 = vmatpush1.bf16.msra.mxu0 %v2260
    %3070 = vmatprep.subr.bf16.mxu0 0
    %3071 = vmatpush2.bf16.msra.mxu0 0
    %3072 = vmatprep.subr.bf16.mxu0 0
    %3073 = vmatpush2.bf16.msra.mxu0 0
    %3074 = vmatprep.subr.bf16.mxu0 0
    %3075 = vmatpush2.bf16.msra.mxu0 0
    %3076 = vmatprep.subr.bf16.mxu0 0
    %3077 = vmatpush2.bf16.msra.mxu0 0
    %3078 = vmatprep.subr.bf16.mxu0 0
    %3079 = vmatpush2.bf16.msra.mxu0 0
    %3080 = vmatprep.subr.bf16.mxu0 0
    %3081 = vmatpush2.bf16.msra.mxu0 0
    %3082 = vmatprep.subr.bf16.mxu0 0
    %3083 = vmatpush2.bf16.msra.mxu0 0
    %3084 = vmatprep.subr.bf16.mxu0 0
    %3085 = vmatpush2.bf16.msra.mxu0 0
    %3086 = vmatprep.mubr.bf16.mxu0 0
    %3087 = vmatmul.mubr.bf16.gmra.mxu0 %v3052
    %v3088 = vpop.f32.mrf.mxu0
    %v3089 = vadd.f32 %v2250, %v3088
    %v3090 = vpop.f32.mrf.mxu0
    %v3091 = vpop.f32.mrf.mxu0
    %v3092 = vpop.f32.mrf.mxu0
    %3093 = vdwg.mxu0
    %v3094 = vld [vmem:[%s1421] sm:$0xff]
    %v3095 = vadd.f32 %v3094, %v3042
    %v3096 = vxor.u32 %v3095, 2147483648
    %v3097 = vmul.f32 %v3096, 1.442695
    %v3098 = vpow.pop %v3097
    %v3099 = vadd.f32 %v3098, 1.0
    %v3100 = vrcp.pop %v3099
    %v3101 = vmul.f32 1.0, %v3100
    %3103 = vrot.lane.b32.xlu0 %v3042, 64
    %v3104 = vpop.permute.xlu0 %3103
    %v3106 = vmul.f32 %v3101, %v3104
    %3108 = vrot.lane.b32.xlu0 %v3106, 64
    %v3109 = vpop.permute.xlu0 %3108
    %v3111 = vadd.f32 %v3094, %v3109
    %v3112 = vtanh.pop %v3111
    %v3113 = vsub.f32 1.0, %v3101
    %3115 = vrot.lane.b32.xlu0 %v3112, 96
    %v3116 = vpop.permute.xlu0 %3115
    %v3118 = vmul.f32 %v3113, %v3116
    %v3119 = vmul.f32 %v3101, %v2962
    %v3120 = vadd.f32 %v3118, %v3119
    %v3121 = vld [vmem:[%s1449] sm:$0xff]
    %v3122 = vadd.f32 %v3121, %v3089
    %v3123 = vxor.u32 %v3122, 2147483648
    %v3124 = vmul.f32 %v3123, 1.442695
    %v3125 = vpow.pop %v3124
    %v3126 = vadd.f32 %v3125, 1.0
    %v3127 = vrcp.pop %v3126
    %v3128 = vmul.f32 1.0, %v3127
    %3130 = vrot.lane.b32.xlu0 %v3089, 64
    %v3131 = vpop.permute.xlu0 %3130
    %v3133 = vmul.f32 %v3128, %v3131
    %3135 = vrot.lane.b32.xlu0 %v3133, 64
    %v3136 = vpop.permute.xlu0 %3135
    %v3138 = vadd.f32 %v3121, %v3136
    %v3139 = vtanh.pop %v3138
    %v3140 = vsub.f32 1.0, %v3128
    %3142 = vrot.lane.b32.xlu0 %v3139, 96
    %v3143 = vpop.permute.xlu0 %3142
    %v3145 = vmul.f32 %v3140, %v3143
    %v3146 = vmul.f32 %v3128, %v2989
    %v3147 = vadd.f32 %v3145, %v3146
    %3149 = vrot.lane.b32.xlu0 %v3120, 96
    %v3150 = vpop.permute.xlu0 %3149
    %3152 = vst.msk [vmem:[%s1481] sm:$0xff] %vm511, %v3150
    %3154 = vrot.lane.b32.xlu0 %v3147, 96
    %v3155 = vpop.permute.xlu0 %3154
    %3157 = vst.msk [vmem:[%s1487] sm:$0xff] %vm511, %v3155
    %v3158 = vpack.c.bf16 %v3120, %v3120
    %3160 = vrot.lane.b32.xlu0 %v3158, 96
    %v3161 = vpop.permute.xlu0 %3160
    %v3163 = vsel %vm511, %v3161, 0
    %3165 = vmatprep.subr.bf16.mxu0 0
    %3166 = vmatpush1.bf16.msra.mxu0 0
    %3167 = vmatprep.subr.bf16.mxu0 0
    %3168 = vmatpush1.bf16.msra.mxu0 0
    %3169 = vmatprep.subr.bf16.mxu0 0
    %3170 = vmatpush1.bf16.msra.mxu0 0
    %3171 = vmatprep.subr.bf16.mxu0 0
    %3172 = vmatpush1.bf16.msra.mxu0 0
    %3173 = vmatprep.subr.bf16.mxu0 0
    %3174 = vmatpush1.bf16.msra.mxu0 0
    %3175 = vmatprep.subr.bf16.mxu0 0
    %3176 = vmatpush1.bf16.msra.mxu0 0
    %3177 = vmatprep.subr.bf16.mxu0 0
    %3178 = vmatpush1.bf16.msra.mxu0 %v2203
    %3179 = vmatprep.subr.bf16.mxu0 0
    %3180 = vmatpush1.bf16.msra.mxu0 %v2202
    %3181 = vmatprep.subr.bf16.mxu0 0
    %3182 = vmatpush2.bf16.msra.mxu0 0
    %3183 = vmatprep.subr.bf16.mxu0 0
    %3184 = vmatpush2.bf16.msra.mxu0 0
    %3185 = vmatprep.subr.bf16.mxu0 0
    %3186 = vmatpush2.bf16.msra.mxu0 0
    %3187 = vmatprep.subr.bf16.mxu0 0
    %3188 = vmatpush2.bf16.msra.mxu0 0
    %3189 = vmatprep.subr.bf16.mxu0 0
    %3190 = vmatpush2.bf16.msra.mxu0 0
    %3191 = vmatprep.subr.bf16.mxu0 0
    %3192 = vmatpush2.bf16.msra.mxu0 0
    %3193 = vmatprep.subr.bf16.mxu0 0
    %3194 = vmatpush2.bf16.msra.mxu0 0
    %3195 = vmatprep.subr.bf16.mxu0 0
    %3196 = vmatpush2.bf16.msra.mxu0 0
    %3197 = vmatprep.mubr.bf16.mxu0 0
    %3198 = vmatmul.mubr.bf16.gmra.mxu0 %v3163
    %v3199 = vpop.f32.mrf.mxu0
    %v3200 = vadd.f32 %v2192, %v3199
    %v3201 = vpop.f32.mrf.mxu0
    %v3202 = vpop.f32.mrf.mxu0
    %v3203 = vpop.f32.mrf.mxu0
    %3204 = vdwg.mxu0
    %v3205 = vpack.c.bf16 %v3147, %v3147
    %3207 = vrot.lane.b32.xlu0 %v3205, 96
    %v3208 = vpop.permute.xlu0 %3207
    %v3210 = vsel %vm511, %v3208, 0
    %3212 = vmatprep.subr.bf16.mxu0 0
    %3213 = vmatpush1.bf16.msra.mxu0 0
    %3214 = vmatprep.subr.bf16.mxu0 0
    %3215 = vmatpush1.bf16.msra.mxu0 0
    %3216 = vmatprep.subr.bf16.mxu0 0
    %3217 = vmatpush1.bf16.msra.mxu0 0
    %3218 = vmatprep.subr.bf16.mxu0 0
    %3219 = vmatpush1.bf16.msra.mxu0 0
    %3220 = vmatprep.subr.bf16.mxu0 0
    %3221 = vmatpush1.bf16.msra.mxu0 0
    %3222 = vmatprep.subr.bf16.mxu0 0
    %3223 = vmatpush1.bf16.msra.mxu0 0
    %3224 = vmatprep.subr.bf16.mxu0 0
    %3225 = vmatpush1.bf16.msra.mxu0 %v2261
    %3226 = vmatprep.subr.bf16.mxu0 0
    %3227 = vmatpush1.bf16.msra.mxu0 %v2260
    %3228 = vmatprep.subr.bf16.mxu0 0
    %3229 = vmatpush2.bf16.msra.mxu0 0
    %3230 = vmatprep.subr.bf16.mxu0 0
    %3231 = vmatpush2.bf16.msra.mxu0 0
    %3232 = vmatprep.subr.bf16.mxu0 0
    %3233 = vmatpush2.bf16.msra.mxu0 0
    %3234 = vmatprep.subr.bf16.mxu0 0
    %3235 = vmatpush2.bf16.msra.mxu0 0
    %3236 = vmatprep.subr.bf16.mxu0 0
    %3237 = vmatpush2.bf16.msra.mxu0 0
    %3238 = vmatprep.subr.bf16.mxu0 0
    %3239 = vmatpush2.bf16.msra.mxu0 0
    %3240 = vmatprep.subr.bf16.mxu0 0
    %3241 = vmatpush2.bf16.msra.mxu0 0
    %3242 = vmatprep.subr.bf16.mxu0 0
    %3243 = vmatpush2.bf16.msra.mxu0 0
    %3244 = vmatprep.mubr.bf16.mxu0 0
    %3245 = vmatmul.mubr.bf16.gmra.mxu0 %v3210
    %v3246 = vpop.f32.mrf.mxu0
    %v3247 = vadd.f32 %v2250, %v3246
    %v3248 = vpop.f32.mrf.mxu0
    %v3249 = vpop.f32.mrf.mxu0
    %v3250 = vpop.f32.mrf.mxu0
    %3251 = vdwg.mxu0
    %v3252 = vld [vmem:[%s1583] sm:$0xff]
    %v3253 = vadd.f32 %v3252, %v3200
    %v3254 = vxor.u32 %v3253, 2147483648
    %v3255 = vmul.f32 %v3254, 1.442695
    %v3256 = vpow.pop %v3255
    %v3257 = vadd.f32 %v3256, 1.0
    %v3258 = vrcp.pop %v3257
    %v3259 = vmul.f32 1.0, %v3258
    %3261 = vrot.lane.b32.xlu0 %v3200, 64
    %v3262 = vpop.permute.xlu0 %3261
    %v3264 = vmul.f32 %v3259, %v3262
    %3266 = vrot.lane.b32.xlu0 %v3264, 64
    %v3267 = vpop.permute.xlu0 %3266
    %v3269 = vadd.f32 %v3252, %v3267
    %v3270 = vtanh.pop %v3269
    %v3271 = vsub.f32 1.0, %v3259
    %3273 = vrot.lane.b32.xlu0 %v3270, 96
    %v3274 = vpop.permute.xlu0 %3273
    %v3276 = vmul.f32 %v3271, %v3274
    %v3277 = vmul.f32 %v3259, %v3120
    %v3278 = vadd.f32 %v3276, %v3277
    %v3279 = vld [vmem:[%s1611] sm:$0xff]
    %v3280 = vadd.f32 %v3279, %v3247
    %v3281 = vxor.u32 %v3280, 2147483648
    %v3282 = vmul.f32 %v3281, 1.442695
    %v3283 = vpow.pop %v3282
    %v3284 = vadd.f32 %v3283, 1.0
    %v3285 = vrcp.pop %v3284
    %v3286 = vmul.f32 1.0, %v3285
    %3288 = vrot.lane.b32.xlu0 %v3247, 64
    %v3289 = vpop.permute.xlu0 %3288
    %v3291 = vmul.f32 %v3286, %v3289
    %3293 = vrot.lane.b32.xlu0 %v3291, 64
    %v3294 = vpop.permute.xlu0 %3293
    %v3296 = vadd.f32 %v3279, %v3294
    %v3297 = vtanh.pop %v3296
    %v3298 = vsub.f32 1.0, %v3286
    %3300 = vrot.lane.b32.xlu0 %v3297, 96
    %v3301 = vpop.permute.xlu0 %3300
    %v3303 = vmul.f32 %v3298, %v3301
    %v3304 = vmul.f32 %v3286, %v3147
    %v3305 = vadd.f32 %v3303, %v3304
    %3307 = vrot.lane.b32.xlu0 %v3278, 96
    %v3308 = vpop.permute.xlu0 %3307
    %3310 = vst.msk [vmem:[%s1643] sm:$0xff] %vm511, %v3308
    %3312 = vrot.lane.b32.xlu0 %v3305, 96
    %v3313 = vpop.permute.xlu0 %3312
    %3315 = vst.msk [vmem:[%s1649] sm:$0xff] %vm511, %v3313
    %v3316 = vpack.c.bf16 %v3278, %v3278
    %3318 = vrot.lane.b32.xlu0 %v3316, 96
    %v3319 = vpop.permute.xlu0 %3318
    %v3321 = vsel %vm511, %v3319, 0
    %3323 = vmatprep.subr.bf16.mxu0 0
    %3324 = vmatpush1.bf16.msra.mxu0 0
    %3325 = vmatprep.subr.bf16.mxu0 0
    %3326 = vmatpush1.bf16.msra.mxu0 0
    %3327 = vmatprep.subr.bf16.mxu0 0
    %3328 = vmatpush1.bf16.msra.mxu0 0
    %3329 = vmatprep.subr.bf16.mxu0 0
    %3330 = vmatpush1.bf16.msra.mxu0 0
    %3331 = vmatprep.subr.bf16.mxu0 0
    %3332 = vmatpush1.bf16.msra.mxu0 0
    %3333 = vmatprep.subr.bf16.mxu0 0
    %3334 = vmatpush1.bf16.msra.mxu0 0
    %3335 = vmatprep.subr.bf16.mxu0 0
    %3336 = vmatpush1.bf16.msra.mxu0 %v2203
    %3337 = vmatprep.subr.bf16.mxu0 0
    %3338 = vmatpush1.bf16.msra.mxu0 %v2202
    %3339 = vmatprep.subr.bf16.mxu0 0
    %3340 = vmatpush2.bf16.msra.mxu0 0
    %3341 = vmatprep.subr.bf16.mxu0 0
    %3342 = vmatpush2.bf16.msra.mxu0 0
    %3343 = vmatprep.subr.bf16.mxu0 0
    %3344 = vmatpush2.bf16.msra.mxu0 0
    %3345 = vmatprep.subr.bf16.mxu0 0
    %3346 = vmatpush2.bf16.msra.mxu0 0
    %3347 = vmatprep.subr.bf16.mxu0 0
    %3348 = vmatpush2.bf16.msra.mxu0 0
    %3349 = vmatprep.subr.bf16.mxu0 0
    %3350 = vmatpush2.bf16.msra.mxu0 0
    %3351 = vmatprep.subr.bf16.mxu0 0
    %3352 = vmatpush2.bf16.msra.mxu0 0
    %3353 = vmatprep.subr.bf16.mxu0 0
    %3354 = vmatpush2.bf16.msra.mxu0 0
    %3355 = vmatprep.mubr.bf16.mxu0 0
    %3356 = vmatmul.mubr.bf16.gmra.mxu0 %v3321
    %v3357 = vpop.f32.mrf.mxu0
    %v3358 = vadd.f32 %v2192, %v3357
    %v3359 = vpop.f32.mrf.mxu0
    %v3360 = vpop.f32.mrf.mxu0
    %v3361 = vpop.f32.mrf.mxu0
    %3362 = vdwg.mxu0
    %v3363 = vpack.c.bf16 %v3305, %v3305
    %3365 = vrot.lane.b32.xlu0 %v3363, 96
    %v3366 = vpop.permute.xlu0 %3365
    %v3368 = vsel %vm511, %v3366, 0
    %3370 = vmatprep.subr.bf16.mxu0 0
    %3371 = vmatpush1.bf16.msra.mxu0 0
    %3372 = vmatprep.subr.bf16.mxu0 0
    %3373 = vmatpush1.bf16.msra.mxu0 0
    %3374 = vmatprep.subr.bf16.mxu0 0
    %3375 = vmatpush1.bf16.msra.mxu0 0
    %3376 = vmatprep.subr.bf16.mxu0 0
    %3377 = vmatpush1.bf16.msra.mxu0 0
    %3378 = vmatprep.subr.bf16.mxu0 0
    %3379 = vmatpush1.bf16.msra.mxu0 0
    %3380 = vmatprep.subr.bf16.mxu0 0
    %3381 = vmatpush1.bf16.msra.mxu0 0
    %3382 = vmatprep.subr.bf16.mxu0 0
    %3383 = vmatpush1.bf16.msra.mxu0 %v2261
    %3384 = vmatprep.subr.bf16.mxu0 0
    %3385 = vmatpush1.bf16.msra.mxu0 %v2260
    %3386 = vmatprep.subr.bf16.mxu0 0
    %3387 = vmatpush2.bf16.msra.mxu0 0
    %3388 = vmatprep.subr.bf16.mxu0 0
    %3389 = vmatpush2.bf16.msra.mxu0 0
    %3390 = vmatprep.subr.bf16.mxu0 0
    %3391 = vmatpush2.bf16.msra.mxu0 0
    %3392 = vmatprep.subr.bf16.mxu0 0
    %3393 = vmatpush2.bf16.msra.mxu0 0
    %3394 = vmatprep.subr.bf16.mxu0 0
    %3395 = vmatpush2.bf16.msra.mxu0 0
    %3396 = vmatprep.subr.bf16.mxu0 0
    %3397 = vmatpush2.bf16.msra.mxu0 0
    %3398 = vmatprep.subr.bf16.mxu0 0
    %3399 = vmatpush2.bf16.msra.mxu0 0
    %3400 = vmatprep.subr.bf16.mxu0 0
    %3401 = vmatpush2.bf16.msra.mxu0 0
    %3402 = vmatprep.mubr.bf16.mxu0 0
    %3403 = vmatmul.mubr.bf16.gmra.mxu0 %v3368
    %v3404 = vpop.f32.mrf.mxu0
    %v3405 = vadd.f32 %v2250, %v3404
    %v3406 = vpop.f32.mrf.mxu0
    %v3407 = vpop.f32.mrf.mxu0
    %v3408 = vpop.f32.mrf.mxu0
    %3409 = vdwg.mxu0
    %v3410 = vld [vmem:[%s1745] sm:$0xff]
    %v3411 = vadd.f32 %v3410, %v3358
    %v3412 = vxor.u32 %v3411, 2147483648
    %v3413 = vmul.f32 %v3412, 1.442695
    %v3414 = vpow.pop %v3413
    %v3415 = vadd.f32 %v3414, 1.0
    %v3416 = vrcp.pop %v3415
    %v3417 = vmul.f32 1.0, %v3416
    %3419 = vrot.lane.b32.xlu0 %v3358, 64
    %v3420 = vpop.permute.xlu0 %3419
    %v3422 = vmul.f32 %v3417, %v3420
    %3424 = vrot.lane.b32.xlu0 %v3422, 64
    %v3425 = vpop.permute.xlu0 %3424
    %v3427 = vadd.f32 %v3410, %v3425
    %v3428 = vtanh.pop %v3427
    %v3429 = vsub.f32 1.0, %v3417
    %3431 = vrot.lane.b32.xlu0 %v3428, 96
    %v3432 = vpop.permute.xlu0 %3431
    %v3434 = vmul.f32 %v3429, %v3432
    %v3435 = vmul.f32 %v3417, %v3278
    %v3436 = vadd.f32 %v3434, %v3435
    %v3437 = vld [vmem:[#allocation3] sm:$0xff]
    %v3438 = vadd.f32 %v3437, %v3405
    %v3439 = vxor.u32 %v3438, 2147483648
    %v3440 = vmul.f32 %v3439, 1.442695
    %v3441 = vpow.pop %v3440
    %v3442 = vadd.f32 %v3441, 1.0
    %v3443 = vrcp.pop %v3442
    %v3444 = vmul.f32 1.0, %v3443
    %3446 = vrot.lane.b32.xlu0 %v3405, 64
    %v3447 = vpop.permute.xlu0 %3446
    %v3449 = vmul.f32 %v3444, %v3447
    %3451 = vrot.lane.b32.xlu0 %v3449, 64
    %v3452 = vpop.permute.xlu0 %3451
    %v3454 = vadd.f32 %v3437, %v3452
    %v3455 = vtanh.pop %v3454
    %v3456 = vsub.f32 1.0, %v3444
    %3458 = vrot.lane.b32.xlu0 %v3455, 96
    %v3459 = vpop.permute.xlu0 %3458
    %v3461 = vmul.f32 %v3456, %v3459
    %v3462 = vmul.f32 %v3444, %v3305
    %v3463 = vadd.f32 %v3461, %v3462
    %3465 = vrot.lane.b32.xlu0 %v3436, 96
    %v3466 = vpop.permute.xlu0 %3465
    %3468 = vst.msk [vmem:[%s1804] sm:$0xff] %vm511, %v3466
    %3470 = vrot.lane.b32.xlu0 %v3463, 96
    %v3471 = vpop.permute.xlu0 %3470
    %3473 = vst.msk [vmem:[#allocation5] sm:$0xff] %vm511, %v3471
    %v3474 = vld [vmem:[#allocation4] sm:$0xff]
    %v3475 = vld [vmem:[#allocation4 + $0x8] sm:$0xff]
    %v3476 = vld [vmem:[#allocation4 + $0x10] sm:$0xff]
    %v3477 = vld [vmem:[#allocation4 + $0x18] sm:$0xff]
    %v3478 = vld [vmem:[#allocation4 + $0x20] sm:$0xff]
    %v3479 = vld [vmem:[#allocation4 + $0x28] sm:$0xff]
    %v3480 = vld [vmem:[#allocation4 + $0x30] sm:$0xff]
    %v3481 = vld [vmem:[#allocation4 + $0x38] sm:$0xff]
    %v3482 = vld [vmem:[#allocation5] sm:$0xff]
    %v3483 = vld [vmem:[#allocation5 + $0x8] sm:$0xff]
    %v3484 = vld [vmem:[#allocation5 + $0x10] sm:$0xff]
    %v3485 = vld [vmem:[#allocation5 + $0x18] sm:$0xff]
    %v3486 = vld [vmem:[#allocation5 + $0x20] sm:$0xff]
    %v3487 = vld [vmem:[#allocation5 + $0x28] sm:$0xff]
    %v3488 = vld [vmem:[#allocation5 + $0x30] sm:$0xff]
    %v3489 = vld [vmem:[#allocation5 + $0x38] sm:$0xff]
    %v3490 = vadd.f32 %v3474, %v3482
    %v3491 = vadd.f32 %v3475, %v3483
    %v3492 = vadd.f32 %v3476, %v3484
    %v3493 = vadd.f32 %v3477, %v3485
    %v3494 = vadd.f32 %v3478, %v3486
    %v3495 = vadd.f32 %v3479, %v3487
    %v3496 = vadd.f32 %v3480, %v3488
    %v3497 = vadd.f32 %v3481, %v3489
    %v3498 = vsel %vm511, %v3490, 0.0
    %3499 = vadd.xlane.f32.xlu0 %v3498
    %v3500 = vpop.xlane.xlu0 %3499
    %v3501 = vsel %vm511, %v3491, 0.0
    %3502 = vadd.xlane.f32.xlu0 %v3501
    %v3503 = vpop.xlane.xlu0 %3502
    %v3504 = vsel %vm511, %v3492, 0.0
    %3505 = vadd.xlane.f32.xlu0 %v3504
    %v3506 = vpop.xlane.xlu0 %3505
    %v3507 = vsel %vm511, %v3493, 0.0
    %3508 = vadd.xlane.f32.xlu0 %v3507
    %v3509 = vpop.xlane.xlu0 %3508
    %v3510 = vsel %vm511, %v3494, 0.0
    %3511 = vadd.xlane.f32.xlu0 %v3510
    %v3512 = vpop.xlane.xlu0 %3511
    %v3513 = vsel %vm511, %v3495, 0.0
    %3514 = vadd.xlane.f32.xlu0 %v3513
    %v3515 = vpop.xlane.xlu0 %3514
    %v3516 = vsel %vm511, %v3496, 0.0
    %3517 = vadd.xlane.f32.xlu0 %v3516
    %v3518 = vpop.xlane.xlu0 %3517
    %v3519 = vsel %vm511, %v3497, 0.0
    %3520 = vadd.xlane.f32.xlu0 %v3519
    %v3521 = vpop.xlane.xlu0 %3520
    %v3522 = vmul.f32 %v3500, %v1859
    %v3523 = vmul.f32 %v3503, %v1859
    %v3524 = vmul.f32 %v3506, %v1859
    %v3525 = vmul.f32 %v3509, %v1859
    %v3526 = vmul.f32 %v3512, %v1859
    %v3527 = vmul.f32 %v3515, %v1859
    %v3528 = vmul.f32 %v3518, %v1859
    %v3529 = vmul.f32 %v3521, %v1859
    %v3530 = vsub.f32 %v3490, %v3522
    %v3531 = vsub.f32 %v3491, %v3523
    %v3532 = vsub.f32 %v3492, %v3524
    %v3533 = vsub.f32 %v3493, %v3525
    %v3534 = vsub.f32 %v3494, %v3526
    %v3535 = vsub.f32 %v3495, %v3527
    %v3536 = vsub.f32 %v3496, %v3528
    %v3537 = vsub.f32 %v3497, %v3529
    %v3538 = vmul.f32 %v3530, %v3530
    %v3539 = vmul.f32 %v3531, %v3531
    %v3540 = vmul.f32 %v3532, %v3532
    %v3541 = vmul.f32 %v3533, %v3533
    %v3542 = vmul.f32 %v3534, %v3534
    %v3543 = vmul.f32 %v3535, %v3535
    %v3544 = vmul.f32 %v3536, %v3536
    %v3545 = vmul.f32 %v3537, %v3537
    %v3546 = vsel %vm511, %v3538, 0.0
    %3547 = vadd.xlane.f32.xlu0 %v3546
    %v3548 = vpop.xlane.xlu0 %3547
    %v3549 = vsel %vm511, %v3539, 0.0
    %3550 = vadd.xlane.f32.xlu0 %v3549
    %v3551 = vpop.xlane.xlu0 %3550
    %v3552 = vsel %vm511, %v3540, 0.0
    %3553 = vadd.xlane.f32.xlu0 %v3552
    %v3554 = vpop.xlane.xlu0 %3553
    %v3555 = vsel %vm511, %v3541, 0.0
    %3556 = vadd.xlane.f32.xlu0 %v3555
    %v3557 = vpop.xlane.xlu0 %3556
    %v3558 = vsel %vm511, %v3542, 0.0
    %3559 = vadd.xlane.f32.xlu0 %v3558
    %v3560 = vpop.xlane.xlu0 %3559
    %v3561 = vsel %vm511, %v3543, 0.0
    %3562 = vadd.xlane.f32.xlu0 %v3561
    %v3563 = vpop.xlane.xlu0 %3562
    %v3564 = vsel %vm511, %v3544, 0.0
    %3565 = vadd.xlane.f32.xlu0 %v3564
    %v3566 = vpop.xlane.xlu0 %3565
    %v3567 = vsel %vm511, %v3545, 0.0
    %3568 = vadd.xlane.f32.xlu0 %v3567
    %v3569 = vpop.xlane.xlu0 %3568
    %v3570 = vmul.f32 %v3548, %v1859
    %v3571 = vmul.f32 %v3551, %v1859
    %v3572 = vmul.f32 %v3554, %v1859
    %v3573 = vmul.f32 %v3557, %v1859
    %v3574 = vmul.f32 %v3560, %v1859
    %v3575 = vmul.f32 %v3563, %v1859
    %v3576 = vmul.f32 %v3566, %v1859
    %v3577 = vmul.f32 %v3569, %v1859
    %v3578 = vadd.f32 %v3570, 1e-05
    %v3579 = vadd.f32 %v3571, 1e-05
    %v3580 = vadd.f32 %v3572, 1e-05
    %v3581 = vadd.f32 %v3573, 1e-05
    %v3582 = vadd.f32 %v3574, 1e-05
    %v3583 = vadd.f32 %v3575, 1e-05
    %v3584 = vadd.f32 %v3576, 1e-05
    %v3585 = vadd.f32 %v3577, 1e-05
    %v3586 = vrsqrt.pop %v3578
    %v3587 = vrsqrt.pop %v3579
    %v3588 = vrsqrt.pop %v3580
    %v3589 = vrsqrt.pop %v3581
    %v3590 = vrsqrt.pop %v3582
    %v3591 = vrsqrt.pop %v3583
    %v3592 = vrsqrt.pop %v3584
    %v3593 = vrsqrt.pop %v3585
    %v3594 = vmul.f32 %v3530, %v3586
    %v3595 = vmul.f32 %v3531, %v3587
    %v3596 = vmul.f32 %v3532, %v3588
    %v3597 = vmul.f32 %v3533, %v3589
    %v3598 = vmul.f32 %v3534, %v3590
    %v3599 = vmul.f32 %v3535, %v3591
    %v3600 = vmul.f32 %v3536, %v3592
    %v3601 = vmul.f32 %v3537, %v3593
    %v3602 = vld [vmem:[#allocation29] sm:$0x1]
    %v3604 = vlaneseq
    %v3605 = vshrl.u32 %v3604, 7
    %v3606 = vsub.s32 0, %v3605
    %v3607 = vrot.slane %v3602, %v3606
    %v3609 = vmul.f32 %v3594, %v3607
    %v3610 = vmul.f32 %v3595, %v3607
    %v3611 = vmul.f32 %v3596, %v3607
    %v3612 = vmul.f32 %v3597, %v3607
    %v3613 = vmul.f32 %v3598, %v3607
    %v3614 = vmul.f32 %v3599, %v3607
    %v3615 = vmul.f32 %v3600, %v3607
    %v3616 = vmul.f32 %v3601, %v3607
    %v3617 = vld [vmem:[#allocation30] sm:$0x1]
    %v3619 = vlaneseq
    %v3620 = vshrl.u32 %v3619, 7
    %v3621 = vsub.s32 0, %v3620
    %v3622 = vrot.slane %v3617, %v3621
    %v3624 = vadd.f32 %v3609, %v3622
    %v3625 = vadd.f32 %v3610, %v3622
    %v3626 = vadd.f32 %v3611, %v3622
    %v3627 = vadd.f32 %v3612, %v3622
    %v3628 = vadd.f32 %v3613, %v3622
    %v3629 = vadd.f32 %v3614, %v3622
    %v3630 = vadd.f32 %v3615, %v3622
    %v3631 = vadd.f32 %v3616, %v3622
    %v3632 = vpack.c.bf16 %v3625, %v3624
    %v3633 = vpack.c.bf16 %v3627, %v3626
    %v3634 = vpack.c.bf16 %v3629, %v3628
    %v3635 = vpack.c.bf16 %v3631, %v3630
    %v3636 = vld [vmem:[%s23] sm:$0xf]
    %v3637 = vld [vmem:[%s23 + $0x4] sm:$0xf]
    %v3638 = vld [vmem:[%s23 + $0x8] sm:$0xf]
    %v3639 = vld [vmem:[%s23 + $0xc] sm:$0xf]
    %v3640 = vld [vmem:[%s24] sm:$0x1]
    %v3642 = vlaneseq
    %v3643 = vshrl.u32 %v3642, 7
    %v3644 = vsub.s32 0, %v3643
    %v3645 = vrot.slane %v3640, %v3644
    %v3651 = vunpack.c.l.b16 %v3636
    %v3652 = vunpack.c.l.b16 %v3637
    %v3653 = vunpack.c.l.b16 %v3638
    %v3654 = vunpack.c.l.b16 %v3639
    %v3655 = vpack.c.b16 %v3652, %v3651
    %v3656 = vpack.c.b16 %v3654, %v3653
    %v3660 = vsel %vm511, %v3632, 0
    %v3663 = vsel %vm511, %v3633, 0
    %v3666 = vsel %vm511, %v3634, 0
    %v3669 = vsel %vm511, %v3635, 0
    %3671 = vmatprep.subr.bf16.mxu0 0
    %3672 = vmatpush1.bf16.msra.mxu0 0
    %3673 = vmatprep.subr.bf16.mxu0 0
    %3674 = vmatpush1.bf16.msra.mxu0 0
    %3675 = vmatprep.subr.bf16.mxu0 0
    %3676 = vmatpush1.bf16.msra.mxu0 0
    %3677 = vmatprep.subr.bf16.mxu0 0
    %3678 = vmatpush1.bf16.msra.mxu0 0
    %3679 = vmatprep.subr.bf16.mxu0 0
    %3680 = vmatpush1.bf16.msra.mxu0 0
    %3681 = vmatprep.subr.bf16.mxu0 0
    %3682 = vmatpush1.bf16.msra.mxu0 0
    %3683 = vmatprep.subr.bf16.mxu0 0
    %3684 = vmatpush1.bf16.msra.mxu0 %v3656
    %3685 = vmatprep.subr.bf16.mxu0 0
    %3686 = vmatpush1.bf16.msra.mxu0 %v3655
    %3687 = vmatprep.subr.bf16.mxu0 0
    %3688 = vmatpush2.bf16.msra.mxu0 0
    %3689 = vmatprep.subr.bf16.mxu0 0
    %3690 = vmatpush2.bf16.msra.mxu0 0
    %3691 = vmatprep.subr.bf16.mxu0 0
    %3692 = vmatpush2.bf16.msra.mxu0 0
    %3693 = vmatprep.subr.bf16.mxu0 0
    %3694 = vmatpush2.bf16.msra.mxu0 0
    %3695 = vmatprep.subr.bf16.mxu0 0
    %3696 = vmatpush2.bf16.msra.mxu0 0
    %3697 = vmatprep.subr.bf16.mxu0 0
    %3698 = vmatpush2.bf16.msra.mxu0 0
    %3699 = vmatprep.subr.bf16.mxu0 0
    %3700 = vmatpush2.bf16.msra.mxu0 0
    %3701 = vmatprep.subr.bf16.mxu0 0
    %3702 = vmatpush2.bf16.msra.mxu0 0
    %3703 = vmatprep.mubr.bf16.mxu0 0
    %3704 = vmatmul.mubr.bf16.gmra.mxu0 %v3660
    %v3705 = vpop.f32.mrf.mxu0
    %v3706 = vadd.f32 %v3645, %v3705
    %v3707 = vpop.f32.mrf.mxu0
    %v3708 = vpop.f32.mrf.mxu0
    %v3709 = vadd.f32 %v3645, %v3708
    %v3710 = vpop.f32.mrf.mxu0
    %3711 = vmatprep.mubr.bf16.mxu0 0
    %3712 = vmatmul.mubr.bf16.gmra.mxu0 %v3663
    %v3713 = vpop.f32.mrf.mxu0
    %v3714 = vadd.f32 %v3645, %v3713
    %v3715 = vpop.f32.mrf.mxu0
    %v3716 = vpop.f32.mrf.mxu0
    %v3717 = vadd.f32 %v3645, %v3716
    %v3718 = vpop.f32.mrf.mxu0
    %3719 = vmatprep.mubr.bf16.mxu0 0
    %3720 = vmatmul.mubr.bf16.gmra.mxu0 %v3666
    %v3721 = vpop.f32.mrf.mxu0
    %v3722 = vadd.f32 %v3645, %v3721
    %v3723 = vpop.f32.mrf.mxu0
    %v3724 = vpop.f32.mrf.mxu0
    %v3725 = vadd.f32 %v3645, %v3724
    %v3726 = vpop.f32.mrf.mxu0
    %3727 = vmatprep.mubr.bf16.mxu0 0
    %3728 = vmatmul.mubr.bf16.gmra.mxu0 %v3669
    %v3729 = vpop.f32.mrf.mxu0
    %v3730 = vadd.f32 %v3645, %v3729
    %v3731 = vpop.f32.mrf.mxu0
    %v3732 = vpop.f32.mrf.mxu0
    %v3733 = vadd.f32 %v3645, %v3732
    %v3734 = vpop.f32.mrf.mxu0
    %3735 = vdwg.mxu0
    %v3736 = vld [vmem:[%s25] sm:$0xf]
    %v3737 = vld [vmem:[%s25 + $0x4] sm:$0xf]
    %v3738 = vld [vmem:[%s25 + $0x8] sm:$0xf]
    %v3739 = vld [vmem:[%s25 + $0xc] sm:$0xf]
    %v3740 = vld [vmem:[%s26] sm:$0x1]
    %v3742 = vlaneseq
    %v3743 = vshrl.u32 %v3742, 7
    %v3744 = vsub.s32 0, %v3743
    %v3745 = vrot.slane %v3740, %v3744
    %v3751 = vunpack.c.l.b16 %v3736
    %v3752 = vunpack.c.l.b16 %v3737
    %v3753 = vunpack.c.l.b16 %v3738
    %v3754 = vunpack.c.l.b16 %v3739
    %v3755 = vpack.c.b16 %v3752, %v3751
    %v3756 = vpack.c.b16 %v3754, %v3753
    %3759 = vmatprep.subr.bf16.mxu0 0
    %3760 = vmatpush1.bf16.msra.mxu0 0
    %3761 = vmatprep.subr.bf16.mxu0 0
    %3762 = vmatpush1.bf16.msra.mxu0 0
    %3763 = vmatprep.subr.bf16.mxu0 0
    %3764 = vmatpush1.bf16.msra.mxu0 0
    %3765 = vmatprep.subr.bf16.mxu0 0
    %3766 = vmatpush1.bf16.msra.mxu0 0
    %3767 = vmatprep.subr.bf16.mxu0 0
    %3768 = vmatpush1.bf16.msra.mxu0 0
    %3769 = vmatprep.subr.bf16.mxu0 0
    %3770 = vmatpush1.bf16.msra.mxu0 0
    %3771 = vmatprep.subr.bf16.mxu0 0
    %3772 = vmatpush1.bf16.msra.mxu0 %v3756
    %3773 = vmatprep.subr.bf16.mxu0 0
    %3774 = vmatpush1.bf16.msra.mxu0 %v3755
    %3775 = vmatprep.subr.bf16.mxu0 0
    %3776 = vmatpush2.bf16.msra.mxu0 0
    %3777 = vmatprep.subr.bf16.mxu0 0
    %3778 = vmatpush2.bf16.msra.mxu0 0
    %3779 = vmatprep.subr.bf16.mxu0 0
    %3780 = vmatpush2.bf16.msra.mxu0 0
    %3781 = vmatprep.subr.bf16.mxu0 0
    %3782 = vmatpush2.bf16.msra.mxu0 0
    %3783 = vmatprep.subr.bf16.mxu0 0
    %3784 = vmatpush2.bf16.msra.mxu0 0
    %3785 = vmatprep.subr.bf16.mxu0 0
    %3786 = vmatpush2.bf16.msra.mxu0 0
    %3787 = vmatprep.subr.bf16.mxu0 0
    %3788 = vmatpush2.bf16.msra.mxu0 0
    %3789 = vmatprep.subr.bf16.mxu0 0
    %3790 = vmatpush2.bf16.msra.mxu0 0
    %3791 = vmatprep.mubr.bf16.mxu0 0
    %3792 = vmatmul.mubr.bf16.gmra.mxu0 %v3660
    %v3793 = vpop.f32.mrf.mxu0
    %v3794 = vadd.f32 %v3745, %v3793
    %v3795 = vpop.f32.mrf.mxu0
    %v3796 = vpop.f32.mrf.mxu0
    %v3797 = vadd.f32 %v3745, %v3796
    %v3798 = vpop.f32.mrf.mxu0
    %3799 = vmatprep.mubr.bf16.mxu0 0
    %3800 = vmatmul.mubr.bf16.gmra.mxu0 %v3663
    %v3801 = vpop.f32.mrf.mxu0
    %v3802 = vadd.f32 %v3745, %v3801
    %v3803 = vpop.f32.mrf.mxu0
    %v3804 = vpop.f32.mrf.mxu0
    %v3805 = vadd.f32 %v3745, %v3804
    %v3806 = vpop.f32.mrf.mxu0
    %3807 = vmatprep.mubr.bf16.mxu0 0
    %3808 = vmatmul.mubr.bf16.gmra.mxu0 %v3666
    %v3809 = vpop.f32.mrf.mxu0
    %v3810 = vadd.f32 %v3745, %v3809
    %v3811 = vpop.f32.mrf.mxu0
    %v3812 = vpop.f32.mrf.mxu0
    %v3813 = vadd.f32 %v3745, %v3812
    %v3814 = vpop.f32.mrf.mxu0
    %3815 = vmatprep.mubr.bf16.mxu0 0
    %3816 = vmatmul.mubr.bf16.gmra.mxu0 %v3669
    %v3817 = vpop.f32.mrf.mxu0
    %v3818 = vadd.f32 %v3745, %v3817
    %v3819 = vpop.f32.mrf.mxu0
    %v3820 = vpop.f32.mrf.mxu0
    %v3821 = vadd.f32 %v3745, %v3820
    %v3822 = vpop.f32.mrf.mxu0
    %3823 = vdwg.mxu0
    %v3824 = vld [vmem:[#allocation6] sm:$0xff]
    %v3825 = vld [vmem:[#allocation6 + $0x8] sm:$0xff]
    %v3826 = vld [vmem:[#allocation6 + $0x10] sm:$0xff]
    %v3827 = vld [vmem:[#allocation6 + $0x18] sm:$0xff]
    %v3828 = vld [vmem:[#allocation6 + $0x20] sm:$0xff]
    %v3829 = vld [vmem:[#allocation6 + $0x28] sm:$0xff]
    %v3830 = vld [vmem:[#allocation6 + $0x30] sm:$0xff]
    %v3831 = vld [vmem:[#allocation6 + $0x38] sm:$0xff]
    %v3832 = vmul.f32 %v3794, 0.5
    %v3833 = vmul.f32 %v3797, 0.5
    %v3834 = vmul.f32 %v3802, 0.5
    %v3835 = vmul.f32 %v3805, 0.5
    %v3836 = vmul.f32 %v3810, 0.5
    %v3837 = vmul.f32 %v3813, 0.5
    %v3838 = vmul.f32 %v3818, 0.5
    %v3839 = vmul.f32 %v3821, 0.5
    %v3840 = vmul.f32 %v3832, 1.442695
    %v3841 = vpow.pop %v3840
    %v3842 = vmul.f32 %v3833, 1.442695
    %v3843 = vpow.pop %v3842
    %v3844 = vmul.f32 %v3834, 1.442695
    %v3845 = vpow.pop %v3844
    %v3846 = vmul.f32 %v3835, 1.442695
    %v3847 = vpow.pop %v3846
    %v3848 = vmul.f32 %v3836, 1.442695
    %v3849 = vpow.pop %v3848
    %v3850 = vmul.f32 %v3837, 1.442695
    %v3851 = vpow.pop %v3850
    %v3852 = vmul.f32 %v3838, 1.442695
    %v3853 = vpow.pop %v3852
    %v3854 = vmul.f32 %v3839, 1.442695
    %v3855 = vpow.pop %v3854
    %v3856 = vmul.f32 %v3841, %v3824
    %v3857 = vmul.f32 %v3843, %v3825
    %v3858 = vmul.f32 %v3845, %v3826
    %v3859 = vmul.f32 %v3847, %v3827
    %v3860 = vmul.f32 %v3849, %v3828
    %v3861 = vmul.f32 %v3851, %v3829
    %v3862 = vmul.f32 %v3853, %v3830
    %v3863 = vmul.f32 %v3855, %v3831
    %v3864 = vadd.f32 %v3706, %v3856
    %v3865 = vadd.f32 %v3709, %v3857
    %v3866 = vadd.f32 %v3714, %v3858
    %v3867 = vadd.f32 %v3717, %v3859
    %v3868 = vadd.f32 %v3722, %v3860
    %v3869 = vadd.f32 %v3725, %v3861
    %v3870 = vadd.f32 %v3730, %v3862
    %v3871 = vadd.f32 %v3733, %v3863
    %v3872 = vld [vmem:[%s2] sm:$0xff]
    %v3873 = vld [vmem:[%s2 + $0x8] sm:$0xff]
    %v3874 = vld [vmem:[%s2 + $0x10] sm:$0xff]
    %v3875 = vld [vmem:[%s2 + $0x18] sm:$0xff]
    %v3876 = vld [vmem:[%s2 + $0x20] sm:$0xff]
    %v3877 = vld [vmem:[%s2 + $0x28] sm:$0xff]
    %v3878 = vld [vmem:[%s2 + $0x30] sm:$0xff]
    %v3879 = vld [vmem:[%s2 + $0x38] sm:$0xff]
    %3881 = vset.pattern.permute.xlu0 0
    %3882 = vperm.xlu0 %3881, %v3872
    %v3883 = vpop.permute.xlu0 %3882
    %3886 = vset.pattern.permute.xlu0 0
    %3887 = vperm.xlu0 %3886, %v3873
    %v3888 = vpop.permute.xlu0 %3887
    %3891 = vset.pattern.permute.xlu0 0
    %3892 = vperm.xlu0 %3891, %v3874
    %v3893 = vpop.permute.xlu0 %3892
    %3896 = vset.pattern.permute.xlu0 0
    %3897 = vperm.xlu0 %3896, %v3875
    %v3898 = vpop.permute.xlu0 %3897
    %3901 = vset.pattern.permute.xlu0 0
    %3902 = vperm.xlu0 %3901, %v3876
    %v3903 = vpop.permute.xlu0 %3902
    %3906 = vset.pattern.permute.xlu0 0
    %3907 = vperm.xlu0 %3906, %v3877
    %v3908 = vpop.permute.xlu0 %3907
    %3911 = vset.pattern.permute.xlu0 0
    %3912 = vperm.xlu0 %3911, %v3878
    %v3913 = vpop.permute.xlu0 %3912
    %3916 = vset.pattern.permute.xlu0 0
    %3917 = vperm.xlu0 %3916, %v3879
    %v3918 = vpop.permute.xlu0 %3917
    %v3920 = vmul.f32 %v3864, %v3883
    %v3921 = vmul.f32 %v3865, %v3888
    %v3922 = vmul.f32 %v3866, %v3893
    %v3923 = vmul.f32 %v3867, %v3898
    %v3924 = vmul.f32 %v3868, %v3903
    %v3925 = vmul.f32 %v3869, %v3908
    %v3926 = vmul.f32 %v3870, %v3913
    %v3927 = vmul.f32 %v3871, %v3918
    %3928 = vst.msk [vmem:[#allocation32] sm:$0xff] %vm308, %v3920
    %3929 = vst.msk [vmem:[#allocation32 + $0x8] sm:$0xff] %vm308, %v3921
    %3930 = vst.msk [vmem:[#allocation32 + $0x10] sm:$0xff] %vm308, %v3922
    %3931 = vst.msk [vmem:[#allocation32 + $0x18] sm:$0xff] %vm308, %v3923
    %3932 = vst.msk [vmem:[#allocation32 + $0x20] sm:$0xff] %vm308, %v3924
    %3933 = vst.msk [vmem:[#allocation32 + $0x28] sm:$0xff] %vm308, %v3925
    %3934 = vst.msk [vmem:[#allocation32 + $0x30] sm:$0xff] %vm308, %v3926
    %3935 = vst.msk [vmem:[#allocation32 + $0x38] sm:$0xff] %vm308, %v3927
    // Predicated region
    $region174: #{tpu_custom_call.1} parent=1 // pred_check
      _
    $region175: #{tpu_custom_call.1} parent=1 // pred_check_branch
      %3937 = sbr.rel (0) target = $region177
    $region176: #{tpu_custom_call.1} parent=1 // pred_region
      %s3939 = ssub.s32 1024, 1024
      %3940 = vsyncadd [#allocation8], %s3939
      %s3941 = sshll.u32 [#allocation32], 4
      %s3942 = int_to_ptr.vmem [resolvable:$true] %s3941
      %3947 = dma.vmem_to_hbm [thread:$0]  %s3942, 1024, %s27, [#allocation8], 128, 128, 8
    $region177: #{tpu_custom_call.1} parent=1 // pred_fallthru
      _
    // Predicated region
    $region178: #{tpu_custom_call.1} parent=1 // pred_check
      _
    $region179: #{tpu_custom_call.1} parent=1 // pred_check_branch
      %3949 = sbr.rel (0) target = $region181
    $region180: #{tpu_custom_call.1} parent=1 // pred_region
      %3950 = dma.done [#allocation8], 1024
    $region181: #{tpu_custom_call.1} parent=1 // pred_fallthru
      _
    %3951 = vsyncpa [#allocation7], 1
    %3952 = vsyncpa [#allocation10], 1
    %3953 = vsyncpa [#allocation13], 1
    %3954 = vsyncpa [#allocation16], 1
    %3955 = vsyncpa [#allocation19], 1
    %3956 = vsyncpa [#allocation22], 1
    %3957 = vsyncpa [#allocation25], 1
    %3958 = vsyncpa [#allocation28], 1
    %3959 = vsyncpa [#allocation31], 1
    %3960 = vsyncpa [#allocation8], 1

</llo_original>
